<compile_context>
chip_gen: v7x
topology: tpu7x:2x2x1
jax: 0.10.0
libtpu: 0.0.40
codegen_flags: <defaults>
</compile_context>

<pallas_src>
import jax
import jax.numpy as jnp
from jax.experimental import pallas as pl
from jax.experimental.pallas import tpu as pltpu

# MXU operand dtype (bf16 halves patch/weight DMA bytes and runs the MXU at
# native rate on all of v5e/v6e/v7x).  All BN / activation math stays f32.
MXU_DTYPE = jnp.bfloat16
_BN_EPS = 1e-5
_LRELU_SLOPE = 0.01

_VMEM_LIMIT_CACHE = None


def _vmem_limit():
    """~3/4 of physical VMEM, capped at 100 MiB (v5e/v6e ~96 MiB, v7x 48 MiB)."""
    global _VMEM_LIMIT_CACHE
    if _VMEM_LIMIT_CACHE is None:
        cap = 128 * 1024 * 1024
        try:
            info = pltpu.get_tpu_info()
            cap = int(getattr(info, "vmem_capacity_bytes", cap) or cap)
        except Exception:
            pass
        _VMEM_LIMIT_CACHE = int(min(cap * 3 // 4, 100 * 1024 * 1024))
    return _VMEM_LIMIT_CACHE


def _compiler_params(sem):
    return pltpu.CompilerParams(dimension_semantics=sem,
                                vmem_limit_bytes=_vmem_limit())


def _pick_cout_block(cout):
    """Largest multiple-of-8 block that still gives >=2 grid steps."""
    for cand in (128, 64, 32, 16, 8):
        if cand < cout and cout % cand == 0:
            return cand
    return cout


def _full_spec(a):
    """BlockSpec covering the whole array (constant index map)."""
    zeros = (0,) * len(a.shape)
    return pl.BlockSpec(tuple(a.shape), lambda i, _z=zeros: _z)


def _leaky(y):
    return jnp.where(y >= 0.0, y, _LRELU_SLOPE * y)


# ---------------------------------------------------------------------------
# Fused  matmul + BatchNorm(batch stats) + Bias2d + LeakyReLU  (C_out tiled)
# ---------------------------------------------------------------------------
def _fused_kernel(w_ref, a_ref, b2_ref, o_ref):
    # Y = W @ A ; one-pass per-channel stats over M; affine folded to scale/shift.
    y = jnp.dot(w_ref[...], a_ref[...], preferred_element_type=jnp.float32)
    mean = jnp.mean(y, axis=1, keepdims=True)
    var = jnp.maximum(jnp.mean(y * y, axis=1, keepdims=True) - mean * mean, 0.0)
    inv = jax.lax.rsqrt(var + _BN_EPS)
    o_ref[...] = _leaky(y * inv + (b2_ref[...] - mean * inv))


def fused_matmul_bn_lrelu(w, a, bias2d):
    """LeakyReLU(Bias2d(BN(W @ A)));  W (Cout,K), A (K,M) -> (Cout,M).

    Grid over C_out blocks ("parallel" -> megacore on v7x).  A keeps a constant
    index map so the patch slab stays resident while W / output blocks are
    pipelined.  The conv bias is omitted: a per-channel constant added before
    affine-less batch-stat BN is exactly cancelled by the mean subtraction.
    """
    cout, k = w.shape
    m = a.shape[-1]
    bc = _pick_cout_block(cout)
    return pl.pallas_call(
        _fused_kernel,
        out_shape=jax.ShapeDtypeStruct((cout, m), jnp.float32),
        grid=(cout // bc,),
        in_specs=[
            pl.BlockSpec((bc, k), lambda i: (i, 0)),
            pl.BlockSpec((k, m), lambda i: (0, 0)),
            pl.BlockSpec((bc, 1), lambda i: (i, 0)),
        ],
        out_specs=pl.BlockSpec((bc, m), lambda i: (i, 0)),
        compiler_params=_compiler_params(("parallel",)),
    )(w.astype(MXU_DTYPE), a.astype(MXU_DTYPE),
      bias2d.reshape(cout, 1).astype(jnp.float32))


def _fused_group_kernel(w_ref, a_ref, b2_ref, o_ref):
    # Per-phase matmuls are written straight into the output block (no
    # concatenate copy); BN stats per channel are reduced over (phase, M).
    g = w_ref.shape[0]
    for gi in range(g):
        o_ref[gi] = jnp.dot(w_ref[gi], a_ref[gi],
                            preferred_element_type=jnp.float32)
    y = o_ref[...]                                            # (G, bc, M) f32
    mean = jnp.mean(jnp.mean(y, axis=2, keepdims=True), axis=0, keepdims=True)
    msq = jnp.mean(jnp.mean(y * y, axis=2, keepdims=True), axis=0, keepdims=True)
    var = jnp.maximum(msq - mean * mean, 0.0)
    inv = jax.lax.rsqrt(var + _BN_EPS)
    b2 = b2_ref[...].reshape(1, -1, 1)
    o_ref[...] = _leaky(y * inv + (b2 - mean * inv))


def fused_group_matmul_bn_lrelu(w, a, bias2d):
    """w (G,Cout,K) per-phase weights, a (G,K,M) per-phase patches -> (G,Cout,M)."""
    g, cout, k = w.shape
    m = a.shape[-1]
    bc = _pick_cout_block(cout)
    return pl.pallas_call(
        _fused_group_kernel,
        out_shape=jax.ShapeDtypeStruct((g, cout, m), jnp.float32),
        grid=(cout // bc,),
        in_specs=[
            pl.BlockSpec((g, bc, k), lambda i: (0, i, 0)),
            pl.BlockSpec((g, k, m), lambda i: (0, 0, 0)),
            pl.BlockSpec((bc, 1), lambda i: (i, 0)),
        ],
        out_specs=pl.BlockSpec((g, bc, m), lambda i: (0, i, 0)),
        compiler_params=_compiler_params(("parallel",)),
    )(w.astype(MXU_DTYPE), a.astype(MXU_DTYPE),
      bias2d.reshape(cout, 1).astype(jnp.float32))


# ---------------------------------------------------------------------------
# Fused de3a/de3b deconv + BN + Bias2d + LeakyReLU + de4a/de4b 1x1 tanh heads
# ---------------------------------------------------------------------------
def _make_de3_heads_kernel(groups):
    def kernel(w_ref, a_ref, b2_ref, wh_ref, bh_ref, o_ref, h_scr):
        for gi in range(groups):
            h_scr[gi] = jnp.dot(w_ref[gi], a_ref[gi],
                                preferred_element_type=jnp.float32)
        y = h_scr[...]                                        # (G, Cout, M) f32
        mean = jnp.mean(jnp.mean(y, axis=2, keepdims=True), axis=0, keepdims=True)
        msq = jnp.mean(jnp.mean(y * y, axis=2, keepdims=True), axis=0, keepdims=True)
        var = jnp.maximum(msq - mean * mean, 0.0)
        inv = jax.lax.rsqrt(var + _BN_EPS)
        b2 = b2_ref[...].reshape(1, -1, 1)
        h = _leaky(y * inv + (b2 - mean * inv))
        # 1x1 tanh heads applied per phase; de_h3 never leaves VMEM.
        for gi in range(groups):
            hd = jnp.dot(wh_ref[...], h[gi].astype(MXU_DTYPE),
                         preferred_element_type=jnp.float32)
            o_ref[gi] = jnp.tanh(hd + bh_ref[...])
    return kernel


# ---------------------------------------------------------------------------
# Fused lane-dense bottleneck: en2 -> en3 -> VAE sample -> de0
# ---------------------------------------------------------------------------
def _bottleneck_kernel(x_ref, w2_ref, b2_ref, w3_ref, b3_ref,
                       wmu_ref, bmu_ref, wsg_ref, bsg_ref,
                       noise_ref, wd_ref, bd_ref,
                       mu_ref, sd_ref, de0_ref):
    def bn_cols(y, b2):
        # BN over the batch rows (spatial is 1x1 here); channels on lanes.
        mean = jnp.mean(y, axis=0, keepdims=True)
        var = jnp.maximum(jnp.mean(y * y, axis=0, keepdims=True)
                          - mean * mean, 0.0)
        inv = jax.lax.rsqrt(var + _BN_EPS)
        return _leaky(y * inv + (b2 - mean * inv))

    # en2 (full-window k=8 conv) and en3 (1x1 conv), lane-dense (2N, C).
    h2 = bn_cols(jnp.dot(x_ref[...], w2_ref[...],
                         preferred_element_type=jnp.float32), b2_ref[...])
    h3 = bn_cols(jnp.dot(h2.astype(MXU_DTYPE), w3_ref[...],
                         preferred_element_type=jnp.float32), b3_ref[...])
    h3b = h3.astype(MXU_DTYPE)
    # VAE mu / sigma 1x1 convs (conv biases kept: no BN here), softplus, sample.
    mu = jnp.dot(h3b, wmu_ref[...],
                 preferred_element_type=jnp.float32) + bmu_ref[...]
    s = jnp.dot(h3b, wsg_ref[...],
                preferred_element_type=jnp.float32) + bsg_ref[...]
    sd = jnp.where(s > 20.0, s, jnp.log1p(jnp.exp(jnp.minimum(s, 20.0))))
    mu_ref[...] = mu
    sd_ref[...] = sd
    zb = (mu + sd * noise_ref[...]).astype(MXU_DTYPE)
    # de0: ConvTranspose2d(k=4, s=2, p=0) on the 1x1 map == channel matmul per
    # output tap; BN per channel reduced over (taps, batch).
    taps = wd_ref.shape[0]
    for t in range(taps):
        de0_ref[t] = jnp.dot(zb, wd_ref[t], preferred_element_type=jnp.float32)
    yd = de0_ref[...]                                         # (16, 2N, Cout)
    mean = jnp.mean(jnp.mean(yd, axis=1, keepdims=True), axis=0, keepdims=True)
    msq = jnp.mean(jnp.mean(yd * yd, axis=1, keepdims=True), axis=0, keepdims=True)
    var = jnp.maximum(msq - mean * mean, 0.0)
    inv = jax.lax.rsqrt(var + _BN_EPS)
    bd = bd_ref[...].reshape(1, 1, -1)
    de0_ref[...] = _leaky(yd * inv + (bd - mean * inv))


def bottleneck_vae_de0(params, en_h1, noise):
    """Fuse en2 -> en3 -> VAE(mu,sd,sample) -> de0 into one lane-dense kernel."""
    c1, n2, hh, ww = en_h1.shape
    x2 = jnp.transpose(en_h1, (1, 0, 2, 3)).reshape(n2, c1 * hh * ww)
    c2 = params["en2"]["w"].shape[0]
    c3 = params["en3"]["w"].shape[0]
    cz = c3
    cde = params["de0"]["w"].shape[1]
    w2 = params["en2"]["w"].reshape(c2, -1).T                       # (K2, c2)
    w3 = params["en3"]["w"].reshape(c3, c2).T                       # (c2, c3)
    wmu = params["vae_mu_w"][:, :, 0, 0].T                          # (cz, cz)
    wsg = params["vae_sg_w"][:, :, 0, 0].T
    wd = jnp.transpose(params["de0"]["w"], (2, 3, 0, 1)).reshape(16, cz, cde)
    args = (
        x2.astype(MXU_DTYPE),
        w2.astype(MXU_DTYPE),
        params["en2"]["bias2d"].reshape(1, c2).astype(jnp.float32),
        w3.astype(MXU_DTYPE),
        params["en3"]["bias2d"].reshape(1, c3).astype(jnp.float32),
        wmu.astype(MXU_DTYPE),
        params["vae_mu_b"].reshape(1, cz).astype(jnp.float32),
        wsg.astype(MXU_DTYPE),
        params["vae_sg_b"].reshape(1, cz).astype(jnp.float32),
        noise.astype(jnp.float32),
        wd.astype(MXU_DTYPE),
        params["de0"]["bias2d"].reshape(1, cde).astype(jnp.float32),
    )
    out_shape = (jax.ShapeDtypeStruct((n2, cz), jnp.float32),
                 jax.ShapeDtypeStruct((n2, cz), jnp.float32),
                 jax.ShapeDtypeStruct((16, n2, cde), jnp.float32))
    mu, sd, de0 = pl.pallas_call(
        _bottleneck_kernel,
        out_shape=out_shape,
        grid=(1,),
        in_specs=[_full_spec(a) for a in args],
        out_specs=tuple(_full_spec(s) for s in out_shape),
        compiler_params=_compiler_params(("arbitrary",)),
    )(*args)
    return mu, sd, de0


# ---------------------------------------------------------------------------
# Patch extraction & layout glue (plain XLA, channel-major activations, bf16)
# ---------------------------------------------------------------------------
def im2col_cnhw(x, k, stride, pad):
    """Patch matrix for channel-major x (Cin,N,H,W) -> (Cin*k*k, N*OH*OW)."""
    c, n, h, w = x.shape
    x = x.astype(MXU_DTYPE)                 # emit patches in bf16 (halves HBM)
    oh = (h + 2 * pad - k) // stride + 1
    ow = (w + 2 * pad - k) // stride + 1
    xp = jnp.pad(x, ((0, 0), (0, 0), (pad, pad), (pad, pad)))
    slabs = []
    for i in range(k):
        for j in range(k):
            slabs.append(xp[:, :, i:i + stride * (oh - 1) + 1:stride,
                             j:j + stride * (ow - 1) + 1:stride])
    a = jnp.stack(slabs, axis=1)            # (c, k*k, n, oh, ow)
    return a.reshape(c * k * k, n * oh * ow), oh, ow


def conv_bn_lrelu(x, w, bias2d, *, stride, pad):
    cout, _, k, _ = w.shape
    a, oh, ow = im2col_cnhw(x, k, stride, pad)
    y = fused_matmul_bn_lrelu(w.reshape(cout, -1), a, bias2d)
    return y.reshape(cout, x.shape[1], oh, ow)


def _subpixel_patches(x):
    """Phase patches for ConvTranspose2d(k=4, s=2, p=1): (4, 4*Cin, N*H*W)."""
    c, n, h, w = x.shape
    x = x.astype(MXU_DTYPE)
    xp = jnp.pad(x, ((0, 0), (0, 0), (1, 1), (1, 1)))
    phases = []
    for py in range(2):
        for px in range(2):
            taps = []
            for di in range(2):
                for dj in range(2):
                    taps.append(xp[:, :, py + di:py + di + h,
                                    px + dj:px + dj + w])
            a = jnp.stack(taps, axis=1)                    # (c, 4, n, h, w)
            phases.append(a.reshape(c * 4, n * h * w))
    return jnp.stack(phases, axis=0)


def _subpixel_weights(w):
    """Per-phase 2x2 sub-kernels of a (Cin,Cout,4,4) deconv weight -> (4,Cout,4Cin)."""
    cin, cout = w.shape[0], w.shape[1]
    phases = []
    for py in range(2):
        for px in range(2):
            taps = []
            for di in range(2):
                for dj in range(2):
                    taps.append(w[:, :, 3 - py - 2 * di, 3 - px - 2 * dj])
            sub = jnp.stack(taps, axis=-1)                 # (cin, cout, 4)
            phases.append(jnp.transpose(sub, (1, 0, 2)).reshape(cout, cin * 4))
    return jnp.stack(phases, axis=0)


def deconv4x2_bn_lrelu(x, weights, bias2ds):
    """ConvTranspose2d(k=4,s=2,p=1) + BN + Bias2d + LeakyReLU (sub-pixel)."""
    _, n, h, w = x.shape
    a = _subpixel_patches(x)
    wp = jnp.concatenate([_subpixel_weights(wi) for wi in weights], axis=1)
    b2 = jnp.concatenate(bias2ds)
    cout = wp.shape[1]
    y = fused_group_matmul_bn_lrelu(wp, a, b2)             # (4, cout, M)
    y = y.reshape(2, 2, cout, n, h, w)
    y = jnp.transpose(y, (2, 3, 4, 0, 5, 1))
    return y.reshape(cout, n, 2 * h, 2 * w)


def deconv4x2_heads_tanh(x, weights, bias2ds, w_head, b_head):
    """de3a/de3b deconv + BN + Bias2d + LeakyReLU + fused de4 1x1 tanh heads."""
    _, n, h, w = x.shape
    a = _subpixel_patches(x)
    wp = jnp.concatenate([_subpixel_weights(wi) for wi in weights], axis=1)
    b2 = jnp.concatenate(bias2ds)
    cout, k = wp.shape[1], wp.shape[2]
    m = n * h * w
    nh = w_head.shape[0]
    heads = pl.pallas_call(
        _make_de3_heads_kernel(4),
        out_shape=jax.ShapeDtypeStruct((4, nh, m), jnp.float32),
        grid=(1,),
        in_specs=[
            pl.BlockSpec((4, cout, k), lambda i: (0, 0, 0)),
            pl.BlockSpec((4, k, m), lambda i: (0, 0, 0)),
            pl.BlockSpec((cout, 1), lambda i: (0, 0)),
            pl.BlockSpec((nh, cout), lambda i: (0, 0)),
            pl.BlockSpec((nh, 1), lambda i: (0, 0)),
        ],
        out_specs=pl.BlockSpec((4, nh, m), lambda i: (0, 0, 0)),
        scratch_shapes=[pltpu.VMEM((4, cout, m), jnp.float32)],
        compiler_params=_compiler_params(("arbitrary",)),
    )(wp.astype(MXU_DTYPE), a.astype(MXU_DTYPE),
      b2.reshape(cout, 1).astype(jnp.float32),
      w_head.astype(MXU_DTYPE), b_head.reshape(nh, 1).astype(jnp.float32))
    # Phase interleave only on the tiny head output.
    heads = heads.reshape(2, 2, nh, n, h, w)
    heads = jnp.transpose(heads, (2, 3, 4, 0, 5, 1))
    return heads.reshape(nh, n, 2 * h, 2 * w)


def _block_diag2(wa, wb):
    ra, ca = wa.shape
    rb, cb = wb.shape
    top = jnp.concatenate([wa, jnp.zeros((ra, cb), wa.dtype)], axis=1)
    bot = jnp.concatenate([jnp.zeros((rb, ca), wb.dtype), wb], axis=1)
    return jnp.concatenate([top, bot], axis=0)


# ---------------------------------------------------------------------------
# Parameters (deterministic synthetic init) + forward
# ---------------------------------------------------------------------------
def init_params(key, ch=8, in_a=3, out_a=3, in_b=1, out_b=1):
    assert ch % 8 == 0, "ch must be a multiple of 8 for clean TPU tiling"
    keys = iter(jax.random.split(key, 64))

    def nrm(shape, std):
        return std * jax.random.normal(next(keys), shape, jnp.float32)

    def conv_block(cin, cout, k):
        # Conv biases before affine-less batch-stat BN are cancelled by the
        # mean subtraction; they are kept here for structural fidelity only.
        return dict(w=nrm((cout, cin, k, k), 0.05),
                    b=nrm((cout,), 0.002),
                    bias2d=nrm((cout,), 0.002))

    def convT_block(cin, cout, k):
        return dict(w=nrm((cin, cout, k, k), 0.05),
                    b=nrm((cout,), 0.002),
                    bias2d=nrm((cout,), 0.002))

    p = {}
    p["en0a"] = conv_block(in_a, ch, 5)
    p["en0b"] = conv_block(in_b, ch, 5)
    p["en1"] = conv_block(ch, ch * 2, 5)
    p["en2"] = conv_block(ch * 2, ch * 4, 8)
    p["en3"] = conv_block(ch * 4, ch * 8, 1)
    p["vae_mu_w"] = nrm((ch * 8, ch * 8, 1, 1), 0.002)
    p["vae_mu_b"] = nrm((ch * 8,), 0.002)
    p["vae_sg_w"] = nrm((ch * 8, ch * 8, 1, 1), 0.002)
    p["vae_sg_b"] = nrm((ch * 8,), 0.002)
    p["de0"] = convT_block(ch * 8, ch * 8, 4)
    p["de1"] = convT_block(ch * 8, ch * 4, 4)
    p["de2"] = convT_block(ch * 4, ch * 2, 4)
    p["de3a"] = convT_block(ch * 2, ch, 4)
    p["de3b"] = convT_block(ch * 2, ch, 4)
    p["de4a_w"] = nrm((ch, out_a, 1, 1), 0.05)
    p["de4a_b"] = nrm((out_a,), 0.002)
    p["de4b_w"] = nrm((ch, out_b, 1, 1), 0.05)
    p["de4b_b"] = nrm((out_b,), 0.002)
    return p


def covae_forward(params, x_a, x_b, noise_key):
    n = x_a.shape[0]

    # NCHW -> channel-major (C, N, H, W); only boundary transposes.
    xa = jnp.transpose(x_a, (1, 0, 2, 3))
    xb = jnp.transpose(x_b, (1, 0, 2, 3))

    # ---------------- encoder ----------------
    # en0a / en0b batched block-diagonally into one C_out-tiled fused kernel.
    pa, oh, ow = im2col_cnhw(xa, 5, 2, 2)
    pb, _, _ = im2col_cnhw(xb, 5, 2, 2)
    ch = params["en0a"]["w"].shape[0]
    w0 = _block_diag2(params["en0a"]["w"].reshape(ch, -1),
                      params["en0b"]["w"].reshape(ch, -1))
    b0 = jnp.concatenate([params["en0a"]["bias2d"], params["en0b"]["bias2d"]])
    h0 = fused_matmul_bn_lrelu(w0, jnp.concatenate([pa, pb], axis=0), b0)
    h0 = h0.reshape(2, ch, n, oh, ow)              # torch.cat((h0_a,h0_b), 0)
    en_h0 = jnp.transpose(h0, (1, 0, 2, 3, 4)).reshape(ch, 2 * n, oh, ow)

    en_h1 = conv_bn_lrelu(en_h0, params["en1"]["w"], params["en1"]["bias2d"],
                          stride=2, pad=2)

    # ------- fused lane-dense bottleneck: en2 -> en3 -> VAE -> de0 ----------
    n2 = 2 * n
    cz = params["en3"]["w"].shape[0]
    noise = jax.random.normal(noise_key, (n2, cz), jnp.float32)
    mu2d, sd2d, de0_3d = bottleneck_vae_de0(params, en_h1, noise)
    mu = mu2d.reshape(n2, cz, 1, 1)
    sd = sd2d.reshape(n2, cz, 1, 1)
    cde = params["de0"]["w"].shape[1]
    de_h0 = jnp.transpose(de0_3d.reshape(4, 4, n2, cde), (3, 2, 0, 1))

    # ---------------- decoder ----------------
    de_h1 = deconv4x2_bn_lrelu(de_h0, [params["de1"]["w"]],
                               [params["de1"]["bias2d"]])
    de_h2 = deconv4x2_bn_lrelu(de_h1, [params["de2"]["w"]],
                               [params["de2"]["bias2d"]])

    # de3a/de3b (batched along C_out) with the de4a/de4b tanh heads fused in.
    out_a = params["de4a_w"].shape[1]
    w4 = _block_diag2(params["de4a_w"][:, :, 0, 0].T,
                      params["de4b_w"][:, :, 0, 0].T)
    b4 = jnp.concatenate([params["de4a_b"], params["de4b_b"]])
    heads = deconv4x2_heads_tanh(
        de_h2, [params["de3a"]["w"], params["de3b"]["w"]],
        [params["de3a"]["bias2d"], params["de3b"]["bias2d"]], w4, b4)

    de_h4_a = jnp.transpose(heads[:out_a], (1, 0, 2, 3))
    de_h4_b = jnp.transpose(heads[out_a:], (1, 0, 2, 3))
    x_aa, x_ba = de_h4_a[:n], de_h4_a[n:]
    x_ab, x_bb = de_h4_b[:n], de_h4_b[n:]
    return x_aa, x_ba, x_ab, x_bb, [(mu, sd)]


if __name__ == "__main__":
    key = jax.random.PRNGKey(0)
    kp, ka, kb, kn = jax.random.split(key, 4)

    ch = 8        # small channel base (module default is 32); spatial is 32x32
    N = 2
    params = init_params(kp, ch=ch, in_a=3, out_a=3, in_b=1, out_b=1)
    x_a = jax.random.normal(ka, (N, 3, 32, 32), jnp.float32)
    x_b = jax.random.normal(kb, (N, 1, 32, 32), jnp.float32)

    fwd = jax.jit(covae_forward)
    out = fwd(params, x_a, x_b, kn)
    out = jax.block_until_ready(out)

    x_aa, x_ba, x_ab, x_bb, codes = out
    assert x_aa.shape == (N, 3, 32, 32)
    assert x_ba.shape == (N, 3, 32, 32)
    assert x_ab.shape == (N, 1, 32, 32)
    assert x_bb.shape == (N, 1, 32, 32)
    assert codes[0][0].shape == (2 * N, ch * 8, 1, 1)
    assert codes[0][1].shape == (2 * N, ch * 8, 1, 1)
    for t in (x_aa, x_ba, x_ab, x_bb, codes[0][0], codes[0][1]):
        assert bool(jnp.isfinite(t).all())
    print("KERNEL_OK")
</pallas_src>

<mosaic_0001>
module attributes {stable_mosaic.version = 11 : i64} {
  func.func @_fused_kernel(%arg0: i32, %arg1: memref<8x100xbf16, #tpu.memory_space<vmem>>, %arg2: memref<100x512xbf16, #tpu.memory_space<vmem>>, %arg3: memref<8x1xf32, #tpu.memory_space<vmem>>, %arg4: memref<8x512xf32, #tpu.memory_space<vmem>>) attributes {dimension_semantics = [#tpu.dimension_semantics<parallel>], iteration_bounds = array<i64: 2>, scalar_prefetch = 0 : i64, scratch_operands = 0 : i64, tpu.core_type = #tpu.core_type<tc>, window_params = [{transform_indices = @transform_0, window_bounds = array<i64: 8, 100>}, {pipeline_mode = #tpu.pipeline_mode<synchronous>, transform_indices = @transform_1, window_bounds = array<i64: 100, 512>}, {transform_indices = @transform_2, window_bounds = array<i64: 8, 1>}, {transform_indices = @transform_3, window_bounds = array<i64: 8, 512>}]} {
    %c0 = arith.constant 0 : index
    %c0_0 = arith.constant 0 : index
    %0 = vector.load %arg1[%c0, %c0_0] : memref<8x100xbf16, #tpu.memory_space<vmem>>, vector<8x100xbf16>
    %c0_1 = arith.constant 0 : index
    %c0_2 = arith.constant 0 : index
    %1 = vector.load %arg2[%c0_1, %c0_2] : memref<100x512xbf16, #tpu.memory_space<vmem>>, vector<100x512xbf16>
    %cst = arith.constant dense<0.000000e+00> : vector<8x512xf32>
    %2 = tpu.matmul %0, %1, %cst {dimension_numbers = #tpu.dot_dimension_numbers<[1], [0], [0], [1], [0, 0, 1, 1], [], []>} : vector<8x100xbf16>, vector<100x512xbf16>, vector<8x512xf32> -> vector<8x512xf32>
    %cst_3 = arith.constant dense<0.000000e+00> : vector<8xf32>
    %3 = vector.multi_reduction <add>, %2, %cst_3 [1] : vector<8x512xf32> to vector<8xf32>
    %4 = vector.shape_cast %3 : vector<8xf32> to vector<8x1xf32>
    %cst_4 = arith.constant 5.120000e+02 : f32
    %5 = vector.broadcast %cst_4 : f32 to vector<8x1xf32>
    %6 = arith.divf %4, %5 : vector<8x1xf32>
    %7 = arith.mulf %2, %2 : vector<8x512xf32>
    %cst_5 = arith.constant dense<0.000000e+00> : vector<8xf32>
    %8 = vector.multi_reduction <add>, %7, %cst_5 [1] : vector<8x512xf32> to vector<8xf32>
    %9 = vector.shape_cast %8 : vector<8xf32> to vector<8x1xf32>
    %cst_6 = arith.constant 5.120000e+02 : f32
    %10 = vector.broadcast %cst_6 : f32 to vector<8x1xf32>
    %11 = arith.divf %9, %10 : vector<8x1xf32>
    %12 = arith.mulf %6, %6 : vector<8x1xf32>
    %13 = arith.subf %11, %12 : vector<8x1xf32>
    %cst_7 = arith.constant 0.000000e+00 : f32
    %14 = vector.broadcast %cst_7 : f32 to vector<8x1xf32>
    %15 = arith.maximumf %13, %14 : vector<8x1xf32>
    %cst_8 = arith.constant 9.99999974E-6 : f32
    %16 = vector.broadcast %cst_8 : f32 to vector<8x1xf32>
    %17 = arith.addf %15, %16 : vector<8x1xf32>
    %18 = math.rsqrt %17 : vector<8x1xf32>
    %19 = vector.broadcast %18 : vector<8x1xf32> to vector<8x512xf32>
    %20 = arith.mulf %2, %19 : vector<8x512xf32>
    %c0_9 = arith.constant 0 : index
    %c0_10 = arith.constant 0 : index
    %21 = vector.load %arg3[%c0_9, %c0_10] : memref<8x1xf32, #tpu.memory_space<vmem>>, vector<8x1xf32>
    %22 = arith.mulf %6, %18 : vector<8x1xf32>
    %23 = arith.subf %21, %22 : vector<8x1xf32>
    %24 = vector.broadcast %23 : vector<8x1xf32> to vector<8x512xf32>
    %25 = arith.addf %20, %24 : vector<8x512xf32>
    %cst_11 = arith.constant 0.000000e+00 : f32
    %26 = vector.broadcast %cst_11 : f32 to vector<8x512xf32>
    %27 = arith.cmpf oge, %25, %26 : vector<8x512xf32>
    %cst_12 = arith.constant 0.00999999977 : f32
    %28 = vector.broadcast %cst_12 : f32 to vector<8x512xf32>
    %29 = arith.mulf %28, %25 : vector<8x512xf32>
    %30 = arith.select %27, %25, %29 : vector<8x512xi1>, vector<8x512xf32>
    %c0_13 = arith.constant 0 : index
    %c0_14 = arith.constant 0 : index
    %31 = vector.load %arg4[%c0_13, %c0_14] : memref<8x512xf32, #tpu.memory_space<vmem>>, vector<8x512xf32>
    tpu.vector_store %arg4[%c0_13, %c0_14], %30 {strides = array<i32>} : memref<8x512xf32, #tpu.memory_space<vmem>>, vector<8x512xf32>,
    return
  }
  func.func @transform_0(%arg0: i32) -> (i32, i32) {
    %c0_i32 = arith.constant 0 : i32
    %c0_i32_0 = arith.constant 0 : i32
    return %arg0, %c0_i32 : i32, i32
  }
  func.func @transform_1(%arg0: i32) -> (i32, i32) {
    %c0_i32 = arith.constant 0 : i32
    %c0_i32_0 = arith.constant 0 : i32
    %c0_i32_1 = arith.constant 0 : i32
    return %c0_i32, %c0_i32_0 : i32, i32
  }
  func.func @transform_2(%arg0: i32) -> (i32, i32) {
    %c0_i32 = arith.constant 0 : i32
    %c0_i32_0 = arith.constant 0 : i32
    return %arg0, %c0_i32 : i32, i32
  }
  func.func @transform_3(%arg0: i32) -> (i32, i32) {
    %c0_i32 = arith.constant 0 : i32
    %c0_i32_0 = arith.constant 0 : i32
    return %arg0, %c0_i32 : i32, i32
  }
}

module attributes {stable_mosaic.version = 11 : i64} {
  func.func @_fused_kernel(%arg0: i32, %arg1: memref<8x200xbf16, #tpu.memory_space<vmem>>, %arg2: memref<200x256xbf16, #tpu.memory_space<vmem>>, %arg3: memref<8x1xf32, #tpu.memory_space<vmem>>, %arg4: memref<8x256xf32, #tpu.memory_space<vmem>>) attributes {dimension_semantics = [#tpu.dimension_semantics<parallel>], iteration_bounds = array<i64: 2>, scalar_prefetch = 0 : i64, scratch_operands = 0 : i64, tpu.core_type = #tpu.core_type<tc>, window_params = [{transform_indices = @transform_0, window_bounds = array<i64: 8, 200>}, {pipeline_mode = #tpu.pipeline_mode<synchronous>, transform_indices = @transform_1, window_bounds = array<i64: 200, 256>}, {transform_indices = @transform_2, window_bounds = array<i64: 8, 1>}, {transform_indices = @transform_3, window_bounds = array<i64: 8, 256>}]} {
    %c0 = arith.constant 0 : index
    %c0_0 = arith.constant 0 : index
    %0 = vector.load %arg1[%c0, %c0_0] : memref<8x200xbf16, #tpu.memory_space<vmem>>, vector<8x200xbf16>
    %c0_1 = arith.constant 0 : index
    %c0_2 = arith.constant 0 : index
    %1 = vector.load %arg2[%c0_1, %c0_2] : memref<200x256xbf16, #tpu.memory_space<vmem>>, vector<200x256xbf16>
    %cst = arith.constant dense<0.000000e+00> : vector<8x256xf32>
    %2 = tpu.matmul %0, %1, %cst {dimension_numbers = #tpu.dot_dimension_numbers<[1], [0], [0], [1], [0, 0, 1, 1], [], []>} : vector<8x200xbf16>, vector<200x256xbf16>, vector<8x256xf32> -> vector<8x256xf32>
    %cst_3 = arith.constant dense<0.000000e+00> : vector<8xf32>
    %3 = vector.multi_reduction <add>, %2, %cst_3 [1] : vector<8x256xf32> to vector<8xf32>
    %4 = vector.shape_cast %3 : vector<8xf32> to vector<8x1xf32>
    %cst_4 = arith.constant 2.560000e+02 : f32
    %5 = vector.broadcast %cst_4 : f32 to vector<8x1xf32>
    %6 = arith.divf %4, %5 : vector<8x1xf32>
    %7 = arith.mulf %2, %2 : vector<8x256xf32>
    %cst_5 = arith.constant dense<0.000000e+00> : vector<8xf32>
    %8 = vector.multi_reduction <add>, %7, %cst_5 [1] : vector<8x256xf32> to vector<8xf32>
    %9 = vector.shape_cast %8 : vector<8xf32> to vector<8x1xf32>
    %cst_6 = arith.constant 2.560000e+02 : f32
    %10 = vector.broadcast %cst_6 : f32 to vector<8x1xf32>
    %11 = arith.divf %9, %10 : vector<8x1xf32>
    %12 = arith.mulf %6, %6 : vector<8x1xf32>
    %13 = arith.subf %11, %12 : vector<8x1xf32>
    %cst_7 = arith.constant 0.000000e+00 : f32
    %14 = vector.broadcast %cst_7 : f32 to vector<8x1xf32>
    %15 = arith.maximumf %13, %14 : vector<8x1xf32>
    %cst_8 = arith.constant 9.99999974E-6 : f32
    %16 = vector.broadcast %cst_8 : f32 to vector<8x1xf32>
    %17 = arith.addf %15, %16 : vector<8x1xf32>
    %18 = math.rsqrt %17 : vector<8x1xf32>
    %19 = vector.broadcast %18 : vector<8x1xf32> to vector<8x256xf32>
    %20 = arith.mulf %2, %19 : vector<8x256xf32>
    %c0_9 = arith.constant 0 : index
    %c0_10 = arith.constant 0 : index
    %21 = vector.load %arg3[%c0_9, %c0_10] : memref<8x1xf32, #tpu.memory_space<vmem>>, vector<8x1xf32>
    %22 = arith.mulf %6, %18 : vector<8x1xf32>
    %23 = arith.subf %21, %22 : vector<8x1xf32>
    %24 = vector.broadcast %23 : vector<8x1xf32> to vector<8x256xf32>
    %25 = arith.addf %20, %24 : vector<8x256xf32>
    %cst_11 = arith.constant 0.000000e+00 : f32
    %26 = vector.broadcast %cst_11 : f32 to vector<8x256xf32>
    %27 = arith.cmpf oge, %25, %26 : vector<8x256xf32>
    %cst_12 = arith.constant 0.00999999977 : f32
    %28 = vector.broadcast %cst_12 : f32 to vector<8x256xf32>
    %29 = arith.mulf %28, %25 : vector<8x256xf32>
    %30 = arith.select %27, %25, %29 : vector<8x256xi1>, vector<8x256xf32>
    %c0_13 = arith.constant 0 : index
    %c0_14 = arith.constant 0 : index
    %31 = vector.load %arg4[%c0_13, %c0_14] : memref<8x256xf32, #tpu.memory_space<vmem>>, vector<8x256xf32>
    tpu.vector_store %arg4[%c0_13, %c0_14], %30 {strides = array<i32>} : memref<8x256xf32, #tpu.memory_space<vmem>>, vector<8x256xf32>,
    return
  }
  func.func @transform_0(%arg0: i32) -> (i32, i32) {
    %c0_i32 = arith.constant 0 : i32
    %c0_i32_0 = arith.constant 0 : i32
    return %arg0, %c0_i32 : i32, i32
  }
  func.func @transform_1(%arg0: i32) -> (i32, i32) {
    %c0_i32 = arith.constant 0 : i32
    %c0_i32_0 = arith.constant 0 : i32
    %c0_i32_1 = arith.constant 0 : i32
    return %c0_i32, %c0_i32_0 : i32, i32
  }
  func.func @transform_2(%arg0: i32) -> (i32, i32) {
    %c0_i32 = arith.constant 0 : i32
    %c0_i32_0 = arith.constant 0 : i32
    return %arg0, %c0_i32 : i32, i32
  }
  func.func @transform_3(%arg0: i32) -> (i32, i32) {
    %c0_i32 = arith.constant 0 : i32
    %c0_i32_0 = arith.constant 0 : i32
    return %arg0, %c0_i32 : i32, i32
  }
}

module attributes {stable_mosaic.version = 11 : i64} {
  func.func @_bottleneck_kernel(%arg0: i32, %arg1: memref<4x1024xbf16, #tpu.memory_space<vmem>>, %arg2: memref<1024x32xbf16, #tpu.memory_space<vmem>>, %arg3: memref<1x32xf32, #tpu.memory_space<vmem>>, %arg4: memref<32x64xbf16, #tpu.memory_space<vmem>>, %arg5: memref<1x64xf32, #tpu.memory_space<vmem>>, %arg6: memref<64x64xbf16, #tpu.memory_space<vmem>>, %arg7: memref<1x64xf32, #tpu.memory_space<vmem>>, %arg8: memref<64x64xbf16, #tpu.memory_space<vmem>>, %arg9: memref<1x64xf32, #tpu.memory_space<vmem>>, %arg10: memref<4x64xf32, #tpu.memory_space<vmem>>, %arg11: memref<16x64x64xbf16, #tpu.memory_space<vmem>>, %arg12: memref<1x64xf32, #tpu.memory_space<vmem>>, %arg13: memref<4x64xf32, #tpu.memory_space<vmem>>, %arg14: memref<4x64xf32, #tpu.memory_space<vmem>>, %arg15: memref<16x4x64xf32, #tpu.memory_space<vmem>>) attributes {dimension_semantics = [#tpu.dimension_semantics<arbitrary>], iteration_bounds = array<i64: 1>, scalar_prefetch = 0 : i64, scratch_operands = 0 : i64, tpu.core_type = #tpu.core_type<tc>, window_params = [{pipeline_mode = #tpu.pipeline_mode<synchronous>, transform_indices = @transform_0, window_bounds = array<i64: 4, 1024>}, {pipeline_mode = #tpu.pipeline_mode<synchronous>, transform_indices = @transform_1, window_bounds = array<i64: 1024, 32>}, {pipeline_mode = #tpu.pipeline_mode<synchronous>, transform_indices = @transform_2, window_bounds = array<i64: 1, 32>}, {pipeline_mode = #tpu.pipeline_mode<synchronous>, transform_indices = @transform_3, window_bounds = array<i64: 32, 64>}, {pipeline_mode = #tpu.pipeline_mode<synchronous>, transform_indices = @transform_4, window_bounds = array<i64: 1, 64>}, {pipeline_mode = #tpu.pipeline_mode<synchronous>, transform_indices = @transform_5, window_bounds = array<i64: 64, 64>}, {pipeline_mode = #tpu.pipeline_mode<synchronous>, transform_indices = @transform_6, window_bounds = array<i64: 1, 64>}, {pipeline_mode = #tpu.pipeline_mode<synchronous>, transform_indices = @transform_7, window_bounds = array<i64: 64, 64>}, {pipeline_mode = #tpu.pipeline_mode<synchronous>, transform_indices = @transform_8, window_bounds = array<i64: 1, 64>}, {pipeline_mode = #tpu.pipeline_mode<synchronous>, transform_indices = @transform_9, window_bounds = array<i64: 4, 64>}, {pipeline_mode = #tpu.pipeline_mode<synchronous>, transform_indices = @transform_10, window_bounds = array<i64: 16, 64, 64>}, {pipeline_mode = #tpu.pipeline_mode<synchronous>, transform_indices = @transform_11, window_bounds = array<i64: 1, 64>}, {pipeline_mode = #tpu.pipeline_mode<synchronous>, transform_indices = @transform_12, window_bounds = array<i64: 4, 64>}, {pipeline_mode = #tpu.pipeline_mode<synchronous>, transform_indices = @transform_13, window_bounds = array<i64: 4, 64>}, {pipeline_mode = #tpu.pipeline_mode<synchronous>, transform_indices = @transform_14, window_bounds = array<i64: 16, 4, 64>}]} {
    %c0 = arith.constant 0 : index
    %c0_0 = arith.constant 0 : index
    %0 = vector.load %arg1[%c0, %c0_0] : memref<4x1024xbf16, #tpu.memory_space<vmem>>, vector<4x1024xbf16>
    %c0_1 = arith.constant 0 : index
    %c0_2 = arith.constant 0 : index
    %1 = vector.load %arg2[%c0_1, %c0_2] : memref<1024x32xbf16, #tpu.memory_space<vmem>>, vector<1024x32xbf16>
    %cst = arith.constant dense<0.000000e+00> : vector<4x32xf32>
    %2 = tpu.matmul %0, %1, %cst {dimension_numbers = #tpu.dot_dimension_numbers<[1], [0], [0], [1], [0, 0, 1, 1], [], []>} : vector<4x1024xbf16>, vector<1024x32xbf16>, vector<4x32xf32> -> vector<4x32xf32>
    %c0_3 = arith.constant 0 : index
    %c0_4 = arith.constant 0 : index
    %3 = vector.load %arg3[%c0_3, %c0_4] : memref<1x32xf32, #tpu.memory_space<vmem>>, vector<1x32xf32>
    %cst_5 = arith.constant dense<0.000000e+00> : vector<32xf32>
    %4 = vector.multi_reduction <add>, %2, %cst_5 [0] : vector<4x32xf32> to vector<32xf32>
    %5 = vector.shape_cast %4 : vector<32xf32> to vector<1x32xf32>
    %cst_6 = arith.constant 4.000000e+00 : f32
    %6 = vector.broadcast %cst_6 : f32 to vector<1x32xf32>
    %7 = arith.divf %5, %6 : vector<1x32xf32>
    %8 = arith.mulf %2, %2 : vector<4x32xf32>
    %cst_7 = arith.constant dense<0.000000e+00> : vector<32xf32>
    %9 = vector.multi_reduction <add>, %8, %cst_7 [0] : vector<4x32xf32> to vector<32xf32>
    %10 = vector.shape_cast %9 : vector<32xf32> to vector<1x32xf32>
    %cst_8 = arith.constant 4.000000e+00 : f32
    %11 = vector.broadcast %cst_8 : f32 to vector<1x32xf32>
    %12 = arith.divf %10, %11 : vector<1x32xf32>
    %13 = arith.mulf %7, %7 : vector<1x32xf32>
    %14 = arith.subf %12, %13 : vector<1x32xf32>
    %cst_9 = arith.constant 0.000000e+00 : f32
    %15 = vector.broadcast %cst_9 : f32 to vector<1x32xf32>
    %16 = arith.maximumf %14, %15 : vector<1x32xf32>
    %cst_10 = arith.constant 9.99999974E-6 : f32
    %17 = vector.broadcast %cst_10 : f32 to vector<1x32xf32>
    %18 = arith.addf %16, %17 : vector<1x32xf32>
    %19 = math.rsqrt %18 : vector<1x32xf32>
    %20 = vector.broadcast %19 : vector<1x32xf32> to vector<4x32xf32>
    %21 = arith.mulf %2, %20 : vector<4x32xf32>
    %22 = arith.mulf %7, %19 : vector<1x32xf32>
    %23 = arith.subf %3, %22 : vector<1x32xf32>
    %24 = vector.broadcast %23 : vector<1x32xf32> to vector<4x32xf32>
    %25 = arith.addf %21, %24 : vector<4x32xf32>
    %cst_11 = arith.constant 0.000000e+00 : f32
    %26 = vector.broadcast %cst_11 : f32 to vector<4x32xf32>
    %27 = arith.cmpf oge, %25, %26 : vector<4x32xf32>
    %cst_12 = arith.constant 0.00999999977 : f32
    %28 = vector.broadcast %cst_12 : f32 to vector<4x32xf32>
    %29 = arith.mulf %28, %25 : vector<4x32xf32>
    %30 = arith.select %27, %25, %29 : vector<4x32xi1>, vector<4x32xf32>
    %31 = arith.truncf %30 : vector<4x32xf32> to vector<4x32xbf16>
    %c0_13 = arith.constant 0 : index
    %c0_14 = arith.constant 0 : index
    %32 = vector.load %arg4[%c0_13, %c0_14] : memref<32x64xbf16, #tpu.memory_space<vmem>>, vector<32x64xbf16>
    %cst_15 = arith.constant dense<0.000000e+00> : vector<4x64xf32>
    %33 = tpu.matmul %31, %32, %cst_15 {dimension_numbers = #tpu.dot_dimension_numbers<[1], [0], [0], [1], [0, 0, 1, 1], [], []>} : vector<4x32xbf16>, vector<32x64xbf16>, vector<4x64xf32> -> vector<4x64xf32>
    %c0_16 = arith.constant 0 : index
    %c0_17 = arith.constant 0 : index
    %34 = vector.load %arg5[%c0_16, %c0_17] : memref<1x64xf32, #tpu.memory_space<vmem>>, vector<1x64xf32>
    %cst_18 = arith.constant dense<0.000000e+00> : vector<64xf32>
    %35 = vector.multi_reduction <add>, %33, %cst_18 [0] : vector<4x64xf32> to vector<64xf32>
    %36 = vector.shape_cast %35 : vector<64xf32> to vector<1x64xf32>
    %cst_19 = arith.constant 4.000000e+00 : f32
    %37 = vector.broadcast %cst_19 : f32 to vector<1x64xf32>
    %38 = arith.divf %36, %37 : vector<1x64xf32>
    %39 = arith.mulf %33, %33 : vector<4x64xf32>
    %cst_20 = arith.constant dense<0.000000e+00> : vector<64xf32>
    %40 = vector.multi_reduction <add>, %39, %cst_20 [0] : vector<4x64xf32> to vector<64xf32>
    %41 = vector.shape_cast %40 : vector<64xf32> to vector<1x64xf32>
    %cst_21 = arith.constant 4.000000e+00 : f32
    %42 = vector.broadcast %cst_21 : f32 to vector<1x64xf32>
    %43 = arith.divf %41, %42 : vector<1x64xf32>
    %44 = arith.mulf %38, %38 : vector<1x64xf32>
    %45 = arith.subf %43, %44 : vector<1x64xf32>
    %cst_22 = arith.constant 0.000000e+00 : f32
    %46 = vector.broadcast %cst_22 : f32 to vector<1x64xf32>
    %47 = arith.maximumf %45, %46 : vector<1x64xf32>
    %cst_23 = arith.constant 9.99999974E-6 : f32
    %48 = vector.broadcast %cst_23 : f32 to vector<1x64xf32>
    %49 = arith.addf %47, %48 : vector<1x64xf32>
    %50 = math.rsqrt %49 : vector<1x64xf32>
    %51 = vector.broadcast %50 : vector<1x64xf32> to vector<4x64xf32>
    %52 = arith.mulf %33, %51 : vector<4x64xf32>
    %53 = arith.mulf %38, %50 : vector<1x64xf32>
    %54 = arith.subf %34, %53 : vector<1x64xf32>
    %55 = vector.broadcast %54 : vector<1x64xf32> to vector<4x64xf32>
    %56 = arith.addf %52, %55 : vector<4x64xf32>
    %cst_24 = arith.constant 0.000000e+00 : f32
    %57 = vector.broadcast %cst_24 : f32 to vector<4x64xf32>
    %58 = arith.cmpf oge, %56, %57 : vector<4x64xf32>
    %cst_25 = arith.constant 0.00999999977 : f32
    %59 = vector.broadcast %cst_25 : f32 to vector<4x64xf32>
    %60 = arith.mulf %59, %56 : vector<4x64xf32>
    %61 = arith.select %58, %56, %60 : vector<4x64xi1>, vector<4x64xf32>
    %62 = arith.truncf %61 : vector<4x64xf32> to vector<4x64xbf16>
    %c0_26 = arith.constant 0 : index
    %c0_27 = arith.constant 0 : index
    %63 = vector.load %arg6[%c0_26, %c0_27] : memref<64x64xbf16, #tpu.memory_space<vmem>>, vector<64x64xbf16>
    %cst_28 = arith.constant dense<0.000000e+00> : vector<4x64xf32>
    %64 = tpu.matmul %62, %63, %cst_28 {dimension_numbers = #tpu.dot_dimension_numbers<[1], [0], [0], [1], [0, 0, 1, 1], [], []>} : vector<4x64xbf16>, vector<64x64xbf16>, vector<4x64xf32> -> vector<4x64xf32>
    %c0_29 = arith.constant 0 : index
    %c0_30 = arith.constant 0 : index
    %65 = vector.load %arg7[%c0_29, %c0_30] : memref<1x64xf32, #tpu.memory_space<vmem>>, vector<1x64xf32>
    %66 = vector.broadcast %65 : vector<1x64xf32> to vector<4x64xf32>
    %67 = arith.addf %64, %66 : vector<4x64xf32>
    %c0_31 = arith.constant 0 : index
    %c0_32 = arith.constant 0 : index
    %68 = vector.load %arg8[%c0_31, %c0_32] : memref<64x64xbf16, #tpu.memory_space<vmem>>, vector<64x64xbf16>
    %cst_33 = arith.constant dense<0.000000e+00> : vector<4x64xf32>
    %69 = tpu.matmul %62, %68, %cst_33 {dimension_numbers = #tpu.dot_dimension_numbers<[1], [0], [0], [1], [0, 0, 1, 1], [], []>} : vector<4x64xbf16>, vector<64x64xbf16>, vector<4x64xf32> -> vector<4x64xf32>
    %c0_34 = arith.constant 0 : index
    %c0_35 = arith.constant 0 : index
    %70 = vector.load %arg9[%c0_34, %c0_35] : memref<1x64xf32, #tpu.memory_space<vmem>>, vector<1x64xf32>
    %71 = vector.broadcast %70 : vector<1x64xf32> to vector<4x64xf32>
    %72 = arith.addf %69, %71 : vector<4x64xf32>
    %cst_36 = arith.constant 2.000000e+01 : f32
    %73 = vector.broadcast %cst_36 : f32 to vector<4x64xf32>
    %74 = arith.cmpf ogt, %72, %73 : vector<4x64xf32>
    %cst_37 = arith.constant 2.000000e+01 : f32
    %75 = vector.broadcast %cst_37 : f32 to vector<4x64xf32>
    %76 = arith.minimumf %72, %75 : vector<4x64xf32>
    %77 = math.exp %76 : vector<4x64xf32>
    %78 = math.log1p %77 : vector<4x64xf32>
    %79 = arith.select %74, %72, %78 : vector<4x64xi1>, vector<4x64xf32>
    %c0_38 = arith.constant 0 : index
    %c0_39 = arith.constant 0 : index
    %80 = vector.load %arg13[%c0_38, %c0_39] : memref<4x64xf32, #tpu.memory_space<vmem>>, vector<4x64xf32>
    tpu.vector_store %arg13[%c0_38, %c0_39], %67 {strides = array<i32>} : memref<4x64xf32, #tpu.memory_space<vmem>>, vector<4x64xf32>,
    %c0_40 = arith.constant 0 : index
    %c0_41 = arith.constant 0 : index
    %81 = vector.load %arg14[%c0_40, %c0_41] : memref<4x64xf32, #tpu.memory_space<vmem>>, vector<4x64xf32>
    tpu.vector_store %arg14[%c0_40, %c0_41], %79 {strides = array<i32>} : memref<4x64xf32, #tpu.memory_space<vmem>>, vector<4x64xf32>,
    %c0_42 = arith.constant 0 : index
    %c0_43 = arith.constant 0 : index
    %82 = vector.load %arg10[%c0_42, %c0_43] : memref<4x64xf32, #tpu.memory_space<vmem>>, vector<4x64xf32>
    %83 = arith.mulf %79, %82 : vector<4x64xf32>
    %84 = arith.addf %67, %83 : vector<4x64xf32>
    %85 = arith.truncf %84 : vector<4x64xf32> to vector<4x64xbf16>
    %c0_44 = arith.constant 0 : index
    %c0_45 = arith.constant 0 : index
    %c0_46 = arith.constant 0 : index
    %86 = vector.load %arg11[%c0_44, %c0_45, %c0_46] : memref<16x64x64xbf16, #tpu.memory_space<vmem>>, vector<1x64x64xbf16>
    %87 = vector.shape_cast %86 : vector<1x64x64xbf16> to vector<64x64xbf16>
    %cst_47 = arith.constant dense<0.000000e+00> : vector<4x64xf32>
    %88 = tpu.matmul %85, %87, %cst_47 {dimension_numbers = #tpu.dot_dimension_numbers<[1], [0], [0], [1], [0, 0, 1, 1], [], []>} : vector<4x64xbf16>, vector<64x64xbf16>, vector<4x64xf32> -> vector<4x64xf32>
    %c0_48 = arith.constant 0 : index
    %c0_49 = arith.constant 0 : index
    %c0_50 = arith.constant 0 : index
    %89 = vector.load %arg15[%c0_48, %c0_49, %c0_50] : memref<16x4x64xf32, #tpu.memory_space<vmem>>, vector<1x4x64xf32>
    %90 = vector.shape_cast %89 : vector<1x4x64xf32> to vector<4x64xf32>
    %91 = vector.shape_cast %88 : vector<4x64xf32> to vector<1x4x64xf32>
    tpu.vector_store %arg15[%c0_48, %c0_49, %c0_50], %91 {strides = array<i32>} : memref<16x4x64xf32, #tpu.memory_space<vmem>>, vector<1x4x64xf32>,
    %c1 = arith.constant 1 : index
    %c0_51 = arith.constant 0 : index
    %c0_52 = arith.constant 0 : index
    %92 = vector.load %arg11[%c1, %c0_51, %c0_52] : memref<16x64x64xbf16, #tpu.memory_space<vmem>>, vector<1x64x64xbf16>
    %93 = vector.shape_cast %92 : vector<1x64x64xbf16> to vector<64x64xbf16>
    %cst_53 = arith.constant dense<0.000000e+00> : vector<4x64xf32>
    %94 = tpu.matmul %85, %93, %cst_53 {dimension_numbers = #tpu.dot_dimension_numbers<[1], [0], [0], [1], [0, 0, 1, 1], [], []>} : vector<4x64xbf16>, vector<64x64xbf16>, vector<4x64xf32> -> vector<4x64xf32>
    %c1_54 = arith.constant 1 : index
    %c0_55 = arith.constant 0 : index
    %c0_56 = arith.constant 0 : index
    %95 = vector.load %arg15[%c1_54, %c0_55, %c0_56] : memref<16x4x64xf32, #tpu.memory_space<vmem>>, vector<1x4x64xf32>
    %96 = vector.shape_cast %95 : vector<1x4x64xf32> to vector<4x64xf32>
    %97 = vector.shape_cast %94 : vector<4x64xf32> to vector<1x4x64xf32>
    tpu.vector_store %arg15[%c1_54, %c0_55, %c0_56], %97 {strides = array<i32>} : memref<16x4x64xf32, #tpu.memory_space<vmem>>, vector<1x4x64xf32>,
    %c2 = arith.constant 2 : index
    %c0_57 = arith.constant 0 : index
    %c0_58 = arith.constant 0 : index
    %98 = vector.load %arg11[%c2, %c0_57, %c0_58] : memref<16x64x64xbf16, #tpu.memory_space<vmem>>, vector<1x64x64xbf16>
    %99 = vector.shape_cast %98 : vector<1x64x64xbf16> to vector<64x64xbf16>
    %cst_59 = arith.constant dense<0.000000e+00> : vector<4x64xf32>
    %100 = tpu.matmul %85, %99, %cst_59 {dimension_numbers = #tpu.dot_dimension_numbers<[1], [0], [0], [1], [0, 0, 1, 1], [], []>} : vector<4x64xbf16>, vector<64x64xbf16>, vector<4x64xf32> -> vector<4x64xf32>
    %c2_60 = arith.constant 2 : index
    %c0_61 = arith.constant 0 : index
    %c0_62 = arith.constant 0 : index
    %101 = vector.load %arg15[%c2_60, %c0_61, %c0_62] : memref<16x4x64xf32, #tpu.memory_space<vmem>>, vector<1x4x64xf32>
    %102 = vector.shape_cast %101 : vector<1x4x64xf32> to vector<4x64xf32>
    %103 = vector.shape_cast %100 : vector<4x64xf32> to vector<1x4x64xf32>
    tpu.vector_store %arg15[%c2_60, %c0_61, %c0_62], %103 {strides = array<i32>} : memref<16x4x64xf32, #tpu.memory_space<vmem>>, vector<1x4x64xf32>,
    %c3 = arith.constant 3 : index
    %c0_63 = arith.constant 0 : index
    %c0_64 = arith.constant 0 : index
    %104 = vector.load %arg11[%c3, %c0_63, %c0_64] : memref<16x64x64xbf16, #tpu.memory_space<vmem>>, vector<1x64x64xbf16>
    %105 = vector.shape_cast %104 : vector<1x64x64xbf16> to vector<64x64xbf16>
    %cst_65 = arith.constant dense<0.000000e+00> : vector<4x64xf32>
    %106 = tpu.matmul %85, %105, %cst_65 {dimension_numbers = #tpu.dot_dimension_numbers<[1], [0], [0], [1], [0, 0, 1, 1], [], []>} : vector<4x64xbf16>, vector<64x64xbf16>, vector<4x64xf32> -> vector<4x64xf32>
    %c3_66 = arith.constant 3 : index
    %c0_67 = arith.constant 0 : index
    %c0_68 = arith.constant 0 : index
    %107 = vector.load %arg15[%c3_66, %c0_67, %c0_68] : memref<16x4x64xf32, #tpu.memory_space<vmem>>, vector<1x4x64xf32>
    %108 = vector.shape_cast %107 : vector<1x4x64xf32> to vector<4x64xf32>
    %109 = vector.shape_cast %106 : vector<4x64xf32> to vector<1x4x64xf32>
    tpu.vector_store %arg15[%c3_66, %c0_67, %c0_68], %109 {strides = array<i32>} : memref<16x4x64xf32, #tpu.memory_space<vmem>>, vector<1x4x64xf32>,
    %c4 = arith.constant 4 : index
    %c0_69 = arith.constant 0 : index
    %c0_70 = arith.constant 0 : index
    %110 = vector.load %arg11[%c4, %c0_69, %c0_70] : memref<16x64x64xbf16, #tpu.memory_space<vmem>>, vector<1x64x64xbf16>
    %111 = vector.shape_cast %110 : vector<1x64x64xbf16> to vector<64x64xbf16>
    %cst_71 = arith.constant dense<0.000000e+00> : vector<4x64xf32>
    %112 = tpu.matmul %85, %111, %cst_71 {dimension_numbers = #tpu.dot_dimension_numbers<[1], [0], [0], [1], [0, 0, 1, 1], [], []>} : vector<4x64xbf16>, vector<64x64xbf16>, vector<4x64xf32> -> vector<4x64xf32>
    %c4_72 = arith.constant 4 : index
    %c0_73 = arith.constant 0 : index
    %c0_74 = arith.constant 0 : index
    %113 = vector.load %arg15[%c4_72, %c0_73, %c0_74] : memref<16x4x64xf32, #tpu.memory_space<vmem>>, vector<1x4x64xf32>
    %114 = vector.shape_cast %113 : vector<1x4x64xf32> to vector<4x64xf32>
    %115 = vector.shape_cast %112 : vector<4x64xf32> to vector<1x4x64xf32>
    tpu.vector_store %arg15[%c4_72, %c0_73, %c0_74], %115 {strides = array<i32>} : memref<16x4x64xf32, #tpu.memory_space<vmem>>, vector<1x4x64xf32>,
    %c5 = arith.constant 5 : index
    %c0_75 = arith.constant 0 : index
    %c0_76 = arith.constant 0 : index
    %116 = vector.load %arg11[%c5, %c0_75, %c0_76] : memref<16x64x64xbf16, #tpu.memory_space<vmem>>, vector<1x64x64xbf16>
    %117 = vector.shape_cast %116 : vector<1x64x64xbf16> to vector<64x64xbf16>
    %cst_77 = arith.constant dense<0.000000e+00> : vector<4x64xf32>
    %118 = tpu.matmul %85, %117, %cst_77 {dimension_numbers = #tpu.dot_dimension_numbers<[1], [0], [0], [1], [0, 0, 1, 1], [], []>} : vector<4x64xbf16>, vector<64x64xbf16>, vector<4x64xf32> -> vector<4x64xf32>
    %c5_78 = arith.constant 5 : index
    %c0_79 = arith.constant 0 : index
    %c0_80 = arith.constant 0 : index
    %119 = vector.load %arg15[%c5_78, %c0_79, %c0_80] : memref<16x4x64xf32, #tpu.memory_space<vmem>>, vector<1x4x64xf32>
    %120 = vector.shape_cast %119 : vector<1x4x64xf32> to vector<4x64xf32>
    %121 = vector.shape_cast %118 : vector<4x64xf32> to vector<1x4x64xf32>
    tpu.vector_store %arg15[%c5_78, %c0_79, %c0_80], %121 {strides = array<i32>} : memref<16x4x64xf32, #tpu.memory_space<vmem>>, vector<1x4x64xf32>,
    %c6 = arith.constant 6 : index
    %c0_81 = arith.constant 0 : index
    %c0_82 = arith.constant 0 : index
    %122 = vector.load %arg11[%c6, %c0_81, %c0_82] : memref<16x64x64xbf16, #tpu.memory_space<vmem>>, vector<1x64x64xbf16>
    %123 = vector.shape_cast %122 : vector<1x64x64xbf16> to vector<64x64xbf16>
    %cst_83 = arith.constant dense<0.000000e+00> : vector<4x64xf32>
    %124 = tpu.matmul %85, %123, %cst_83 {dimension_numbers = #tpu.dot_dimension_numbers<[1], [0], [0], [1], [0, 0, 1, 1], [], []>} : vector<4x64xbf16>, vector<64x64xbf16>, vector<4x64xf32> -> vector<4x64xf32>
    %c6_84 = arith.constant 6 : index
    %c0_85 = arith.constant 0 : index
    %c0_86 = arith.constant 0 : index
    %125 = vector.load %arg15[%c6_84, %c0_85, %c0_86] : memref<16x4x64xf32, #tpu.memory_space<vmem>>, vector<1x4x64xf32>
    %126 = vector.shape_cast %125 : vector<1x4x64xf32> to vector<4x64xf32>
    %127 = vector.shape_cast %124 : vector<4x64xf32> to vector<1x4x64xf32>
    tpu.vector_store %arg15[%c6_84, %c0_85, %c0_86], %127 {strides = array<i32>} : memref<16x4x64xf32, #tpu.memory_space<vmem>>, vector<1x4x64xf32>,
    %c7 = arith.constant 7 : index
    %c0_87 = arith.constant 0 : index
    %c0_88 = arith.constant 0 : index
    %128 = vector.load %arg11[%c7, %c0_87, %c0_88] : memref<16x64x64xbf16, #tpu.memory_space<vmem>>, vector<1x64x64xbf16>
    %129 = vector.shape_cast %128 : vector<1x64x64xbf16> to vector<64x64xbf16>
    %cst_89 = arith.constant dense<0.000000e+00> : vector<4x64xf32>
    %130 = tpu.matmul %85, %129, %cst_89 {dimension_numbers = #tpu.dot_dimension_numbers<[1], [0], [0], [1], [0, 0, 1, 1], [], []>} : vector<4x64xbf16>, vector<64x64xbf16>, vector<4x64xf32> -> vector<4x64xf32>
    %c7_90 = arith.constant 7 : index
    %c0_91 = arith.constant 0 : index
    %c0_92 = arith.constant 0 : index
    %131 = vector.load %arg15[%c7_90, %c0_91, %c0_92] : memref<16x4x64xf32, #tpu.memory_space<vmem>>, vector<1x4x64xf32>
    %132 = vector.shape_cast %131 : vector<1x4x64xf32> to vector<4x64xf32>
    %133 = vector.shape_cast %130 : vector<4x64xf32> to vector<1x4x64xf32>
    tpu.vector_store %arg15[%c7_90, %c0_91, %c0_92], %133 {strides = array<i32>} : memref<16x4x64xf32, #tpu.memory_space<vmem>>, vector<1x4x64xf32>,
    %c8 = arith.constant 8 : index
    %c0_93 = arith.constant 0 : index
    %c0_94 = arith.constant 0 : index
    %134 = vector.load %arg11[%c8, %c0_93, %c0_94] : memref<16x64x64xbf16, #tpu.memory_space<vmem>>, vector<1x64x64xbf16>
    %135 = vector.shape_cast %134 : vector<1x64x64xbf16> to vector<64x64xbf16>
    %cst_95 = arith.constant dense<0.000000e+00> : vector<4x64xf32>
    %136 = tpu.matmul %85, %135, %cst_95 {dimension_numbers = #tpu.dot_dimension_numbers<[1], [0], [0], [1], [0, 0, 1, 1], [], []>} : vector<4x64xbf16>, vector<64x64xbf16>, vector<4x64xf32> -> vector<4x64xf32>
    %c8_96 = arith.constant 8 : index
    %c0_97 = arith.constant 0 : index
    %c0_98 = arith.constant 0 : index
    %137 = vector.load %arg15[%c8_96, %c0_97, %c0_98] : memref<16x4x64xf32, #tpu.memory_space<vmem>>, vector<1x4x64xf32>
    %138 = vector.shape_cast %137 : vector<1x4x64xf32> to vector<4x64xf32>
    %139 = vector.shape_cast %136 : vector<4x64xf32> to vector<1x4x64xf32>
    tpu.vector_store %arg15[%c8_96, %c0_97, %c0_98], %139 {strides = array<i32>} : memref<16x4x64xf32, #tpu.memory_space<vmem>>, vector<1x4x64xf32>,
    %c9 = arith.constant 9 : index
    %c0_99 = arith.constant 0 : index
    %c0_100 = arith.constant 0 : index
    %140 = vector.load %arg11[%c9, %c0_99, %c0_100] : memref<16x64x64xbf16, #tpu.memory_space<vmem>>, vector<1x64x64xbf16>
    %141 = vector.shape_cast %140 : vector<1x64x64xbf16> to vector<64x64xbf16>
    %cst_101 = arith.constant dense<0.000000e+00> : vector<4x64xf32>
    %142 = tpu.matmul %85, %141, %cst_101 {dimension_numbers = #tpu.dot_dimension_numbers<[1], [0], [0], [1], [0, 0, 1, 1], [], []>} : vector<4x64xbf16>, vector<64x64xbf16>, vector<4x64xf32> -> vector<4x64xf32>
    %c9_102 = arith.constant 9 : index
    %c0_103 = arith.constant 0 : index
    %c0_104 = arith.constant 0 : index
    %143 = vector.load %arg15[%c9_102, %c0_103, %c0_104] : memref<16x4x64xf32, #tpu.memory_space<vmem>>, vector<1x4x64xf32>
    %144 = vector.shape_cast %143 : vector<1x4x64xf32> to vector<4x64xf32>
    %145 = vector.shape_cast %142 : vector<4x64xf32> to vector<1x4x64xf32>
    tpu.vector_store %arg15[%c9_102, %c0_103, %c0_104], %145 {strides = array<i32>} : memref<16x4x64xf32, #tpu.memory_space<vmem>>, vector<1x4x64xf32>,
    %c10 = arith.constant 10 : index
    %c0_105 = arith.constant 0 : index
    %c0_106 = arith.constant 0 : index
    %146 = vector.load %arg11[%c10, %c0_105, %c0_106] : memref<16x64x64xbf16, #tpu.memory_space<vmem>>, vector<1x64x64xbf16>
    %147 = vector.shape_cast %146 : vector<1x64x64xbf16> to vector<64x64xbf16>
    %cst_107 = arith.constant dense<0.000000e+00> : vector<4x64xf32>
    %148 = tpu.matmul %85, %147, %cst_107 {dimension_numbers = #tpu.dot_dimension_numbers<[1], [0], [0], [1], [0, 0, 1, 1], [], []>} : vector<4x64xbf16>, vector<64x64xbf16>, vector<4x64xf32> -> vector<4x64xf32>
    %c10_108 = arith.constant 10 : index
    %c0_109 = arith.constant 0 : index
    %c0_110 = arith.constant 0 : index
    %149 = vector.load %arg15[%c10_108, %c0_109, %c0_110] : memref<16x4x64xf32, #tpu.memory_space<vmem>>, vector<1x4x64xf32>
    %150 = vector.shape_cast %149 : vector<1x4x64xf32> to vector<4x64xf32>
    %151 = vector.shape_cast %148 : vector<4x64xf32> to vector<1x4x64xf32>
    tpu.vector_store %arg15[%c10_108, %c0_109, %c0_110], %151 {strides = array<i32>} : memref<16x4x64xf32, #tpu.memory_space<vmem>>, vector<1x4x64xf32>,
    %c11 = arith.constant 11 : index
    %c0_111 = arith.constant 0 : index
    %c0_112 = arith.constant 0 : index
    %152 = vector.load %arg11[%c11, %c0_111, %c0_112] : memref<16x64x64xbf16, #tpu.memory_space<vmem>>, vector<1x64x64xbf16>
    %153 = vector.shape_cast %152 : vector<1x64x64xbf16> to vector<64x64xbf16>
    %cst_113 = arith.constant dense<0.000000e+00> : vector<4x64xf32>
    %154 = tpu.matmul %85, %153, %cst_113 {dimension_numbers = #tpu.dot_dimension_numbers<[1], [0], [0], [1], [0, 0, 1, 1], [], []>} : vector<4x64xbf16>, vector<64x64xbf16>, vector<4x64xf32> -> vector<4x64xf32>
    %c11_114 = arith.constant 11 : index
    %c0_115 = arith.constant 0 : index
    %c0_116 = arith.constant 0 : index
    %155 = vector.load %arg15[%c11_114, %c0_115, %c0_116] : memref<16x4x64xf32, #tpu.memory_space<vmem>>, vector<1x4x64xf32>
    %156 = vector.shape_cast %155 : vector<1x4x64xf32> to vector<4x64xf32>
    %157 = vector.shape_cast %154 : vector<4x64xf32> to vector<1x4x64xf32>
    tpu.vector_store %arg15[%c11_114, %c0_115, %c0_116], %157 {strides = array<i32>} : memref<16x4x64xf32, #tpu.memory_space<vmem>>, vector<1x4x64xf32>,
    %c12 = arith.constant 12 : index
    %c0_117 = arith.constant 0 : index
    %c0_118 = arith.constant 0 : index
    %158 = vector.load %arg11[%c12, %c0_117, %c0_118] : memref<16x64x64xbf16, #tpu.memory_space<vmem>>, vector<1x64x64xbf16>
    %159 = vector.shape_cast %158 : vector<1x64x64xbf16> to vector<64x64xbf16>
    %cst_119 = arith.constant dense<0.000000e+00> : vector<4x64xf32>
    %160 = tpu.matmul %85, %159, %cst_119 {dimension_numbers = #tpu.dot_dimension_numbers<[1], [0], [0], [1], [0, 0, 1, 1], [], []>} : vector<4x64xbf16>, vector<64x64xbf16>, vector<4x64xf32> -> vector<4x64xf32>
    %c12_120 = arith.constant 12 : index
    %c0_121 = arith.constant 0 : index
    %c0_122 = arith.constant 0 : index
    %161 = vector.load %arg15[%c12_120, %c0_121, %c0_122] : memref<16x4x64xf32, #tpu.memory_space<vmem>>, vector<1x4x64xf32>
    %162 = vector.shape_cast %161 : vector<1x4x64xf32> to vector<4x64xf32>
    %163 = vector.shape_cast %160 : vector<4x64xf32> to vector<1x4x64xf32>
    tpu.vector_store %arg15[%c12_120, %c0_121, %c0_122], %163 {strides = array<i32>} : memref<16x4x64xf32, #tpu.memory_space<vmem>>, vector<1x4x64xf32>,
    %c13 = arith.constant 13 : index
    %c0_123 = arith.constant 0 : index
    %c0_124 = arith.constant 0 : index
    %164 = vector.load %arg11[%c13, %c0_123, %c0_124] : memref<16x64x64xbf16, #tpu.memory_space<vmem>>, vector<1x64x64xbf16>
    %165 = vector.shape_cast %164 : vector<1x64x64xbf16> to vector<64x64xbf16>
    %cst_125 = arith.constant dense<0.000000e+00> : vector<4x64xf32>
    %166 = tpu.matmul %85, %165, %cst_125 {dimension_numbers = #tpu.dot_dimension_numbers<[1], [0], [0], [1], [0, 0, 1, 1], [], []>} : vector<4x64xbf16>, vector<64x64xbf16>, vector<4x64xf32> -> vector<4x64xf32>
    %c13_126 = arith.constant 13 : index
    %c0_127 = arith.constant 0 : index
    %c0_128 = arith.constant 0 : index
    %167 = vector.load %arg15[%c13_126, %c0_127, %c0_128] : memref<16x4x64xf32, #tpu.memory_space<vmem>>, vector<1x4x64xf32>
    %168 = vector.shape_cast %167 : vector<1x4x64xf32> to vector<4x64xf32>
    %169 = vector.shape_cast %166 : vector<4x64xf32> to vector<1x4x64xf32>
    tpu.vector_store %arg15[%c13_126, %c0_127, %c0_128], %169 {strides = array<i32>} : memref<16x4x64xf32, #tpu.memory_space<vmem>>, vector<1x4x64xf32>,
    %c14 = arith.constant 14 : index
    %c0_129 = arith.constant 0 : index
    %c0_130 = arith.constant 0 : index
    %170 = vector.load %arg11[%c14, %c0_129, %c0_130] : memref<16x64x64xbf16, #tpu.memory_space<vmem>>, vector<1x64x64xbf16>
    %171 = vector.shape_cast %170 : vector<1x64x64xbf16> to vector<64x64xbf16>
    %cst_131 = arith.constant dense<0.000000e+00> : vector<4x64xf32>
    %172 = tpu.matmul %85, %171, %cst_131 {dimension_numbers = #tpu.dot_dimension_numbers<[1], [0], [0], [1], [0, 0, 1, 1], [], []>} : vector<4x64xbf16>, vector<64x64xbf16>, vector<4x64xf32> -> vector<4x64xf32>
    %c14_132 = arith.constant 14 : index
    %c0_133 = arith.constant 0 : index
    %c0_134 = arith.constant 0 : index
    %173 = vector.load %arg15[%c14_132, %c0_133, %c0_134] : memref<16x4x64xf32, #tpu.memory_space<vmem>>, vector<1x4x64xf32>
    %174 = vector.shape_cast %173 : vector<1x4x64xf32> to vector<4x64xf32>
    %175 = vector.shape_cast %172 : vector<4x64xf32> to vector<1x4x64xf32>
    tpu.vector_store %arg15[%c14_132, %c0_133, %c0_134], %175 {strides = array<i32>} : memref<16x4x64xf32, #tpu.memory_space<vmem>>, vector<1x4x64xf32>,
    %c15 = arith.constant 15 : index
    %c0_135 = arith.constant 0 : index
    %c0_136 = arith.constant 0 : index
    %176 = vector.load %arg11[%c15, %c0_135, %c0_136] : memref<16x64x64xbf16, #tpu.memory_space<vmem>>, vector<1x64x64xbf16>
    %177 = vector.shape_cast %176 : vector<1x64x64xbf16> to vector<64x64xbf16>
    %cst_137 = arith.constant dense<0.000000e+00> : vector<4x64xf32>
    %178 = tpu.matmul %85, %177, %cst_137 {dimension_numbers = #tpu.dot_dimension_numbers<[1], [0], [0], [1], [0, 0, 1, 1], [], []>} : vector<4x64xbf16>, vector<64x64xbf16>, vector<4x64xf32> -> vector<4x64xf32>
    %c15_138 = arith.constant 15 : index
    %c0_139 = arith.constant 0 : index
    %c0_140 = arith.constant 0 : index
    %179 = vector.load %arg15[%c15_138, %c0_139, %c0_140] : memref<16x4x64xf32, #tpu.memory_space<vmem>>, vector<1x4x64xf32>
    %180 = vector.shape_cast %179 : vector<1x4x64xf32> to vector<4x64xf32>
    %181 = vector.shape_cast %178 : vector<4x64xf32> to vector<1x4x64xf32>
    tpu.vector_store %arg15[%c15_138, %c0_139, %c0_140], %181 {strides = array<i32>} : memref<16x4x64xf32, #tpu.memory_space<vmem>>, vector<1x4x64xf32>,
    %c0_141 = arith.constant 0 : index
    %c0_142 = arith.constant 0 : index
    %c0_143 = arith.constant 0 : index
    %182 = vector.load %arg15[%c0_141, %c0_142, %c0_143] : memref<16x4x64xf32, #tpu.memory_space<vmem>>, vector<16x4x64xf32>
    %cst_144 = arith.constant dense<0.000000e+00> : vector<16x64xf32>
    %183 = vector.multi_reduction <add>, %182, %cst_144 [1] : vector<16x4x64xf32> to vector<16x64xf32>
    %184 = vector.shape_cast %183 : vector<16x64xf32> to vector<16x1x64xf32>
    %cst_145 = arith.constant 4.000000e+00 : f32
    %185 = vector.broadcast %cst_145 : f32 to vector<16x1x64xf32>
    %186 = arith.divf %184, %185 : vector<16x1x64xf32>
    %cst_146 = arith.constant dense<0.000000e+00> : vector<1x64xf32>
    %187 = vector.multi_reduction <add>, %186, %cst_146 [0] : vector<16x1x64xf32> to vector<1x64xf32>
    %188 = vector.shape_cast %187 : vector<1x64xf32> to vector<1x1x64xf32>
    %cst_147 = arith.constant 1.600000e+01 : f32
    %189 = vector.broadcast %cst_147 : f32 to vector<1x1x64xf32>
    %190 = arith.divf %188, %189 : vector<1x1x64xf32>
    %191 = arith.mulf %182, %182 : vector<16x4x64xf32>
    %cst_148 = arith.constant dense<0.000000e+00> : vector<16x64xf32>
    %192 = vector.multi_reduction <add>, %191, %cst_148 [1] : vector<16x4x64xf32> to vector<16x64xf32>
    %193 = vector.shape_cast %192 : vector<16x64xf32> to vector<16x1x64xf32>
    %cst_149 = arith.constant 4.000000e+00 : f32
    %194 = vector.broadcast %cst_149 : f32 to vector<16x1x64xf32>
    %195 = arith.divf %193, %194 : vector<16x1x64xf32>
    %cst_150 = arith.constant dense<0.000000e+00> : vector<1x64xf32>
    %196 = vector.multi_reduction <add>, %195, %cst_150 [0] : vector<16x1x64xf32> to vector<1x64xf32>
    %197 = vector.shape_cast %196 : vector<1x64xf32> to vector<1x1x64xf32>
    %cst_151 = arith.constant 1.600000e+01 : f32
    %198 = vector.broadcast %cst_151 : f32 to vector<1x1x64xf32>
    %199 = arith.divf %197, %198 : vector<1x1x64xf32>
    %200 = arith.mulf %190, %190 : vector<1x1x64xf32>
    %201 = arith.subf %199, %200 : vector<1x1x64xf32>
    %cst_152 = arith.constant 0.000000e+00 : f32
    %202 = vector.broadcast %cst_152 : f32 to vector<1x1x64xf32>
    %203 = arith.maximumf %201, %202 : vector<1x1x64xf32>
    %cst_153 = arith.constant 9.99999974E-6 : f32
    %204 = vector.broadcast %cst_153 : f32 to vector<1x1x64xf32>
    %205 = arith.addf %203, %204 : vector<1x1x64xf32>
    %206 = math.rsqrt %205 : vector<1x1x64xf32>
    %c0_154 = arith.constant 0 : index
    %c0_155 = arith.constant 0 : index
    %207 = vector.load %arg12[%c0_154, %c0_155] : memref<1x64xf32, #tpu.memory_space<vmem>>, vector<1x64xf32>
    %208 = vector.shape_cast %207 : vector<1x64xf32> to vector<1x1x64xf32>
    %209 = vector.broadcast %206 : vector<1x1x64xf32> to vector<16x4x64xf32>
    %210 = arith.mulf %182, %209 : vector<16x4x64xf32>
    %211 = arith.mulf %190, %206 : vector<1x1x64xf32>
    %212 = arith.subf %208, %211 : vector<1x1x64xf32>
    %213 = vector.broadcast %212 : vector<1x1x64xf32> to vector<16x4x64xf32>
    %214 = arith.addf %210, %213 : vector<16x4x64xf32>
    %cst_156 = arith.constant 0.000000e+00 : f32
    %215 = vector.broadcast %cst_156 : f32 to vector<16x4x64xf32>
    %216 = arith.cmpf oge, %214, %215 : vector<16x4x64xf32>
    %cst_157 = arith.constant 0.00999999977 : f32
    %217 = vector.broadcast %cst_157 : f32 to vector<16x4x64xf32>
    %218 = arith.mulf %217, %214 : vector<16x4x64xf32>
    %219 = arith.select %216, %214, %218 : vector<16x4x64xi1>, vector<16x4x64xf32>
    %c0_158 = arith.constant 0 : index
    %c0_159 = arith.constant 0 : index
    %c0_160 = arith.constant 0 : index
    %220 = vector.load %arg15[%c0_158, %c0_159, %c0_160] : memref<16x4x64xf32, #tpu.memory_space<vmem>>, vector<16x4x64xf32>
    tpu.vector_store %arg15[%c0_158, %c0_159, %c0_160], %219 {strides = array<i32>} : memref<16x4x64xf32, #tpu.memory_space<vmem>>, vector<16x4x64xf32>,
    return
  }
  func.func @transform_0(%arg0: i32) -> (i32, i32) {
    %c0_i32 = arith.constant 0 : i32
    %c0_i32_0 = arith.constant 0 : i32
    %c0_i32_1 = arith.constant 0 : i32
    return %c0_i32, %c0_i32_0 : i32, i32
  }
  func.func @transform_1(%arg0: i32) -> (i32, i32) {
    %c0_i32 = arith.constant 0 : i32
    %c0_i32_0 = arith.constant 0 : i32
    %c0_i32_1 = arith.constant 0 : i32
    return %c0_i32, %c0_i32_0 : i32, i32
  }
  func.func @transform_2(%arg0: i32) -> (i32, i32) {
    %c0_i32 = arith.constant 0 : i32
    %c0_i32_0 = arith.constant 0 : i32
    %c0_i32_1 = arith.constant 0 : i32
    return %c0_i32, %c0_i32_0 : i32, i32
  }
  func.func @transform_3(%arg0: i32) -> (i32, i32) {
    %c0_i32 = arith.constant 0 : i32
    %c0_i32_0 = arith.constant 0 : i32
    %c0_i32_1 = arith.constant 0 : i32
    return %c0_i32, %c0_i32_0 : i32, i32
  }
  func.func @transform_4(%arg0: i32) -> (i32, i32) {
    %c0_i32 = arith.constant 0 : i32
    %c0_i32_0 = arith.constant 0 : i32
    %c0_i32_1 = arith.constant 0 : i32
    return %c0_i32, %c0_i32_0 : i32, i32
  }
  func.func @transform_5(%arg0: i32) -> (i32, i32) {
    %c0_i32 = arith.constant 0 : i32
    %c0_i32_0 = arith.constant 0 : i32
    %c0_i32_1 = arith.constant 0 : i32
    return %c0_i32, %c0_i32_0 : i32, i32
  }
  func.func @transform_6(%arg0: i32) -> (i32, i32) {
    %c0_i32 = arith.constant 0 : i32
    %c0_i32_0 = arith.constant 0 : i32
    %c0_i32_1 = arith.constant 0 : i32
    return %c0_i32, %c0_i32_0 : i32, i32
  }
  func.func @transform_7(%arg0: i32) -> (i32, i32) {
    %c0_i32 = arith.constant 0 : i32
    %c0_i32_0 = arith.constant 0 : i32
    %c0_i32_1 = arith.constant 0 : i32
    return %c0_i32, %c0_i32_0 : i32, i32
  }
  func.func @transform_8(%arg0: i32) -> (i32, i32) {
    %c0_i32 = arith.constant 0 : i32
    %c0_i32_0 = arith.constant 0 : i32
    %c0_i32_1 = arith.constant 0 : i32
    return %c0_i32, %c0_i32_0 : i32, i32
  }
  func.func @transform_9(%arg0: i32) -> (i32, i32) {
    %c0_i32 = arith.constant 0 : i32
    %c0_i32_0 = arith.constant 0 : i32
    %c0_i32_1 = arith.constant 0 : i32
    return %c0_i32, %c0_i32_0 : i32, i32
  }
  func.func @transform_10(%arg0: i32) -> (i32, i32, i32) {
    %c0_i32 = arith.constant 0 : i32
    %c0_i32_0 = arith.constant 0 : i32
    %c0_i32_1 = arith.constant 0 : i32
    %c0_i32_2 = arith.constant 0 : i32
    return %c0_i32, %c0_i32_0, %c0_i32_1 : i32, i32, i32
  }
  func.func @transform_11(%arg0: i32) -> (i32, i32) {
    %c0_i32 = arith.constant 0 : i32
    %c0_i32_0 = arith.constant 0 : i32
    %c0_i32_1 = arith.constant 0 : i32
    return %c0_i32, %c0_i32_0 : i32, i32
  }
  func.func @transform_12(%arg0: i32) -> (i32, i32) {
    %c0_i32 = arith.constant 0 : i32
    %c0_i32_0 = arith.constant 0 : i32
    %c0_i32_1 = arith.constant 0 : i32
    return %c0_i32, %c0_i32_0 : i32, i32
  }
  func.func @transform_13(%arg0: i32) -> (i32, i32) {
    %c0_i32 = arith.constant 0 : i32
    %c0_i32_0 = arith.constant 0 : i32
    %c0_i32_1 = arith.constant 0 : i32
    return %c0_i32, %c0_i32_0 : i32, i32
  }
  func.func @transform_14(%arg0: i32) -> (i32, i32, i32) {
    %c0_i32 = arith.constant 0 : i32
    %c0_i32_0 = arith.constant 0 : i32
    %c0_i32_1 = arith.constant 0 : i32
    %c0_i32_2 = arith.constant 0 : i32
    return %c0_i32, %c0_i32_0, %c0_i32_1 : i32, i32, i32
  }
}

module attributes {stable_mosaic.version = 11 : i64} {
  func.func @_fused_group_kernel(%arg0: i32, %arg1: memref<4x16x256xbf16, #tpu.memory_space<vmem>>, %arg2: memref<4x256x64xbf16, #tpu.memory_space<vmem>>, %arg3: memref<16x1xf32, #tpu.memory_space<vmem>>, %arg4: memref<4x16x64xf32, #tpu.memory_space<vmem>>) attributes {dimension_semantics = [#tpu.dimension_semantics<parallel>], iteration_bounds = array<i64: 2>, scalar_prefetch = 0 : i64, scratch_operands = 0 : i64, tpu.core_type = #tpu.core_type<tc>, window_params = [{transform_indices = @transform_0, window_bounds = array<i64: 4, 16, 256>}, {pipeline_mode = #tpu.pipeline_mode<synchronous>, transform_indices = @transform_1, window_bounds = array<i64: 4, 256, 64>}, {transform_indices = @transform_2, window_bounds = array<i64: 16, 1>}, {transform_indices = @transform_3, window_bounds = array<i64: 4, 16, 64>}]} {
    %c0 = arith.constant 0 : index
    %c0_0 = arith.constant 0 : index
    %c0_1 = arith.constant 0 : index
    %0 = vector.load %arg1[%c0, %c0_0, %c0_1] : memref<4x16x256xbf16, #tpu.memory_space<vmem>>, vector<1x16x256xbf16>
    %1 = vector.shape_cast %0 : vector<1x16x256xbf16> to vector<16x256xbf16>
    %c0_2 = arith.constant 0 : index
    %c0_3 = arith.constant 0 : index
    %c0_4 = arith.constant 0 : index
    %2 = vector.load %arg2[%c0_2, %c0_3, %c0_4] : memref<4x256x64xbf16, #tpu.memory_space<vmem>>, vector<1x256x64xbf16>
    %3 = vector.shape_cast %2 : vector<1x256x64xbf16> to vector<256x64xbf16>
    %cst = arith.constant dense<0.000000e+00> : vector<16x64xf32>
    %4 = tpu.matmul %1, %3, %cst {dimension_numbers = #tpu.dot_dimension_numbers<[1], [0], [0], [1], [0, 0, 1, 1], [], []>} : vector<16x256xbf16>, vector<256x64xbf16>, vector<16x64xf32> -> vector<16x64xf32>
    %c0_5 = arith.constant 0 : index
    %c0_6 = arith.constant 0 : index
    %c0_7 = arith.constant 0 : index
    %5 = vector.load %arg4[%c0_5, %c0_6, %c0_7] : memref<4x16x64xf32, #tpu.memory_space<vmem>>, vector<1x16x64xf32>
    %6 = vector.shape_cast %5 : vector<1x16x64xf32> to vector<16x64xf32>
    %7 = vector.shape_cast %4 : vector<16x64xf32> to vector<1x16x64xf32>
    tpu.vector_store %arg4[%c0_5, %c0_6, %c0_7], %7 {strides = array<i32>} : memref<4x16x64xf32, #tpu.memory_space<vmem>>, vector<1x16x64xf32>,
    %c1 = arith.constant 1 : index
    %c0_8 = arith.constant 0 : index
    %c0_9 = arith.constant 0 : index
    %8 = vector.load %arg1[%c1, %c0_8, %c0_9] : memref<4x16x256xbf16, #tpu.memory_space<vmem>>, vector<1x16x256xbf16>
    %9 = vector.shape_cast %8 : vector<1x16x256xbf16> to vector<16x256xbf16>
    %c1_10 = arith.constant 1 : index
    %c0_11 = arith.constant 0 : index
    %c0_12 = arith.constant 0 : index
    %10 = vector.load %arg2[%c1_10, %c0_11, %c0_12] : memref<4x256x64xbf16, #tpu.memory_space<vmem>>, vector<1x256x64xbf16>
    %11 = vector.shape_cast %10 : vector<1x256x64xbf16> to vector<256x64xbf16>
    %cst_13 = arith.constant dense<0.000000e+00> : vector<16x64xf32>
    %12 = tpu.matmul %9, %11, %cst_13 {dimension_numbers = #tpu.dot_dimension_numbers<[1], [0], [0], [1], [0, 0, 1, 1], [], []>} : vector<16x256xbf16>, vector<256x64xbf16>, vector<16x64xf32> -> vector<16x64xf32>
    %c1_14 = arith.constant 1 : index
    %c0_15 = arith.constant 0 : index
    %c0_16 = arith.constant 0 : index
    %13 = vector.load %arg4[%c1_14, %c0_15, %c0_16] : memref<4x16x64xf32, #tpu.memory_space<vmem>>, vector<1x16x64xf32>
    %14 = vector.shape_cast %13 : vector<1x16x64xf32> to vector<16x64xf32>
    %15 = vector.shape_cast %12 : vector<16x64xf32> to vector<1x16x64xf32>
    tpu.vector_store %arg4[%c1_14, %c0_15, %c0_16], %15 {strides = array<i32>} : memref<4x16x64xf32, #tpu.memory_space<vmem>>, vector<1x16x64xf32>,
    %c2 = arith.constant 2 : index
    %c0_17 = arith.constant 0 : index
    %c0_18 = arith.constant 0 : index
    %16 = vector.load %arg1[%c2, %c0_17, %c0_18] : memref<4x16x256xbf16, #tpu.memory_space<vmem>>, vector<1x16x256xbf16>
    %17 = vector.shape_cast %16 : vector<1x16x256xbf16> to vector<16x256xbf16>
    %c2_19 = arith.constant 2 : index
    %c0_20 = arith.constant 0 : index
    %c0_21 = arith.constant 0 : index
    %18 = vector.load %arg2[%c2_19, %c0_20, %c0_21] : memref<4x256x64xbf16, #tpu.memory_space<vmem>>, vector<1x256x64xbf16>
    %19 = vector.shape_cast %18 : vector<1x256x64xbf16> to vector<256x64xbf16>
    %cst_22 = arith.constant dense<0.000000e+00> : vector<16x64xf32>
    %20 = tpu.matmul %17, %19, %cst_22 {dimension_numbers = #tpu.dot_dimension_numbers<[1], [0], [0], [1], [0, 0, 1, 1], [], []>} : vector<16x256xbf16>, vector<256x64xbf16>, vector<16x64xf32> -> vector<16x64xf32>
    %c2_23 = arith.constant 2 : index
    %c0_24 = arith.constant 0 : index
    %c0_25 = arith.constant 0 : index
    %21 = vector.load %arg4[%c2_23, %c0_24, %c0_25] : memref<4x16x64xf32, #tpu.memory_space<vmem>>, vector<1x16x64xf32>
    %22 = vector.shape_cast %21 : vector<1x16x64xf32> to vector<16x64xf32>
    %23 = vector.shape_cast %20 : vector<16x64xf32> to vector<1x16x64xf32>
    tpu.vector_store %arg4[%c2_23, %c0_24, %c0_25], %23 {strides = array<i32>} : memref<4x16x64xf32, #tpu.memory_space<vmem>>, vector<1x16x64xf32>,
    %c3 = arith.constant 3 : index
    %c0_26 = arith.constant 0 : index
    %c0_27 = arith.constant 0 : index
    %24 = vector.load %arg1[%c3, %c0_26, %c0_27] : memref<4x16x256xbf16, #tpu.memory_space<vmem>>, vector<1x16x256xbf16>
    %25 = vector.shape_cast %24 : vector<1x16x256xbf16> to vector<16x256xbf16>
    %c3_28 = arith.constant 3 : index
    %c0_29 = arith.constant 0 : index
    %c0_30 = arith.constant 0 : index
    %26 = vector.load %arg2[%c3_28, %c0_29, %c0_30] : memref<4x256x64xbf16, #tpu.memory_space<vmem>>, vector<1x256x64xbf16>
    %27 = vector.shape_cast %26 : vector<1x256x64xbf16> to vector<256x64xbf16>
    %cst_31 = arith.constant dense<0.000000e+00> : vector<16x64xf32>
    %28 = tpu.matmul %25, %27, %cst_31 {dimension_numbers = #tpu.dot_dimension_numbers<[1], [0], [0], [1], [0, 0, 1, 1], [], []>} : vector<16x256xbf16>, vector<256x64xbf16>, vector<16x64xf32> -> vector<16x64xf32>
    %c3_32 = arith.constant 3 : index
    %c0_33 = arith.constant 0 : index
    %c0_34 = arith.constant 0 : index
    %29 = vector.load %arg4[%c3_32, %c0_33, %c0_34] : memref<4x16x64xf32, #tpu.memory_space<vmem>>, vector<1x16x64xf32>
    %30 = vector.shape_cast %29 : vector<1x16x64xf32> to vector<16x64xf32>
    %31 = vector.shape_cast %28 : vector<16x64xf32> to vector<1x16x64xf32>
    tpu.vector_store %arg4[%c3_32, %c0_33, %c0_34], %31 {strides = array<i32>} : memref<4x16x64xf32, #tpu.memory_space<vmem>>, vector<1x16x64xf32>,
    %c0_35 = arith.constant 0 : index
    %c0_36 = arith.constant 0 : index
    %c0_37 = arith.constant 0 : index
    %32 = vector.load %arg4[%c0_35, %c0_36, %c0_37] : memref<4x16x64xf32, #tpu.memory_space<vmem>>, vector<4x16x64xf32>
    %cst_38 = arith.constant dense<0.000000e+00> : vector<4x16xf32>
    %33 = vector.multi_reduction <add>, %32, %cst_38 [2] : vector<4x16x64xf32> to vector<4x16xf32>
    %34 = vector.shape_cast %33 : vector<4x16xf32> to vector<4x16x1xf32>
    %cst_39 = arith.constant 6.400000e+01 : f32
    %35 = vector.broadcast %cst_39 : f32 to vector<4x16x1xf32>
    %36 = arith.divf %34, %35 : vector<4x16x1xf32>
    %cst_40 = arith.constant dense<0.000000e+00> : vector<16x1xf32>
    %37 = vector.multi_reduction <add>, %36, %cst_40 [0] : vector<4x16x1xf32> to vector<16x1xf32>
    %38 = vector.shape_cast %37 : vector<16x1xf32> to vector<1x16x1xf32>
    %cst_41 = arith.constant 4.000000e+00 : f32
    %39 = vector.broadcast %cst_41 : f32 to vector<1x16x1xf32>
    %40 = arith.divf %38, %39 : vector<1x16x1xf32>
    %41 = arith.mulf %32, %32 : vector<4x16x64xf32>
    %cst_42 = arith.constant dense<0.000000e+00> : vector<4x16xf32>
    %42 = vector.multi_reduction <add>, %41, %cst_42 [2] : vector<4x16x64xf32> to vector<4x16xf32>
    %43 = vector.shape_cast %42 : vector<4x16xf32> to vector<4x16x1xf32>
    %cst_43 = arith.constant 6.400000e+01 : f32
    %44 = vector.broadcast %cst_43 : f32 to vector<4x16x1xf32>
    %45 = arith.divf %43, %44 : vector<4x16x1xf32>
    %cst_44 = arith.constant dense<0.000000e+00> : vector<16x1xf32>
    %46 = vector.multi_reduction <add>, %45, %cst_44 [0] : vector<4x16x1xf32> to vector<16x1xf32>
    %47 = vector.shape_cast %46 : vector<16x1xf32> to vector<1x16x1xf32>
    %cst_45 = arith.constant 4.000000e+00 : f32
    %48 = vector.broadcast %cst_45 : f32 to vector<1x16x1xf32>
    %49 = arith.divf %47, %48 : vector<1x16x1xf32>
    %50 = arith.mulf %40, %40 : vector<1x16x1xf32>
    %51 = arith.subf %49, %50 : vector<1x16x1xf32>
    %cst_46 = arith.constant 0.000000e+00 : f32
    %52 = vector.broadcast %cst_46 : f32 to vector<1x16x1xf32>
    %53 = arith.maximumf %51, %52 : vector<1x16x1xf32>
    %cst_47 = arith.constant 9.99999974E-6 : f32
    %54 = vector.broadcast %cst_47 : f32 to vector<1x16x1xf32>
    %55 = arith.addf %53, %54 : vector<1x16x1xf32>
    %56 = math.rsqrt %55 : vector<1x16x1xf32>
    %c0_48 = arith.constant 0 : index
    %c0_49 = arith.constant 0 : index
    %57 = vector.load %arg3[%c0_48, %c0_49] : memref<16x1xf32, #tpu.memory_space<vmem>>, vector<16x1xf32>
    %58 = vector.shape_cast %57 : vector<16x1xf32> to vector<1x16x1xf32>
    %59 = vector.broadcast %56 : vector<1x16x1xf32> to vector<4x16x64xf32>
    %60 = arith.mulf %32, %59 : vector<4x16x64xf32>
    %61 = arith.mulf %40, %56 : vector<1x16x1xf32>
    %62 = arith.subf %58, %61 : vector<1x16x1xf32>
    %63 = vector.broadcast %62 : vector<1x16x1xf32> to vector<4x16x64xf32>
    %64 = arith.addf %60, %63 : vector<4x16x64xf32>
    %cst_50 = arith.constant 0.000000e+00 : f32
    %65 = vector.broadcast %cst_50 : f32 to vector<4x16x64xf32>
    %66 = arith.cmpf oge, %64, %65 : vector<4x16x64xf32>
    %cst_51 = arith.constant 0.00999999977 : f32
    %67 = vector.broadcast %cst_51 : f32 to vector<4x16x64xf32>
    %68 = arith.mulf %67, %64 : vector<4x16x64xf32>
    %69 = arith.select %66, %64, %68 : vector<4x16x64xi1>, vector<4x16x64xf32>
    %c0_52 = arith.constant 0 : index
    %c0_53 = arith.constant 0 : index
    %c0_54 = arith.constant 0 : index
    %70 = vector.load %arg4[%c0_52, %c0_53, %c0_54] : memref<4x16x64xf32, #tpu.memory_space<vmem>>, vector<4x16x64xf32>
    tpu.vector_store %arg4[%c0_52, %c0_53, %c0_54], %69 {strides = array<i32>} : memref<4x16x64xf32, #tpu.memory_space<vmem>>, vector<4x16x64xf32>,
    return
  }
  func.func @transform_0(%arg0: i32) -> (i32, i32, i32) {
    %c0_i32 = arith.constant 0 : i32
    %c0_i32_0 = arith.constant 0 : i32
    %c0_i32_1 = arith.constant 0 : i32
    return %c0_i32, %arg0, %c0_i32_0 : i32, i32, i32
  }
  func.func @transform_1(%arg0: i32) -> (i32, i32, i32) {
    %c0_i32 = arith.constant 0 : i32
    %c0_i32_0 = arith.constant 0 : i32
    %c0_i32_1 = arith.constant 0 : i32
    %c0_i32_2 = arith.constant 0 : i32
    return %c0_i32, %c0_i32_0, %c0_i32_1 : i32, i32, i32
  }
  func.func @transform_2(%arg0: i32) -> (i32, i32) {
    %c0_i32 = arith.constant 0 : i32
    %c0_i32_0 = arith.constant 0 : i32
    return %arg0, %c0_i32 : i32, i32
  }
  func.func @transform_3(%arg0: i32) -> (i32, i32, i32) {
    %c0_i32 = arith.constant 0 : i32
    %c0_i32_0 = arith.constant 0 : i32
    %c0_i32_1 = arith.constant 0 : i32
    return %c0_i32, %arg0, %c0_i32_0 : i32, i32, i32
  }
}

module attributes {stable_mosaic.version = 11 : i64} {
  func.func @_fused_group_kernel(%arg0: i32, %arg1: memref<4x8x128xbf16, #tpu.memory_space<vmem>>, %arg2: memref<4x128x256xbf16, #tpu.memory_space<vmem>>, %arg3: memref<8x1xf32, #tpu.memory_space<vmem>>, %arg4: memref<4x8x256xf32, #tpu.memory_space<vmem>>) attributes {dimension_semantics = [#tpu.dimension_semantics<parallel>], iteration_bounds = array<i64: 2>, scalar_prefetch = 0 : i64, scratch_operands = 0 : i64, tpu.core_type = #tpu.core_type<tc>, window_params = [{transform_indices = @transform_0, window_bounds = array<i64: 4, 8, 128>}, {pipeline_mode = #tpu.pipeline_mode<synchronous>, transform_indices = @transform_1, window_bounds = array<i64: 4, 128, 256>}, {transform_indices = @transform_2, window_bounds = array<i64: 8, 1>}, {transform_indices = @transform_3, window_bounds = array<i64: 4, 8, 256>}]} {
    %c0 = arith.constant 0 : index
    %c0_0 = arith.constant 0 : index
    %c0_1 = arith.constant 0 : index
    %0 = vector.load %arg1[%c0, %c0_0, %c0_1] : memref<4x8x128xbf16, #tpu.memory_space<vmem>>, vector<1x8x128xbf16>
    %1 = vector.shape_cast %0 : vector<1x8x128xbf16> to vector<8x128xbf16>
    %c0_2 = arith.constant 0 : index
    %c0_3 = arith.constant 0 : index
    %c0_4 = arith.constant 0 : index
    %2 = vector.load %arg2[%c0_2, %c0_3, %c0_4] : memref<4x128x256xbf16, #tpu.memory_space<vmem>>, vector<1x128x256xbf16>
    %3 = vector.shape_cast %2 : vector<1x128x256xbf16> to vector<128x256xbf16>
    %cst = arith.constant dense<0.000000e+00> : vector<8x256xf32>
    %4 = tpu.matmul %1, %3, %cst {dimension_numbers = #tpu.dot_dimension_numbers<[1], [0], [0], [1], [0, 0, 1, 1], [], []>} : vector<8x128xbf16>, vector<128x256xbf16>, vector<8x256xf32> -> vector<8x256xf32>
    %c0_5 = arith.constant 0 : index
    %c0_6 = arith.constant 0 : index
    %c0_7 = arith.constant 0 : index
    %5 = vector.load %arg4[%c0_5, %c0_6, %c0_7] : memref<4x8x256xf32, #tpu.memory_space<vmem>>, vector<1x8x256xf32>
    %6 = vector.shape_cast %5 : vector<1x8x256xf32> to vector<8x256xf32>
    %7 = vector.shape_cast %4 : vector<8x256xf32> to vector<1x8x256xf32>
    tpu.vector_store %arg4[%c0_5, %c0_6, %c0_7], %7 {strides = array<i32>} : memref<4x8x256xf32, #tpu.memory_space<vmem>>, vector<1x8x256xf32>,
    %c1 = arith.constant 1 : index
    %c0_8 = arith.constant 0 : index
    %c0_9 = arith.constant 0 : index
    %8 = vector.load %arg1[%c1, %c0_8, %c0_9] : memref<4x8x128xbf16, #tpu.memory_space<vmem>>, vector<1x8x128xbf16>
    %9 = vector.shape_cast %8 : vector<1x8x128xbf16> to vector<8x128xbf16>
    %c1_10 = arith.constant 1 : index
    %c0_11 = arith.constant 0 : index
    %c0_12 = arith.constant 0 : index
    %10 = vector.load %arg2[%c1_10, %c0_11, %c0_12] : memref<4x128x256xbf16, #tpu.memory_space<vmem>>, vector<1x128x256xbf16>
    %11 = vector.shape_cast %10 : vector<1x128x256xbf16> to vector<128x256xbf16>
    %cst_13 = arith.constant dense<0.000000e+00> : vector<8x256xf32>
    %12 = tpu.matmul %9, %11, %cst_13 {dimension_numbers = #tpu.dot_dimension_numbers<[1], [0], [0], [1], [0, 0, 1, 1], [], []>} : vector<8x128xbf16>, vector<128x256xbf16>, vector<8x256xf32> -> vector<8x256xf32>
    %c1_14 = arith.constant 1 : index
    %c0_15 = arith.constant 0 : index
    %c0_16 = arith.constant 0 : index
    %13 = vector.load %arg4[%c1_14, %c0_15, %c0_16] : memref<4x8x256xf32, #tpu.memory_space<vmem>>, vector<1x8x256xf32>
    %14 = vector.shape_cast %13 : vector<1x8x256xf32> to vector<8x256xf32>
    %15 = vector.shape_cast %12 : vector<8x256xf32> to vector<1x8x256xf32>
    tpu.vector_store %arg4[%c1_14, %c0_15, %c0_16], %15 {strides = array<i32>} : memref<4x8x256xf32, #tpu.memory_space<vmem>>, vector<1x8x256xf32>,
    %c2 = arith.constant 2 : index
    %c0_17 = arith.constant 0 : index
    %c0_18 = arith.constant 0 : index
    %16 = vector.load %arg1[%c2, %c0_17, %c0_18] : memref<4x8x128xbf16, #tpu.memory_space<vmem>>, vector<1x8x128xbf16>
    %17 = vector.shape_cast %16 : vector<1x8x128xbf16> to vector<8x128xbf16>
    %c2_19 = arith.constant 2 : index
    %c0_20 = arith.constant 0 : index
    %c0_21 = arith.constant 0 : index
    %18 = vector.load %arg2[%c2_19, %c0_20, %c0_21] : memref<4x128x256xbf16, #tpu.memory_space<vmem>>, vector<1x128x256xbf16>
    %19 = vector.shape_cast %18 : vector<1x128x256xbf16> to vector<128x256xbf16>
    %cst_22 = arith.constant dense<0.000000e+00> : vector<8x256xf32>
    %20 = tpu.matmul %17, %19, %cst_22 {dimension_numbers = #tpu.dot_dimension_numbers<[1], [0], [0], [1], [0, 0, 1, 1], [], []>} : vector<8x128xbf16>, vector<128x256xbf16>, vector<8x256xf32> -> vector<8x256xf32>
    %c2_23 = arith.constant 2 : index
    %c0_24 = arith.constant 0 : index
    %c0_25 = arith.constant 0 : index
    %21 = vector.load %arg4[%c2_23, %c0_24, %c0_25] : memref<4x8x256xf32, #tpu.memory_space<vmem>>, vector<1x8x256xf32>
    %22 = vector.shape_cast %21 : vector<1x8x256xf32> to vector<8x256xf32>
    %23 = vector.shape_cast %20 : vector<8x256xf32> to vector<1x8x256xf32>
    tpu.vector_store %arg4[%c2_23, %c0_24, %c0_25], %23 {strides = array<i32>} : memref<4x8x256xf32, #tpu.memory_space<vmem>>, vector<1x8x256xf32>,
    %c3 = arith.constant 3 : index
    %c0_26 = arith.constant 0 : index
    %c0_27 = arith.constant 0 : index
    %24 = vector.load %arg1[%c3, %c0_26, %c0_27] : memref<4x8x128xbf16, #tpu.memory_space<vmem>>, vector<1x8x128xbf16>
    %25 = vector.shape_cast %24 : vector<1x8x128xbf16> to vector<8x128xbf16>
    %c3_28 = arith.constant 3 : index
    %c0_29 = arith.constant 0 : index
    %c0_30 = arith.constant 0 : index
    %26 = vector.load %arg2[%c3_28, %c0_29, %c0_30] : memref<4x128x256xbf16, #tpu.memory_space<vmem>>, vector<1x128x256xbf16>
    %27 = vector.shape_cast %26 : vector<1x128x256xbf16> to vector<128x256xbf16>
    %cst_31 = arith.constant dense<0.000000e+00> : vector<8x256xf32>
    %28 = tpu.matmul %25, %27, %cst_31 {dimension_numbers = #tpu.dot_dimension_numbers<[1], [0], [0], [1], [0, 0, 1, 1], [], []>} : vector<8x128xbf16>, vector<128x256xbf16>, vector<8x256xf32> -> vector<8x256xf32>
    %c3_32 = arith.constant 3 : index
    %c0_33 = arith.constant 0 : index
    %c0_34 = arith.constant 0 : index
    %29 = vector.load %arg4[%c3_32, %c0_33, %c0_34] : memref<4x8x256xf32, #tpu.memory_space<vmem>>, vector<1x8x256xf32>
    %30 = vector.shape_cast %29 : vector<1x8x256xf32> to vector<8x256xf32>
    %31 = vector.shape_cast %28 : vector<8x256xf32> to vector<1x8x256xf32>
    tpu.vector_store %arg4[%c3_32, %c0_33, %c0_34], %31 {strides = array<i32>} : memref<4x8x256xf32, #tpu.memory_space<vmem>>, vector<1x8x256xf32>,
    %c0_35 = arith.constant 0 : index
    %c0_36 = arith.constant 0 : index
    %c0_37 = arith.constant 0 : index
    %32 = vector.load %arg4[%c0_35, %c0_36, %c0_37] : memref<4x8x256xf32, #tpu.memory_space<vmem>>, vector<4x8x256xf32>
    %cst_38 = arith.constant dense<0.000000e+00> : vector<4x8xf32>
    %33 = vector.multi_reduction <add>, %32, %cst_38 [2] : vector<4x8x256xf32> to vector<4x8xf32>
    %34 = vector.shape_cast %33 : vector<4x8xf32> to vector<4x8x1xf32>
    %cst_39 = arith.constant 2.560000e+02 : f32
    %35 = vector.broadcast %cst_39 : f32 to vector<4x8x1xf32>
    %36 = arith.divf %34, %35 : vector<4x8x1xf32>
    %cst_40 = arith.constant dense<0.000000e+00> : vector<8x1xf32>
    %37 = vector.multi_reduction <add>, %36, %cst_40 [0] : vector<4x8x1xf32> to vector<8x1xf32>
    %38 = vector.shape_cast %37 : vector<8x1xf32> to vector<1x8x1xf32>
    %cst_41 = arith.constant 4.000000e+00 : f32
    %39 = vector.broadcast %cst_41 : f32 to vector<1x8x1xf32>
    %40 = arith.divf %38, %39 : vector<1x8x1xf32>
    %41 = arith.mulf %32, %32 : vector<4x8x256xf32>
    %cst_42 = arith.constant dense<0.000000e+00> : vector<4x8xf32>
    %42 = vector.multi_reduction <add>, %41, %cst_42 [2] : vector<4x8x256xf32> to vector<4x8xf32>
    %43 = vector.shape_cast %42 : vector<4x8xf32> to vector<4x8x1xf32>
    %cst_43 = arith.constant 2.560000e+02 : f32
    %44 = vector.broadcast %cst_43 : f32 to vector<4x8x1xf32>
    %45 = arith.divf %43, %44 : vector<4x8x1xf32>
    %cst_44 = arith.constant dense<0.000000e+00> : vector<8x1xf32>
    %46 = vector.multi_reduction <add>, %45, %cst_44 [0] : vector<4x8x1xf32> to vector<8x1xf32>
    %47 = vector.shape_cast %46 : vector<8x1xf32> to vector<1x8x1xf32>
    %cst_45 = arith.constant 4.000000e+00 : f32
    %48 = vector.broadcast %cst_45 : f32 to vector<1x8x1xf32>
    %49 = arith.divf %47, %48 : vector<1x8x1xf32>
    %50 = arith.mulf %40, %40 : vector<1x8x1xf32>
    %51 = arith.subf %49, %50 : vector<1x8x1xf32>
    %cst_46 = arith.constant 0.000000e+00 : f32
    %52 = vector.broadcast %cst_46 : f32 to vector<1x8x1xf32>
    %53 = arith.maximumf %51, %52 : vector<1x8x1xf32>
    %cst_47 = arith.constant 9.99999974E-6 : f32
    %54 = vector.broadcast %cst_47 : f32 to vector<1x8x1xf32>
    %55 = arith.addf %53, %54 : vector<1x8x1xf32>
    %56 = math.rsqrt %55 : vector<1x8x1xf32>
    %c0_48 = arith.constant 0 : index
    %c0_49 = arith.constant 0 : index
    %57 = vector.load %arg3[%c0_48, %c0_49] : memref<8x1xf32, #tpu.memory_space<vmem>>, vector<8x1xf32>
    %58 = vector.shape_cast %57 : vector<8x1xf32> to vector<1x8x1xf32>
    %59 = vector.broadcast %56 : vector<1x8x1xf32> to vector<4x8x256xf32>
    %60 = arith.mulf %32, %59 : vector<4x8x256xf32>
    %61 = arith.mulf %40, %56 : vector<1x8x1xf32>
    %62 = arith.subf %58, %61 : vector<1x8x1xf32>
    %63 = vector.broadcast %62 : vector<1x8x1xf32> to vector<4x8x256xf32>
    %64 = arith.addf %60, %63 : vector<4x8x256xf32>
    %cst_50 = arith.constant 0.000000e+00 : f32
    %65 = vector.broadcast %cst_50 : f32 to vector<4x8x256xf32>
    %66 = arith.cmpf oge, %64, %65 : vector<4x8x256xf32>
    %cst_51 = arith.constant 0.00999999977 : f32
    %67 = vector.broadcast %cst_51 : f32 to vector<4x8x256xf32>
    %68 = arith.mulf %67, %64 : vector<4x8x256xf32>
    %69 = arith.select %66, %64, %68 : vector<4x8x256xi1>, vector<4x8x256xf32>
    %c0_52 = arith.constant 0 : index
    %c0_53 = arith.constant 0 : index
    %c0_54 = arith.constant 0 : index
    %70 = vector.load %arg4[%c0_52, %c0_53, %c0_54] : memref<4x8x256xf32, #tpu.memory_space<vmem>>, vector<4x8x256xf32>
    tpu.vector_store %arg4[%c0_52, %c0_53, %c0_54], %69 {strides = array<i32>} : memref<4x8x256xf32, #tpu.memory_space<vmem>>, vector<4x8x256xf32>,
    return
  }
  func.func @transform_0(%arg0: i32) -> (i32, i32, i32) {
    %c0_i32 = arith.constant 0 : i32
    %c0_i32_0 = arith.constant 0 : i32
    %c0_i32_1 = arith.constant 0 : i32
    return %c0_i32, %arg0, %c0_i32_0 : i32, i32, i32
  }
  func.func @transform_1(%arg0: i32) -> (i32, i32, i32) {
    %c0_i32 = arith.constant 0 : i32
    %c0_i32_0 = arith.constant 0 : i32
    %c0_i32_1 = arith.constant 0 : i32
    %c0_i32_2 = arith.constant 0 : i32
    return %c0_i32, %c0_i32_0, %c0_i32_1 : i32, i32, i32
  }
  func.func @transform_2(%arg0: i32) -> (i32, i32) {
    %c0_i32 = arith.constant 0 : i32
    %c0_i32_0 = arith.constant 0 : i32
    return %arg0, %c0_i32 : i32, i32
  }
  func.func @transform_3(%arg0: i32) -> (i32, i32, i32) {
    %c0_i32 = arith.constant 0 : i32
    %c0_i32_0 = arith.constant 0 : i32
    %c0_i32_1 = arith.constant 0 : i32
    return %c0_i32, %arg0, %c0_i32_0 : i32, i32, i32
  }
}

module attributes {stable_mosaic.version = 11 : i64} {
  func.func @kernel(%arg0: i32, %arg1: memref<4x16x64xbf16, #tpu.memory_space<vmem>>, %arg2: memref<4x64x1024xbf16, #tpu.memory_space<vmem>>, %arg3: memref<16x1xf32, #tpu.memory_space<vmem>>, %arg4: memref<4x16xbf16, #tpu.memory_space<vmem>>, %arg5: memref<4x1xf32, #tpu.memory_space<vmem>>, %arg6: memref<4x4x1024xf32, #tpu.memory_space<vmem>>, %arg7: memref<4x16x1024xf32, #tpu.memory_space<vmem>>) attributes {dimension_semantics = [#tpu.dimension_semantics<arbitrary>], iteration_bounds = array<i64: 1>, scalar_prefetch = 0 : i64, scratch_operands = 1 : i64, tpu.core_type = #tpu.core_type<tc>, window_params = [{pipeline_mode = #tpu.pipeline_mode<synchronous>, transform_indices = @transform_0, window_bounds = array<i64: 4, 16, 64>}, {pipeline_mode = #tpu.pipeline_mode<synchronous>, transform_indices = @transform_1, window_bounds = array<i64: 4, 64, 1024>}, {pipeline_mode = #tpu.pipeline_mode<synchronous>, transform_indices = @transform_2, window_bounds = array<i64: 16, 1>}, {pipeline_mode = #tpu.pipeline_mode<synchronous>, transform_indices = @transform_3, window_bounds = array<i64: 4, 16>}, {pipeline_mode = #tpu.pipeline_mode<synchronous>, transform_indices = @transform_4, window_bounds = array<i64: 4, 1>}, {pipeline_mode = #tpu.pipeline_mode<synchronous>, transform_indices = @transform_5, window_bounds = array<i64: 4, 4, 1024>}]} {
    %c0 = arith.constant 0 : index
    %c0_0 = arith.constant 0 : index
    %c0_1 = arith.constant 0 : index
    %0 = vector.load %arg1[%c0, %c0_0, %c0_1] : memref<4x16x64xbf16, #tpu.memory_space<vmem>>, vector<1x16x64xbf16>
    %1 = vector.shape_cast %0 : vector<1x16x64xbf16> to vector<16x64xbf16>
    %c0_2 = arith.constant 0 : index
    %c0_3 = arith.constant 0 : index
    %c0_4 = arith.constant 0 : index
    %2 = vector.load %arg2[%c0_2, %c0_3, %c0_4] : memref<4x64x1024xbf16, #tpu.memory_space<vmem>>, vector<1x64x1024xbf16>
    %3 = vector.shape_cast %2 : vector<1x64x1024xbf16> to vector<64x1024xbf16>
    %cst = arith.constant dense<0.000000e+00> : vector<16x1024xf32>
    %4 = tpu.matmul %1, %3, %cst {dimension_numbers = #tpu.dot_dimension_numbers<[1], [0], [0], [1], [0, 0, 1, 1], [], []>} : vector<16x64xbf16>, vector<64x1024xbf16>, vector<16x1024xf32> -> vector<16x1024xf32>
    %c0_5 = arith.constant 0 : index
    %c0_6 = arith.constant 0 : index
    %c0_7 = arith.constant 0 : index
    %5 = vector.load %arg7[%c0_5, %c0_6, %c0_7] : memref<4x16x1024xf32, #tpu.memory_space<vmem>>, vector<1x16x1024xf32>
    %6 = vector.shape_cast %5 : vector<1x16x1024xf32> to vector<16x1024xf32>
    %7 = vector.shape_cast %4 : vector<16x1024xf32> to vector<1x16x1024xf32>
    tpu.vector_store %arg7[%c0_5, %c0_6, %c0_7], %7 {strides = array<i32>} : memref<4x16x1024xf32, #tpu.memory_space<vmem>>, vector<1x16x1024xf32>,
    %c1 = arith.constant 1 : index
    %c0_8 = arith.constant 0 : index
    %c0_9 = arith.constant 0 : index
    %8 = vector.load %arg1[%c1, %c0_8, %c0_9] : memref<4x16x64xbf16, #tpu.memory_space<vmem>>, vector<1x16x64xbf16>
    %9 = vector.shape_cast %8 : vector<1x16x64xbf16> to vector<16x64xbf16>
    %c1_10 = arith.constant 1 : index
    %c0_11 = arith.constant 0 : index
    %c0_12 = arith.constant 0 : index
    %10 = vector.load %arg2[%c1_10, %c0_11, %c0_12] : memref<4x64x1024xbf16, #tpu.memory_space<vmem>>, vector<1x64x1024xbf16>
    %11 = vector.shape_cast %10 : vector<1x64x1024xbf16> to vector<64x1024xbf16>
    %cst_13 = arith.constant dense<0.000000e+00> : vector<16x1024xf32>
    %12 = tpu.matmul %9, %11, %cst_13 {dimension_numbers = #tpu.dot_dimension_numbers<[1], [0], [0], [1], [0, 0, 1, 1], [], []>} : vector<16x64xbf16>, vector<64x1024xbf16>, vector<16x1024xf32> -> vector<16x1024xf32>
    %c1_14 = arith.constant 1 : index
    %c0_15 = arith.constant 0 : index
    %c0_16 = arith.constant 0 : index
    %13 = vector.load %arg7[%c1_14, %c0_15, %c0_16] : memref<4x16x1024xf32, #tpu.memory_space<vmem>>, vector<1x16x1024xf32>
    %14 = vector.shape_cast %13 : vector<1x16x1024xf32> to vector<16x1024xf32>
    %15 = vector.shape_cast %12 : vector<16x1024xf32> to vector<1x16x1024xf32>
    tpu.vector_store %arg7[%c1_14, %c0_15, %c0_16], %15 {strides = array<i32>} : memref<4x16x1024xf32, #tpu.memory_space<vmem>>, vector<1x16x1024xf32>,
    %c2 = arith.constant 2 : index
    %c0_17 = arith.constant 0 : index
    %c0_18 = arith.constant 0 : index
    %16 = vector.load %arg1[%c2, %c0_17, %c0_18] : memref<4x16x64xbf16, #tpu.memory_space<vmem>>, vector<1x16x64xbf16>
    %17 = vector.shape_cast %16 : vector<1x16x64xbf16> to vector<16x64xbf16>
    %c2_19 = arith.constant 2 : index
    %c0_20 = arith.constant 0 : index
    %c0_21 = arith.constant 0 : index
    %18 = vector.load %arg2[%c2_19, %c0_20, %c0_21] : memref<4x64x1024xbf16, #tpu.memory_space<vmem>>, vector<1x64x1024xbf16>
    %19 = vector.shape_cast %18 : vector<1x64x1024xbf16> to vector<64x1024xbf16>
    %cst_22 = arith.constant dense<0.000000e+00> : vector<16x1024xf32>
    %20 = tpu.matmul %17, %19, %cst_22 {dimension_numbers = #tpu.dot_dimension_numbers<[1], [0], [0], [1], [0, 0, 1, 1], [], []>} : vector<16x64xbf16>, vector<64x1024xbf16>, vector<16x1024xf32> -> vector<16x1024xf32>
    %c2_23 = arith.constant 2 : index
    %c0_24 = arith.constant 0 : index
    %c0_25 = arith.constant 0 : index
    %21 = vector.load %arg7[%c2_23, %c0_24, %c0_25] : memref<4x16x1024xf32, #tpu.memory_space<vmem>>, vector<1x16x1024xf32>
    %22 = vector.shape_cast %21 : vector<1x16x1024xf32> to vector<16x1024xf32>
    %23 = vector.shape_cast %20 : vector<16x1024xf32> to vector<1x16x1024xf32>
    tpu.vector_store %arg7[%c2_23, %c0_24, %c0_25], %23 {strides = array<i32>} : memref<4x16x1024xf32, #tpu.memory_space<vmem>>, vector<1x16x1024xf32>,
    %c3 = arith.constant 3 : index
    %c0_26 = arith.constant 0 : index
    %c0_27 = arith.constant 0 : index
    %24 = vector.load %arg1[%c3, %c0_26, %c0_27] : memref<4x16x64xbf16, #tpu.memory_space<vmem>>, vector<1x16x64xbf16>
    %25 = vector.shape_cast %24 : vector<1x16x64xbf16> to vector<16x64xbf16>
    %c3_28 = arith.constant 3 : index
    %c0_29 = arith.constant 0 : index
    %c0_30 = arith.constant 0 : index
    %26 = vector.load %arg2[%c3_28, %c0_29, %c0_30] : memref<4x64x1024xbf16, #tpu.memory_space<vmem>>, vector<1x64x1024xbf16>
    %27 = vector.shape_cast %26 : vector<1x64x1024xbf16> to vector<64x1024xbf16>
    %cst_31 = arith.constant dense<0.000000e+00> : vector<16x1024xf32>
    %28 = tpu.matmul %25, %27, %cst_31 {dimension_numbers = #tpu.dot_dimension_numbers<[1], [0], [0], [1], [0, 0, 1, 1], [], []>} : vector<16x64xbf16>, vector<64x1024xbf16>, vector<16x1024xf32> -> vector<16x1024xf32>
    %c3_32 = arith.constant 3 : index
    %c0_33 = arith.constant 0 : index
    %c0_34 = arith.constant 0 : index
    %29 = vector.load %arg7[%c3_32, %c0_33, %c0_34] : memref<4x16x1024xf32, #tpu.memory_space<vmem>>, vector<1x16x1024xf32>
    %30 = vector.shape_cast %29 : vector<1x16x1024xf32> to vector<16x1024xf32>
    %31 = vector.shape_cast %28 : vector<16x1024xf32> to vector<1x16x1024xf32>
    tpu.vector_store %arg7[%c3_32, %c0_33, %c0_34], %31 {strides = array<i32>} : memref<4x16x1024xf32, #tpu.memory_space<vmem>>, vector<1x16x1024xf32>,
    %c0_35 = arith.constant 0 : index
    %c0_36 = arith.constant 0 : index
    %c0_37 = arith.constant 0 : index
    %32 = vector.load %arg7[%c0_35, %c0_36, %c0_37] : memref<4x16x1024xf32, #tpu.memory_space<vmem>>, vector<4x16x1024xf32>
    %cst_38 = arith.constant dense<0.000000e+00> : vector<4x16xf32>
    %33 = vector.multi_reduction <add>, %32, %cst_38 [2] : vector<4x16x1024xf32> to vector<4x16xf32>
    %34 = vector.shape_cast %33 : vector<4x16xf32> to vector<4x16x1xf32>
    %cst_39 = arith.constant 1.024000e+03 : f32
    %35 = vector.broadcast %cst_39 : f32 to vector<4x16x1xf32>
    %36 = arith.divf %34, %35 : vector<4x16x1xf32>
    %cst_40 = arith.constant dense<0.000000e+00> : vector<16x1xf32>
    %37 = vector.multi_reduction <add>, %36, %cst_40 [0] : vector<4x16x1xf32> to vector<16x1xf32>
    %38 = vector.shape_cast %37 : vector<16x1xf32> to vector<1x16x1xf32>
    %cst_41 = arith.constant 4.000000e+00 : f32
    %39 = vector.broadcast %cst_41 : f32 to vector<1x16x1xf32>
    %40 = arith.divf %38, %39 : vector<1x16x1xf32>
    %41 = arith.mulf %32, %32 : vector<4x16x1024xf32>
    %cst_42 = arith.constant dense<0.000000e+00> : vector<4x16xf32>
    %42 = vector.multi_reduction <add>, %41, %cst_42 [2] : vector<4x16x1024xf32> to vector<4x16xf32>
    %43 = vector.shape_cast %42 : vector<4x16xf32> to vector<4x16x1xf32>
    %cst_43 = arith.constant 1.024000e+03 : f32
    %44 = vector.broadcast %cst_43 : f32 to vector<4x16x1xf32>
    %45 = arith.divf %43, %44 : vector<4x16x1xf32>
    %cst_44 = arith.constant dense<0.000000e+00> : vector<16x1xf32>
    %46 = vector.multi_reduction <add>, %45, %cst_44 [0] : vector<4x16x1xf32> to vector<16x1xf32>
    %47 = vector.shape_cast %46 : vector<16x1xf32> to vector<1x16x1xf32>
    %cst_45 = arith.constant 4.000000e+00 : f32
    %48 = vector.broadcast %cst_45 : f32 to vector<1x16x1xf32>
    %49 = arith.divf %47, %48 : vector<1x16x1xf32>
    %50 = arith.mulf %40, %40 : vector<1x16x1xf32>
    %51 = arith.subf %49, %50 : vector<1x16x1xf32>
    %cst_46 = arith.constant 0.000000e+00 : f32
    %52 = vector.broadcast %cst_46 : f32 to vector<1x16x1xf32>
    %53 = arith.maximumf %51, %52 : vector<1x16x1xf32>
    %cst_47 = arith.constant 9.99999974E-6 : f32
    %54 = vector.broadcast %cst_47 : f32 to vector<1x16x1xf32>
    %55 = arith.addf %53, %54 : vector<1x16x1xf32>
    %56 = math.rsqrt %55 : vector<1x16x1xf32>
    %c0_48 = arith.constant 0 : index
    %c0_49 = arith.constant 0 : index
    %57 = vector.load %arg3[%c0_48, %c0_49] : memref<16x1xf32, #tpu.memory_space<vmem>>, vector<16x1xf32>
    %58 = vector.shape_cast %57 : vector<16x1xf32> to vector<1x16x1xf32>
    %59 = vector.broadcast %56 : vector<1x16x1xf32> to vector<4x16x1024xf32>
    %60 = arith.mulf %32, %59 : vector<4x16x1024xf32>
    %61 = arith.mulf %40, %56 : vector<1x16x1xf32>
    %62 = arith.subf %58, %61 : vector<1x16x1xf32>
    %63 = vector.broadcast %62 : vector<1x16x1xf32> to vector<4x16x1024xf32>
    %64 = arith.addf %60, %63 : vector<4x16x1024xf32>
    %cst_50 = arith.constant 0.000000e+00 : f32
    %65 = vector.broadcast %cst_50 : f32 to vector<4x16x1024xf32>
    %66 = arith.cmpf oge, %64, %65 : vector<4x16x1024xf32>
    %cst_51 = arith.constant 0.00999999977 : f32
    %67 = vector.broadcast %cst_51 : f32 to vector<4x16x1024xf32>
    %68 = arith.mulf %67, %64 : vector<4x16x1024xf32>
    %69 = arith.select %66, %64, %68 : vector<4x16x1024xi1>, vector<4x16x1024xf32>
    %c0_52 = arith.constant 0 : index
    %c0_53 = arith.constant 0 : index
    %70 = vector.load %arg4[%c0_52, %c0_53] : memref<4x16xbf16, #tpu.memory_space<vmem>>, vector<4x16xbf16>
    %71 = vector.extract_strided_slice %69 {offsets = [0, 0, 0], sizes = [1, 16, 1024], strides = [1, 1, 1]} : vector<4x16x1024xf32> to vector<1x16x1024xf32>
    %72 = vector.shape_cast %71 : vector<1x16x1024xf32> to vector<16x1024xf32>
    %73 = arith.truncf %72 : vector<16x1024xf32> to vector<16x1024xbf16>
    %cst_54 = arith.constant dense<0.000000e+00> : vector<4x1024xf32>
    %74 = tpu.matmul %70, %73, %cst_54 {dimension_numbers = #tpu.dot_dimension_numbers<[1], [0], [0], [1], [0, 0, 1, 1], [], []>} : vector<4x16xbf16>, vector<16x1024xbf16>, vector<4x1024xf32> -> vector<4x1024xf32>
    %c0_55 = arith.constant 0 : index
    %c0_56 = arith.constant 0 : index
    %75 = vector.load %arg5[%c0_55, %c0_56] : memref<4x1xf32, #tpu.memory_space<vmem>>, vector<4x1xf32>
    %76 = vector.broadcast %75 : vector<4x1xf32> to vector<4x1024xf32>
    %77 = arith.addf %74, %76 : vector<4x1024xf32>
    %78 = math.tanh %77 : vector<4x1024xf32>
    %c0_57 = arith.constant 0 : index
    %c0_58 = arith.constant 0 : index
    %c0_59 = arith.constant 0 : index
    %79 = vector.load %arg6[%c0_57, %c0_58, %c0_59] : memref<4x4x1024xf32, #tpu.memory_space<vmem>>, vector<1x4x1024xf32>
    %80 = vector.shape_cast %79 : vector<1x4x1024xf32> to vector<4x1024xf32>
    %81 = vector.shape_cast %78 : vector<4x1024xf32> to vector<1x4x1024xf32>
    tpu.vector_store %arg6[%c0_57, %c0_58, %c0_59], %81 {strides = array<i32>} : memref<4x4x1024xf32, #tpu.memory_space<vmem>>, vector<1x4x1024xf32>,
    %c0_60 = arith.constant 0 : index
    %c0_61 = arith.constant 0 : index
    %82 = vector.load %arg4[%c0_60, %c0_61] : memref<4x16xbf16, #tpu.memory_space<vmem>>, vector<4x16xbf16>
    %83 = vector.extract_strided_slice %69 {offsets = [1, 0, 0], sizes = [1, 16, 1024], strides = [1, 1, 1]} : vector<4x16x1024xf32> to vector<1x16x1024xf32>
    %84 = vector.shape_cast %83 : vector<1x16x1024xf32> to vector<16x1024xf32>
    %85 = arith.truncf %84 : vector<16x1024xf32> to vector<16x1024xbf16>
    %cst_62 = arith.constant dense<0.000000e+00> : vector<4x1024xf32>
    %86 = tpu.matmul %82, %85, %cst_62 {dimension_numbers = #tpu.dot_dimension_numbers<[1], [0], [0], [1], [0, 0, 1, 1], [], []>} : vector<4x16xbf16>, vector<16x1024xbf16>, vector<4x1024xf32> -> vector<4x1024xf32>
    %c0_63 = arith.constant 0 : index
    %c0_64 = arith.constant 0 : index
    %87 = vector.load %arg5[%c0_63, %c0_64] : memref<4x1xf32, #tpu.memory_space<vmem>>, vector<4x1xf32>
    %88 = vector.broadcast %87 : vector<4x1xf32> to vector<4x1024xf32>
    %89 = arith.addf %86, %88 : vector<4x1024xf32>
    %90 = math.tanh %89 : vector<4x1024xf32>
    %c1_65 = arith.constant 1 : index
    %c0_66 = arith.constant 0 : index
    %c0_67 = arith.constant 0 : index
    %91 = vector.load %arg6[%c1_65, %c0_66, %c0_67] : memref<4x4x1024xf32, #tpu.memory_space<vmem>>, vector<1x4x1024xf32>
    %92 = vector.shape_cast %91 : vector<1x4x1024xf32> to vector<4x1024xf32>
    %93 = vector.shape_cast %90 : vector<4x1024xf32> to vector<1x4x1024xf32>
    tpu.vector_store %arg6[%c1_65, %c0_66, %c0_67], %93 {strides = array<i32>} : memref<4x4x1024xf32, #tpu.memory_space<vmem>>, vector<1x4x1024xf32>,
    %c0_68 = arith.constant 0 : index
    %c0_69 = arith.constant 0 : index
    %94 = vector.load %arg4[%c0_68, %c0_69] : memref<4x16xbf16, #tpu.memory_space<vmem>>, vector<4x16xbf16>
    %95 = vector.extract_strided_slice %69 {offsets = [2, 0, 0], sizes = [1, 16, 1024], strides = [1, 1, 1]} : vector<4x16x1024xf32> to vector<1x16x1024xf32>
    %96 = vector.shape_cast %95 : vector<1x16x1024xf32> to vector<16x1024xf32>
    %97 = arith.truncf %96 : vector<16x1024xf32> to vector<16x1024xbf16>
    %cst_70 = arith.constant dense<0.000000e+00> : vector<4x1024xf32>
    %98 = tpu.matmul %94, %97, %cst_70 {dimension_numbers = #tpu.dot_dimension_numbers<[1], [0], [0], [1], [0, 0, 1, 1], [], []>} : vector<4x16xbf16>, vector<16x1024xbf16>, vector<4x1024xf32> -> vector<4x1024xf32>
    %c0_71 = arith.constant 0 : index
    %c0_72 = arith.constant 0 : index
    %99 = vector.load %arg5[%c0_71, %c0_72] : memref<4x1xf32, #tpu.memory_space<vmem>>, vector<4x1xf32>
    %100 = vector.broadcast %99 : vector<4x1xf32> to vector<4x1024xf32>
    %101 = arith.addf %98, %100 : vector<4x1024xf32>
    %102 = math.tanh %101 : vector<4x1024xf32>
    %c2_73 = arith.constant 2 : index
    %c0_74 = arith.constant 0 : index
    %c0_75 = arith.constant 0 : index
    %103 = vector.load %arg6[%c2_73, %c0_74, %c0_75] : memref<4x4x1024xf32, #tpu.memory_space<vmem>>, vector<1x4x1024xf32>
    %104 = vector.shape_cast %103 : vector<1x4x1024xf32> to vector<4x1024xf32>
    %105 = vector.shape_cast %102 : vector<4x1024xf32> to vector<1x4x1024xf32>
    tpu.vector_store %arg6[%c2_73, %c0_74, %c0_75], %105 {strides = array<i32>} : memref<4x4x1024xf32, #tpu.memory_space<vmem>>, vector<1x4x1024xf32>,
    %c0_76 = arith.constant 0 : index
    %c0_77 = arith.constant 0 : index
    %106 = vector.load %arg4[%c0_76, %c0_77] : memref<4x16xbf16, #tpu.memory_space<vmem>>, vector<4x16xbf16>
    %107 = vector.extract_strided_slice %69 {offsets = [3, 0, 0], sizes = [1, 16, 1024], strides = [1, 1, 1]} : vector<4x16x1024xf32> to vector<1x16x1024xf32>
    %108 = vector.shape_cast %107 : vector<1x16x1024xf32> to vector<16x1024xf32>
    %109 = arith.truncf %108 : vector<16x1024xf32> to vector<16x1024xbf16>
    %cst_78 = arith.constant dense<0.000000e+00> : vector<4x1024xf32>
    %110 = tpu.matmul %106, %109, %cst_78 {dimension_numbers = #tpu.dot_dimension_numbers<[1], [0], [0], [1], [0, 0, 1, 1], [], []>} : vector<4x16xbf16>, vector<16x1024xbf16>, vector<4x1024xf32> -> vector<4x1024xf32>
    %c0_79 = arith.constant 0 : index
    %c0_80 = arith.constant 0 : index
    %111 = vector.load %arg5[%c0_79, %c0_80] : memref<4x1xf32, #tpu.memory_space<vmem>>, vector<4x1xf32>
    %112 = vector.broadcast %111 : vector<4x1xf32> to vector<4x1024xf32>
    %113 = arith.addf %110, %112 : vector<4x1024xf32>
    %114 = math.tanh %113 : vector<4x1024xf32>
    %c3_81 = arith.constant 3 : index
    %c0_82 = arith.constant 0 : index
    %c0_83 = arith.constant 0 : index
    %115 = vector.load %arg6[%c3_81, %c0_82, %c0_83] : memref<4x4x1024xf32, #tpu.memory_space<vmem>>, vector<1x4x1024xf32>
    %116 = vector.shape_cast %115 : vector<1x4x1024xf32> to vector<4x1024xf32>
    %117 = vector.shape_cast %114 : vector<4x1024xf32> to vector<1x4x1024xf32>
    tpu.vector_store %arg6[%c3_81, %c0_82, %c0_83], %117 {strides = array<i32>} : memref<4x4x1024xf32, #tpu.memory_space<vmem>>, vector<1x4x1024xf32>,
    return
  }
  func.func @transform_0(%arg0: i32) -> (i32, i32, i32) {
    %c0_i32 = arith.constant 0 : i32
    %c0_i32_0 = arith.constant 0 : i32
    %c0_i32_1 = arith.constant 0 : i32
    %c0_i32_2 = arith.constant 0 : i32
    return %c0_i32, %c0_i32_0, %c0_i32_1 : i32, i32, i32
  }
  func.func @transform_1(%arg0: i32) -> (i32, i32, i32) {
    %c0_i32 = arith.constant 0 : i32
    %c0_i32_0 = arith.constant 0 : i32
    %c0_i32_1 = arith.constant 0 : i32
    %c0_i32_2 = arith.constant 0 : i32
    return %c0_i32, %c0_i32_0, %c0_i32_1 : i32, i32, i32
  }
  func.func @transform_2(%arg0: i32) -> (i32, i32) {
    %c0_i32 = arith.constant 0 : i32
    %c0_i32_0 = arith.constant 0 : i32
    %c0_i32_1 = arith.constant 0 : i32
    return %c0_i32, %c0_i32_0 : i32, i32
  }
  func.func @transform_3(%arg0: i32) -> (i32, i32) {
    %c0_i32 = arith.constant 0 : i32
    %c0_i32_0 = arith.constant 0 : i32
    %c0_i32_1 = arith.constant 0 : i32
    return %c0_i32, %c0_i32_0 : i32, i32
  }
  func.func @transform_4(%arg0: i32) -> (i32, i32) {
    %c0_i32 = arith.constant 0 : i32
    %c0_i32_0 = arith.constant 0 : i32
    %c0_i32_1 = arith.constant 0 : i32
    return %c0_i32, %c0_i32_0 : i32, i32
  }
  func.func @transform_5(%arg0: i32) -> (i32, i32, i32) {
    %c0_i32 = arith.constant 0 : i32
    %c0_i32_0 = arith.constant 0 : i32
    %c0_i32_1 = arith.constant 0 : i32
    %c0_i32_2 = arith.constant 0 : i32
    return %c0_i32, %c0_i32_0, %c0_i32_1 : i32, i32, i32
  }
}

</mosaic_0001>

<llo_original>
// kernel: covae_forward.6
$region0: #{covae_forward.6}
  #allocation0 [shape = 'u32[]', space=smem, size = 0x4, offset = 0x4, fixed_abs, tag = 'smem constant byte address 0x4 - core index']
  #allocation1 [shape = 'u32[144,128]{1,0:T(1,128)}', space=vmem, size = 0x12000, scoped, tag = 'internal scratch']
  %s0 = inlined_call_operand.hbm [shape: bf16[16,100], index: 0, kind: input, shape index: {}]
  %s1 = inlined_call_operand.hbm [shape: bf16[100,512], index: 1, kind: input, shape index: {}]
  %s2 = inlined_call_operand.hbm [shape: f32[16,1], index: 2, kind: input, shape index: {}]
  %s3 = inlined_call_operand.hbm [shape: f32[16,512], index: 3, kind: output, shape index: {}]
  %s4 = sld [smem:[#allocation0]]
  $region57: #{covae_forward.6} parent=0
    _
  %s6 = ssub.s32 1, %s4
  %s7 = scalar_select 0, %s6, %s4
  $region1: #{covae_forward.6} parent=0
    #allocation2 [shape = 'u8[4096]{0}', space=vmem, size = 0x1000, scoped, tag = 'input window, operand 0']
    #allocation3 [shape = 's32[2]{0}', space=sflag, size = 0x8, scoped, tag = 'scoped memory for covae_forward.6']
    #allocation4 [shape = 's32[2]{0}', space=sflag, size = 0x8, scoped, tag = 'scoped memory for covae_forward.6']
    #allocation5 [shape = 'u8[106496]{0}', space=vmem, size = 0x1a000, scoped, tag = 'input window, operand 1, single buffered']
    #allocation6 [shape = 's32[1]{0}', space=sflag, size = 0x4, scoped, tag = 'scoped memory for covae_forward.6']
    #allocation7 [shape = 'u8[8192]{0}', space=vmem, size = 0x2000, scoped, tag = 'input window, operand 2']
    #allocation8 [shape = 'u8[32768]{0}', space=vmem, size = 0x8000, scoped, tag = 'output window, operand 0']
    %8 = vsyncpa [#allocation3], 0
    %s9 = scalar_lea.sflag [#allocation3], 1
    %10 = vsyncpa %s9, 0
    %11 = vsyncpa [#allocation6], 0
    %12 = vsyncpa [#allocation4], 0
    %s13 = scalar_lea.sflag [#allocation4], 1
    %14 = vsyncpa %s13, 0
    loop: start=0, step=1, limit=4
    $region2: #{covae_forward.6} parent=1 // loop_pre_header
      _
    $region3: #{covae_forward.6} parent=1 // loop_header
      %s16 = sphi 0, %s20
      %p17 = scmp.ge.s32.totalorder %s16, 4
      %s26 = sphi 0, %s28
      %s29 = sphi 0, %s26
      %s30 = sphi 0, %s29
      %s46 = sphi 0, %s30
      %s50 = sphi 0, %s50
      %s52 = sphi 0, %s50
      %s53 = sphi 0, %s52
      %s67 = sphi 0, %s53
      %s73 = sphi 0, %s75
      %s76 = sphi 0, %s73
      %s77 = sphi 0, %s76
      %s93 = sphi 0, %s77
      %s99 = sphi 0, %s101
      %s102 = sphi 0, %s99
      %s103 = sphi 0, %s102
      %s119 = sphi 0, %s103
    $region4: #{covae_forward.6} parent=1 // loop_header_branch
      %19 = sbr.rel (%p17) target = $region8
    $region5: #{covae_forward.6} parent=1 // loop_body
      %s21 = ssub.s32 %s16, 1
      %s22 = ssub.s32 %s16, 2
      %s23 = sadd.s32 %s16, 1
      %s24 = ssub.s32 %s16, %s23
      %p25 = scmp.eq.s32.totalorder %s24, 0
      %s27 = sadd.s32 %s26, 1
      %s28 = scalar_select %p25, %s26, %s27
      %p31 = pneg %p25
      %p32 = scmp.eq.s32.totalorder %s16, 1
      %p33 = por %p31, %p32
      %p34 = scmp.ne.s32.totalorder %s26, %s29
      %p35 = scmp.eq.s32.totalorder %s16, 0
      %p36 = por %p34, %p35
      %p37 = scmp.ne.s32.totalorder %s26, %s29
      %p38 = scmp.eq.s32.totalorder %s21, 1
      %p39 = por %p37, %p38
      %p40 = scmp.ne.s32.totalorder %s29, %s30
      %p41 = scmp.eq.s32.totalorder %s21, 0
      %p42 = por %p40, %p41
      %p43 = scmp.ne.s32.totalorder %s29, %s30
      %p44 = scmp.eq.s32.totalorder %s22, 1
      %p45 = por %p43, %p44
      %p47 = scmp.ne.s32.totalorder %s30, %s46
      %p48 = scmp.eq.s32.totalorder %s22, 0
      %p49 = por %p47, %p48
      %s51 = sadd.s32 %s50, 1
      %p54 = scmp.eq.s32.totalorder %s16, 1
      %p55 = scmp.ne.s32.totalorder %s50, %s52
      %p56 = scmp.eq.s32.totalorder %s16, 0
      %p57 = por %p55, %p56
      %p58 = scmp.ne.s32.totalorder %s50, %s52
      %p59 = scmp.eq.s32.totalorder %s21, 1
      %p60 = por %p58, %p59
      %p61 = scmp.ne.s32.totalorder %s52, %s53
      %p62 = scmp.eq.s32.totalorder %s21, 0
      %p63 = por %p61, %p62
      %p64 = scmp.ne.s32.totalorder %s52, %s53
      %p65 = scmp.eq.s32.totalorder %s22, 1
      %p66 = por %p64, %p65
      %p68 = scmp.ne.s32.totalorder %s53, %s67
      %p69 = scmp.eq.s32.totalorder %s22, 0
      %p70 = por %p68, %p69
      %s71 = ssub.s32 %s16, %s23
      %p72 = scmp.eq.s32.totalorder %s71, 0
      %s74 = sadd.s32 %s73, 1
      %s75 = scalar_select %p72, %s73, %s74
      %p78 = pneg %p72
      %p79 = scmp.eq.s32.totalorder %s16, 1
      %p80 = por %p78, %p79
      %p81 = scmp.ne.s32.totalorder %s73, %s76
      %p82 = scmp.eq.s32.totalorder %s16, 0
      %p83 = por %p81, %p82
      %p84 = scmp.ne.s32.totalorder %s73, %s76
      %p85 = scmp.eq.s32.totalorder %s21, 1
      %p86 = por %p84, %p85
      %p87 = scmp.ne.s32.totalorder %s76, %s77
      %p88 = scmp.eq.s32.totalorder %s21, 0
      %p89 = por %p87, %p88
      %p90 = scmp.ne.s32.totalorder %s76, %s77
      %p91 = scmp.eq.s32.totalorder %s22, 1
      %p92 = por %p90, %p91
      %p94 = scmp.ne.s32.totalorder %s77, %s93
      %p95 = scmp.eq.s32.totalorder %s22, 0
      %p96 = por %p94, %p95
      %s97 = ssub.s32 %s16, %s23
      %p98 = scmp.eq.s32.totalorder %s97, 0
      %s100 = sadd.s32 %s99, 1
      %s101 = scalar_select %p98, %s99, %s100
      %p104 = pneg %p98
      %p105 = scmp.eq.s32.totalorder %s16, 1
      %p106 = por %p104, %p105
      %p107 = scmp.ne.s32.totalorder %s99, %s102
      %p108 = scmp.eq.s32.totalorder %s16, 0
      %p109 = por %p107, %p108
      %p110 = scmp.ne.s32.totalorder %s99, %s102
      %p111 = scmp.eq.s32.totalorder %s21, 1
      %p112 = por %p110, %p111
      %p113 = scmp.ne.s32.totalorder %s102, %s103
      %p114 = scmp.eq.s32.totalorder %s21, 0
      %p115 = por %p113, %p114
      %p116 = scmp.ne.s32.totalorder %s102, %s103
      %p117 = scmp.eq.s32.totalorder %s22, 1
      %p118 = por %p116, %p117
      %p120 = scmp.ne.s32.totalorder %s103, %s119
      %p121 = scmp.eq.s32.totalorder %s22, 0
      %p122 = por %p120, %p121
      %p123 = scmp.le.s32.totalorder 1, %s16
      %p124 = scmp.lt.s32.totalorder %s16, 3
      %p125 = pnand %p123, %p124
      %p126 = pneg %p125
      // Predicated region
      $region9: #{covae_forward.6} parent=5 // pred_check
        _
      $region10: #{covae_forward.6} parent=5 // pred_check_branch
        %128 = sbr.rel (%p125) target = $region12
      $region11: #{covae_forward.6} parent=5 // pred_region
        %s129 = ssub.s32 %s16, 1
        // Predicated region
        $region13: #{covae_forward.6} parent=11 // pred_check
          %p130 = pneg %p63
        $region14: #{covae_forward.6} parent=11 // pred_check_branch
          %132 = sbr.rel (%p130) target = $region16
        $region15: #{covae_forward.6} parent=11 // pred_region
          %s134 = ssub.s32 3328, 3328
          %135 = vsyncadd [#allocation6], %s134
          %s136 = sshll.u32 [#allocation5], 4
          %s137 = int_to_ptr.vmem [resolvable:$true] %s136
          %142 = dma.hbm_to_vmem [thread:$0]  %s1, 3328, %s137, [#allocation6], 256, 256, 16
        $region16: #{covae_forward.6} parent=11 // pred_fallthru
          _
      $region12: #{covae_forward.6} parent=5 // pred_fallthru
        _
      %p143 = scmp.lt.s32.totalorder %s16, 2
      // Predicated region
      $region17: #{covae_forward.6} parent=5 // pred_check
        %p144 = pneg %p143
      $region18: #{covae_forward.6} parent=5 // pred_check_branch
        %146 = sbr.rel (%p144) target = $region20
      $region19: #{covae_forward.6} parent=5 // pred_region
        // Predicated region
        $region21: #{covae_forward.6} parent=19 // pred_check
          %p147 = pneg %p36
        $region22: #{covae_forward.6} parent=19 // pred_check_branch
          %149 = sbr.rel (%p147) target = $region24
        $region23: #{covae_forward.6} parent=19 // pred_region
          %s150 = sand.u32 %s16, 1
          %s151 = scalar_lea.sflag [#allocation3], %s150
          %s152 = sand.u32 %s26, 1
          %s153 = smul.addr %s152, 4
          %s154 = scalar_lea.vmem [#allocation2], %s153
          %s156 = ssub.s32 64, 64
          %157 = vsyncadd %s151, %s156
          %s158 = smul.addr %s16, 64
          %s159 = scalar_lea.hbm %s0, %s158
          %s161 = sshll.u32 %s154, 4
          %s162 = int_to_ptr.vmem [resolvable:$true] %s161
          %164 = dma.hbm_to_vmem [thread:$0]  %s159, 64, %s162, %s151
        $region24: #{covae_forward.6} parent=19 // pred_fallthru
          _
        // Predicated region
        $region25: #{covae_forward.6} parent=19 // pred_check
          %p165 = pneg %p83
        $region26: #{covae_forward.6} parent=19 // pred_check_branch
          %167 = sbr.rel (%p165) target = $region28
        $region27: #{covae_forward.6} parent=19 // pred_region
          %s168 = sand.u32 %s16, 1
          %s169 = scalar_lea.sflag [#allocation3], %s168
          %s170 = sand.u32 %s73, 1
          %s171 = smul.addr %s170, 8
          %s172 = scalar_lea.vmem [#allocation7], %s171
          %s174 = ssub.s32 128, 128
          %175 = vsyncadd %s169, %s174
          %s176 = smul.addr %s16, 128
          %s177 = scalar_lea.hbm %s2, %s176
          %s179 = sshll.u32 %s172, 4
          %s180 = int_to_ptr.vmem [resolvable:$true] %s179
          %182 = dma.hbm_to_vmem [thread:$0]  %s177, 128, %s180, %s169
        $region28: #{covae_forward.6} parent=19 // pred_fallthru
          _
      $region20: #{covae_forward.6} parent=5 // pred_fallthru
        _
      %p183 = scmp.le.s32.totalorder 1, %s16
      %p184 = scmp.lt.s32.totalorder %s16, 3
      %p185 = pnand %p183, %p184
      %p186 = pneg %p185
      // Predicated region
      $region29: #{covae_forward.6} parent=5 // pred_check
        _
      $region30: #{covae_forward.6} parent=5 // pred_check_branch
        %188 = sbr.rel (%p185) target = $region32
      $region31: #{covae_forward.6} parent=5 // pred_region
        %s189 = ssub.s32 %s16, 1
        %s190 = sand.u32 %s21, 1
        %s191 = scalar_lea.sflag [#allocation3], %s190
        %s192 = sand.u32 %s29, 1
        %s193 = smul.addr %s192, 4
        %s194 = scalar_lea.vmem [#allocation2], %s193
        // Predicated region
        $region33: #{covae_forward.6} parent=31 // pred_check
          %p195 = pneg %p42
        $region34: #{covae_forward.6} parent=31 // pred_check_branch
          %197 = sbr.rel (%p195) target = $region36
        $region35: #{covae_forward.6} parent=31 // pred_region
          %198 = dma.done %s191, 64
        $region36: #{covae_forward.6} parent=31 // pred_fallthru
          _
        // Predicated region
        $region37: #{covae_forward.6} parent=31 // pred_check
          %p199 = pneg %p63
        $region38: #{covae_forward.6} parent=31 // pred_check_branch
          %201 = sbr.rel (%p199) target = $region40
        $region39: #{covae_forward.6} parent=31 // pred_region
          %202 = dma.done [#allocation6], 3328
        $region40: #{covae_forward.6} parent=31 // pred_fallthru
          _
        %s203 = sand.u32 %s21, 1
        %s204 = scalar_lea.sflag [#allocation3], %s203
        %s205 = sand.u32 %s76, 1
        %s206 = smul.addr %s205, 8
        %s207 = scalar_lea.vmem [#allocation7], %s206
        // Predicated region
        $region41: #{covae_forward.6} parent=31 // pred_check
          %p208 = pneg %p89
        $region42: #{covae_forward.6} parent=31 // pred_check_branch
          %210 = sbr.rel (%p208) target = $region44
        $region43: #{covae_forward.6} parent=31 // pred_region
          %211 = dma.done %s204, 128
        $region44: #{covae_forward.6} parent=31 // pred_fallthru
          _
        %s212 = sand.u32 %s21, 1
        %s213 = scalar_lea.sflag [#allocation3], %s212
        %s214 = sand.u32 %s29, 1
        %s215 = smul.addr %s214, 4
        %s216 = scalar_lea.vmem [#allocation2], %s215
        %p217 = pneg %p42
        %p218 = pneg %p39
        %p219 = pneg %p63
        %p220 = pneg %p60
        %s221 = sand.u32 %s21, 1
        %s222 = scalar_lea.sflag [#allocation3], %s221
        %s223 = sand.u32 %s76, 1
        %s224 = smul.addr %s223, 8
        %s225 = scalar_lea.vmem [#allocation7], %s224
        %p226 = pneg %p89
        %p227 = pneg %p86
        %p228 = pneg %p115
        %p229 = pneg %p112
        %s230 = sand.u32 %s102, 1
        %s231 = scalar_lea.sflag [#allocation4], %s230
        %s232 = sand.u32 %s102, 1
        %s233 = smul.addr %s232, 32
        %s234 = scalar_lea.vmem [#allocation8], %s233
        %v236 = vld [vmem:[%s194] sm:$0xf]
        %v237 = vld [vmem:[#allocation5] sm:$0xff]
        %v238 = vld [vmem:[#allocation5 + $0x8] sm:$0xff]
        %v239 = vld [vmem:[#allocation5 + $0x10] sm:$0xff]
        %v240 = vld [vmem:[#allocation5 + $0x18] sm:$0xff]
        %v241 = vld [vmem:[#allocation5 + $0x20] sm:$0xff]
        %v242 = vld [vmem:[#allocation5 + $0x28] sm:$0xff]
        %v243 = vld [vmem:[#allocation5 + $0x30] sm:$0xff]
        %v244 = vld [vmem:[#allocation5 + $0x38] sm:$0xff]
        %v245 = vld [vmem:[#allocation5 + $0x40] sm:$0xff]
        %v246 = vld [vmem:[#allocation5 + $0x48] sm:$0xff]
        %v247 = vld [vmem:[#allocation5 + $0x50] sm:$0xff]
        %v248 = vld [vmem:[#allocation5 + $0x58] sm:$0xff]
        %v249 = vld [vmem:[#allocation5 + $0x60] sm:$0xff]
        %v250 = vld [vmem:[#allocation5 + $0x68] sm:$0xff]
        %v251 = vld [vmem:[#allocation5 + $0x70] sm:$0xff]
        %v252 = vld [vmem:[#allocation5 + $0x78] sm:$0xff]
        %v253 = vld [vmem:[#allocation5 + $0x80] sm:$0xff]
        %v254 = vld [vmem:[#allocation5 + $0x88] sm:$0xff]
        %v255 = vld [vmem:[#allocation5 + $0x90] sm:$0xff]
        %v256 = vld [vmem:[#allocation5 + $0x98] sm:$0xff]
        %v257 = vld [vmem:[#allocation5 + $0xa0] sm:$0xff]
        %v258 = vld [vmem:[#allocation5 + $0xa8] sm:$0xff]
        %v259 = vld [vmem:[#allocation5 + $0xb0] sm:$0xff]
        %v260 = vld [vmem:[#allocation5 + $0xb8] sm:$0xff]
        %v261 = vld [vmem:[#allocation5 + $0xc0] sm:$0x33]
        %v262 = vld [vmem:[#allocation5 + $0xc8] sm:$0x33]
        %v289 = vunpack.c.l.b16 %v237
        %v290 = vunpack.c.h.b16 %v237
        %v291 = vunpack.c.l.b16 %v238
        %v292 = vunpack.c.h.b16 %v238
        %v293 = vunpack.c.l.b16 %v239
        %v294 = vunpack.c.h.b16 %v239
        %v295 = vunpack.c.l.b16 %v240
        %v296 = vunpack.c.h.b16 %v240
        %v297 = vunpack.c.l.b16 %v241
        %v298 = vunpack.c.h.b16 %v241
        %v299 = vunpack.c.l.b16 %v242
        %v300 = vunpack.c.h.b16 %v242
        %v301 = vunpack.c.l.b16 %v243
        %v302 = vunpack.c.h.b16 %v243
        %v303 = vunpack.c.l.b16 %v244
        %v304 = vunpack.c.h.b16 %v244
        %v305 = vunpack.c.l.b16 %v245
        %v306 = vunpack.c.h.b16 %v245
        %v307 = vunpack.c.l.b16 %v246
        %v308 = vunpack.c.h.b16 %v246
        %v309 = vunpack.c.l.b16 %v247
        %v310 = vunpack.c.h.b16 %v247
        %v311 = vunpack.c.l.b16 %v248
        %v312 = vunpack.c.h.b16 %v248
        %v313 = vunpack.c.l.b16 %v249
        %v314 = vunpack.c.h.b16 %v249
        %v315 = vunpack.c.l.b16 %v250
        %v316 = vunpack.c.h.b16 %v250
        %v317 = vunpack.c.l.b16 %v251
        %v318 = vunpack.c.h.b16 %v251
        %v319 = vunpack.c.l.b16 %v252
        %v320 = vunpack.c.h.b16 %v252
        %v321 = vunpack.c.l.b16 %v253
        %v322 = vunpack.c.h.b16 %v253
        %v323 = vunpack.c.l.b16 %v254
        %v324 = vunpack.c.h.b16 %v254
        %v325 = vunpack.c.l.b16 %v255
        %v326 = vunpack.c.h.b16 %v255
        %v327 = vunpack.c.l.b16 %v256
        %v328 = vunpack.c.h.b16 %v256
        %v329 = vunpack.c.l.b16 %v257
        %v330 = vunpack.c.h.b16 %v257
        %v331 = vunpack.c.l.b16 %v258
        %v332 = vunpack.c.h.b16 %v258
        %v333 = vunpack.c.l.b16 %v259
        %v334 = vunpack.c.h.b16 %v259
        %v335 = vunpack.c.l.b16 %v260
        %v336 = vunpack.c.h.b16 %v260
        %v337 = vunpack.c.l.b16 %v261
        %v338 = vunpack.c.h.b16 %v261
        %v339 = vunpack.c.l.b16 %v262
        %v340 = vunpack.c.h.b16 %v262
        %v341 = vpack.c.b16 %v293, %v289
        %v342 = vpack.c.b16 %v294, %v290
        %v343 = vpack.c.b16 %v295, %v291
        %v344 = vpack.c.b16 %v296, %v292
        %v345 = vpack.c.b16 %v301, %v297
        %v346 = vpack.c.b16 %v302, %v298
        %v347 = vpack.c.b16 %v303, %v299
        %v348 = vpack.c.b16 %v304, %v300
        %v349 = vpack.c.b16 %v309, %v305
        %v350 = vpack.c.b16 %v310, %v306
        %v351 = vpack.c.b16 %v311, %v307
        %v352 = vpack.c.b16 %v312, %v308
        %v353 = vpack.c.b16 %v317, %v313
        %v354 = vpack.c.b16 %v318, %v314
        %v355 = vpack.c.b16 %v319, %v315
        %v356 = vpack.c.b16 %v320, %v316
        %v357 = vpack.c.b16 %v325, %v321
        %v358 = vpack.c.b16 %v326, %v322
        %v359 = vpack.c.b16 %v327, %v323
        %v360 = vpack.c.b16 %v328, %v324
        %v361 = vpack.c.b16 %v333, %v329
        %v362 = vpack.c.b16 %v334, %v330
        %v363 = vpack.c.b16 %v335, %v331
        %v364 = vpack.c.b16 %v336, %v332
        %v365 = vpack.c.b16 %v337, %v337
        %v366 = vpack.c.b16 %v338, %v338
        %v367 = vpack.c.b16 %v339, %v339
        %v368 = vpack.c.b16 %v340, %v340
        %vm393 = vcmask 818176
        %v395 = vsel %vm393, %v236, 0
        %vm397 = vcmask 1041408
        %v399 = vsel %vm397, %v365, 0
        %v402 = vsel %vm397, %v366, 0
        %v405 = vsel %vm397, %v367, 0
        %v408 = vsel %vm397, %v368, 0
        %410 = vmatprep.subr.bf16.mxu0 %v342
        %411 = vmatpush1.bf16.msra.mxu0 %v341
        %412 = vmatprep.subr.bf16.mxu0 %v346
        %413 = vmatpush1.bf16.msra.mxu0 %v345
        %414 = vmatprep.subr.bf16.mxu0 %v350
        %415 = vmatpush1.bf16.msra.mxu0 %v349
        %416 = vmatprep.subr.bf16.mxu0 %v354
        %417 = vmatpush1.bf16.msra.mxu0 %v353
        %418 = vmatprep.subr.bf16.mxu0 %v358
        %419 = vmatpush1.bf16.msra.mxu0 %v357
        %420 = vmatprep.subr.bf16.mxu0 %v362
        %421 = vmatpush1.bf16.msra.mxu0 %v361
        %422 = vmatprep.subr.bf16.mxu0 %v402
        %423 = vmatpush1.bf16.msra.mxu0 %v399
        %424 = vmatprep.subr.bf16.mxu0 0
        %425 = vmatpush1.bf16.msra.mxu0 0
        %426 = vmatprep.subr.bf16.mxu0 0
        %427 = vmatpush1.bf16.msra.mxu0 0
        %428 = vmatprep.subr.bf16.mxu0 0
        %429 = vmatpush1.bf16.msra.mxu0 0
        %430 = vmatprep.subr.bf16.mxu0 0
        %431 = vmatpush1.bf16.msra.mxu0 0
        %432 = vmatprep.subr.bf16.mxu0 0
        %433 = vmatpush1.bf16.msra.mxu0 0
        %434 = vmatprep.subr.bf16.mxu0 0
        %435 = vmatpush1.bf16.msra.mxu0 0
        %436 = vmatprep.subr.bf16.mxu0 0
        %437 = vmatpush1.bf16.msra.mxu0 0
        %438 = vmatprep.subr.bf16.mxu0 0
        %439 = vmatpush1.bf16.msra.mxu0 0
        %440 = vmatprep.subr.bf16.mxu0 0
        %441 = vmatpush1.bf16.msra.mxu0 0
        %442 = vmatprep.mubr.bf16.mxu0 0
        %443 = vmatmul.mubr.bf16.gmra.mrb[0].mxu0 %v395
        %v444 = vpop.f32.mrb[0].mxu0
        %v445 = vadd.f32 0.0, %v444
        %v446 = vpop.f32.mrb[0].mxu0
        %v447 = vadd.f32 0.0, %v446
        %v448 = vpop.f32.mrb[0].mxu0
        %v449 = vpop.f32.mrb[0].mxu0
        %450 = vdwg.mxu0
        %451 = vmatprep.subr.bf16.mxu0 %v344
        %452 = vmatpush1.bf16.msra.mxu0 %v343
        %453 = vmatprep.subr.bf16.mxu0 %v348
        %454 = vmatpush1.bf16.msra.mxu0 %v347
        %455 = vmatprep.subr.bf16.mxu0 %v352
        %456 = vmatpush1.bf16.msra.mxu0 %v351
        %457 = vmatprep.subr.bf16.mxu0 %v356
        %458 = vmatpush1.bf16.msra.mxu0 %v355
        %459 = vmatprep.subr.bf16.mxu0 %v360
        %460 = vmatpush1.bf16.msra.mxu0 %v359
        %461 = vmatprep.subr.bf16.mxu0 %v364
        %462 = vmatpush1.bf16.msra.mxu0 %v363
        %463 = vmatprep.subr.bf16.mxu0 %v408
        %464 = vmatpush1.bf16.msra.mxu0 %v405
        %465 = vmatprep.subr.bf16.mxu0 0
        %466 = vmatpush1.bf16.msra.mxu0 0
        %467 = vmatprep.subr.bf16.mxu0 0
        %468 = vmatpush1.bf16.msra.mxu0 0
        %469 = vmatprep.subr.bf16.mxu0 0
        %470 = vmatpush1.bf16.msra.mxu0 0
        %471 = vmatprep.subr.bf16.mxu0 0
        %472 = vmatpush1.bf16.msra.mxu0 0
        %473 = vmatprep.subr.bf16.mxu0 0
        %474 = vmatpush1.bf16.msra.mxu0 0
        %475 = vmatprep.subr.bf16.mxu0 0
        %476 = vmatpush1.bf16.msra.mxu0 0
        %477 = vmatprep.subr.bf16.mxu0 0
        %478 = vmatpush1.bf16.msra.mxu0 0
        %479 = vmatprep.subr.bf16.mxu0 0
        %480 = vmatpush1.bf16.msra.mxu0 0
        %481 = vmatprep.subr.bf16.mxu0 0
        %482 = vmatpush1.bf16.msra.mxu0 0
        %483 = vmatprep.mubr.bf16.mxu0 0
        %484 = vmatmul.mubr.bf16.gmra.mrb[0].mxu0 %v395
        %v485 = vpop.f32.mrb[0].mxu0
        %v486 = vadd.f32 0.0, %v485
        %v487 = vpop.f32.mrb[0].mxu0
        %v488 = vadd.f32 0.0, %v487
        %v489 = vpop.f32.mrb[0].mxu0
        %v490 = vpop.f32.mrb[0].mxu0
        %491 = vdwg.mxu0
        %v492 = vadd.f32 %v445, %v447
        %v493 = vadd.f32 %v492, %v486
        %v494 = vadd.f32 %v493, %v488
        %495 = vadd.xlane.f32.xlu0 %v494
        %v496 = vpop.xlane.xlu0 %495
        %v497 = vrcp.pop 512.0
        %v498 = vmul.f32 %v496, %v497
        %v499 = vmul.f32 %v445, %v445
        %v500 = vmul.f32 %v447, %v447
        %v501 = vmul.f32 %v486, %v486
        %v502 = vmul.f32 %v488, %v488
        %v503 = vadd.f32 %v499, %v500
        %v504 = vadd.f32 %v503, %v501
        %v505 = vadd.f32 %v504, %v502
        %506 = vadd.xlane.f32.xlu0 %v505
        %v507 = vpop.xlane.xlu0 %506
        %v508 = vmul.f32 %v507, %v497
        %v509 = vmul.f32 %v498, %v498
        %v510 = vsub.f32 %v508, %v509
        %v511 = vmax.f32 %v510, 0.0
        %v512 = vadd.f32 %v511, 1e-05
        %v513 = vrsqrt.pop %v512
        %v514 = vmul.f32 %v445, %v513
        %v515 = vmul.f32 %v447, %v513
        %v516 = vmul.f32 %v486, %v513
        %v517 = vmul.f32 %v488, %v513
        %v518 = vld [vmem:[%s207] sm:$0xff]
        %v519 = vmul.f32 %v498, %v513
        %v520 = vsub.f32 %v518, %v519
        %522 = vset.pattern.permute.xlu0 0
        %523 = vperm.xlu0 %522, %v520
        %v524 = vpop.permute.xlu0 %523
        %v526 = vadd.f32 %v514, %v524
        %v527 = vadd.f32 %v515, %v524
        %v528 = vadd.f32 %v516, %v524
        %v529 = vadd.f32 %v517, %v524
        %vm530 = vcmp.ge.f32.partialorder %v526, 0.0
        %vm531 = vcmp.ge.f32.partialorder %v527, 0.0
        %vm532 = vcmp.ge.f32.partialorder %v528, 0.0
        %vm533 = vcmp.ge.f32.partialorder %v529, 0.0
        %v534 = vmul.f32 %v526, 0.01
        %v535 = vmul.f32 %v527, 0.01
        %v536 = vmul.f32 %v528, 0.01
        %v537 = vmul.f32 %v529, 0.01
        %v538 = vsel %vm530, %v526, %v534
        %v539 = vsel %vm531, %v527, %v535
        %v540 = vsel %vm532, %v528, %v536
        %v541 = vsel %vm533, %v529, %v537
        %542 = vst [vmem:[%s234] sm:$0xff] %v538
        %543 = vst [vmem:[%s234 + $0x8] sm:$0xff] %v539
        %544 = vst [vmem:[%s234 + $0x10] sm:$0xff] %v540
        %545 = vst [vmem:[%s234 + $0x18] sm:$0xff] %v541
        %s546 = sand.u32 %s102, 1
        %s547 = scalar_lea.sflag [#allocation4], %s546
        %s548 = sand.u32 %s102, 1
        %s549 = smul.addr %s548, 32
        %s550 = scalar_lea.vmem [#allocation8], %s549
        // Predicated region
        $region45: #{covae_forward.6} parent=31 // pred_check
          %p551 = pneg %p112
        $region46: #{covae_forward.6} parent=31 // pred_check_branch
          %553 = sbr.rel (%p551) target = $region48
        $region47: #{covae_forward.6} parent=31 // pred_region
          %s555 = ssub.s32 512, 512
          %556 = vsyncadd %s547, %s555
          %s557 = smul.addr %s21, 4
          %s558 = smul.addr %s557, 128
          %s559 = scalar_lea.hbm %s3, %s558
          %s561 = sshll.u32 %s550, 4
          %s562 = int_to_ptr.vmem [resolvable:$true] %s561
          %564 = dma.vmem_to_hbm [thread:$0]  %s562, 512, %s559, %s547
        $region48: #{covae_forward.6} parent=31 // pred_fallthru
          _
      $region32: #{covae_forward.6} parent=5 // pred_fallthru
        _
      %p565 = scmp.le.s32.totalorder 2, %s16
      // Predicated region
      $region49: #{covae_forward.6} parent=5 // pred_check
        %p566 = pneg %p565
      $region50: #{covae_forward.6} parent=5 // pred_check_branch
        %568 = sbr.rel (%p566) target = $region52
      $region51: #{covae_forward.6} parent=5 // pred_region
        %s569 = ssub.s32 %s16, 2
        // Predicated region
        $region53: #{covae_forward.6} parent=51 // pred_check
          %p570 = pneg %p118
        $region54: #{covae_forward.6} parent=51 // pred_check_branch
          %572 = sbr.rel (%p570) target = $region56
        $region55: #{covae_forward.6} parent=51 // pred_region
          %s573 = sand.u32 %s103, 1
          %s574 = scalar_lea.sflag [#allocation4], %s573
          %s575 = sand.u32 %s103, 1
          %s576 = smul.addr %s575, 32
          %s577 = scalar_lea.vmem [#allocation8], %s576
          %578 = dma.done %s574, 512
        $region56: #{covae_forward.6} parent=51 // pred_fallthru
          _
      $region52: #{covae_forward.6} parent=5 // pred_fallthru
        _
    $region6: #{covae_forward.6} parent=1 // loop_footer
      %s20 = sadd.s32 1, %s16
    $region7: #{covae_forward.6} parent=1 // loop_footer_branch
      %15 = sbr.rel target = $region3
    $region8: #{covae_forward.6} parent=1 // loop_exit
      _
    %579 = vsyncpa [#allocation3], 1
    %s580 = scalar_lea.sflag [#allocation3], 1
    %581 = vsyncpa %s580, 1
    %582 = vsyncpa [#allocation6], 1
    %583 = vsyncpa [#allocation4], 1
    %s584 = scalar_lea.sflag [#allocation4], 1
    %585 = vsyncpa %s584, 1

// kernel: covae_forward.7
$region0: #{covae_forward.7}
  #allocation0 [shape = 'u32[]', space=smem, size = 0x4, offset = 0x4, fixed_abs, tag = 'smem constant byte address 0x4 - core index']
  #allocation1 [shape = 'u32[144,128]{1,0:T(1,128)}', space=vmem, size = 0x12000, scoped, tag = 'internal scratch']
  %s0 = inlined_call_operand.hbm [shape: bf16[16,200], index: 0, kind: input, shape index: {}]
  %s1 = inlined_call_operand.hbm [shape: bf16[200,256], index: 1, kind: input, shape index: {}]
  %s2 = inlined_call_operand.hbm [shape: f32[16,1], index: 2, kind: input, shape index: {}]
  %s3 = inlined_call_operand.hbm [shape: f32[16,256], index: 3, kind: output, shape index: {}]
  %s4 = sld [smem:[#allocation0]]
  $region57: #{covae_forward.7} parent=0
    _
  %s6 = ssub.s32 1, %s4
  %s7 = scalar_select 0, %s6, %s4
  $region1: #{covae_forward.7} parent=0
    #allocation2 [shape = 'u8[8192]{0}', space=vmem, size = 0x2000, scoped, tag = 'input window, operand 0']
    #allocation3 [shape = 's32[2]{0}', space=sflag, size = 0x8, scoped, tag = 'scoped memory for covae_forward.7']
    #allocation4 [shape = 's32[2]{0}', space=sflag, size = 0x8, scoped, tag = 'scoped memory for covae_forward.7']
    #allocation5 [shape = 'u8[102400]{0}', space=vmem, size = 0x19000, scoped, tag = 'input window, operand 1, single buffered']
    #allocation6 [shape = 's32[1]{0}', space=sflag, size = 0x4, scoped, tag = 'scoped memory for covae_forward.7']
    #allocation7 [shape = 'u8[8192]{0}', space=vmem, size = 0x2000, scoped, tag = 'input window, operand 2']
    #allocation8 [shape = 'u8[16384]{0}', space=vmem, size = 0x4000, scoped, tag = 'output window, operand 0']
    %8 = vsyncpa [#allocation3], 0
    %s9 = scalar_lea.sflag [#allocation3], 1
    %10 = vsyncpa %s9, 0
    %11 = vsyncpa [#allocation6], 0
    %12 = vsyncpa [#allocation4], 0
    %s13 = scalar_lea.sflag [#allocation4], 1
    %14 = vsyncpa %s13, 0
    loop: start=0, step=1, limit=4
    $region2: #{covae_forward.7} parent=1 // loop_pre_header
      _
    $region3: #{covae_forward.7} parent=1 // loop_header
      %s16 = sphi 0, %s20
      %p17 = scmp.ge.s32.totalorder %s16, 4
      %s26 = sphi 0, %s28
      %s29 = sphi 0, %s26
      %s30 = sphi 0, %s29
      %s46 = sphi 0, %s30
      %s50 = sphi 0, %s50
      %s52 = sphi 0, %s50
      %s53 = sphi 0, %s52
      %s67 = sphi 0, %s53
      %s73 = sphi 0, %s75
      %s76 = sphi 0, %s73
      %s77 = sphi 0, %s76
      %s93 = sphi 0, %s77
      %s99 = sphi 0, %s101
      %s102 = sphi 0, %s99
      %s103 = sphi 0, %s102
      %s119 = sphi 0, %s103
    $region4: #{covae_forward.7} parent=1 // loop_header_branch
      %19 = sbr.rel (%p17) target = $region8
    $region5: #{covae_forward.7} parent=1 // loop_body
      %s21 = ssub.s32 %s16, 1
      %s22 = ssub.s32 %s16, 2
      %s23 = sadd.s32 %s16, 1
      %s24 = ssub.s32 %s16, %s23
      %p25 = scmp.eq.s32.totalorder %s24, 0
      %s27 = sadd.s32 %s26, 1
      %s28 = scalar_select %p25, %s26, %s27
      %p31 = pneg %p25
      %p32 = scmp.eq.s32.totalorder %s16, 1
      %p33 = por %p31, %p32
      %p34 = scmp.ne.s32.totalorder %s26, %s29
      %p35 = scmp.eq.s32.totalorder %s16, 0
      %p36 = por %p34, %p35
      %p37 = scmp.ne.s32.totalorder %s26, %s29
      %p38 = scmp.eq.s32.totalorder %s21, 1
      %p39 = por %p37, %p38
      %p40 = scmp.ne.s32.totalorder %s29, %s30
      %p41 = scmp.eq.s32.totalorder %s21, 0
      %p42 = por %p40, %p41
      %p43 = scmp.ne.s32.totalorder %s29, %s30
      %p44 = scmp.eq.s32.totalorder %s22, 1
      %p45 = por %p43, %p44
      %p47 = scmp.ne.s32.totalorder %s30, %s46
      %p48 = scmp.eq.s32.totalorder %s22, 0
      %p49 = por %p47, %p48
      %s51 = sadd.s32 %s50, 1
      %p54 = scmp.eq.s32.totalorder %s16, 1
      %p55 = scmp.ne.s32.totalorder %s50, %s52
      %p56 = scmp.eq.s32.totalorder %s16, 0
      %p57 = por %p55, %p56
      %p58 = scmp.ne.s32.totalorder %s50, %s52
      %p59 = scmp.eq.s32.totalorder %s21, 1
      %p60 = por %p58, %p59
      %p61 = scmp.ne.s32.totalorder %s52, %s53
      %p62 = scmp.eq.s32.totalorder %s21, 0
      %p63 = por %p61, %p62
      %p64 = scmp.ne.s32.totalorder %s52, %s53
      %p65 = scmp.eq.s32.totalorder %s22, 1
      %p66 = por %p64, %p65
      %p68 = scmp.ne.s32.totalorder %s53, %s67
      %p69 = scmp.eq.s32.totalorder %s22, 0
      %p70 = por %p68, %p69
      %s71 = ssub.s32 %s16, %s23
      %p72 = scmp.eq.s32.totalorder %s71, 0
      %s74 = sadd.s32 %s73, 1
      %s75 = scalar_select %p72, %s73, %s74
      %p78 = pneg %p72
      %p79 = scmp.eq.s32.totalorder %s16, 1
      %p80 = por %p78, %p79
      %p81 = scmp.ne.s32.totalorder %s73, %s76
      %p82 = scmp.eq.s32.totalorder %s16, 0
      %p83 = por %p81, %p82
      %p84 = scmp.ne.s32.totalorder %s73, %s76
      %p85 = scmp.eq.s32.totalorder %s21, 1
      %p86 = por %p84, %p85
      %p87 = scmp.ne.s32.totalorder %s76, %s77
      %p88 = scmp.eq.s32.totalorder %s21, 0
      %p89 = por %p87, %p88
      %p90 = scmp.ne.s32.totalorder %s76, %s77
      %p91 = scmp.eq.s32.totalorder %s22, 1
      %p92 = por %p90, %p91
      %p94 = scmp.ne.s32.totalorder %s77, %s93
      %p95 = scmp.eq.s32.totalorder %s22, 0
      %p96 = por %p94, %p95
      %s97 = ssub.s32 %s16, %s23
      %p98 = scmp.eq.s32.totalorder %s97, 0
      %s100 = sadd.s32 %s99, 1
      %s101 = scalar_select %p98, %s99, %s100
      %p104 = pneg %p98
      %p105 = scmp.eq.s32.totalorder %s16, 1
      %p106 = por %p104, %p105
      %p107 = scmp.ne.s32.totalorder %s99, %s102
      %p108 = scmp.eq.s32.totalorder %s16, 0
      %p109 = por %p107, %p108
      %p110 = scmp.ne.s32.totalorder %s99, %s102
      %p111 = scmp.eq.s32.totalorder %s21, 1
      %p112 = por %p110, %p111
      %p113 = scmp.ne.s32.totalorder %s102, %s103
      %p114 = scmp.eq.s32.totalorder %s21, 0
      %p115 = por %p113, %p114
      %p116 = scmp.ne.s32.totalorder %s102, %s103
      %p117 = scmp.eq.s32.totalorder %s22, 1
      %p118 = por %p116, %p117
      %p120 = scmp.ne.s32.totalorder %s103, %s119
      %p121 = scmp.eq.s32.totalorder %s22, 0
      %p122 = por %p120, %p121
      %p123 = scmp.le.s32.totalorder 1, %s16
      %p124 = scmp.lt.s32.totalorder %s16, 3
      %p125 = pnand %p123, %p124
      %p126 = pneg %p125
      // Predicated region
      $region9: #{covae_forward.7} parent=5 // pred_check
        _
      $region10: #{covae_forward.7} parent=5 // pred_check_branch
        %128 = sbr.rel (%p125) target = $region12
      $region11: #{covae_forward.7} parent=5 // pred_region
        %s129 = ssub.s32 %s16, 1
        // Predicated region
        $region13: #{covae_forward.7} parent=11 // pred_check
          %p130 = pneg %p63
        $region14: #{covae_forward.7} parent=11 // pred_check_branch
          %132 = sbr.rel (%p130) target = $region16
        $region15: #{covae_forward.7} parent=11 // pred_region
          %s134 = ssub.s32 3200, 3200
          %135 = vsyncadd [#allocation6], %s134
          %s136 = sshll.u32 [#allocation5], 4
          %s137 = int_to_ptr.vmem [resolvable:$true] %s136
          %142 = dma.hbm_to_vmem [thread:$0]  %s1, 3200, %s137, [#allocation6], 128, 128, 8
        $region16: #{covae_forward.7} parent=11 // pred_fallthru
          _
      $region12: #{covae_forward.7} parent=5 // pred_fallthru
        _
      %p143 = scmp.lt.s32.totalorder %s16, 2
      // Predicated region
      $region17: #{covae_forward.7} parent=5 // pred_check
        %p144 = pneg %p143
      $region18: #{covae_forward.7} parent=5 // pred_check_branch
        %146 = sbr.rel (%p144) target = $region20
      $region19: #{covae_forward.7} parent=5 // pred_region
        // Predicated region
        $region21: #{covae_forward.7} parent=19 // pred_check
          %p147 = pneg %p36
        $region22: #{covae_forward.7} parent=19 // pred_check_branch
          %149 = sbr.rel (%p147) target = $region24
        $region23: #{covae_forward.7} parent=19 // pred_region
          %s150 = sand.u32 %s16, 1
          %s151 = scalar_lea.sflag [#allocation3], %s150
          %s152 = sand.u32 %s26, 1
          %s153 = smul.addr %s152, 8
          %s154 = scalar_lea.vmem [#allocation2], %s153
          %s156 = ssub.s32 128, 128
          %157 = vsyncadd %s151, %s156
          %s158 = smul.addr %s16, 2
          %s159 = smul.addr %s158, 64
          %s160 = scalar_lea.hbm %s0, %s159
          %s162 = sshll.u32 %s154, 4
          %s163 = int_to_ptr.vmem [resolvable:$true] %s162
          %165 = dma.hbm_to_vmem [thread:$0]  %s160, 128, %s163, %s151
        $region24: #{covae_forward.7} parent=19 // pred_fallthru
          _
        // Predicated region
        $region25: #{covae_forward.7} parent=19 // pred_check
          %p166 = pneg %p83
        $region26: #{covae_forward.7} parent=19 // pred_check_branch
          %168 = sbr.rel (%p166) target = $region28
        $region27: #{covae_forward.7} parent=19 // pred_region
          %s169 = sand.u32 %s16, 1
          %s170 = scalar_lea.sflag [#allocation3], %s169
          %s171 = sand.u32 %s73, 1
          %s172 = smul.addr %s171, 8
          %s173 = scalar_lea.vmem [#allocation7], %s172
          %s175 = ssub.s32 128, 128
          %176 = vsyncadd %s170, %s175
          %s177 = smul.addr %s16, 128
          %s178 = scalar_lea.hbm %s2, %s177
          %s180 = sshll.u32 %s173, 4
          %s181 = int_to_ptr.vmem [resolvable:$true] %s180
          %183 = dma.hbm_to_vmem [thread:$0]  %s178, 128, %s181, %s170
        $region28: #{covae_forward.7} parent=19 // pred_fallthru
          _
      $region20: #{covae_forward.7} parent=5 // pred_fallthru
        _
      %p184 = scmp.le.s32.totalorder 1, %s16
      %p185 = scmp.lt.s32.totalorder %s16, 3
      %p186 = pnand %p184, %p185
      %p187 = pneg %p186
      // Predicated region
      $region29: #{covae_forward.7} parent=5 // pred_check
        _
      $region30: #{covae_forward.7} parent=5 // pred_check_branch
        %189 = sbr.rel (%p186) target = $region32
      $region31: #{covae_forward.7} parent=5 // pred_region
        %s190 = ssub.s32 %s16, 1
        %s191 = sand.u32 %s21, 1
        %s192 = scalar_lea.sflag [#allocation3], %s191
        %s193 = sand.u32 %s29, 1
        %s194 = smul.addr %s193, 8
        %s195 = scalar_lea.vmem [#allocation2], %s194
        // Predicated region
        $region33: #{covae_forward.7} parent=31 // pred_check
          %p196 = pneg %p42
        $region34: #{covae_forward.7} parent=31 // pred_check_branch
          %198 = sbr.rel (%p196) target = $region36
        $region35: #{covae_forward.7} parent=31 // pred_region
          %199 = dma.done %s192, 128
        $region36: #{covae_forward.7} parent=31 // pred_fallthru
          _
        // Predicated region
        $region37: #{covae_forward.7} parent=31 // pred_check
          %p200 = pneg %p63
        $region38: #{covae_forward.7} parent=31 // pred_check_branch
          %202 = sbr.rel (%p200) target = $region40
        $region39: #{covae_forward.7} parent=31 // pred_region
          %203 = dma.done [#allocation6], 3200
        $region40: #{covae_forward.7} parent=31 // pred_fallthru
          _
        %s204 = sand.u32 %s21, 1
        %s205 = scalar_lea.sflag [#allocation3], %s204
        %s206 = sand.u32 %s76, 1
        %s207 = smul.addr %s206, 8
        %s208 = scalar_lea.vmem [#allocation7], %s207
        // Predicated region
        $region41: #{covae_forward.7} parent=31 // pred_check
          %p209 = pneg %p89
        $region42: #{covae_forward.7} parent=31 // pred_check_branch
          %211 = sbr.rel (%p209) target = $region44
        $region43: #{covae_forward.7} parent=31 // pred_region
          %212 = dma.done %s205, 128
        $region44: #{covae_forward.7} parent=31 // pred_fallthru
          _
        %s213 = sand.u32 %s21, 1
        %s214 = scalar_lea.sflag [#allocation3], %s213
        %s215 = sand.u32 %s29, 1
        %s216 = smul.addr %s215, 8
        %s217 = scalar_lea.vmem [#allocation2], %s216
        %p218 = pneg %p42
        %p219 = pneg %p39
        %p220 = pneg %p63
        %p221 = pneg %p60
        %s222 = sand.u32 %s21, 1
        %s223 = scalar_lea.sflag [#allocation3], %s222
        %s224 = sand.u32 %s76, 1
        %s225 = smul.addr %s224, 8
        %s226 = scalar_lea.vmem [#allocation7], %s225
        %p227 = pneg %p89
        %p228 = pneg %p86
        %p229 = pneg %p115
        %p230 = pneg %p112
        %s231 = sand.u32 %s102, 1
        %s232 = scalar_lea.sflag [#allocation4], %s231
        %s233 = sand.u32 %s102, 1
        %s234 = smul.addr %s233, 16
        %s235 = scalar_lea.vmem [#allocation8], %s234
        %v237 = vld [vmem:[%s195] sm:$0xff]
        %v238 = vld [vmem:[#allocation5] sm:$0xff]
        %v239 = vld [vmem:[#allocation5 + $0x8] sm:$0xff]
        %v240 = vld [vmem:[#allocation5 + $0x10] sm:$0xff]
        %v241 = vld [vmem:[#allocation5 + $0x18] sm:$0xff]
        %v242 = vld [vmem:[#allocation5 + $0x20] sm:$0xff]
        %v243 = vld [vmem:[#allocation5 + $0x28] sm:$0xff]
        %v244 = vld [vmem:[#allocation5 + $0x30] sm:$0xff]
        %v245 = vld [vmem:[#allocation5 + $0x38] sm:$0xff]
        %v246 = vld [vmem:[#allocation5 + $0x40] sm:$0xff]
        %v247 = vld [vmem:[#allocation5 + $0x48] sm:$0xff]
        %v248 = vld [vmem:[#allocation5 + $0x50] sm:$0xff]
        %v249 = vld [vmem:[#allocation5 + $0x58] sm:$0xff]
        %v250 = vld [vmem:[#allocation5 + $0x60] sm:$0xff]
        %v251 = vld [vmem:[#allocation5 + $0x68] sm:$0xff]
        %v252 = vld [vmem:[#allocation5 + $0x70] sm:$0xff]
        %v253 = vld [vmem:[#allocation5 + $0x78] sm:$0xff]
        %v254 = vld [vmem:[#allocation5 + $0x80] sm:$0xff]
        %v255 = vld [vmem:[#allocation5 + $0x88] sm:$0xff]
        %v256 = vld [vmem:[#allocation5 + $0x90] sm:$0xff]
        %v257 = vld [vmem:[#allocation5 + $0x98] sm:$0xff]
        %v258 = vld [vmem:[#allocation5 + $0xa0] sm:$0xff]
        %v259 = vld [vmem:[#allocation5 + $0xa8] sm:$0xff]
        %v260 = vld [vmem:[#allocation5 + $0xb0] sm:$0xff]
        %v261 = vld [vmem:[#allocation5 + $0xb8] sm:$0xff]
        %v262 = vld [vmem:[#allocation5 + $0xc0] sm:$0xff]
        %v264 = vunpack.c.l.b16 %v237
        %v265 = vunpack.c.h.b16 %v237
        %v266 = vpack.c.b16 %v264, %v264
        %v267 = vpack.c.b16 %v265, %v265
        %v294 = vunpack.c.l.b16 %v238
        %v295 = vunpack.c.h.b16 %v238
        %v296 = vunpack.c.l.b16 %v239
        %v297 = vunpack.c.h.b16 %v239
        %v298 = vunpack.c.l.b16 %v240
        %v299 = vunpack.c.h.b16 %v240
        %v300 = vunpack.c.l.b16 %v241
        %v301 = vunpack.c.h.b16 %v241
        %v302 = vunpack.c.l.b16 %v242
        %v303 = vunpack.c.h.b16 %v242
        %v304 = vunpack.c.l.b16 %v243
        %v305 = vunpack.c.h.b16 %v243
        %v306 = vunpack.c.l.b16 %v244
        %v307 = vunpack.c.h.b16 %v244
        %v308 = vunpack.c.l.b16 %v245
        %v309 = vunpack.c.h.b16 %v245
        %v310 = vunpack.c.l.b16 %v246
        %v311 = vunpack.c.h.b16 %v246
        %v312 = vunpack.c.l.b16 %v247
        %v313 = vunpack.c.h.b16 %v247
        %v314 = vunpack.c.l.b16 %v248
        %v315 = vunpack.c.h.b16 %v248
        %v316 = vunpack.c.l.b16 %v249
        %v317 = vunpack.c.h.b16 %v249
        %v318 = vunpack.c.l.b16 %v250
        %v319 = vunpack.c.h.b16 %v250
        %v320 = vunpack.c.l.b16 %v251
        %v321 = vunpack.c.h.b16 %v251
        %v322 = vunpack.c.l.b16 %v252
        %v323 = vunpack.c.h.b16 %v252
        %v324 = vunpack.c.l.b16 %v253
        %v325 = vunpack.c.h.b16 %v253
        %v326 = vunpack.c.l.b16 %v254
        %v327 = vunpack.c.h.b16 %v254
        %v328 = vunpack.c.l.b16 %v255
        %v329 = vunpack.c.h.b16 %v255
        %v330 = vunpack.c.l.b16 %v256
        %v331 = vunpack.c.h.b16 %v256
        %v332 = vunpack.c.l.b16 %v257
        %v333 = vunpack.c.h.b16 %v257
        %v334 = vunpack.c.l.b16 %v258
        %v335 = vunpack.c.h.b16 %v258
        %v336 = vunpack.c.l.b16 %v259
        %v337 = vunpack.c.h.b16 %v259
        %v338 = vunpack.c.l.b16 %v260
        %v339 = vunpack.c.h.b16 %v260
        %v340 = vunpack.c.l.b16 %v261
        %v341 = vunpack.c.h.b16 %v261
        %v342 = vunpack.c.l.b16 %v262
        %v343 = vunpack.c.h.b16 %v262
        %v344 = vpack.c.b16 %v296, %v294
        %v345 = vpack.c.b16 %v297, %v295
        %v346 = vpack.c.b16 %v300, %v298
        %v347 = vpack.c.b16 %v301, %v299
        %v348 = vpack.c.b16 %v304, %v302
        %v349 = vpack.c.b16 %v305, %v303
        %v350 = vpack.c.b16 %v308, %v306
        %v351 = vpack.c.b16 %v309, %v307
        %v352 = vpack.c.b16 %v312, %v310
        %v353 = vpack.c.b16 %v313, %v311
        %v354 = vpack.c.b16 %v316, %v314
        %v355 = vpack.c.b16 %v317, %v315
        %v356 = vpack.c.b16 %v320, %v318
        %v357 = vpack.c.b16 %v321, %v319
        %v358 = vpack.c.b16 %v324, %v322
        %v359 = vpack.c.b16 %v325, %v323
        %v360 = vpack.c.b16 %v328, %v326
        %v361 = vpack.c.b16 %v329, %v327
        %v362 = vpack.c.b16 %v332, %v330
        %v363 = vpack.c.b16 %v333, %v331
        %v364 = vpack.c.b16 %v336, %v334
        %v365 = vpack.c.b16 %v337, %v335
        %v366 = vpack.c.b16 %v340, %v338
        %v367 = vpack.c.b16 %v341, %v339
        %v368 = vpack.c.b16 %v342, %v342
        %v369 = vpack.c.b16 %v343, %v343
        %vm394 = vcmask 588800
        %v396 = vsel %vm394, %v267, 0
        %vm398 = vcmask 1043456
        %v400 = vsel %vm398, %v368, 0
        %v403 = vsel %vm398, %v369, 0
        %405 = vmatprep.subr.bf16.mxu0 %v345
        %406 = vmatpush1.bf16.msra.mxu0 %v344
        %407 = vmatprep.subr.bf16.mxu0 %v347
        %408 = vmatpush1.bf16.msra.mxu0 %v346
        %409 = vmatprep.subr.bf16.mxu0 %v349
        %410 = vmatpush1.bf16.msra.mxu0 %v348
        %411 = vmatprep.subr.bf16.mxu0 %v351
        %412 = vmatpush1.bf16.msra.mxu0 %v350
        %413 = vmatprep.subr.bf16.mxu0 %v353
        %414 = vmatpush1.bf16.msra.mxu0 %v352
        %415 = vmatprep.subr.bf16.mxu0 %v355
        %416 = vmatpush1.bf16.msra.mxu0 %v354
        %417 = vmatprep.subr.bf16.mxu0 %v357
        %418 = vmatpush1.bf16.msra.mxu0 %v356
        %419 = vmatprep.subr.bf16.mxu0 %v359
        %420 = vmatpush1.bf16.msra.mxu0 %v358
        %421 = vmatprep.subr.bf16.mxu0 %v361
        %422 = vmatpush1.bf16.msra.mxu0 %v360
        %423 = vmatprep.subr.bf16.mxu0 %v363
        %424 = vmatpush1.bf16.msra.mxu0 %v362
        %425 = vmatprep.subr.bf16.mxu0 %v365
        %426 = vmatpush1.bf16.msra.mxu0 %v364
        %427 = vmatprep.subr.bf16.mxu0 %v367
        %428 = vmatpush1.bf16.msra.mxu0 %v366
        %429 = vmatprep.subr.bf16.mxu0 %v403
        %430 = vmatpush1.bf16.msra.mxu0 %v400
        %431 = vmatprep.subr.bf16.mxu0 0
        %432 = vmatpush1.bf16.msra.mxu0 0
        %433 = vmatprep.subr.bf16.mxu0 0
        %434 = vmatpush1.bf16.msra.mxu0 0
        %435 = vmatprep.subr.bf16.mxu0 0
        %436 = vmatpush1.bf16.msra.mxu0 0
        %437 = vmatprep.mubr.bf16.mxu0 %v396
        %438 = vmatmul.mubr.bf16.gmra.mrb[0].mxu0 %v266
        %v439 = vpop.f32.mrb[0].mxu0
        %v440 = vadd.f32 0.0, %v439
        %v441 = vpop.f32.mrb[0].mxu0
        %v442 = vadd.f32 0.0, %v441
        %v443 = vpop.f32.mrb[0].mxu0
        %v444 = vpop.f32.mrb[0].mxu0
        %445 = vdwg.mxu0
        %v446 = vadd.f32 %v440, %v442
        %447 = vadd.xlane.f32.xlu0 %v446
        %v448 = vpop.xlane.xlu0 %447
        %v449 = vrcp.pop 256.0
        %v450 = vmul.f32 %v448, %v449
        %v451 = vmul.f32 %v440, %v440
        %v452 = vmul.f32 %v442, %v442
        %v453 = vadd.f32 %v451, %v452
        %454 = vadd.xlane.f32.xlu0 %v453
        %v455 = vpop.xlane.xlu0 %454
        %v456 = vmul.f32 %v455, %v449
        %v457 = vmul.f32 %v450, %v450
        %v458 = vsub.f32 %v456, %v457
        %v459 = vmax.f32 %v458, 0.0
        %v460 = vadd.f32 %v459, 1e-05
        %v461 = vrsqrt.pop %v460
        %v462 = vmul.f32 %v440, %v461
        %v463 = vmul.f32 %v442, %v461
        %v464 = vld [vmem:[%s208] sm:$0xff]
        %v465 = vmul.f32 %v450, %v461
        %v466 = vsub.f32 %v464, %v465
        %468 = vset.pattern.permute.xlu0 0
        %469 = vperm.xlu0 %468, %v466
        %v470 = vpop.permute.xlu0 %469
        %v472 = vadd.f32 %v462, %v470
        %v473 = vadd.f32 %v463, %v470
        %vm474 = vcmp.ge.f32.partialorder %v472, 0.0
        %vm475 = vcmp.ge.f32.partialorder %v473, 0.0
        %v476 = vmul.f32 %v472, 0.01
        %v477 = vmul.f32 %v473, 0.01
        %v478 = vsel %vm474, %v472, %v476
        %v479 = vsel %vm475, %v473, %v477
        %480 = vst [vmem:[%s235] sm:$0xff] %v478
        %481 = vst [vmem:[%s235 + $0x8] sm:$0xff] %v479
        %s482 = sand.u32 %s102, 1
        %s483 = scalar_lea.sflag [#allocation4], %s482
        %s484 = sand.u32 %s102, 1
        %s485 = smul.addr %s484, 16
        %s486 = scalar_lea.vmem [#allocation8], %s485
        // Predicated region
        $region45: #{covae_forward.7} parent=31 // pred_check
          %p487 = pneg %p112
        $region46: #{covae_forward.7} parent=31 // pred_check_branch
          %489 = sbr.rel (%p487) target = $region48
        $region47: #{covae_forward.7} parent=31 // pred_region
          %s491 = ssub.s32 256, 256
          %492 = vsyncadd %s483, %s491
          %s493 = smul.addr %s21, 2
          %s494 = smul.addr %s493, 128
          %s495 = scalar_lea.hbm %s3, %s494
          %s497 = sshll.u32 %s486, 4
          %s498 = int_to_ptr.vmem [resolvable:$true] %s497
          %500 = dma.vmem_to_hbm [thread:$0]  %s498, 256, %s495, %s483
        $region48: #{covae_forward.7} parent=31 // pred_fallthru
          _
      $region32: #{covae_forward.7} parent=5 // pred_fallthru
        _
      %p501 = scmp.le.s32.totalorder 2, %s16
      // Predicated region
      $region49: #{covae_forward.7} parent=5 // pred_check
        %p502 = pneg %p501
      $region50: #{covae_forward.7} parent=5 // pred_check_branch
        %504 = sbr.rel (%p502) target = $region52
      $region51: #{covae_forward.7} parent=5 // pred_region
        %s505 = ssub.s32 %s16, 2
        // Predicated region
        $region53: #{covae_forward.7} parent=51 // pred_check
          %p506 = pneg %p118
        $region54: #{covae_forward.7} parent=51 // pred_check_branch
          %508 = sbr.rel (%p506) target = $region56
        $region55: #{covae_forward.7} parent=51 // pred_region
          %s509 = sand.u32 %s103, 1
          %s510 = scalar_lea.sflag [#allocation4], %s509
          %s511 = sand.u32 %s103, 1
          %s512 = smul.addr %s511, 16
          %s513 = scalar_lea.vmem [#allocation8], %s512
          %514 = dma.done %s510, 256
        $region56: #{covae_forward.7} parent=51 // pred_fallthru
          _
      $region52: #{covae_forward.7} parent=5 // pred_fallthru
        _
    $region6: #{covae_forward.7} parent=1 // loop_footer
      %s20 = sadd.s32 1, %s16
    $region7: #{covae_forward.7} parent=1 // loop_footer_branch
      %15 = sbr.rel target = $region3
    $region8: #{covae_forward.7} parent=1 // loop_exit
      _
    %515 = vsyncpa [#allocation3], 1
    %s516 = scalar_lea.sflag [#allocation3], 1
    %517 = vsyncpa %s516, 1
    %518 = vsyncpa [#allocation6], 1
    %519 = vsyncpa [#allocation4], 1
    %s520 = scalar_lea.sflag [#allocation4], 1
    %521 = vsyncpa %s520, 1

// kernel: covae_forward.8
$region0: #{covae_forward.8}
  #allocation0 [shape = 'u32[]', space=smem, size = 0x4, offset = 0x4, fixed_abs, tag = 'smem constant byte address 0x4 - core index']
  #allocation1 [shape = 'u32[144,128]{1,0:T(1,128)}', space=vmem, size = 0x12000, scoped, tag = 'internal scratch']
  %s0 = inlined_call_operand.hbm [shape: bf16[4,1024], index: 0, kind: input, shape index: {}]
  %s1 = inlined_call_operand.hbm [shape: bf16[1024,32], index: 1, kind: input, shape index: {}]
  %s2 = inlined_call_operand.hbm [shape: f32[1,32], index: 2, kind: input, shape index: {}]
  %s3 = inlined_call_operand.hbm [shape: bf16[32,64], index: 3, kind: input, shape index: {}]
  %s4 = inlined_call_operand.hbm [shape: f32[1,64], index: 4, kind: input, shape index: {}]
  %s5 = inlined_call_operand.hbm [shape: bf16[64,64], index: 5, kind: input, shape index: {}]
  %s6 = inlined_call_operand.hbm [shape: f32[1,64], index: 6, kind: input, shape index: {}]
  %s7 = inlined_call_operand.hbm [shape: bf16[64,64], index: 7, kind: input, shape index: {}]
  %s8 = inlined_call_operand.hbm [shape: f32[1,64], index: 8, kind: input, shape index: {}]
  %s9 = inlined_call_operand.hbm [shape: f32[4,64], index: 9, kind: input, shape index: {}]
  %s10 = inlined_call_operand.hbm [shape: bf16[16,64,64], index: 10, kind: input, shape index: {}]
  %s11 = inlined_call_operand.hbm [shape: f32[1,64], index: 11, kind: input, shape index: {}]
  %s12 = inlined_call_operand.hbm [shape: f32[4,64], index: 12, kind: output, shape index: {0}]
  %s13 = inlined_call_operand.hbm [shape: f32[4,64], index: 13, kind: output, shape index: {1}]
  %s14 = inlined_call_operand.hbm [shape: f32[16,4,64], index: 14, kind: output, shape index: {2}]
  %15 = xla_tuple %s12, %s13, %s14
  %s16 = sld [smem:[#allocation0]]
  $region122: #{covae_forward.8} parent=0
    _
  %s18 = ssub.s32 1, %s16
  %s19 = scalar_select 0, %s18, %s16
  $region1: #{covae_forward.8} parent=0
    #allocation2 [shape = 'u8[8192]{0}', space=vmem, size = 0x2000, scoped, tag = 'input window, operand 0, single buffered']
    #allocation3 [shape = 's32[1]{0}', space=sflag, size = 0x4, scoped, tag = 'scoped memory for covae_forward.8']
    #allocation4 [shape = 's32[1]{0}', space=sflag, size = 0x4, scoped, tag = 'scoped memory for covae_forward.8']
    #allocation5 [shape = 'u8[262144]{0}', space=vmem, size = 0x40000, scoped, tag = 'input window, operand 1, single buffered']
    #allocation6 [shape = 's32[1]{0}', space=sflag, size = 0x4, scoped, tag = 'scoped memory for covae_forward.8']
    #allocation7 [shape = 'u8[512]{0}', space=vmem, size = 0x400, scoped, tag = 'input window, operand 2, single buffered']
    #allocation8 [shape = 'u8[8192]{0}', space=vmem, size = 0x2000, scoped, tag = 'input window, operand 3, single buffered']
    #allocation9 [shape = 's32[1]{0}', space=sflag, size = 0x4, scoped, tag = 'scoped memory for covae_forward.8']
    #allocation10 [shape = 'u8[512]{0}', space=vmem, size = 0x400, scoped, tag = 'input window, operand 4, single buffered']
    #allocation11 [shape = 'u8[16384]{0}', space=vmem, size = 0x4000, scoped, tag = 'input window, operand 5, single buffered']
    #allocation12 [shape = 's32[1]{0}', space=sflag, size = 0x4, scoped, tag = 'scoped memory for covae_forward.8']
    #allocation13 [shape = 'u8[512]{0}', space=vmem, size = 0x400, scoped, tag = 'input window, operand 6, single buffered']
    #allocation14 [shape = 'u8[16384]{0}', space=vmem, size = 0x4000, scoped, tag = 'input window, operand 7, single buffered']
    #allocation15 [shape = 's32[1]{0}', space=sflag, size = 0x4, scoped, tag = 'scoped memory for covae_forward.8']
    #allocation16 [shape = 'u8[512]{0}', space=vmem, size = 0x400, scoped, tag = 'input window, operand 8, single buffered']
    #allocation17 [shape = 'u8[2048]{0}', space=vmem, size = 0x800, scoped, tag = 'input window, operand 9, single buffered']
    #allocation18 [shape = 's32[1]{0}', space=sflag, size = 0x4, scoped, tag = 'scoped memory for covae_forward.8']
    #allocation19 [shape = 'u8[262144]{0}', space=vmem, size = 0x40000, scoped, tag = 'input window, operand 10, single buffered']
    #allocation20 [shape = 'u8[512]{0}', space=vmem, size = 0x400, scoped, tag = 'input window, operand 11, single buffered']
    #allocation21 [shape = 's32[1]{0}', space=sflag, size = 0x4, scoped, tag = 'scoped memory for covae_forward.8']
    #allocation22 [shape = 'u8[2048]{0}', space=vmem, size = 0x800, scoped, tag = 'output window, operand 0, single buffered']
    #allocation23 [shape = 'u8[2048]{0}', space=vmem, size = 0x800, scoped, tag = 'output window, operand 1, single buffered']
    #allocation24 [shape = 's32[1]{0}', space=sflag, size = 0x4, scoped, tag = 'scoped memory for covae_forward.8']
    #allocation25 [shape = 'u8[32768]{0}', space=vmem, size = 0x8000, scoped, tag = 'output window, operand 2, single buffered']
    %20 = vsyncpa [#allocation3], 0
    %21 = vsyncpa [#allocation6], 0
    %22 = vsyncpa [#allocation9], 0
    %23 = vsyncpa [#allocation12], 0
    %24 = vsyncpa [#allocation15], 0
    %25 = vsyncpa [#allocation18], 0
    %26 = vsyncpa [#allocation21], 0
    %27 = vsyncpa [#allocation4], 0
    %28 = vsyncpa [#allocation24], 0
    // Predicated region
    $region2: #{covae_forward.8} parent=1 // pred_check
      _
    $region3: #{covae_forward.8} parent=1 // pred_check_branch
      %30 = sbr.rel (0) target = $region5
    $region4: #{covae_forward.8} parent=1 // pred_region
      %s32 = ssub.s32 256, 256
      %33 = vsyncadd [#allocation3], %s32
      %s35 = sshll.u32 [#allocation2], 4
      %s36 = int_to_ptr.vmem [resolvable:$true] %s35
      %38 = dma.hbm_to_vmem [thread:$0]  %s0, 256, %s36, [#allocation3]
    $region5: #{covae_forward.8} parent=1 // pred_fallthru
      _
    // Predicated region
    $region6: #{covae_forward.8} parent=1 // pred_check
      _
    $region7: #{covae_forward.8} parent=1 // pred_check_branch
      %40 = sbr.rel (0) target = $region9
    $region8: #{covae_forward.8} parent=1 // pred_region
      %s42 = ssub.s32 8192, 8192
      %43 = vsyncadd [#allocation6], %s42
      %s44 = sshll.u32 [#allocation5], 4
      %s45 = int_to_ptr.vmem [resolvable:$true] %s44
      %50 = dma.hbm_to_vmem [thread:$0]  %s1, 8192, %s45, [#allocation6], 64, 64, 4
    $region9: #{covae_forward.8} parent=1 // pred_fallthru
      _
    // Predicated region
    $region10: #{covae_forward.8} parent=1 // pred_check
      _
    $region11: #{covae_forward.8} parent=1 // pred_check_branch
      %52 = sbr.rel (0) target = $region13
    $region12: #{covae_forward.8} parent=1 // pred_region
      %s54 = ssub.s32 16, 16
      %55 = vsyncadd [#allocation6], %s54
      %s57 = sshll.u32 [#allocation7], 4
      %s58 = int_to_ptr.vmem [resolvable:$true] %s57
      %60 = dma.hbm_to_vmem [thread:$0]  %s2, 16, %s58, [#allocation6]
    $region13: #{covae_forward.8} parent=1 // pred_fallthru
      _
    // Predicated region
    $region14: #{covae_forward.8} parent=1 // pred_check
      _
    $region15: #{covae_forward.8} parent=1 // pred_check_branch
      %62 = sbr.rel (0) target = $region17
    $region16: #{covae_forward.8} parent=1 // pred_region
      %s64 = ssub.s32 256, 256
      %65 = vsyncadd [#allocation9], %s64
      %s66 = sshll.u32 [#allocation8], 4
      %s67 = int_to_ptr.vmem [resolvable:$true] %s66
      %72 = dma.hbm_to_vmem [thread:$0]  %s3, 256, %s67, [#allocation9], 64, 64, 4
    $region17: #{covae_forward.8} parent=1 // pred_fallthru
      _
    // Predicated region
    $region18: #{covae_forward.8} parent=1 // pred_check
      _
    $region19: #{covae_forward.8} parent=1 // pred_check_branch
      %74 = sbr.rel (0) target = $region21
    $region20: #{covae_forward.8} parent=1 // pred_region
      %s76 = ssub.s32 16, 16
      %77 = vsyncadd [#allocation9], %s76
      %s79 = sshll.u32 [#allocation10], 4
      %s80 = int_to_ptr.vmem [resolvable:$true] %s79
      %82 = dma.hbm_to_vmem [thread:$0]  %s4, 16, %s80, [#allocation9]
    $region21: #{covae_forward.8} parent=1 // pred_fallthru
      _
    // Predicated region
    $region22: #{covae_forward.8} parent=1 // pred_check
      _
    $region23: #{covae_forward.8} parent=1 // pred_check_branch
      %84 = sbr.rel (0) target = $region25
    $region24: #{covae_forward.8} parent=1 // pred_region
      %s86 = ssub.s32 512, 512
      %87 = vsyncadd [#allocation12], %s86
      %s88 = sshll.u32 [#allocation11], 4
      %s89 = int_to_ptr.vmem [resolvable:$true] %s88
      %94 = dma.hbm_to_vmem [thread:$0]  %s5, 512, %s89, [#allocation12], 64, 64, 4
    $region25: #{covae_forward.8} parent=1 // pred_fallthru
      _
    // Predicated region
    $region26: #{covae_forward.8} parent=1 // pred_check
      _
    $region27: #{covae_forward.8} parent=1 // pred_check_branch
      %96 = sbr.rel (0) target = $region29
    $region28: #{covae_forward.8} parent=1 // pred_region
      %s98 = ssub.s32 16, 16
      %99 = vsyncadd [#allocation12], %s98
      %s101 = sshll.u32 [#allocation13], 4
      %s102 = int_to_ptr.vmem [resolvable:$true] %s101
      %104 = dma.hbm_to_vmem [thread:$0]  %s6, 16, %s102, [#allocation12]
    $region29: #{covae_forward.8} parent=1 // pred_fallthru
      _
    // Predicated region
    $region30: #{covae_forward.8} parent=1 // pred_check
      _
    $region31: #{covae_forward.8} parent=1 // pred_check_branch
      %106 = sbr.rel (0) target = $region33
    $region32: #{covae_forward.8} parent=1 // pred_region
      %s108 = ssub.s32 512, 512
      %109 = vsyncadd [#allocation15], %s108
      %s110 = sshll.u32 [#allocation14], 4
      %s111 = int_to_ptr.vmem [resolvable:$true] %s110
      %116 = dma.hbm_to_vmem [thread:$0]  %s7, 512, %s111, [#allocation15], 64, 64, 4
    $region33: #{covae_forward.8} parent=1 // pred_fallthru
      _
    // Predicated region
    $region34: #{covae_forward.8} parent=1 // pred_check
      _
    $region35: #{covae_forward.8} parent=1 // pred_check_branch
      %118 = sbr.rel (0) target = $region37
    $region36: #{covae_forward.8} parent=1 // pred_region
      %s120 = ssub.s32 16, 16
      %121 = vsyncadd [#allocation15], %s120
      %s123 = sshll.u32 [#allocation16], 4
      %s124 = int_to_ptr.vmem [resolvable:$true] %s123
      %126 = dma.hbm_to_vmem [thread:$0]  %s8, 16, %s124, [#allocation15]
    $region37: #{covae_forward.8} parent=1 // pred_fallthru
      _
    // Predicated region
    $region38: #{covae_forward.8} parent=1 // pred_check
      _
    $region39: #{covae_forward.8} parent=1 // pred_check_branch
      %128 = sbr.rel (0) target = $region41
    $region40: #{covae_forward.8} parent=1 // pred_region
      %s130 = ssub.s32 64, 64
      %131 = vsyncadd [#allocation18], %s130
      %s133 = sshll.u32 [#allocation17], 4
      %s134 = int_to_ptr.vmem [resolvable:$true] %s133
      %136 = dma.hbm_to_vmem [thread:$0]  %s9, 64, %s134, [#allocation18]
    $region41: #{covae_forward.8} parent=1 // pred_fallthru
      _
    // Predicated region
    $region42: #{covae_forward.8} parent=1 // pred_check
      _
    $region43: #{covae_forward.8} parent=1 // pred_check_branch
      %138 = sbr.rel (0) target = $region45
    $region44: #{covae_forward.8} parent=1 // pred_region
      %s140 = ssub.s32 8192, 8192
      %141 = vsyncadd [#allocation18], %s140
      %s142 = sshll.u32 [#allocation19], 4
      %s143 = int_to_ptr.vmem [resolvable:$true] %s142
      %148 = dma.hbm_to_vmem [thread:$0]  %s10, 8192, %s143, [#allocation18], 64, 64, 4
    $region45: #{covae_forward.8} parent=1 // pred_fallthru
      _
    // Predicated region
    $region46: #{covae_forward.8} parent=1 // pred_check
      _
    $region47: #{covae_forward.8} parent=1 // pred_check_branch
      %150 = sbr.rel (0) target = $region49
    $region48: #{covae_forward.8} parent=1 // pred_region
      %s152 = ssub.s32 16, 16
      %153 = vsyncadd [#allocation21], %s152
      %s155 = sshll.u32 [#allocation20], 4
      %s156 = int_to_ptr.vmem [resolvable:$true] %s155
      %158 = dma.hbm_to_vmem [thread:$0]  %s11, 16, %s156, [#allocation21]
    $region49: #{covae_forward.8} parent=1 // pred_fallthru
      _
    // Predicated region
    $region50: #{covae_forward.8} parent=1 // pred_check
      _
    $region51: #{covae_forward.8} parent=1 // pred_check_branch
      %160 = sbr.rel (0) target = $region53
    $region52: #{covae_forward.8} parent=1 // pred_region
      %161 = dma.done [#allocation3], 256
    $region53: #{covae_forward.8} parent=1 // pred_fallthru
      _
    // Predicated region
    $region54: #{covae_forward.8} parent=1 // pred_check
      _
    $region55: #{covae_forward.8} parent=1 // pred_check_branch
      %163 = sbr.rel (0) target = $region57
    $region56: #{covae_forward.8} parent=1 // pred_region
      %164 = dma.done [#allocation6], 8192
    $region57: #{covae_forward.8} parent=1 // pred_fallthru
      _
    // Predicated region
    $region58: #{covae_forward.8} parent=1 // pred_check
      _
    $region59: #{covae_forward.8} parent=1 // pred_check_branch
      %166 = sbr.rel (0) target = $region61
    $region60: #{covae_forward.8} parent=1 // pred_region
      %167 = dma.done [#allocation6], 16
    $region61: #{covae_forward.8} parent=1 // pred_fallthru
      _
    // Predicated region
    $region62: #{covae_forward.8} parent=1 // pred_check
      _
    $region63: #{covae_forward.8} parent=1 // pred_check_branch
      %169 = sbr.rel (0) target = $region65
    $region64: #{covae_forward.8} parent=1 // pred_region
      %170 = dma.done [#allocation9], 256
    $region65: #{covae_forward.8} parent=1 // pred_fallthru
      _
    // Predicated region
    $region66: #{covae_forward.8} parent=1 // pred_check
      _
    $region67: #{covae_forward.8} parent=1 // pred_check_branch
      %172 = sbr.rel (0) target = $region69
    $region68: #{covae_forward.8} parent=1 // pred_region
      %173 = dma.done [#allocation9], 16
    $region69: #{covae_forward.8} parent=1 // pred_fallthru
      _
    // Predicated region
    $region70: #{covae_forward.8} parent=1 // pred_check
      _
    $region71: #{covae_forward.8} parent=1 // pred_check_branch
      %175 = sbr.rel (0) target = $region73
    $region72: #{covae_forward.8} parent=1 // pred_region
      %176 = dma.done [#allocation12], 512
    $region73: #{covae_forward.8} parent=1 // pred_fallthru
      _
    // Predicated region
    $region74: #{covae_forward.8} parent=1 // pred_check
      _
    $region75: #{covae_forward.8} parent=1 // pred_check_branch
      %178 = sbr.rel (0) target = $region77
    $region76: #{covae_forward.8} parent=1 // pred_region
      %179 = dma.done [#allocation12], 16
    $region77: #{covae_forward.8} parent=1 // pred_fallthru
      _
    // Predicated region
    $region78: #{covae_forward.8} parent=1 // pred_check
      _
    $region79: #{covae_forward.8} parent=1 // pred_check_branch
      %181 = sbr.rel (0) target = $region81
    $region80: #{covae_forward.8} parent=1 // pred_region
      %182 = dma.done [#allocation15], 512
    $region81: #{covae_forward.8} parent=1 // pred_fallthru
      _
    // Predicated region
    $region82: #{covae_forward.8} parent=1 // pred_check
      _
    $region83: #{covae_forward.8} parent=1 // pred_check_branch
      %184 = sbr.rel (0) target = $region85
    $region84: #{covae_forward.8} parent=1 // pred_region
      %185 = dma.done [#allocation15], 16
    $region85: #{covae_forward.8} parent=1 // pred_fallthru
      _
    // Predicated region
    $region86: #{covae_forward.8} parent=1 // pred_check
      _
    $region87: #{covae_forward.8} parent=1 // pred_check_branch
      %187 = sbr.rel (0) target = $region89
    $region88: #{covae_forward.8} parent=1 // pred_region
      %188 = dma.done [#allocation18], 64
    $region89: #{covae_forward.8} parent=1 // pred_fallthru
      _
    // Predicated region
    $region90: #{covae_forward.8} parent=1 // pred_check
      _
    $region91: #{covae_forward.8} parent=1 // pred_check_branch
      %190 = sbr.rel (0) target = $region93
    $region92: #{covae_forward.8} parent=1 // pred_region
      %191 = dma.done [#allocation18], 8192
    $region93: #{covae_forward.8} parent=1 // pred_fallthru
      _
    // Predicated region
    $region94: #{covae_forward.8} parent=1 // pred_check
      _
    $region95: #{covae_forward.8} parent=1 // pred_check_branch
      %193 = sbr.rel (0) target = $region97
    $region96: #{covae_forward.8} parent=1 // pred_region
      %194 = dma.done [#allocation21], 16
    $region97: #{covae_forward.8} parent=1 // pred_fallthru
      _
    %v196 = vld [vmem:[#allocation2] sm:$0xff]
    %v197 = vld [vmem:[#allocation2 + $0x8] sm:$0xff]
    %v198 = vld [vmem:[#allocation5] sm:$0xf]
    %v199 = vld [vmem:[#allocation5 + $0x4] sm:$0xf]
    %v200 = vld [vmem:[#allocation5 + $0x8] sm:$0xf]
    %v201 = vld [vmem:[#allocation5 + $0xc] sm:$0xf]
    %v202 = vld [vmem:[#allocation5 + $0x10] sm:$0xf]
    %v203 = vld [vmem:[#allocation5 + $0x14] sm:$0xf]
    %v204 = vld [vmem:[#allocation5 + $0x18] sm:$0xf]
    %v205 = vld [vmem:[#allocation5 + $0x1c] sm:$0xf]
    %v206 = vld [vmem:[#allocation5 + $0x20] sm:$0xf]
    %v207 = vld [vmem:[#allocation5 + $0x24] sm:$0xf]
    %v208 = vld [vmem:[#allocation5 + $0x28] sm:$0xf]
    %v209 = vld [vmem:[#allocation5 + $0x2c] sm:$0xf]
    %v210 = vld [vmem:[#allocation5 + $0x30] sm:$0xf]
    %v211 = vld [vmem:[#allocation5 + $0x34] sm:$0xf]
    %v212 = vld [vmem:[#allocation5 + $0x38] sm:$0xf]
    %v213 = vld [vmem:[#allocation5 + $0x3c] sm:$0xf]
    %v214 = vld [vmem:[#allocation5 + $0x40] sm:$0xf]
    %v215 = vld [vmem:[#allocation5 + $0x44] sm:$0xf]
    %v216 = vld [vmem:[#allocation5 + $0x48] sm:$0xf]
    %v217 = vld [vmem:[#allocation5 + $0x4c] sm:$0xf]
    %v218 = vld [vmem:[#allocation5 + $0x50] sm:$0xf]
    %v219 = vld [vmem:[#allocation5 + $0x54] sm:$0xf]
    %v220 = vld [vmem:[#allocation5 + $0x58] sm:$0xf]
    %v221 = vld [vmem:[#allocation5 + $0x5c] sm:$0xf]
    %v222 = vld [vmem:[#allocation5 + $0x60] sm:$0xf]
    %v223 = vld [vmem:[#allocation5 + $0x64] sm:$0xf]
    %v224 = vld [vmem:[#allocation5 + $0x68] sm:$0xf]
    %v225 = vld [vmem:[#allocation5 + $0x6c] sm:$0xf]
    %v226 = vld [vmem:[#allocation5 + $0x70] sm:$0xf]
    %v227 = vld [vmem:[#allocation5 + $0x74] sm:$0xf]
    %v228 = vld [vmem:[#allocation5 + $0x78] sm:$0xf]
    %v229 = vld [vmem:[#allocation5 + $0x7c] sm:$0xf]
    %v230 = vld [vmem:[#allocation5 + $0x80] sm:$0xf]
    %v231 = vld [vmem:[#allocation5 + $0x84] sm:$0xf]
    %v232 = vld [vmem:[#allocation5 + $0x88] sm:$0xf]
    %v233 = vld [vmem:[#allocation5 + $0x8c] sm:$0xf]
    %v234 = vld [vmem:[#allocation5 + $0x90] sm:$0xf]
    %v235 = vld [vmem:[#allocation5 + $0x94] sm:$0xf]
    %v236 = vld [vmem:[#allocation5 + $0x98] sm:$0xf]
    %v237 = vld [vmem:[#allocation5 + $0x9c] sm:$0xf]
    %v238 = vld [vmem:[#allocation5 + $0xa0] sm:$0xf]
    %v239 = vld [vmem:[#allocation5 + $0xa4] sm:$0xf]
    %v240 = vld [vmem:[#allocation5 + $0xa8] sm:$0xf]
    %v241 = vld [vmem:[#allocation5 + $0xac] sm:$0xf]
    %v242 = vld [vmem:[#allocation5 + $0xb0] sm:$0xf]
    %v243 = vld [vmem:[#allocation5 + $0xb4] sm:$0xf]
    %v244 = vld [vmem:[#allocation5 + $0xb8] sm:$0xf]
    %v245 = vld [vmem:[#allocation5 + $0xbc] sm:$0xf]
    %v246 = vld [vmem:[#allocation5 + $0xc0] sm:$0xf]
    %v247 = vld [vmem:[#allocation5 + $0xc4] sm:$0xf]
    %v248 = vld [vmem:[#allocation5 + $0xc8] sm:$0xf]
    %v249 = vld [vmem:[#allocation5 + $0xcc] sm:$0xf]
    %v250 = vld [vmem:[#allocation5 + $0xd0] sm:$0xf]
    %v251 = vld [vmem:[#allocation5 + $0xd4] sm:$0xf]
    %v252 = vld [vmem:[#allocation5 + $0xd8] sm:$0xf]
    %v253 = vld [vmem:[#allocation5 + $0xdc] sm:$0xf]
    %v254 = vld [vmem:[#allocation5 + $0xe0] sm:$0xf]
    %v255 = vld [vmem:[#allocation5 + $0xe4] sm:$0xf]
    %v256 = vld [vmem:[#allocation5 + $0xe8] sm:$0xf]
    %v257 = vld [vmem:[#allocation5 + $0xec] sm:$0xf]
    %v258 = vld [vmem:[#allocation5 + $0xf0] sm:$0xf]
    %v259 = vld [vmem:[#allocation5 + $0xf4] sm:$0xf]
    %v260 = vld [vmem:[#allocation5 + $0xf8] sm:$0xf]
    %v261 = vld [vmem:[#allocation5 + $0xfc] sm:$0xf]
    %v262 = vld [vmem:[#allocation5 + $0x100] sm:$0xf]
    %v263 = vld [vmem:[#allocation5 + $0x104] sm:$0xf]
    %v264 = vld [vmem:[#allocation5 + $0x108] sm:$0xf]
    %v265 = vld [vmem:[#allocation5 + $0x10c] sm:$0xf]
    %v266 = vld [vmem:[#allocation5 + $0x110] sm:$0xf]
    %v267 = vld [vmem:[#allocation5 + $0x114] sm:$0xf]
    %v268 = vld [vmem:[#allocation5 + $0x118] sm:$0xf]
    %v269 = vld [vmem:[#allocation5 + $0x11c] sm:$0xf]
    %v270 = vld [vmem:[#allocation5 + $0x120] sm:$0xf]
    %v271 = vld [vmem:[#allocation5 + $0x124] sm:$0xf]
    %v272 = vld [vmem:[#allocation5 + $0x128] sm:$0xf]
    %v273 = vld [vmem:[#allocation5 + $0x12c] sm:$0xf]
    %v274 = vld [vmem:[#allocation5 + $0x130] sm:$0xf]
    %v275 = vld [vmem:[#allocation5 + $0x134] sm:$0xf]
    %v276 = vld [vmem:[#allocation5 + $0x138] sm:$0xf]
    %v277 = vld [vmem:[#allocation5 + $0x13c] sm:$0xf]
    %v278 = vld [vmem:[#allocation5 + $0x140] sm:$0xf]
    %v279 = vld [vmem:[#allocation5 + $0x144] sm:$0xf]
    %v280 = vld [vmem:[#allocation5 + $0x148] sm:$0xf]
    %v281 = vld [vmem:[#allocation5 + $0x14c] sm:$0xf]
    %v282 = vld [vmem:[#allocation5 + $0x150] sm:$0xf]
    %v283 = vld [vmem:[#allocation5 + $0x154] sm:$0xf]
    %v284 = vld [vmem:[#allocation5 + $0x158] sm:$0xf]
    %v285 = vld [vmem:[#allocation5 + $0x15c] sm:$0xf]
    %v286 = vld [vmem:[#allocation5 + $0x160] sm:$0xf]
    %v287 = vld [vmem:[#allocation5 + $0x164] sm:$0xf]
    %v288 = vld [vmem:[#allocation5 + $0x168] sm:$0xf]
    %v289 = vld [vmem:[#allocation5 + $0x16c] sm:$0xf]
    %v290 = vld [vmem:[#allocation5 + $0x170] sm:$0xf]
    %v291 = vld [vmem:[#allocation5 + $0x174] sm:$0xf]
    %v292 = vld [vmem:[#allocation5 + $0x178] sm:$0xf]
    %v293 = vld [vmem:[#allocation5 + $0x17c] sm:$0xf]
    %v294 = vld [vmem:[#allocation5 + $0x180] sm:$0xf]
    %v295 = vld [vmem:[#allocation5 + $0x184] sm:$0xf]
    %v296 = vld [vmem:[#allocation5 + $0x188] sm:$0xf]
    %v297 = vld [vmem:[#allocation5 + $0x18c] sm:$0xf]
    %v298 = vld [vmem:[#allocation5 + $0x190] sm:$0xf]
    %v299 = vld [vmem:[#allocation5 + $0x194] sm:$0xf]
    %v300 = vld [vmem:[#allocation5 + $0x198] sm:$0xf]
    %v301 = vld [vmem:[#allocation5 + $0x19c] sm:$0xf]
    %v302 = vld [vmem:[#allocation5 + $0x1a0] sm:$0xf]
    %v303 = vld [vmem:[#allocation5 + $0x1a4] sm:$0xf]
    %v304 = vld [vmem:[#allocation5 + $0x1a8] sm:$0xf]
    %v305 = vld [vmem:[#allocation5 + $0x1ac] sm:$0xf]
    %v306 = vld [vmem:[#allocation5 + $0x1b0] sm:$0xf]
    %v307 = vld [vmem:[#allocation5 + $0x1b4] sm:$0xf]
    %v308 = vld [vmem:[#allocation5 + $0x1b8] sm:$0xf]
    %v309 = vld [vmem:[#allocation5 + $0x1bc] sm:$0xf]
    %v310 = vld [vmem:[#allocation5 + $0x1c0] sm:$0xf]
    %v311 = vld [vmem:[#allocation5 + $0x1c4] sm:$0xf]
    %v312 = vld [vmem:[#allocation5 + $0x1c8] sm:$0xf]
    %v313 = vld [vmem:[#allocation5 + $0x1cc] sm:$0xf]
    %v314 = vld [vmem:[#allocation5 + $0x1d0] sm:$0xf]
    %v315 = vld [vmem:[#allocation5 + $0x1d4] sm:$0xf]
    %v316 = vld [vmem:[#allocation5 + $0x1d8] sm:$0xf]
    %v317 = vld [vmem:[#allocation5 + $0x1dc] sm:$0xf]
    %v318 = vld [vmem:[#allocation5 + $0x1e0] sm:$0xf]
    %v319 = vld [vmem:[#allocation5 + $0x1e4] sm:$0xf]
    %v320 = vld [vmem:[#allocation5 + $0x1e8] sm:$0xf]
    %v321 = vld [vmem:[#allocation5 + $0x1ec] sm:$0xf]
    %v322 = vld [vmem:[#allocation5 + $0x1f0] sm:$0xf]
    %v323 = vld [vmem:[#allocation5 + $0x1f4] sm:$0xf]
    %v324 = vld [vmem:[#allocation5 + $0x1f8] sm:$0xf]
    %v325 = vld [vmem:[#allocation5 + $0x1fc] sm:$0xf]
    %v328 = vcombine.high %v196, %v196
    %v330 = vunpack.c.l.s4 1983009808
    %v331 = vunpack.c.0.s8 %v330
    %v332 = vlaneseq
    %v333 = vshrl.u32 %v332, 7
    %v334 = vsub.s32 %v331, %v333
    %v335 = vrot.slane %v196, %v334
    %v337 = vunpack.c.l.s4 1983009808
    %v338 = vunpack.c.0.s8 %v337
    %v339 = vlaneseq
    %v340 = vshrl.u32 %v339, 7
    %v341 = vsub.s32 %v338, %v340
    %v342 = vrot.slane %v328, %v341
    %v343 = vcombine.high %v335, %v335
    %v344 = vcombine.high %v342, %v342
    %v345 = vcombine.high %v197, %v197
    %v347 = vunpack.c.l.s4 1983009808
    %v348 = vunpack.c.0.s8 %v347
    %v349 = vlaneseq
    %v350 = vshrl.u32 %v349, 7
    %v351 = vsub.s32 %v348, %v350
    %v352 = vrot.slane %v197, %v351
    %v354 = vunpack.c.l.s4 1983009808
    %v355 = vunpack.c.0.s8 %v354
    %v356 = vlaneseq
    %v357 = vshrl.u32 %v356, 7
    %v358 = vsub.s32 %v355, %v357
    %v359 = vrot.slane %v345, %v358
    %v360 = vcombine.high %v352, %v352
    %v361 = vcombine.high %v359, %v359
    %v498 = vunpack.c.l.b16 %v198
    %v499 = vunpack.c.l.b16 %v199
    %v500 = vunpack.c.l.b16 %v200
    %v501 = vunpack.c.l.b16 %v201
    %v502 = vunpack.c.l.b16 %v202
    %v503 = vunpack.c.l.b16 %v203
    %v504 = vunpack.c.l.b16 %v204
    %v505 = vunpack.c.l.b16 %v205
    %v506 = vunpack.c.l.b16 %v206
    %v507 = vunpack.c.l.b16 %v207
    %v508 = vunpack.c.l.b16 %v208
    %v509 = vunpack.c.l.b16 %v209
    %v510 = vunpack.c.l.b16 %v210
    %v511 = vunpack.c.l.b16 %v211
    %v512 = vunpack.c.l.b16 %v212
    %v513 = vunpack.c.l.b16 %v213
    %v514 = vunpack.c.l.b16 %v214
    %v515 = vunpack.c.l.b16 %v215
    %v516 = vunpack.c.l.b16 %v216
    %v517 = vunpack.c.l.b16 %v217
    %v518 = vunpack.c.l.b16 %v218
    %v519 = vunpack.c.l.b16 %v219
    %v520 = vunpack.c.l.b16 %v220
    %v521 = vunpack.c.l.b16 %v221
    %v522 = vunpack.c.l.b16 %v222
    %v523 = vunpack.c.l.b16 %v223
    %v524 = vunpack.c.l.b16 %v224
    %v525 = vunpack.c.l.b16 %v225
    %v526 = vunpack.c.l.b16 %v226
    %v527 = vunpack.c.l.b16 %v227
    %v528 = vunpack.c.l.b16 %v228
    %v529 = vunpack.c.l.b16 %v229
    %v530 = vunpack.c.l.b16 %v230
    %v531 = vunpack.c.l.b16 %v231
    %v532 = vunpack.c.l.b16 %v232
    %v533 = vunpack.c.l.b16 %v233
    %v534 = vunpack.c.l.b16 %v234
    %v535 = vunpack.c.l.b16 %v235
    %v536 = vunpack.c.l.b16 %v236
    %v537 = vunpack.c.l.b16 %v237
    %v538 = vunpack.c.l.b16 %v238
    %v539 = vunpack.c.l.b16 %v239
    %v540 = vunpack.c.l.b16 %v240
    %v541 = vunpack.c.l.b16 %v241
    %v542 = vunpack.c.l.b16 %v242
    %v543 = vunpack.c.l.b16 %v243
    %v544 = vunpack.c.l.b16 %v244
    %v545 = vunpack.c.l.b16 %v245
    %v546 = vunpack.c.l.b16 %v246
    %v547 = vunpack.c.l.b16 %v247
    %v548 = vunpack.c.l.b16 %v248
    %v549 = vunpack.c.l.b16 %v249
    %v550 = vunpack.c.l.b16 %v250
    %v551 = vunpack.c.l.b16 %v251
    %v552 = vunpack.c.l.b16 %v252
    %v553 = vunpack.c.l.b16 %v253
    %v554 = vunpack.c.l.b16 %v254
    %v555 = vunpack.c.l.b16 %v255
    %v556 = vunpack.c.l.b16 %v256
    %v557 = vunpack.c.l.b16 %v257
    %v558 = vunpack.c.l.b16 %v258
    %v559 = vunpack.c.l.b16 %v259
    %v560 = vunpack.c.l.b16 %v260
    %v561 = vunpack.c.l.b16 %v261
    %v562 = vunpack.c.l.b16 %v262
    %v563 = vunpack.c.l.b16 %v263
    %v564 = vunpack.c.l.b16 %v264
    %v565 = vunpack.c.l.b16 %v265
    %v566 = vunpack.c.l.b16 %v266
    %v567 = vunpack.c.l.b16 %v267
    %v568 = vunpack.c.l.b16 %v268
    %v569 = vunpack.c.l.b16 %v269
    %v570 = vunpack.c.l.b16 %v270
    %v571 = vunpack.c.l.b16 %v271
    %v572 = vunpack.c.l.b16 %v272
    %v573 = vunpack.c.l.b16 %v273
    %v574 = vunpack.c.l.b16 %v274
    %v575 = vunpack.c.l.b16 %v275
    %v576 = vunpack.c.l.b16 %v276
    %v577 = vunpack.c.l.b16 %v277
    %v578 = vunpack.c.l.b16 %v278
    %v579 = vunpack.c.l.b16 %v279
    %v580 = vunpack.c.l.b16 %v280
    %v581 = vunpack.c.l.b16 %v281
    %v582 = vunpack.c.l.b16 %v282
    %v583 = vunpack.c.l.b16 %v283
    %v584 = vunpack.c.l.b16 %v284
    %v585 = vunpack.c.l.b16 %v285
    %v586 = vunpack.c.l.b16 %v286
    %v587 = vunpack.c.l.b16 %v287
    %v588 = vunpack.c.l.b16 %v288
    %v589 = vunpack.c.l.b16 %v289
    %v590 = vunpack.c.l.b16 %v290
    %v591 = vunpack.c.l.b16 %v291
    %v592 = vunpack.c.l.b16 %v292
    %v593 = vunpack.c.l.b16 %v293
    %v594 = vunpack.c.l.b16 %v294
    %v595 = vunpack.c.l.b16 %v295
    %v596 = vunpack.c.l.b16 %v296
    %v597 = vunpack.c.l.b16 %v297
    %v598 = vunpack.c.l.b16 %v298
    %v599 = vunpack.c.l.b16 %v299
    %v600 = vunpack.c.l.b16 %v300
    %v601 = vunpack.c.l.b16 %v301
    %v602 = vunpack.c.l.b16 %v302
    %v603 = vunpack.c.l.b16 %v303
    %v604 = vunpack.c.l.b16 %v304
    %v605 = vunpack.c.l.b16 %v305
    %v606 = vunpack.c.l.b16 %v306
    %v607 = vunpack.c.l.b16 %v307
    %v608 = vunpack.c.l.b16 %v308
    %v609 = vunpack.c.l.b16 %v309
    %v610 = vunpack.c.l.b16 %v310
    %v611 = vunpack.c.l.b16 %v311
    %v612 = vunpack.c.l.b16 %v312
    %v613 = vunpack.c.l.b16 %v313
    %v614 = vunpack.c.l.b16 %v314
    %v615 = vunpack.c.l.b16 %v315
    %v616 = vunpack.c.l.b16 %v316
    %v617 = vunpack.c.l.b16 %v317
    %v618 = vunpack.c.l.b16 %v318
    %v619 = vunpack.c.l.b16 %v319
    %v620 = vunpack.c.l.b16 %v320
    %v621 = vunpack.c.l.b16 %v321
    %v622 = vunpack.c.l.b16 %v322
    %v623 = vunpack.c.l.b16 %v323
    %v624 = vunpack.c.l.b16 %v324
    %v625 = vunpack.c.l.b16 %v325
    %v626 = vpack.c.b16 %v499, %v498
    %v627 = vpack.c.b16 %v501, %v500
    %v628 = vpack.c.b16 %v503, %v502
    %v629 = vpack.c.b16 %v505, %v504
    %v630 = vpack.c.b16 %v507, %v506
    %v631 = vpack.c.b16 %v509, %v508
    %v632 = vpack.c.b16 %v511, %v510
    %v633 = vpack.c.b16 %v513, %v512
    %v634 = vpack.c.b16 %v515, %v514
    %v635 = vpack.c.b16 %v517, %v516
    %v636 = vpack.c.b16 %v519, %v518
    %v637 = vpack.c.b16 %v521, %v520
    %v638 = vpack.c.b16 %v523, %v522
    %v639 = vpack.c.b16 %v525, %v524
    %v640 = vpack.c.b16 %v527, %v526
    %v641 = vpack.c.b16 %v529, %v528
    %v642 = vpack.c.b16 %v531, %v530
    %v643 = vpack.c.b16 %v533, %v532
    %v644 = vpack.c.b16 %v535, %v534
    %v645 = vpack.c.b16 %v537, %v536
    %v646 = vpack.c.b16 %v539, %v538
    %v647 = vpack.c.b16 %v541, %v540
    %v648 = vpack.c.b16 %v543, %v542
    %v649 = vpack.c.b16 %v545, %v544
    %v650 = vpack.c.b16 %v547, %v546
    %v651 = vpack.c.b16 %v549, %v548
    %v652 = vpack.c.b16 %v551, %v550
    %v653 = vpack.c.b16 %v553, %v552
    %v654 = vpack.c.b16 %v555, %v554
    %v655 = vpack.c.b16 %v557, %v556
    %v656 = vpack.c.b16 %v559, %v558
    %v657 = vpack.c.b16 %v561, %v560
    %v658 = vpack.c.b16 %v563, %v562
    %v659 = vpack.c.b16 %v565, %v564
    %v660 = vpack.c.b16 %v567, %v566
    %v661 = vpack.c.b16 %v569, %v568
    %v662 = vpack.c.b16 %v571, %v570
    %v663 = vpack.c.b16 %v573, %v572
    %v664 = vpack.c.b16 %v575, %v574
    %v665 = vpack.c.b16 %v577, %v576
    %v666 = vpack.c.b16 %v579, %v578
    %v667 = vpack.c.b16 %v581, %v580
    %v668 = vpack.c.b16 %v583, %v582
    %v669 = vpack.c.b16 %v585, %v584
    %v670 = vpack.c.b16 %v587, %v586
    %v671 = vpack.c.b16 %v589, %v588
    %v672 = vpack.c.b16 %v591, %v590
    %v673 = vpack.c.b16 %v593, %v592
    %v674 = vpack.c.b16 %v595, %v594
    %v675 = vpack.c.b16 %v597, %v596
    %v676 = vpack.c.b16 %v599, %v598
    %v677 = vpack.c.b16 %v601, %v600
    %v678 = vpack.c.b16 %v603, %v602
    %v679 = vpack.c.b16 %v605, %v604
    %v680 = vpack.c.b16 %v607, %v606
    %v681 = vpack.c.b16 %v609, %v608
    %v682 = vpack.c.b16 %v611, %v610
    %v683 = vpack.c.b16 %v613, %v612
    %v684 = vpack.c.b16 %v615, %v614
    %v685 = vpack.c.b16 %v617, %v616
    %v686 = vpack.c.b16 %v619, %v618
    %v687 = vpack.c.b16 %v621, %v620
    %v688 = vpack.c.b16 %v623, %v622
    %v689 = vpack.c.b16 %v625, %v624
    %754 = vmatprep.subr.bf16.mxu0 0
    %755 = vmatpush1.bf16.msra.mxu0 %v626
    %756 = vmatprep.subr.bf16.mxu0 0
    %757 = vmatpush1.bf16.msra.mxu0 %v627
    %758 = vmatprep.subr.bf16.mxu0 0
    %759 = vmatpush1.bf16.msra.mxu0 %v628
    %760 = vmatprep.subr.bf16.mxu0 0
    %761 = vmatpush1.bf16.msra.mxu0 %v629
    %762 = vmatprep.subr.bf16.mxu0 0
    %763 = vmatpush1.bf16.msra.mxu0 %v630
    %764 = vmatprep.subr.bf16.mxu0 0
    %765 = vmatpush1.bf16.msra.mxu0 %v631
    %766 = vmatprep.subr.bf16.mxu0 0
    %767 = vmatpush1.bf16.msra.mxu0 %v632
    %768 = vmatprep.subr.bf16.mxu0 0
    %769 = vmatpush1.bf16.msra.mxu0 %v633
    %770 = vmatprep.subr.bf16.mxu0 0
    %771 = vmatpush1.bf16.msra.mxu0 %v634
    %772 = vmatprep.subr.bf16.mxu0 0
    %773 = vmatpush1.bf16.msra.mxu0 %v635
    %774 = vmatprep.subr.bf16.mxu0 0
    %775 = vmatpush1.bf16.msra.mxu0 %v636
    %776 = vmatprep.subr.bf16.mxu0 0
    %777 = vmatpush1.bf16.msra.mxu0 %v637
    %778 = vmatprep.subr.bf16.mxu0 0
    %779 = vmatpush1.bf16.msra.mxu0 %v638
    %780 = vmatprep.subr.bf16.mxu0 0
    %781 = vmatpush1.bf16.msra.mxu0 %v639
    %782 = vmatprep.subr.bf16.mxu0 0
    %783 = vmatpush1.bf16.msra.mxu0 %v640
    %784 = vmatprep.subr.bf16.mxu0 0
    %785 = vmatpush1.bf16.msra.mxu0 %v641
    %786 = vmatprep.mubr.bf16.mxu0 %v343
    %787 = vmatmul.mubr.bf16.gmra.mrb[0].mxu0 %v335
    %v788 = vpop.f32.mrb[0].mxu0
    %v789 = vadd.f32 0.0, %v788
    %v790 = vpop.f32.mrb[0].mxu0
    %v791 = vpop.f32.mrb[0].mxu0
    %v792 = vpop.f32.mrb[0].mxu0
    %793 = vdwg.mxu0
    %794 = vmatprep.subr.bf16.mxu0 0
    %795 = vmatpush1.bf16.msra.mxu0 %v642
    %796 = vmatprep.subr.bf16.mxu0 0
    %797 = vmatpush1.bf16.msra.mxu0 %v643
    %798 = vmatprep.subr.bf16.mxu0 0
    %799 = vmatpush1.bf16.msra.mxu0 %v644
    %800 = vmatprep.subr.bf16.mxu0 0
    %801 = vmatpush1.bf16.msra.mxu0 %v645
    %802 = vmatprep.subr.bf16.mxu0 0
    %803 = vmatpush1.bf16.msra.mxu0 %v646
    %804 = vmatprep.subr.bf16.mxu0 0
    %805 = vmatpush1.bf16.msra.mxu0 %v647
    %806 = vmatprep.subr.bf16.mxu0 0
    %807 = vmatpush1.bf16.msra.mxu0 %v648
    %808 = vmatprep.subr.bf16.mxu0 0
    %809 = vmatpush1.bf16.msra.mxu0 %v649
    %810 = vmatprep.subr.bf16.mxu0 0
    %811 = vmatpush1.bf16.msra.mxu0 %v650
    %812 = vmatprep.subr.bf16.mxu0 0
    %813 = vmatpush1.bf16.msra.mxu0 %v651
    %814 = vmatprep.subr.bf16.mxu0 0
    %815 = vmatpush1.bf16.msra.mxu0 %v652
    %816 = vmatprep.subr.bf16.mxu0 0
    %817 = vmatpush1.bf16.msra.mxu0 %v653
    %818 = vmatprep.subr.bf16.mxu0 0
    %819 = vmatpush1.bf16.msra.mxu0 %v654
    %820 = vmatprep.subr.bf16.mxu0 0
    %821 = vmatpush1.bf16.msra.mxu0 %v655
    %822 = vmatprep.subr.bf16.mxu0 0
    %823 = vmatpush1.bf16.msra.mxu0 %v656
    %824 = vmatprep.subr.bf16.mxu0 0
    %825 = vmatpush1.bf16.msra.mxu0 %v657
    %826 = vmatprep.mubr.bf16.mxu0 %v344
    %827 = vmatmul.mubr.bf16.gmra.mrb[0].mxu0 %v342
    %v828 = vpop.f32.mrb[0].mxu0
    %v829 = vadd.f32 %v789, %v828
    %v830 = vpop.f32.mrb[0].mxu0
    %v831 = vpop.f32.mrb[0].mxu0
    %v832 = vpop.f32.mrb[0].mxu0
    %833 = vdwg.mxu0
    %834 = vmatprep.subr.bf16.mxu0 0
    %835 = vmatpush1.bf16.msra.mxu0 %v658
    %836 = vmatprep.subr.bf16.mxu0 0
    %837 = vmatpush1.bf16.msra.mxu0 %v659
    %838 = vmatprep.subr.bf16.mxu0 0
    %839 = vmatpush1.bf16.msra.mxu0 %v660
    %840 = vmatprep.subr.bf16.mxu0 0
    %841 = vmatpush1.bf16.msra.mxu0 %v661
    %842 = vmatprep.subr.bf16.mxu0 0
    %843 = vmatpush1.bf16.msra.mxu0 %v662
    %844 = vmatprep.subr.bf16.mxu0 0
    %845 = vmatpush1.bf16.msra.mxu0 %v663
    %846 = vmatprep.subr.bf16.mxu0 0
    %847 = vmatpush1.bf16.msra.mxu0 %v664
    %848 = vmatprep.subr.bf16.mxu0 0
    %849 = vmatpush1.bf16.msra.mxu0 %v665
    %850 = vmatprep.subr.bf16.mxu0 0
    %851 = vmatpush1.bf16.msra.mxu0 %v666
    %852 = vmatprep.subr.bf16.mxu0 0
    %853 = vmatpush1.bf16.msra.mxu0 %v667
    %854 = vmatprep.subr.bf16.mxu0 0
    %855 = vmatpush1.bf16.msra.mxu0 %v668
    %856 = vmatprep.subr.bf16.mxu0 0
    %857 = vmatpush1.bf16.msra.mxu0 %v669
    %858 = vmatprep.subr.bf16.mxu0 0
    %859 = vmatpush1.bf16.msra.mxu0 %v670
    %860 = vmatprep.subr.bf16.mxu0 0
    %861 = vmatpush1.bf16.msra.mxu0 %v671
    %862 = vmatprep.subr.bf16.mxu0 0
    %863 = vmatpush1.bf16.msra.mxu0 %v672
    %864 = vmatprep.subr.bf16.mxu0 0
    %865 = vmatpush1.bf16.msra.mxu0 %v673
    %866 = vmatprep.mubr.bf16.mxu0 %v360
    %867 = vmatmul.mubr.bf16.gmra.mrb[0].mxu0 %v352
    %v868 = vpop.f32.mrb[0].mxu0
    %v869 = vadd.f32 %v829, %v868
    %v870 = vpop.f32.mrb[0].mxu0
    %v871 = vpop.f32.mrb[0].mxu0
    %v872 = vpop.f32.mrb[0].mxu0
    %873 = vdwg.mxu0
    %874 = vmatprep.subr.bf16.mxu0 0
    %875 = vmatpush1.bf16.msra.mxu0 %v674
    %876 = vmatprep.subr.bf16.mxu0 0
    %877 = vmatpush1.bf16.msra.mxu0 %v675
    %878 = vmatprep.subr.bf16.mxu0 0
    %879 = vmatpush1.bf16.msra.mxu0 %v676
    %880 = vmatprep.subr.bf16.mxu0 0
    %881 = vmatpush1.bf16.msra.mxu0 %v677
    %882 = vmatprep.subr.bf16.mxu0 0
    %883 = vmatpush1.bf16.msra.mxu0 %v678
    %884 = vmatprep.subr.bf16.mxu0 0
    %885 = vmatpush1.bf16.msra.mxu0 %v679
    %886 = vmatprep.subr.bf16.mxu0 0
    %887 = vmatpush1.bf16.msra.mxu0 %v680
    %888 = vmatprep.subr.bf16.mxu0 0
    %889 = vmatpush1.bf16.msra.mxu0 %v681
    %890 = vmatprep.subr.bf16.mxu0 0
    %891 = vmatpush1.bf16.msra.mxu0 %v682
    %892 = vmatprep.subr.bf16.mxu0 0
    %893 = vmatpush1.bf16.msra.mxu0 %v683
    %894 = vmatprep.subr.bf16.mxu0 0
    %895 = vmatpush1.bf16.msra.mxu0 %v684
    %896 = vmatprep.subr.bf16.mxu0 0
    %897 = vmatpush1.bf16.msra.mxu0 %v685
    %898 = vmatprep.subr.bf16.mxu0 0
    %899 = vmatpush1.bf16.msra.mxu0 %v686
    %900 = vmatprep.subr.bf16.mxu0 0
    %901 = vmatpush1.bf16.msra.mxu0 %v687
    %902 = vmatprep.subr.bf16.mxu0 0
    %903 = vmatpush1.bf16.msra.mxu0 %v688
    %904 = vmatprep.subr.bf16.mxu0 0
    %905 = vmatpush1.bf16.msra.mxu0 %v689
    %906 = vmatprep.mubr.bf16.mxu0 %v361
    %907 = vmatmul.mubr.bf16.gmra.mrb[0].mxu0 %v359
    %v908 = vpop.f32.mrb[0].mxu0
    %v909 = vadd.f32 %v869, %v908
    %v910 = vpop.f32.mrb[0].mxu0
    %v911 = vpop.f32.mrb[0].mxu0
    %v912 = vpop.f32.mrb[0].mxu0
    %913 = vdwg.mxu0
    %v914 = vld [vmem:[#allocation7] sm:$0x1]
    %vm915 = vcmask 257024
    %v916 = vsel %vm915, %v909, 0.0
    %v917 = vrot.slane %v916, 4
    %v918 = vadd.f32 %v916, %v917
    %v919 = vrot.slane %v918, 2
    %v920 = vadd.f32 %v918, %v919
    %v921 = vrot.slane %v920, 1
    %v922 = vadd.f32 %v920, %v921
    %v923 = vrcp.pop 4.0
    %v924 = vmul.f32 %v922, %v923
    %v925 = vmul.f32 %v909, %v909
    %v926 = vsel %vm915, %v925, 0.0
    %v927 = vrot.slane %v926, 4
    %v928 = vadd.f32 %v926, %v927
    %v929 = vrot.slane %v928, 2
    %v930 = vadd.f32 %v928, %v929
    %v931 = vrot.slane %v930, 1
    %v932 = vadd.f32 %v930, %v931
    %v933 = vmul.f32 %v932, %v923
    %v934 = vmul.f32 %v924, %v924
    %v935 = vsub.f32 %v933, %v934
    %v936 = vmax.f32 %v935, 0.0
    %v937 = vadd.f32 %v936, 1e-05
    %v938 = vrsqrt.pop %v937
    %v939 = vmul.f32 %v909, %v938
    %v940 = vmul.f32 %v924, %v938
    %v941 = vsub.f32 %v914, %v940
    %v943 = vlaneseq
    %v944 = vshrl.u32 %v943, 7
    %v945 = vsub.s32 0, %v944
    %v946 = vrot.slane %v941, %v945
    %v948 = vadd.f32 %v939, %v946
    %vm949 = vcmp.ge.f32.partialorder %v948, 0.0
    %v950 = vmul.f32 %v948, 0.01
    %v951 = vsel %vm949, %v948, %v950
    %v952 = vpack.c.bf16 %v951, %v951
    %v953 = vld [vmem:[#allocation8] sm:$0xf]
    %v954 = vld [vmem:[#allocation8 + $0x4] sm:$0xf]
    %v955 = vld [vmem:[#allocation8 + $0x8] sm:$0xf]
    %v956 = vld [vmem:[#allocation8 + $0xc] sm:$0xf]
    %v961 = vunpack.c.l.b16 %v953
    %v962 = vunpack.c.l.b16 %v954
    %v963 = vunpack.c.l.b16 %v955
    %v964 = vunpack.c.l.b16 %v956
    %v965 = vpack.c.b16 %v962, %v961
    %v966 = vpack.c.b16 %v964, %v963
    %vm969 = vcmask 261120
    %v971 = vsel %vm969, %v952, 0
    %973 = vmatprep.subr.bf16.mxu0 0
    %974 = vmatpush1.bf16.msra.mxu0 %v965
    %975 = vmatprep.subr.bf16.mxu0 0
    %976 = vmatpush1.bf16.msra.mxu0 %v966
    %977 = vmatprep.subr.bf16.mxu0 0
    %978 = vmatpush1.bf16.msra.mxu0 0
    %979 = vmatprep.subr.bf16.mxu0 0
    %980 = vmatpush1.bf16.msra.mxu0 0
    %981 = vmatprep.subr.bf16.mxu0 0
    %982 = vmatpush1.bf16.msra.mxu0 0
    %983 = vmatprep.subr.bf16.mxu0 0
    %984 = vmatpush1.bf16.msra.mxu0 0
    %985 = vmatprep.subr.bf16.mxu0 0
    %986 = vmatpush1.bf16.msra.mxu0 0
    %987 = vmatprep.subr.bf16.mxu0 0
    %988 = vmatpush1.bf16.msra.mxu0 0
    %989 = vmatprep.subr.bf16.mxu0 0
    %990 = vmatpush1.bf16.msra.mxu0 0
    %991 = vmatprep.subr.bf16.mxu0 0
    %992 = vmatpush1.bf16.msra.mxu0 0
    %993 = vmatprep.subr.bf16.mxu0 0
    %994 = vmatpush1.bf16.msra.mxu0 0
    %995 = vmatprep.subr.bf16.mxu0 0
    %996 = vmatpush1.bf16.msra.mxu0 0
    %997 = vmatprep.subr.bf16.mxu0 0
    %998 = vmatpush1.bf16.msra.mxu0 0
    %999 = vmatprep.subr.bf16.mxu0 0
    %1000 = vmatpush1.bf16.msra.mxu0 0
    %1001 = vmatprep.subr.bf16.mxu0 0
    %1002 = vmatpush1.bf16.msra.mxu0 0
    %1003 = vmatprep.subr.bf16.mxu0 0
    %1004 = vmatpush1.bf16.msra.mxu0 0
    %1005 = vmatprep.mubr.bf16.mxu0 0
    %1006 = vmatmul.mubr.bf16.gmra.mrb[0].mxu0 %v971
    %v1007 = vpop.f32.mrb[0].mxu0
    %v1008 = vadd.f32 0.0, %v1007
    %v1009 = vpop.f32.mrb[0].mxu0
    %v1010 = vpop.f32.mrb[0].mxu0
    %v1011 = vpop.f32.mrb[0].mxu0
    %1012 = vdwg.mxu0
    %v1013 = vld [vmem:[#allocation10] sm:$0x1]
    %vm1014 = vcmask 519168
    %v1015 = vsel %vm1014, %v1008, 0.0
    %v1016 = vrot.slane %v1015, 4
    %v1017 = vadd.f32 %v1015, %v1016
    %v1018 = vrot.slane %v1017, 2
    %v1019 = vadd.f32 %v1017, %v1018
    %v1020 = vrot.slane %v1019, 1
    %v1021 = vadd.f32 %v1019, %v1020
    %v1022 = vmul.f32 %v1021, %v923
    %v1023 = vmul.f32 %v1008, %v1008
    %v1024 = vsel %vm1014, %v1023, 0.0
    %v1025 = vrot.slane %v1024, 4
    %v1026 = vadd.f32 %v1024, %v1025
    %v1027 = vrot.slane %v1026, 2
    %v1028 = vadd.f32 %v1026, %v1027
    %v1029 = vrot.slane %v1028, 1
    %v1030 = vadd.f32 %v1028, %v1029
    %v1031 = vmul.f32 %v1030, %v923
    %v1032 = vmul.f32 %v1022, %v1022
    %v1033 = vsub.f32 %v1031, %v1032
    %v1034 = vmax.f32 %v1033, 0.0
    %v1035 = vadd.f32 %v1034, 1e-05
    %v1036 = vrsqrt.pop %v1035
    %v1037 = vmul.f32 %v1008, %v1036
    %v1038 = vmul.f32 %v1022, %v1036
    %v1039 = vsub.f32 %v1013, %v1038
    %v1041 = vlaneseq
    %v1042 = vshrl.u32 %v1041, 7
    %v1043 = vsub.s32 0, %v1042
    %v1044 = vrot.slane %v1039, %v1043
    %v1046 = vadd.f32 %v1037, %v1044
    %vm1047 = vcmp.ge.f32.partialorder %v1046, 0.0
    %v1048 = vmul.f32 %v1046, 0.01
    %v1049 = vsel %vm1047, %v1046, %v1048
    %v1050 = vpack.c.bf16 %v1049, %v1049
    %v1051 = vld [vmem:[#allocation11] sm:$0xf]
    %v1052 = vld [vmem:[#allocation11 + $0x4] sm:$0xf]
    %v1053 = vld [vmem:[#allocation11 + $0x8] sm:$0xf]
    %v1054 = vld [vmem:[#allocation11 + $0xc] sm:$0xf]
    %v1055 = vld [vmem:[#allocation11 + $0x10] sm:$0xf]
    %v1056 = vld [vmem:[#allocation11 + $0x14] sm:$0xf]
    %v1057 = vld [vmem:[#allocation11 + $0x18] sm:$0xf]
    %v1058 = vld [vmem:[#allocation11 + $0x1c] sm:$0xf]
    %v1059 = vld [vmem:[#allocation13] sm:$0x1]
    %v1061 = vlaneseq
    %v1062 = vshrl.u32 %v1061, 7
    %v1063 = vsub.s32 0, %v1062
    %v1064 = vrot.slane %v1059, %v1063
    %v1074 = vunpack.c.l.b16 %v1051
    %v1075 = vunpack.c.l.b16 %v1052
    %v1076 = vunpack.c.l.b16 %v1053
    %v1077 = vunpack.c.l.b16 %v1054
    %v1078 = vunpack.c.l.b16 %v1055
    %v1079 = vunpack.c.l.b16 %v1056
    %v1080 = vunpack.c.l.b16 %v1057
    %v1081 = vunpack.c.l.b16 %v1058
    %v1082 = vpack.c.b16 %v1075, %v1074
    %v1083 = vpack.c.b16 %v1077, %v1076
    %v1084 = vpack.c.b16 %v1079, %v1078
    %v1085 = vpack.c.b16 %v1081, %v1080
    %vm1090 = vcmask 523264
    %v1092 = vsel %vm1090, %v1050, 0
    %1094 = vmatprep.subr.bf16.mxu0 0
    %1095 = vmatpush1.bf16.msra.mxu0 %v1082
    %1096 = vmatprep.subr.bf16.mxu0 0
    %1097 = vmatpush1.bf16.msra.mxu0 %v1083
    %1098 = vmatprep.subr.bf16.mxu0 0
    %1099 = vmatpush1.bf16.msra.mxu0 %v1084
    %1100 = vmatprep.subr.bf16.mxu0 0
    %1101 = vmatpush1.bf16.msra.mxu0 %v1085
    %1102 = vmatprep.subr.bf16.mxu0 0
    %1103 = vmatpush1.bf16.msra.mxu0 0
    %1104 = vmatprep.subr.bf16.mxu0 0
    %1105 = vmatpush1.bf16.msra.mxu0 0
    %1106 = vmatprep.subr.bf16.mxu0 0
    %1107 = vmatpush1.bf16.msra.mxu0 0
    %1108 = vmatprep.subr.bf16.mxu0 0
    %1109 = vmatpush1.bf16.msra.mxu0 0
    %1110 = vmatprep.subr.bf16.mxu0 0
    %1111 = vmatpush1.bf16.msra.mxu0 0
    %1112 = vmatprep.subr.bf16.mxu0 0
    %1113 = vmatpush1.bf16.msra.mxu0 0
    %1114 = vmatprep.subr.bf16.mxu0 0
    %1115 = vmatpush1.bf16.msra.mxu0 0
    %1116 = vmatprep.subr.bf16.mxu0 0
    %1117 = vmatpush1.bf16.msra.mxu0 0
    %1118 = vmatprep.subr.bf16.mxu0 0
    %1119 = vmatpush1.bf16.msra.mxu0 0
    %1120 = vmatprep.subr.bf16.mxu0 0
    %1121 = vmatpush1.bf16.msra.mxu0 0
    %1122 = vmatprep.subr.bf16.mxu0 0
    %1123 = vmatpush1.bf16.msra.mxu0 0
    %1124 = vmatprep.subr.bf16.mxu0 0
    %1125 = vmatpush1.bf16.msra.mxu0 0
    %1126 = vmatprep.mubr.bf16.mxu0 0
    %1127 = vmatmul.mubr.bf16.gmra.mrb[0].mxu0 %v1092
    %v1128 = vpop.f32.mrb[0].mxu0
    %v1129 = vadd.f32 %v1064, %v1128
    %v1130 = vpop.f32.mrb[0].mxu0
    %v1131 = vpop.f32.mrb[0].mxu0
    %v1132 = vpop.f32.mrb[0].mxu0
    %1133 = vdwg.mxu0
    %v1134 = vld [vmem:[#allocation14] sm:$0xf]
    %v1135 = vld [vmem:[#allocation14 + $0x4] sm:$0xf]
    %v1136 = vld [vmem:[#allocation14 + $0x8] sm:$0xf]
    %v1137 = vld [vmem:[#allocation14 + $0xc] sm:$0xf]
    %v1138 = vld [vmem:[#allocation14 + $0x10] sm:$0xf]
    %v1139 = vld [vmem:[#allocation14 + $0x14] sm:$0xf]
    %v1140 = vld [vmem:[#allocation14 + $0x18] sm:$0xf]
    %v1141 = vld [vmem:[#allocation14 + $0x1c] sm:$0xf]
    %v1142 = vld [vmem:[#allocation16] sm:$0x1]
    %v1144 = vlaneseq
    %v1145 = vshrl.u32 %v1144, 7
    %v1146 = vsub.s32 0, %v1145
    %v1147 = vrot.slane %v1142, %v1146
    %v1157 = vunpack.c.l.b16 %v1134
    %v1158 = vunpack.c.l.b16 %v1135
    %v1159 = vunpack.c.l.b16 %v1136
    %v1160 = vunpack.c.l.b16 %v1137
    %v1161 = vunpack.c.l.b16 %v1138
    %v1162 = vunpack.c.l.b16 %v1139
    %v1163 = vunpack.c.l.b16 %v1140
    %v1164 = vunpack.c.l.b16 %v1141
    %v1165 = vpack.c.b16 %v1158, %v1157
    %v1166 = vpack.c.b16 %v1160, %v1159
    %v1167 = vpack.c.b16 %v1162, %v1161
    %v1168 = vpack.c.b16 %v1164, %v1163
    %1173 = vmatprep.subr.bf16.mxu0 0
    %1174 = vmatpush1.bf16.msra.mxu0 %v1165
    %1175 = vmatprep.subr.bf16.mxu0 0
    %1176 = vmatpush1.bf16.msra.mxu0 %v1166
    %1177 = vmatprep.subr.bf16.mxu0 0
    %1178 = vmatpush1.bf16.msra.mxu0 %v1167
    %1179 = vmatprep.subr.bf16.mxu0 0
    %1180 = vmatpush1.bf16.msra.mxu0 %v1168
    %1181 = vmatprep.subr.bf16.mxu0 0
    %1182 = vmatpush1.bf16.msra.mxu0 0
    %1183 = vmatprep.subr.bf16.mxu0 0
    %1184 = vmatpush1.bf16.msra.mxu0 0
    %1185 = vmatprep.subr.bf16.mxu0 0
    %1186 = vmatpush1.bf16.msra.mxu0 0
    %1187 = vmatprep.subr.bf16.mxu0 0
    %1188 = vmatpush1.bf16.msra.mxu0 0
    %1189 = vmatprep.subr.bf16.mxu0 0
    %1190 = vmatpush1.bf16.msra.mxu0 0
    %1191 = vmatprep.subr.bf16.mxu0 0
    %1192 = vmatpush1.bf16.msra.mxu0 0
    %1193 = vmatprep.subr.bf16.mxu0 0
    %1194 = vmatpush1.bf16.msra.mxu0 0
    %1195 = vmatprep.subr.bf16.mxu0 0
    %1196 = vmatpush1.bf16.msra.mxu0 0
    %1197 = vmatprep.subr.bf16.mxu0 0
    %1198 = vmatpush1.bf16.msra.mxu0 0
    %1199 = vmatprep.subr.bf16.mxu0 0
    %1200 = vmatpush1.bf16.msra.mxu0 0
    %1201 = vmatprep.subr.bf16.mxu0 0
    %1202 = vmatpush1.bf16.msra.mxu0 0
    %1203 = vmatprep.subr.bf16.mxu0 0
    %1204 = vmatpush1.bf16.msra.mxu0 0
    %1205 = vmatprep.mubr.bf16.mxu0 0
    %1206 = vmatmul.mubr.bf16.gmra.mrb[0].mxu0 %v1092
    %v1207 = vpop.f32.mrb[0].mxu0
    %v1208 = vadd.f32 %v1147, %v1207
    %v1209 = vpop.f32.mrb[0].mxu0
    %v1210 = vpop.f32.mrb[0].mxu0
    %v1211 = vpop.f32.mrb[0].mxu0
    %1212 = vdwg.mxu0
    %vm1213 = vcmp.gt.f32.partialorder %v1208, 20.0
    %v1214 = vmin.f32 %v1208, 20.0
    %v1215 = vmul.f32 %v1214, 1.442695
    %v1216 = vpow.pop %v1215
    %v1217 = vadd.f32 %v1216, 1.0
    %v1218 = vlog2.pop %v1217
    %v1219 = vmul.f32 %v1218, 0.6931472
    %v1220 = vmul.f32 -0.5, %v1216
    %v1221 = vadd.f32 %v1220, 1.0
    %v1222 = vmul.f32 %v1221, %v1216
    %v1223 = vand.u32 2147483647, %v1216
    %vm1224 = vcmp.lt.f32.partialorder %v1223, 0.0004427343
    %v1225 = vsel %vm1224, %v1222, %v1219
    %v1226 = vsel %vm1213, %v1208, %v1225
    %1227 = vst.msk [vmem:[#allocation22] sm:$0xf] %vm1014, %v1129
    %1228 = vst.msk [vmem:[#allocation23] sm:$0xf] %vm1014, %v1226
    %v1229 = vld [vmem:[#allocation17] sm:$0xf]
    %v1230 = vmul.f32 %v1226, %v1229
    %v1231 = vadd.f32 %v1129, %v1230
    %v1232 = vpack.c.bf16 %v1231, %v1231
    %v1233 = vld [vmem:[#allocation19] sm:$0xf]
    %v1234 = vld [vmem:[#allocation19 + $0x4] sm:$0xf]
    %v1235 = vld [vmem:[#allocation19 + $0x8] sm:$0xf]
    %v1236 = vld [vmem:[#allocation19 + $0xc] sm:$0xf]
    %v1237 = vld [vmem:[#allocation19 + $0x10] sm:$0xf]
    %v1238 = vld [vmem:[#allocation19 + $0x14] sm:$0xf]
    %v1239 = vld [vmem:[#allocation19 + $0x18] sm:$0xf]
    %v1240 = vld [vmem:[#allocation19 + $0x1c] sm:$0xf]
    %v1249 = vunpack.c.l.b16 %v1233
    %v1250 = vunpack.c.l.b16 %v1234
    %v1251 = vunpack.c.l.b16 %v1235
    %v1252 = vunpack.c.l.b16 %v1236
    %v1253 = vunpack.c.l.b16 %v1237
    %v1254 = vunpack.c.l.b16 %v1238
    %v1255 = vunpack.c.l.b16 %v1239
    %v1256 = vunpack.c.l.b16 %v1240
    %v1257 = vpack.c.b16 %v1250, %v1249
    %v1258 = vpack.c.b16 %v1252, %v1251
    %v1259 = vpack.c.b16 %v1254, %v1253
    %v1260 = vpack.c.b16 %v1256, %v1255
    %v1266 = vsel %vm1090, %v1232, 0
    %1268 = vmatprep.subr.bf16.mxu0 0
    %1269 = vmatpush1.bf16.msra.mxu0 %v1257
    %1270 = vmatprep.subr.bf16.mxu0 0
    %1271 = vmatpush1.bf16.msra.mxu0 %v1258
    %1272 = vmatprep.subr.bf16.mxu0 0
    %1273 = vmatpush1.bf16.msra.mxu0 %v1259
    %1274 = vmatprep.subr.bf16.mxu0 0
    %1275 = vmatpush1.bf16.msra.mxu0 %v1260
    %1276 = vmatprep.subr.bf16.mxu0 0
    %1277 = vmatpush1.bf16.msra.mxu0 0
    %1278 = vmatprep.subr.bf16.mxu0 0
    %1279 = vmatpush1.bf16.msra.mxu0 0
    %1280 = vmatprep.subr.bf16.mxu0 0
    %1281 = vmatpush1.bf16.msra.mxu0 0
    %1282 = vmatprep.subr.bf16.mxu0 0
    %1283 = vmatpush1.bf16.msra.mxu0 0
    %1284 = vmatprep.subr.bf16.mxu0 0
    %1285 = vmatpush1.bf16.msra.mxu0 0
    %1286 = vmatprep.subr.bf16.mxu0 0
    %1287 = vmatpush1.bf16.msra.mxu0 0
    %1288 = vmatprep.subr.bf16.mxu0 0
    %1289 = vmatpush1.bf16.msra.mxu0 0
    %1290 = vmatprep.subr.bf16.mxu0 0
    %1291 = vmatpush1.bf16.msra.mxu0 0
    %1292 = vmatprep.subr.bf16.mxu0 0
    %1293 = vmatpush1.bf16.msra.mxu0 0
    %1294 = vmatprep.subr.bf16.mxu0 0
    %1295 = vmatpush1.bf16.msra.mxu0 0
    %1296 = vmatprep.subr.bf16.mxu0 0
    %1297 = vmatpush1.bf16.msra.mxu0 0
    %1298 = vmatprep.subr.bf16.mxu0 0
    %1299 = vmatpush1.bf16.msra.mxu0 0
    %1300 = vmatprep.mubr.bf16.mxu0 0
    %1301 = vmatmul.mubr.bf16.gmra.mrb[0].mxu0 %v1266
    %v1302 = vpop.f32.mrb[0].mxu0
    %v1303 = vadd.f32 0.0, %v1302
    %v1304 = vpop.f32.mrb[0].mxu0
    %v1305 = vpop.f32.mrb[0].mxu0
    %v1306 = vpop.f32.mrb[0].mxu0
    %1307 = vdwg.mxu0
    %1308 = vst.msk [vmem:[#allocation25] sm:$0xf] %vm1014, %v1303
    %s1309 = scalar_lea.vmem [#allocation19], 32
    %v1310 = vld [vmem:[%s1309] sm:$0xf]
    %v1311 = vld [vmem:[%s1309 + $0x4] sm:$0xf]
    %v1312 = vld [vmem:[%s1309 + $0x8] sm:$0xf]
    %v1313 = vld [vmem:[%s1309 + $0xc] sm:$0xf]
    %v1314 = vld [vmem:[%s1309 + $0x10] sm:$0xf]
    %v1315 = vld [vmem:[%s1309 + $0x14] sm:$0xf]
    %v1316 = vld [vmem:[%s1309 + $0x18] sm:$0xf]
    %v1317 = vld [vmem:[%s1309 + $0x1c] sm:$0xf]
    %v1326 = vunpack.c.l.b16 %v1310
    %v1327 = vunpack.c.l.b16 %v1311
    %v1328 = vunpack.c.l.b16 %v1312
    %v1329 = vunpack.c.l.b16 %v1313
    %v1330 = vunpack.c.l.b16 %v1314
    %v1331 = vunpack.c.l.b16 %v1315
    %v1332 = vunpack.c.l.b16 %v1316
    %v1333 = vunpack.c.l.b16 %v1317
    %v1334 = vpack.c.b16 %v1327, %v1326
    %v1335 = vpack.c.b16 %v1329, %v1328
    %v1336 = vpack.c.b16 %v1331, %v1330
    %v1337 = vpack.c.b16 %v1333, %v1332
    %1342 = vmatprep.subr.bf16.mxu0 0
    %1343 = vmatpush1.bf16.msra.mxu0 %v1334
    %1344 = vmatprep.subr.bf16.mxu0 0
    %1345 = vmatpush1.bf16.msra.mxu0 %v1335
    %1346 = vmatprep.subr.bf16.mxu0 0
    %1347 = vmatpush1.bf16.msra.mxu0 %v1336
    %1348 = vmatprep.subr.bf16.mxu0 0
    %1349 = vmatpush1.bf16.msra.mxu0 %v1337
    %1350 = vmatprep.subr.bf16.mxu0 0
    %1351 = vmatpush1.bf16.msra.mxu0 0
    %1352 = vmatprep.subr.bf16.mxu0 0
    %1353 = vmatpush1.bf16.msra.mxu0 0
    %1354 = vmatprep.subr.bf16.mxu0 0
    %1355 = vmatpush1.bf16.msra.mxu0 0
    %1356 = vmatprep.subr.bf16.mxu0 0
    %1357 = vmatpush1.bf16.msra.mxu0 0
    %1358 = vmatprep.subr.bf16.mxu0 0
    %1359 = vmatpush1.bf16.msra.mxu0 0
    %1360 = vmatprep.subr.bf16.mxu0 0
    %1361 = vmatpush1.bf16.msra.mxu0 0
    %1362 = vmatprep.subr.bf16.mxu0 0
    %1363 = vmatpush1.bf16.msra.mxu0 0
    %1364 = vmatprep.subr.bf16.mxu0 0
    %1365 = vmatpush1.bf16.msra.mxu0 0
    %1366 = vmatprep.subr.bf16.mxu0 0
    %1367 = vmatpush1.bf16.msra.mxu0 0
    %1368 = vmatprep.subr.bf16.mxu0 0
    %1369 = vmatpush1.bf16.msra.mxu0 0
    %1370 = vmatprep.subr.bf16.mxu0 0
    %1371 = vmatpush1.bf16.msra.mxu0 0
    %1372 = vmatprep.subr.bf16.mxu0 0
    %1373 = vmatpush1.bf16.msra.mxu0 0
    %1374 = vmatprep.mubr.bf16.mxu0 0
    %1375 = vmatmul.mubr.bf16.gmra.mrb[0].mxu0 %v1266
    %v1376 = vpop.f32.mrb[0].mxu0
    %v1377 = vadd.f32 0.0, %v1376
    %v1378 = vpop.f32.mrb[0].mxu0
    %v1379 = vpop.f32.mrb[0].mxu0
    %v1380 = vpop.f32.mrb[0].mxu0
    %1381 = vdwg.mxu0
    %s1382 = scalar_lea.vmem [#allocation25], 4
    %1383 = vst.msk [vmem:[%s1382] sm:$0xf] %vm1014, %v1377
    %s1384 = scalar_lea.vmem [#allocation19], 64
    %v1385 = vld [vmem:[%s1384] sm:$0xf]
    %v1386 = vld [vmem:[%s1384 + $0x4] sm:$0xf]
    %v1387 = vld [vmem:[%s1384 + $0x8] sm:$0xf]
    %v1388 = vld [vmem:[%s1384 + $0xc] sm:$0xf]
    %v1389 = vld [vmem:[%s1384 + $0x10] sm:$0xf]
    %v1390 = vld [vmem:[%s1384 + $0x14] sm:$0xf]
    %v1391 = vld [vmem:[%s1384 + $0x18] sm:$0xf]
    %v1392 = vld [vmem:[%s1384 + $0x1c] sm:$0xf]
    %v1401 = vunpack.c.l.b16 %v1385
    %v1402 = vunpack.c.l.b16 %v1386
    %v1403 = vunpack.c.l.b16 %v1387
    %v1404 = vunpack.c.l.b16 %v1388
    %v1405 = vunpack.c.l.b16 %v1389
    %v1406 = vunpack.c.l.b16 %v1390
    %v1407 = vunpack.c.l.b16 %v1391
    %v1408 = vunpack.c.l.b16 %v1392
    %v1409 = vpack.c.b16 %v1402, %v1401
    %v1410 = vpack.c.b16 %v1404, %v1403
    %v1411 = vpack.c.b16 %v1406, %v1405
    %v1412 = vpack.c.b16 %v1408, %v1407
    %1417 = vmatprep.subr.bf16.mxu0 0
    %1418 = vmatpush1.bf16.msra.mxu0 %v1409
    %1419 = vmatprep.subr.bf16.mxu0 0
    %1420 = vmatpush1.bf16.msra.mxu0 %v1410
    %1421 = vmatprep.subr.bf16.mxu0 0
    %1422 = vmatpush1.bf16.msra.mxu0 %v1411
    %1423 = vmatprep.subr.bf16.mxu0 0
    %1424 = vmatpush1.bf16.msra.mxu0 %v1412
    %1425 = vmatprep.subr.bf16.mxu0 0
    %1426 = vmatpush1.bf16.msra.mxu0 0
    %1427 = vmatprep.subr.bf16.mxu0 0
    %1428 = vmatpush1.bf16.msra.mxu0 0
    %1429 = vmatprep.subr.bf16.mxu0 0
    %1430 = vmatpush1.bf16.msra.mxu0 0
    %1431 = vmatprep.subr.bf16.mxu0 0
    %1432 = vmatpush1.bf16.msra.mxu0 0
    %1433 = vmatprep.subr.bf16.mxu0 0
    %1434 = vmatpush1.bf16.msra.mxu0 0
    %1435 = vmatprep.subr.bf16.mxu0 0
    %1436 = vmatpush1.bf16.msra.mxu0 0
    %1437 = vmatprep.subr.bf16.mxu0 0
    %1438 = vmatpush1.bf16.msra.mxu0 0
    %1439 = vmatprep.subr.bf16.mxu0 0
    %1440 = vmatpush1.bf16.msra.mxu0 0
    %1441 = vmatprep.subr.bf16.mxu0 0
    %1442 = vmatpush1.bf16.msra.mxu0 0
    %1443 = vmatprep.subr.bf16.mxu0 0
    %1444 = vmatpush1.bf16.msra.mxu0 0
    %1445 = vmatprep.subr.bf16.mxu0 0
    %1446 = vmatpush1.bf16.msra.mxu0 0
    %1447 = vmatprep.subr.bf16.mxu0 0
    %1448 = vmatpush1.bf16.msra.mxu0 0
    %1449 = vmatprep.mubr.bf16.mxu0 0
    %1450 = vmatmul.mubr.bf16.gmra.mrb[0].mxu0 %v1266
    %v1451 = vpop.f32.mrb[0].mxu0
    %v1452 = vadd.f32 0.0, %v1451
    %v1453 = vpop.f32.mrb[0].mxu0
    %v1454 = vpop.f32.mrb[0].mxu0
    %v1455 = vpop.f32.mrb[0].mxu0
    %1456 = vdwg.mxu0
    %s1457 = scalar_lea.vmem [#allocation25], 8
    %1458 = vst.msk [vmem:[%s1457] sm:$0xf] %vm1014, %v1452
    %s1459 = scalar_lea.vmem [#allocation19], 96
    %v1460 = vld [vmem:[%s1459] sm:$0xf]
    %v1461 = vld [vmem:[%s1459 + $0x4] sm:$0xf]
    %v1462 = vld [vmem:[%s1459 + $0x8] sm:$0xf]
    %v1463 = vld [vmem:[%s1459 + $0xc] sm:$0xf]
    %v1464 = vld [vmem:[%s1459 + $0x10] sm:$0xf]
    %v1465 = vld [vmem:[%s1459 + $0x14] sm:$0xf]
    %v1466 = vld [vmem:[%s1459 + $0x18] sm:$0xf]
    %v1467 = vld [vmem:[%s1459 + $0x1c] sm:$0xf]
    %v1476 = vunpack.c.l.b16 %v1460
    %v1477 = vunpack.c.l.b16 %v1461
    %v1478 = vunpack.c.l.b16 %v1462
    %v1479 = vunpack.c.l.b16 %v1463
    %v1480 = vunpack.c.l.b16 %v1464
    %v1481 = vunpack.c.l.b16 %v1465
    %v1482 = vunpack.c.l.b16 %v1466
    %v1483 = vunpack.c.l.b16 %v1467
    %v1484 = vpack.c.b16 %v1477, %v1476
    %v1485 = vpack.c.b16 %v1479, %v1478
    %v1486 = vpack.c.b16 %v1481, %v1480
    %v1487 = vpack.c.b16 %v1483, %v1482
    %1492 = vmatprep.subr.bf16.mxu0 0
    %1493 = vmatpush1.bf16.msra.mxu0 %v1484
    %1494 = vmatprep.subr.bf16.mxu0 0
    %1495 = vmatpush1.bf16.msra.mxu0 %v1485
    %1496 = vmatprep.subr.bf16.mxu0 0
    %1497 = vmatpush1.bf16.msra.mxu0 %v1486
    %1498 = vmatprep.subr.bf16.mxu0 0
    %1499 = vmatpush1.bf16.msra.mxu0 %v1487
    %1500 = vmatprep.subr.bf16.mxu0 0
    %1501 = vmatpush1.bf16.msra.mxu0 0
    %1502 = vmatprep.subr.bf16.mxu0 0
    %1503 = vmatpush1.bf16.msra.mxu0 0
    %1504 = vmatprep.subr.bf16.mxu0 0
    %1505 = vmatpush1.bf16.msra.mxu0 0
    %1506 = vmatprep.subr.bf16.mxu0 0
    %1507 = vmatpush1.bf16.msra.mxu0 0
    %1508 = vmatprep.subr.bf16.mxu0 0
    %1509 = vmatpush1.bf16.msra.mxu0 0
    %1510 = vmatprep.subr.bf16.mxu0 0
    %1511 = vmatpush1.bf16.msra.mxu0 0
    %1512 = vmatprep.subr.bf16.mxu0 0
    %1513 = vmatpush1.bf16.msra.mxu0 0
    %1514 = vmatprep.subr.bf16.mxu0 0
    %1515 = vmatpush1.bf16.msra.mxu0 0
    %1516 = vmatprep.subr.bf16.mxu0 0
    %1517 = vmatpush1.bf16.msra.mxu0 0
    %1518 = vmatprep.subr.bf16.mxu0 0
    %1519 = vmatpush1.bf16.msra.mxu0 0
    %1520 = vmatprep.subr.bf16.mxu0 0
    %1521 = vmatpush1.bf16.msra.mxu0 0
    %1522 = vmatprep.subr.bf16.mxu0 0
    %1523 = vmatpush1.bf16.msra.mxu0 0
    %1524 = vmatprep.mubr.bf16.mxu0 0
    %1525 = vmatmul.mubr.bf16.gmra.mrb[0].mxu0 %v1266
    %v1526 = vpop.f32.mrb[0].mxu0
    %v1527 = vadd.f32 0.0, %v1526
    %v1528 = vpop.f32.mrb[0].mxu0
    %v1529 = vpop.f32.mrb[0].mxu0
    %v1530 = vpop.f32.mrb[0].mxu0
    %1531 = vdwg.mxu0
    %s1532 = scalar_lea.vmem [#allocation25], 12
    %1533 = vst.msk [vmem:[%s1532] sm:$0xf] %vm1014, %v1527
    %s1534 = scalar_lea.vmem [#allocation19], 128
    %v1535 = vld [vmem:[%s1534] sm:$0xf]
    %v1536 = vld [vmem:[%s1534 + $0x4] sm:$0xf]
    %v1537 = vld [vmem:[%s1534 + $0x8] sm:$0xf]
    %v1538 = vld [vmem:[%s1534 + $0xc] sm:$0xf]
    %v1539 = vld [vmem:[%s1534 + $0x10] sm:$0xf]
    %v1540 = vld [vmem:[%s1534 + $0x14] sm:$0xf]
    %v1541 = vld [vmem:[%s1534 + $0x18] sm:$0xf]
    %v1542 = vld [vmem:[%s1534 + $0x1c] sm:$0xf]
    %v1551 = vunpack.c.l.b16 %v1535
    %v1552 = vunpack.c.l.b16 %v1536
    %v1553 = vunpack.c.l.b16 %v1537
    %v1554 = vunpack.c.l.b16 %v1538
    %v1555 = vunpack.c.l.b16 %v1539
    %v1556 = vunpack.c.l.b16 %v1540
    %v1557 = vunpack.c.l.b16 %v1541
    %v1558 = vunpack.c.l.b16 %v1542
    %v1559 = vpack.c.b16 %v1552, %v1551
    %v1560 = vpack.c.b16 %v1554, %v1553
    %v1561 = vpack.c.b16 %v1556, %v1555
    %v1562 = vpack.c.b16 %v1558, %v1557
    %1567 = vmatprep.subr.bf16.mxu0 0
    %1568 = vmatpush1.bf16.msra.mxu0 %v1559
    %1569 = vmatprep.subr.bf16.mxu0 0
    %1570 = vmatpush1.bf16.msra.mxu0 %v1560
    %1571 = vmatprep.subr.bf16.mxu0 0
    %1572 = vmatpush1.bf16.msra.mxu0 %v1561
    %1573 = vmatprep.subr.bf16.mxu0 0
    %1574 = vmatpush1.bf16.msra.mxu0 %v1562
    %1575 = vmatprep.subr.bf16.mxu0 0
    %1576 = vmatpush1.bf16.msra.mxu0 0
    %1577 = vmatprep.subr.bf16.mxu0 0
    %1578 = vmatpush1.bf16.msra.mxu0 0
    %1579 = vmatprep.subr.bf16.mxu0 0
    %1580 = vmatpush1.bf16.msra.mxu0 0
    %1581 = vmatprep.subr.bf16.mxu0 0
    %1582 = vmatpush1.bf16.msra.mxu0 0
    %1583 = vmatprep.subr.bf16.mxu0 0
    %1584 = vmatpush1.bf16.msra.mxu0 0
    %1585 = vmatprep.subr.bf16.mxu0 0
    %1586 = vmatpush1.bf16.msra.mxu0 0
    %1587 = vmatprep.subr.bf16.mxu0 0
    %1588 = vmatpush1.bf16.msra.mxu0 0
    %1589 = vmatprep.subr.bf16.mxu0 0
    %1590 = vmatpush1.bf16.msra.mxu0 0
    %1591 = vmatprep.subr.bf16.mxu0 0
    %1592 = vmatpush1.bf16.msra.mxu0 0
    %1593 = vmatprep.subr.bf16.mxu0 0
    %1594 = vmatpush1.bf16.msra.mxu0 0
    %1595 = vmatprep.subr.bf16.mxu0 0
    %1596 = vmatpush1.bf16.msra.mxu0 0
    %1597 = vmatprep.subr.bf16.mxu0 0
    %1598 = vmatpush1.bf16.msra.mxu0 0
    %1599 = vmatprep.mubr.bf16.mxu0 0
    %1600 = vmatmul.mubr.bf16.gmra.mrb[0].mxu0 %v1266
    %v1601 = vpop.f32.mrb[0].mxu0
    %v1602 = vadd.f32 0.0, %v1601
    %v1603 = vpop.f32.mrb[0].mxu0
    %v1604 = vpop.f32.mrb[0].mxu0
    %v1605 = vpop.f32.mrb[0].mxu0
    %1606 = vdwg.mxu0
    %s1607 = scalar_lea.vmem [#allocation25], 16
    %1608 = vst.msk [vmem:[%s1607] sm:$0xf] %vm1014, %v1602
    %s1609 = scalar_lea.vmem [#allocation19], 160
    %v1610 = vld [vmem:[%s1609] sm:$0xf]
    %v1611 = vld [vmem:[%s1609 + $0x4] sm:$0xf]
    %v1612 = vld [vmem:[%s1609 + $0x8] sm:$0xf]
    %v1613 = vld [vmem:[%s1609 + $0xc] sm:$0xf]
    %v1614 = vld [vmem:[%s1609 + $0x10] sm:$0xf]
    %v1615 = vld [vmem:[%s1609 + $0x14] sm:$0xf]
    %v1616 = vld [vmem:[%s1609 + $0x18] sm:$0xf]
    %v1617 = vld [vmem:[%s1609 + $0x1c] sm:$0xf]
    %v1626 = vunpack.c.l.b16 %v1610
    %v1627 = vunpack.c.l.b16 %v1611
    %v1628 = vunpack.c.l.b16 %v1612
    %v1629 = vunpack.c.l.b16 %v1613
    %v1630 = vunpack.c.l.b16 %v1614
    %v1631 = vunpack.c.l.b16 %v1615
    %v1632 = vunpack.c.l.b16 %v1616
    %v1633 = vunpack.c.l.b16 %v1617
    %v1634 = vpack.c.b16 %v1627, %v1626
    %v1635 = vpack.c.b16 %v1629, %v1628
    %v1636 = vpack.c.b16 %v1631, %v1630
    %v1637 = vpack.c.b16 %v1633, %v1632
    %1642 = vmatprep.subr.bf16.mxu0 0
    %1643 = vmatpush1.bf16.msra.mxu0 %v1634
    %1644 = vmatprep.subr.bf16.mxu0 0
    %1645 = vmatpush1.bf16.msra.mxu0 %v1635
    %1646 = vmatprep.subr.bf16.mxu0 0
    %1647 = vmatpush1.bf16.msra.mxu0 %v1636
    %1648 = vmatprep.subr.bf16.mxu0 0
    %1649 = vmatpush1.bf16.msra.mxu0 %v1637
    %1650 = vmatprep.subr.bf16.mxu0 0
    %1651 = vmatpush1.bf16.msra.mxu0 0
    %1652 = vmatprep.subr.bf16.mxu0 0
    %1653 = vmatpush1.bf16.msra.mxu0 0
    %1654 = vmatprep.subr.bf16.mxu0 0
    %1655 = vmatpush1.bf16.msra.mxu0 0
    %1656 = vmatprep.subr.bf16.mxu0 0
    %1657 = vmatpush1.bf16.msra.mxu0 0
    %1658 = vmatprep.subr.bf16.mxu0 0
    %1659 = vmatpush1.bf16.msra.mxu0 0
    %1660 = vmatprep.subr.bf16.mxu0 0
    %1661 = vmatpush1.bf16.msra.mxu0 0
    %1662 = vmatprep.subr.bf16.mxu0 0
    %1663 = vmatpush1.bf16.msra.mxu0 0
    %1664 = vmatprep.subr.bf16.mxu0 0
    %1665 = vmatpush1.bf16.msra.mxu0 0
    %1666 = vmatprep.subr.bf16.mxu0 0
    %1667 = vmatpush1.bf16.msra.mxu0 0
    %1668 = vmatprep.subr.bf16.mxu0 0
    %1669 = vmatpush1.bf16.msra.mxu0 0
    %1670 = vmatprep.subr.bf16.mxu0 0
    %1671 = vmatpush1.bf16.msra.mxu0 0
    %1672 = vmatprep.subr.bf16.mxu0 0
    %1673 = vmatpush1.bf16.msra.mxu0 0
    %1674 = vmatprep.mubr.bf16.mxu0 0
    %1675 = vmatmul.mubr.bf16.gmra.mrb[0].mxu0 %v1266
    %v1676 = vpop.f32.mrb[0].mxu0
    %v1677 = vadd.f32 0.0, %v1676
    %v1678 = vpop.f32.mrb[0].mxu0
    %v1679 = vpop.f32.mrb[0].mxu0
    %v1680 = vpop.f32.mrb[0].mxu0
    %1681 = vdwg.mxu0
    %s1682 = scalar_lea.vmem [#allocation25], 20
    %1683 = vst.msk [vmem:[%s1682] sm:$0xf] %vm1014, %v1677
    %s1684 = scalar_lea.vmem [#allocation19], 192
    %v1685 = vld [vmem:[%s1684] sm:$0xf]
    %v1686 = vld [vmem:[%s1684 + $0x4] sm:$0xf]
    %v1687 = vld [vmem:[%s1684 + $0x8] sm:$0xf]
    %v1688 = vld [vmem:[%s1684 + $0xc] sm:$0xf]
    %v1689 = vld [vmem:[%s1684 + $0x10] sm:$0xf]
    %v1690 = vld [vmem:[%s1684 + $0x14] sm:$0xf]
    %v1691 = vld [vmem:[%s1684 + $0x18] sm:$0xf]
    %v1692 = vld [vmem:[%s1684 + $0x1c] sm:$0xf]
    %v1701 = vunpack.c.l.b16 %v1685
    %v1702 = vunpack.c.l.b16 %v1686
    %v1703 = vunpack.c.l.b16 %v1687
    %v1704 = vunpack.c.l.b16 %v1688
    %v1705 = vunpack.c.l.b16 %v1689
    %v1706 = vunpack.c.l.b16 %v1690
    %v1707 = vunpack.c.l.b16 %v1691
    %v1708 = vunpack.c.l.b16 %v1692
    %v1709 = vpack.c.b16 %v1702, %v1701
    %v1710 = vpack.c.b16 %v1704, %v1703
    %v1711 = vpack.c.b16 %v1706, %v1705
    %v1712 = vpack.c.b16 %v1708, %v1707
    %1717 = vmatprep.subr.bf16.mxu0 0
    %1718 = vmatpush1.bf16.msra.mxu0 %v1709
    %1719 = vmatprep.subr.bf16.mxu0 0
    %1720 = vmatpush1.bf16.msra.mxu0 %v1710
    %1721 = vmatprep.subr.bf16.mxu0 0
    %1722 = vmatpush1.bf16.msra.mxu0 %v1711
    %1723 = vmatprep.subr.bf16.mxu0 0
    %1724 = vmatpush1.bf16.msra.mxu0 %v1712
    %1725 = vmatprep.subr.bf16.mxu0 0
    %1726 = vmatpush1.bf16.msra.mxu0 0
    %1727 = vmatprep.subr.bf16.mxu0 0
    %1728 = vmatpush1.bf16.msra.mxu0 0
    %1729 = vmatprep.subr.bf16.mxu0 0
    %1730 = vmatpush1.bf16.msra.mxu0 0
    %1731 = vmatprep.subr.bf16.mxu0 0
    %1732 = vmatpush1.bf16.msra.mxu0 0
    %1733 = vmatprep.subr.bf16.mxu0 0
    %1734 = vmatpush1.bf16.msra.mxu0 0
    %1735 = vmatprep.subr.bf16.mxu0 0
    %1736 = vmatpush1.bf16.msra.mxu0 0
    %1737 = vmatprep.subr.bf16.mxu0 0
    %1738 = vmatpush1.bf16.msra.mxu0 0
    %1739 = vmatprep.subr.bf16.mxu0 0
    %1740 = vmatpush1.bf16.msra.mxu0 0
    %1741 = vmatprep.subr.bf16.mxu0 0
    %1742 = vmatpush1.bf16.msra.mxu0 0
    %1743 = vmatprep.subr.bf16.mxu0 0
    %1744 = vmatpush1.bf16.msra.mxu0 0
    %1745 = vmatprep.subr.bf16.mxu0 0
    %1746 = vmatpush1.bf16.msra.mxu0 0
    %1747 = vmatprep.subr.bf16.mxu0 0
    %1748 = vmatpush1.bf16.msra.mxu0 0
    %1749 = vmatprep.mubr.bf16.mxu0 0
    %1750 = vmatmul.mubr.bf16.gmra.mrb[0].mxu0 %v1266
    %v1751 = vpop.f32.mrb[0].mxu0
    %v1752 = vadd.f32 0.0, %v1751
    %v1753 = vpop.f32.mrb[0].mxu0
    %v1754 = vpop.f32.mrb[0].mxu0
    %v1755 = vpop.f32.mrb[0].mxu0
    %1756 = vdwg.mxu0
    %s1757 = scalar_lea.vmem [#allocation25], 24
    %1758 = vst.msk [vmem:[%s1757] sm:$0xf] %vm1014, %v1752
    %s1759 = scalar_lea.vmem [#allocation19], 224
    %v1760 = vld [vmem:[%s1759] sm:$0xf]
    %v1761 = vld [vmem:[%s1759 + $0x4] sm:$0xf]
    %v1762 = vld [vmem:[%s1759 + $0x8] sm:$0xf]
    %v1763 = vld [vmem:[%s1759 + $0xc] sm:$0xf]
    %v1764 = vld [vmem:[%s1759 + $0x10] sm:$0xf]
    %v1765 = vld [vmem:[%s1759 + $0x14] sm:$0xf]
    %v1766 = vld [vmem:[%s1759 + $0x18] sm:$0xf]
    %v1767 = vld [vmem:[%s1759 + $0x1c] sm:$0xf]
    %v1776 = vunpack.c.l.b16 %v1760
    %v1777 = vunpack.c.l.b16 %v1761
    %v1778 = vunpack.c.l.b16 %v1762
    %v1779 = vunpack.c.l.b16 %v1763
    %v1780 = vunpack.c.l.b16 %v1764
    %v1781 = vunpack.c.l.b16 %v1765
    %v1782 = vunpack.c.l.b16 %v1766
    %v1783 = vunpack.c.l.b16 %v1767
    %v1784 = vpack.c.b16 %v1777, %v1776
    %v1785 = vpack.c.b16 %v1779, %v1778
    %v1786 = vpack.c.b16 %v1781, %v1780
    %v1787 = vpack.c.b16 %v1783, %v1782
    %1792 = vmatprep.subr.bf16.mxu0 0
    %1793 = vmatpush1.bf16.msra.mxu0 %v1784
    %1794 = vmatprep.subr.bf16.mxu0 0
    %1795 = vmatpush1.bf16.msra.mxu0 %v1785
    %1796 = vmatprep.subr.bf16.mxu0 0
    %1797 = vmatpush1.bf16.msra.mxu0 %v1786
    %1798 = vmatprep.subr.bf16.mxu0 0
    %1799 = vmatpush1.bf16.msra.mxu0 %v1787
    %1800 = vmatprep.subr.bf16.mxu0 0
    %1801 = vmatpush1.bf16.msra.mxu0 0
    %1802 = vmatprep.subr.bf16.mxu0 0
    %1803 = vmatpush1.bf16.msra.mxu0 0
    %1804 = vmatprep.subr.bf16.mxu0 0
    %1805 = vmatpush1.bf16.msra.mxu0 0
    %1806 = vmatprep.subr.bf16.mxu0 0
    %1807 = vmatpush1.bf16.msra.mxu0 0
    %1808 = vmatprep.subr.bf16.mxu0 0
    %1809 = vmatpush1.bf16.msra.mxu0 0
    %1810 = vmatprep.subr.bf16.mxu0 0
    %1811 = vmatpush1.bf16.msra.mxu0 0
    %1812 = vmatprep.subr.bf16.mxu0 0
    %1813 = vmatpush1.bf16.msra.mxu0 0
    %1814 = vmatprep.subr.bf16.mxu0 0
    %1815 = vmatpush1.bf16.msra.mxu0 0
    %1816 = vmatprep.subr.bf16.mxu0 0
    %1817 = vmatpush1.bf16.msra.mxu0 0
    %1818 = vmatprep.subr.bf16.mxu0 0
    %1819 = vmatpush1.bf16.msra.mxu0 0
    %1820 = vmatprep.subr.bf16.mxu0 0
    %1821 = vmatpush1.bf16.msra.mxu0 0
    %1822 = vmatprep.subr.bf16.mxu0 0
    %1823 = vmatpush1.bf16.msra.mxu0 0
    %1824 = vmatprep.mubr.bf16.mxu0 0
    %1825 = vmatmul.mubr.bf16.gmra.mrb[0].mxu0 %v1266
    %v1826 = vpop.f32.mrb[0].mxu0
    %v1827 = vadd.f32 0.0, %v1826
    %v1828 = vpop.f32.mrb[0].mxu0
    %v1829 = vpop.f32.mrb[0].mxu0
    %v1830 = vpop.f32.mrb[0].mxu0
    %1831 = vdwg.mxu0
    %s1832 = scalar_lea.vmem [#allocation25], 28
    %1833 = vst.msk [vmem:[%s1832] sm:$0xf] %vm1014, %v1827
    %s1834 = scalar_lea.vmem [#allocation19], 256
    %v1835 = vld [vmem:[%s1834] sm:$0xf]
    %v1836 = vld [vmem:[%s1834 + $0x4] sm:$0xf]
    %v1837 = vld [vmem:[%s1834 + $0x8] sm:$0xf]
    %v1838 = vld [vmem:[%s1834 + $0xc] sm:$0xf]
    %v1839 = vld [vmem:[%s1834 + $0x10] sm:$0xf]
    %v1840 = vld [vmem:[%s1834 + $0x14] sm:$0xf]
    %v1841 = vld [vmem:[%s1834 + $0x18] sm:$0xf]
    %v1842 = vld [vmem:[%s1834 + $0x1c] sm:$0xf]
    %v1851 = vunpack.c.l.b16 %v1835
    %v1852 = vunpack.c.l.b16 %v1836
    %v1853 = vunpack.c.l.b16 %v1837
    %v1854 = vunpack.c.l.b16 %v1838
    %v1855 = vunpack.c.l.b16 %v1839
    %v1856 = vunpack.c.l.b16 %v1840
    %v1857 = vunpack.c.l.b16 %v1841
    %v1858 = vunpack.c.l.b16 %v1842
    %v1859 = vpack.c.b16 %v1852, %v1851
    %v1860 = vpack.c.b16 %v1854, %v1853
    %v1861 = vpack.c.b16 %v1856, %v1855
    %v1862 = vpack.c.b16 %v1858, %v1857
    %1867 = vmatprep.subr.bf16.mxu0 0
    %1868 = vmatpush1.bf16.msra.mxu0 %v1859
    %1869 = vmatprep.subr.bf16.mxu0 0
    %1870 = vmatpush1.bf16.msra.mxu0 %v1860
    %1871 = vmatprep.subr.bf16.mxu0 0
    %1872 = vmatpush1.bf16.msra.mxu0 %v1861
    %1873 = vmatprep.subr.bf16.mxu0 0
    %1874 = vmatpush1.bf16.msra.mxu0 %v1862
    %1875 = vmatprep.subr.bf16.mxu0 0
    %1876 = vmatpush1.bf16.msra.mxu0 0
    %1877 = vmatprep.subr.bf16.mxu0 0
    %1878 = vmatpush1.bf16.msra.mxu0 0
    %1879 = vmatprep.subr.bf16.mxu0 0
    %1880 = vmatpush1.bf16.msra.mxu0 0
    %1881 = vmatprep.subr.bf16.mxu0 0
    %1882 = vmatpush1.bf16.msra.mxu0 0
    %1883 = vmatprep.subr.bf16.mxu0 0
    %1884 = vmatpush1.bf16.msra.mxu0 0
    %1885 = vmatprep.subr.bf16.mxu0 0
    %1886 = vmatpush1.bf16.msra.mxu0 0
    %1887 = vmatprep.subr.bf16.mxu0 0
    %1888 = vmatpush1.bf16.msra.mxu0 0
    %1889 = vmatprep.subr.bf16.mxu0 0
    %1890 = vmatpush1.bf16.msra.mxu0 0
    %1891 = vmatprep.subr.bf16.mxu0 0
    %1892 = vmatpush1.bf16.msra.mxu0 0
    %1893 = vmatprep.subr.bf16.mxu0 0
    %1894 = vmatpush1.bf16.msra.mxu0 0
    %1895 = vmatprep.subr.bf16.mxu0 0
    %1896 = vmatpush1.bf16.msra.mxu0 0
    %1897 = vmatprep.subr.bf16.mxu0 0
    %1898 = vmatpush1.bf16.msra.mxu0 0
    %1899 = vmatprep.mubr.bf16.mxu0 0
    %1900 = vmatmul.mubr.bf16.gmra.mrb[0].mxu0 %v1266
    %v1901 = vpop.f32.mrb[0].mxu0
    %v1902 = vadd.f32 0.0, %v1901
    %v1903 = vpop.f32.mrb[0].mxu0
    %v1904 = vpop.f32.mrb[0].mxu0
    %v1905 = vpop.f32.mrb[0].mxu0
    %1906 = vdwg.mxu0
    %s1907 = scalar_lea.vmem [#allocation25], 32
    %1908 = vst.msk [vmem:[%s1907] sm:$0xf] %vm1014, %v1902
    %s1909 = scalar_lea.vmem [#allocation19], 288
    %v1910 = vld [vmem:[%s1909] sm:$0xf]
    %v1911 = vld [vmem:[%s1909 + $0x4] sm:$0xf]
    %v1912 = vld [vmem:[%s1909 + $0x8] sm:$0xf]
    %v1913 = vld [vmem:[%s1909 + $0xc] sm:$0xf]
    %v1914 = vld [vmem:[%s1909 + $0x10] sm:$0xf]
    %v1915 = vld [vmem:[%s1909 + $0x14] sm:$0xf]
    %v1916 = vld [vmem:[%s1909 + $0x18] sm:$0xf]
    %v1917 = vld [vmem:[%s1909 + $0x1c] sm:$0xf]
    %v1926 = vunpack.c.l.b16 %v1910
    %v1927 = vunpack.c.l.b16 %v1911
    %v1928 = vunpack.c.l.b16 %v1912
    %v1929 = vunpack.c.l.b16 %v1913
    %v1930 = vunpack.c.l.b16 %v1914
    %v1931 = vunpack.c.l.b16 %v1915
    %v1932 = vunpack.c.l.b16 %v1916
    %v1933 = vunpack.c.l.b16 %v1917
    %v1934 = vpack.c.b16 %v1927, %v1926
    %v1935 = vpack.c.b16 %v1929, %v1928
    %v1936 = vpack.c.b16 %v1931, %v1930
    %v1937 = vpack.c.b16 %v1933, %v1932
    %1942 = vmatprep.subr.bf16.mxu0 0
    %1943 = vmatpush1.bf16.msra.mxu0 %v1934
    %1944 = vmatprep.subr.bf16.mxu0 0
    %1945 = vmatpush1.bf16.msra.mxu0 %v1935
    %1946 = vmatprep.subr.bf16.mxu0 0
    %1947 = vmatpush1.bf16.msra.mxu0 %v1936
    %1948 = vmatprep.subr.bf16.mxu0 0
    %1949 = vmatpush1.bf16.msra.mxu0 %v1937
    %1950 = vmatprep.subr.bf16.mxu0 0
    %1951 = vmatpush1.bf16.msra.mxu0 0
    %1952 = vmatprep.subr.bf16.mxu0 0
    %1953 = vmatpush1.bf16.msra.mxu0 0
    %1954 = vmatprep.subr.bf16.mxu0 0
    %1955 = vmatpush1.bf16.msra.mxu0 0
    %1956 = vmatprep.subr.bf16.mxu0 0
    %1957 = vmatpush1.bf16.msra.mxu0 0
    %1958 = vmatprep.subr.bf16.mxu0 0
    %1959 = vmatpush1.bf16.msra.mxu0 0
    %1960 = vmatprep.subr.bf16.mxu0 0
    %1961 = vmatpush1.bf16.msra.mxu0 0
    %1962 = vmatprep.subr.bf16.mxu0 0
    %1963 = vmatpush1.bf16.msra.mxu0 0
    %1964 = vmatprep.subr.bf16.mxu0 0
    %1965 = vmatpush1.bf16.msra.mxu0 0
    %1966 = vmatprep.subr.bf16.mxu0 0
    %1967 = vmatpush1.bf16.msra.mxu0 0
    %1968 = vmatprep.subr.bf16.mxu0 0
    %1969 = vmatpush1.bf16.msra.mxu0 0
    %1970 = vmatprep.subr.bf16.mxu0 0
    %1971 = vmatpush1.bf16.msra.mxu0 0
    %1972 = vmatprep.subr.bf16.mxu0 0
    %1973 = vmatpush1.bf16.msra.mxu0 0
    %1974 = vmatprep.mubr.bf16.mxu0 0
    %1975 = vmatmul.mubr.bf16.gmra.mrb[0].mxu0 %v1266
    %v1976 = vpop.f32.mrb[0].mxu0
    %v1977 = vadd.f32 0.0, %v1976
    %v1978 = vpop.f32.mrb[0].mxu0
    %v1979 = vpop.f32.mrb[0].mxu0
    %v1980 = vpop.f32.mrb[0].mxu0
    %1981 = vdwg.mxu0
    %s1982 = scalar_lea.vmem [#allocation25], 36
    %1983 = vst.msk [vmem:[%s1982] sm:$0xf] %vm1014, %v1977
    %s1984 = scalar_lea.vmem [#allocation19], 320
    %v1985 = vld [vmem:[%s1984] sm:$0xf]
    %v1986 = vld [vmem:[%s1984 + $0x4] sm:$0xf]
    %v1987 = vld [vmem:[%s1984 + $0x8] sm:$0xf]
    %v1988 = vld [vmem:[%s1984 + $0xc] sm:$0xf]
    %v1989 = vld [vmem:[%s1984 + $0x10] sm:$0xf]
    %v1990 = vld [vmem:[%s1984 + $0x14] sm:$0xf]
    %v1991 = vld [vmem:[%s1984 + $0x18] sm:$0xf]
    %v1992 = vld [vmem:[%s1984 + $0x1c] sm:$0xf]
    %v2001 = vunpack.c.l.b16 %v1985
    %v2002 = vunpack.c.l.b16 %v1986
    %v2003 = vunpack.c.l.b16 %v1987
    %v2004 = vunpack.c.l.b16 %v1988
    %v2005 = vunpack.c.l.b16 %v1989
    %v2006 = vunpack.c.l.b16 %v1990
    %v2007 = vunpack.c.l.b16 %v1991
    %v2008 = vunpack.c.l.b16 %v1992
    %v2009 = vpack.c.b16 %v2002, %v2001
    %v2010 = vpack.c.b16 %v2004, %v2003
    %v2011 = vpack.c.b16 %v2006, %v2005
    %v2012 = vpack.c.b16 %v2008, %v2007
    %2017 = vmatprep.subr.bf16.mxu0 0
    %2018 = vmatpush1.bf16.msra.mxu0 %v2009
    %2019 = vmatprep.subr.bf16.mxu0 0
    %2020 = vmatpush1.bf16.msra.mxu0 %v2010
    %2021 = vmatprep.subr.bf16.mxu0 0
    %2022 = vmatpush1.bf16.msra.mxu0 %v2011
    %2023 = vmatprep.subr.bf16.mxu0 0
    %2024 = vmatpush1.bf16.msra.mxu0 %v2012
    %2025 = vmatprep.subr.bf16.mxu0 0
    %2026 = vmatpush1.bf16.msra.mxu0 0
    %2027 = vmatprep.subr.bf16.mxu0 0
    %2028 = vmatpush1.bf16.msra.mxu0 0
    %2029 = vmatprep.subr.bf16.mxu0 0
    %2030 = vmatpush1.bf16.msra.mxu0 0
    %2031 = vmatprep.subr.bf16.mxu0 0
    %2032 = vmatpush1.bf16.msra.mxu0 0
    %2033 = vmatprep.subr.bf16.mxu0 0
    %2034 = vmatpush1.bf16.msra.mxu0 0
    %2035 = vmatprep.subr.bf16.mxu0 0
    %2036 = vmatpush1.bf16.msra.mxu0 0
    %2037 = vmatprep.subr.bf16.mxu0 0
    %2038 = vmatpush1.bf16.msra.mxu0 0
    %2039 = vmatprep.subr.bf16.mxu0 0
    %2040 = vmatpush1.bf16.msra.mxu0 0
    %2041 = vmatprep.subr.bf16.mxu0 0
    %2042 = vmatpush1.bf16.msra.mxu0 0
    %2043 = vmatprep.subr.bf16.mxu0 0
    %2044 = vmatpush1.bf16.msra.mxu0 0
    %2045 = vmatprep.subr.bf16.mxu0 0
    %2046 = vmatpush1.bf16.msra.mxu0 0
    %2047 = vmatprep.subr.bf16.mxu0 0
    %2048 = vmatpush1.bf16.msra.mxu0 0
    %2049 = vmatprep.mubr.bf16.mxu0 0
    %2050 = vmatmul.mubr.bf16.gmra.mrb[0].mxu0 %v1266
    %v2051 = vpop.f32.mrb[0].mxu0
    %v2052 = vadd.f32 0.0, %v2051
    %v2053 = vpop.f32.mrb[0].mxu0
    %v2054 = vpop.f32.mrb[0].mxu0
    %v2055 = vpop.f32.mrb[0].mxu0
    %2056 = vdwg.mxu0
    %s2057 = scalar_lea.vmem [#allocation25], 40
    %2058 = vst.msk [vmem:[%s2057] sm:$0xf] %vm1014, %v2052
    %s2059 = scalar_lea.vmem [#allocation19], 352
    %v2060 = vld [vmem:[%s2059] sm:$0xf]
    %v2061 = vld [vmem:[%s2059 + $0x4] sm:$0xf]
    %v2062 = vld [vmem:[%s2059 + $0x8] sm:$0xf]
    %v2063 = vld [vmem:[%s2059 + $0xc] sm:$0xf]
    %v2064 = vld [vmem:[%s2059 + $0x10] sm:$0xf]
    %v2065 = vld [vmem:[%s2059 + $0x14] sm:$0xf]
    %v2066 = vld [vmem:[%s2059 + $0x18] sm:$0xf]
    %v2067 = vld [vmem:[%s2059 + $0x1c] sm:$0xf]
    %v2076 = vunpack.c.l.b16 %v2060
    %v2077 = vunpack.c.l.b16 %v2061
    %v2078 = vunpack.c.l.b16 %v2062
    %v2079 = vunpack.c.l.b16 %v2063
    %v2080 = vunpack.c.l.b16 %v2064
    %v2081 = vunpack.c.l.b16 %v2065
    %v2082 = vunpack.c.l.b16 %v2066
    %v2083 = vunpack.c.l.b16 %v2067
    %v2084 = vpack.c.b16 %v2077, %v2076
    %v2085 = vpack.c.b16 %v2079, %v2078
    %v2086 = vpack.c.b16 %v2081, %v2080
    %v2087 = vpack.c.b16 %v2083, %v2082
    %2092 = vmatprep.subr.bf16.mxu0 0
    %2093 = vmatpush1.bf16.msra.mxu0 %v2084
    %2094 = vmatprep.subr.bf16.mxu0 0
    %2095 = vmatpush1.bf16.msra.mxu0 %v2085
    %2096 = vmatprep.subr.bf16.mxu0 0
    %2097 = vmatpush1.bf16.msra.mxu0 %v2086
    %2098 = vmatprep.subr.bf16.mxu0 0
    %2099 = vmatpush1.bf16.msra.mxu0 %v2087
    %2100 = vmatprep.subr.bf16.mxu0 0
    %2101 = vmatpush1.bf16.msra.mxu0 0
    %2102 = vmatprep.subr.bf16.mxu0 0
    %2103 = vmatpush1.bf16.msra.mxu0 0
    %2104 = vmatprep.subr.bf16.mxu0 0
    %2105 = vmatpush1.bf16.msra.mxu0 0
    %2106 = vmatprep.subr.bf16.mxu0 0
    %2107 = vmatpush1.bf16.msra.mxu0 0
    %2108 = vmatprep.subr.bf16.mxu0 0
    %2109 = vmatpush1.bf16.msra.mxu0 0
    %2110 = vmatprep.subr.bf16.mxu0 0
    %2111 = vmatpush1.bf16.msra.mxu0 0
    %2112 = vmatprep.subr.bf16.mxu0 0
    %2113 = vmatpush1.bf16.msra.mxu0 0
    %2114 = vmatprep.subr.bf16.mxu0 0
    %2115 = vmatpush1.bf16.msra.mxu0 0
    %2116 = vmatprep.subr.bf16.mxu0 0
    %2117 = vmatpush1.bf16.msra.mxu0 0
    %2118 = vmatprep.subr.bf16.mxu0 0
    %2119 = vmatpush1.bf16.msra.mxu0 0
    %2120 = vmatprep.subr.bf16.mxu0 0
    %2121 = vmatpush1.bf16.msra.mxu0 0
    %2122 = vmatprep.subr.bf16.mxu0 0
    %2123 = vmatpush1.bf16.msra.mxu0 0
    %2124 = vmatprep.mubr.bf16.mxu0 0
    %2125 = vmatmul.mubr.bf16.gmra.mrb[0].mxu0 %v1266
    %v2126 = vpop.f32.mrb[0].mxu0
    %v2127 = vadd.f32 0.0, %v2126
    %v2128 = vpop.f32.mrb[0].mxu0
    %v2129 = vpop.f32.mrb[0].mxu0
    %v2130 = vpop.f32.mrb[0].mxu0
    %2131 = vdwg.mxu0
    %s2132 = scalar_lea.vmem [#allocation25], 44
    %2133 = vst.msk [vmem:[%s2132] sm:$0xf] %vm1014, %v2127
    %s2134 = scalar_lea.vmem [#allocation19], 384
    %v2135 = vld [vmem:[%s2134] sm:$0xf]
    %v2136 = vld [vmem:[%s2134 + $0x4] sm:$0xf]
    %v2137 = vld [vmem:[%s2134 + $0x8] sm:$0xf]
    %v2138 = vld [vmem:[%s2134 + $0xc] sm:$0xf]
    %v2139 = vld [vmem:[%s2134 + $0x10] sm:$0xf]
    %v2140 = vld [vmem:[%s2134 + $0x14] sm:$0xf]
    %v2141 = vld [vmem:[%s2134 + $0x18] sm:$0xf]
    %v2142 = vld [vmem:[%s2134 + $0x1c] sm:$0xf]
    %v2151 = vunpack.c.l.b16 %v2135
    %v2152 = vunpack.c.l.b16 %v2136
    %v2153 = vunpack.c.l.b16 %v2137
    %v2154 = vunpack.c.l.b16 %v2138
    %v2155 = vunpack.c.l.b16 %v2139
    %v2156 = vunpack.c.l.b16 %v2140
    %v2157 = vunpack.c.l.b16 %v2141
    %v2158 = vunpack.c.l.b16 %v2142
    %v2159 = vpack.c.b16 %v2152, %v2151
    %v2160 = vpack.c.b16 %v2154, %v2153
    %v2161 = vpack.c.b16 %v2156, %v2155
    %v2162 = vpack.c.b16 %v2158, %v2157
    %2167 = vmatprep.subr.bf16.mxu0 0
    %2168 = vmatpush1.bf16.msra.mxu0 %v2159
    %2169 = vmatprep.subr.bf16.mxu0 0
    %2170 = vmatpush1.bf16.msra.mxu0 %v2160
    %2171 = vmatprep.subr.bf16.mxu0 0
    %2172 = vmatpush1.bf16.msra.mxu0 %v2161
    %2173 = vmatprep.subr.bf16.mxu0 0
    %2174 = vmatpush1.bf16.msra.mxu0 %v2162
    %2175 = vmatprep.subr.bf16.mxu0 0
    %2176 = vmatpush1.bf16.msra.mxu0 0
    %2177 = vmatprep.subr.bf16.mxu0 0
    %2178 = vmatpush1.bf16.msra.mxu0 0
    %2179 = vmatprep.subr.bf16.mxu0 0
    %2180 = vmatpush1.bf16.msra.mxu0 0
    %2181 = vmatprep.subr.bf16.mxu0 0
    %2182 = vmatpush1.bf16.msra.mxu0 0
    %2183 = vmatprep.subr.bf16.mxu0 0
    %2184 = vmatpush1.bf16.msra.mxu0 0
    %2185 = vmatprep.subr.bf16.mxu0 0
    %2186 = vmatpush1.bf16.msra.mxu0 0
    %2187 = vmatprep.subr.bf16.mxu0 0
    %2188 = vmatpush1.bf16.msra.mxu0 0
    %2189 = vmatprep.subr.bf16.mxu0 0
    %2190 = vmatpush1.bf16.msra.mxu0 0
    %2191 = vmatprep.subr.bf16.mxu0 0
    %2192 = vmatpush1.bf16.msra.mxu0 0
    %2193 = vmatprep.subr.bf16.mxu0 0
    %2194 = vmatpush1.bf16.msra.mxu0 0
    %2195 = vmatprep.subr.bf16.mxu0 0
    %2196 = vmatpush1.bf16.msra.mxu0 0
    %2197 = vmatprep.subr.bf16.mxu0 0
    %2198 = vmatpush1.bf16.msra.mxu0 0
    %2199 = vmatprep.mubr.bf16.mxu0 0
    %2200 = vmatmul.mubr.bf16.gmra.mrb[0].mxu0 %v1266
    %v2201 = vpop.f32.mrb[0].mxu0
    %v2202 = vadd.f32 0.0, %v2201
    %v2203 = vpop.f32.mrb[0].mxu0
    %v2204 = vpop.f32.mrb[0].mxu0
    %v2205 = vpop.f32.mrb[0].mxu0
    %2206 = vdwg.mxu0
    %s2207 = scalar_lea.vmem [#allocation25], 48
    %2208 = vst.msk [vmem:[%s2207] sm:$0xf] %vm1014, %v2202
    %s2209 = scalar_lea.vmem [#allocation19], 416
    %v2210 = vld [vmem:[%s2209] sm:$0xf]
    %v2211 = vld [vmem:[%s2209 + $0x4] sm:$0xf]
    %v2212 = vld [vmem:[%s2209 + $0x8] sm:$0xf]
    %v2213 = vld [vmem:[%s2209 + $0xc] sm:$0xf]
    %v2214 = vld [vmem:[%s2209 + $0x10] sm:$0xf]
    %v2215 = vld [vmem:[%s2209 + $0x14] sm:$0xf]
    %v2216 = vld [vmem:[%s2209 + $0x18] sm:$0xf]
    %v2217 = vld [vmem:[%s2209 + $0x1c] sm:$0xf]
    %v2226 = vunpack.c.l.b16 %v2210
    %v2227 = vunpack.c.l.b16 %v2211
    %v2228 = vunpack.c.l.b16 %v2212
    %v2229 = vunpack.c.l.b16 %v2213
    %v2230 = vunpack.c.l.b16 %v2214
    %v2231 = vunpack.c.l.b16 %v2215
    %v2232 = vunpack.c.l.b16 %v2216
    %v2233 = vunpack.c.l.b16 %v2217
    %v2234 = vpack.c.b16 %v2227, %v2226
    %v2235 = vpack.c.b16 %v2229, %v2228
    %v2236 = vpack.c.b16 %v2231, %v2230
    %v2237 = vpack.c.b16 %v2233, %v2232
    %2242 = vmatprep.subr.bf16.mxu0 0
    %2243 = vmatpush1.bf16.msra.mxu0 %v2234
    %2244 = vmatprep.subr.bf16.mxu0 0
    %2245 = vmatpush1.bf16.msra.mxu0 %v2235
    %2246 = vmatprep.subr.bf16.mxu0 0
    %2247 = vmatpush1.bf16.msra.mxu0 %v2236
    %2248 = vmatprep.subr.bf16.mxu0 0
    %2249 = vmatpush1.bf16.msra.mxu0 %v2237
    %2250 = vmatprep.subr.bf16.mxu0 0
    %2251 = vmatpush1.bf16.msra.mxu0 0
    %2252 = vmatprep.subr.bf16.mxu0 0
    %2253 = vmatpush1.bf16.msra.mxu0 0
    %2254 = vmatprep.subr.bf16.mxu0 0
    %2255 = vmatpush1.bf16.msra.mxu0 0
    %2256 = vmatprep.subr.bf16.mxu0 0
    %2257 = vmatpush1.bf16.msra.mxu0 0
    %2258 = vmatprep.subr.bf16.mxu0 0
    %2259 = vmatpush1.bf16.msra.mxu0 0
    %2260 = vmatprep.subr.bf16.mxu0 0
    %2261 = vmatpush1.bf16.msra.mxu0 0
    %2262 = vmatprep.subr.bf16.mxu0 0
    %2263 = vmatpush1.bf16.msra.mxu0 0
    %2264 = vmatprep.subr.bf16.mxu0 0
    %2265 = vmatpush1.bf16.msra.mxu0 0
    %2266 = vmatprep.subr.bf16.mxu0 0
    %2267 = vmatpush1.bf16.msra.mxu0 0
    %2268 = vmatprep.subr.bf16.mxu0 0
    %2269 = vmatpush1.bf16.msra.mxu0 0
    %2270 = vmatprep.subr.bf16.mxu0 0
    %2271 = vmatpush1.bf16.msra.mxu0 0
    %2272 = vmatprep.subr.bf16.mxu0 0
    %2273 = vmatpush1.bf16.msra.mxu0 0
    %2274 = vmatprep.mubr.bf16.mxu0 0
    %2275 = vmatmul.mubr.bf16.gmra.mrb[0].mxu0 %v1266
    %v2276 = vpop.f32.mrb[0].mxu0
    %v2277 = vadd.f32 0.0, %v2276
    %v2278 = vpop.f32.mrb[0].mxu0
    %v2279 = vpop.f32.mrb[0].mxu0
    %v2280 = vpop.f32.mrb[0].mxu0
    %2281 = vdwg.mxu0
    %s2282 = scalar_lea.vmem [#allocation25], 52
    %2283 = vst.msk [vmem:[%s2282] sm:$0xf] %vm1014, %v2277
    %s2284 = scalar_lea.vmem [#allocation19], 448
    %v2285 = vld [vmem:[%s2284] sm:$0xf]
    %v2286 = vld [vmem:[%s2284 + $0x4] sm:$0xf]
    %v2287 = vld [vmem:[%s2284 + $0x8] sm:$0xf]
    %v2288 = vld [vmem:[%s2284 + $0xc] sm:$0xf]
    %v2289 = vld [vmem:[%s2284 + $0x10] sm:$0xf]
    %v2290 = vld [vmem:[%s2284 + $0x14] sm:$0xf]
    %v2291 = vld [vmem:[%s2284 + $0x18] sm:$0xf]
    %v2292 = vld [vmem:[%s2284 + $0x1c] sm:$0xf]
    %v2301 = vunpack.c.l.b16 %v2285
    %v2302 = vunpack.c.l.b16 %v2286
    %v2303 = vunpack.c.l.b16 %v2287
    %v2304 = vunpack.c.l.b16 %v2288
    %v2305 = vunpack.c.l.b16 %v2289
    %v2306 = vunpack.c.l.b16 %v2290
    %v2307 = vunpack.c.l.b16 %v2291
    %v2308 = vunpack.c.l.b16 %v2292
    %v2309 = vpack.c.b16 %v2302, %v2301
    %v2310 = vpack.c.b16 %v2304, %v2303
    %v2311 = vpack.c.b16 %v2306, %v2305
    %v2312 = vpack.c.b16 %v2308, %v2307
    %2317 = vmatprep.subr.bf16.mxu0 0
    %2318 = vmatpush1.bf16.msra.mxu0 %v2309
    %2319 = vmatprep.subr.bf16.mxu0 0
    %2320 = vmatpush1.bf16.msra.mxu0 %v2310
    %2321 = vmatprep.subr.bf16.mxu0 0
    %2322 = vmatpush1.bf16.msra.mxu0 %v2311
    %2323 = vmatprep.subr.bf16.mxu0 0
    %2324 = vmatpush1.bf16.msra.mxu0 %v2312
    %2325 = vmatprep.subr.bf16.mxu0 0
    %2326 = vmatpush1.bf16.msra.mxu0 0
    %2327 = vmatprep.subr.bf16.mxu0 0
    %2328 = vmatpush1.bf16.msra.mxu0 0
    %2329 = vmatprep.subr.bf16.mxu0 0
    %2330 = vmatpush1.bf16.msra.mxu0 0
    %2331 = vmatprep.subr.bf16.mxu0 0
    %2332 = vmatpush1.bf16.msra.mxu0 0
    %2333 = vmatprep.subr.bf16.mxu0 0
    %2334 = vmatpush1.bf16.msra.mxu0 0
    %2335 = vmatprep.subr.bf16.mxu0 0
    %2336 = vmatpush1.bf16.msra.mxu0 0
    %2337 = vmatprep.subr.bf16.mxu0 0
    %2338 = vmatpush1.bf16.msra.mxu0 0
    %2339 = vmatprep.subr.bf16.mxu0 0
    %2340 = vmatpush1.bf16.msra.mxu0 0
    %2341 = vmatprep.subr.bf16.mxu0 0
    %2342 = vmatpush1.bf16.msra.mxu0 0
    %2343 = vmatprep.subr.bf16.mxu0 0
    %2344 = vmatpush1.bf16.msra.mxu0 0
    %2345 = vmatprep.subr.bf16.mxu0 0
    %2346 = vmatpush1.bf16.msra.mxu0 0
    %2347 = vmatprep.subr.bf16.mxu0 0
    %2348 = vmatpush1.bf16.msra.mxu0 0
    %2349 = vmatprep.mubr.bf16.mxu0 0
    %2350 = vmatmul.mubr.bf16.gmra.mrb[0].mxu0 %v1266
    %v2351 = vpop.f32.mrb[0].mxu0
    %v2352 = vadd.f32 0.0, %v2351
    %v2353 = vpop.f32.mrb[0].mxu0
    %v2354 = vpop.f32.mrb[0].mxu0
    %v2355 = vpop.f32.mrb[0].mxu0
    %2356 = vdwg.mxu0
    %s2357 = scalar_lea.vmem [#allocation25], 56
    %2358 = vst.msk [vmem:[%s2357] sm:$0xf] %vm1014, %v2352
    %s2359 = scalar_lea.vmem [#allocation19], 480
    %v2360 = vld [vmem:[%s2359] sm:$0xf]
    %v2361 = vld [vmem:[%s2359 + $0x4] sm:$0xf]
    %v2362 = vld [vmem:[%s2359 + $0x8] sm:$0xf]
    %v2363 = vld [vmem:[%s2359 + $0xc] sm:$0xf]
    %v2364 = vld [vmem:[%s2359 + $0x10] sm:$0xf]
    %v2365 = vld [vmem:[%s2359 + $0x14] sm:$0xf]
    %v2366 = vld [vmem:[%s2359 + $0x18] sm:$0xf]
    %v2367 = vld [vmem:[%s2359 + $0x1c] sm:$0xf]
    %v2376 = vunpack.c.l.b16 %v2360
    %v2377 = vunpack.c.l.b16 %v2361
    %v2378 = vunpack.c.l.b16 %v2362
    %v2379 = vunpack.c.l.b16 %v2363
    %v2380 = vunpack.c.l.b16 %v2364
    %v2381 = vunpack.c.l.b16 %v2365
    %v2382 = vunpack.c.l.b16 %v2366
    %v2383 = vunpack.c.l.b16 %v2367
    %v2384 = vpack.c.b16 %v2377, %v2376
    %v2385 = vpack.c.b16 %v2379, %v2378
    %v2386 = vpack.c.b16 %v2381, %v2380
    %v2387 = vpack.c.b16 %v2383, %v2382
    %2392 = vmatprep.subr.bf16.mxu0 0
    %2393 = vmatpush1.bf16.msra.mxu0 %v2384
    %2394 = vmatprep.subr.bf16.mxu0 0
    %2395 = vmatpush1.bf16.msra.mxu0 %v2385
    %2396 = vmatprep.subr.bf16.mxu0 0
    %2397 = vmatpush1.bf16.msra.mxu0 %v2386
    %2398 = vmatprep.subr.bf16.mxu0 0
    %2399 = vmatpush1.bf16.msra.mxu0 %v2387
    %2400 = vmatprep.subr.bf16.mxu0 0
    %2401 = vmatpush1.bf16.msra.mxu0 0
    %2402 = vmatprep.subr.bf16.mxu0 0
    %2403 = vmatpush1.bf16.msra.mxu0 0
    %2404 = vmatprep.subr.bf16.mxu0 0
    %2405 = vmatpush1.bf16.msra.mxu0 0
    %2406 = vmatprep.subr.bf16.mxu0 0
    %2407 = vmatpush1.bf16.msra.mxu0 0
    %2408 = vmatprep.subr.bf16.mxu0 0
    %2409 = vmatpush1.bf16.msra.mxu0 0
    %2410 = vmatprep.subr.bf16.mxu0 0
    %2411 = vmatpush1.bf16.msra.mxu0 0
    %2412 = vmatprep.subr.bf16.mxu0 0
    %2413 = vmatpush1.bf16.msra.mxu0 0
    %2414 = vmatprep.subr.bf16.mxu0 0
    %2415 = vmatpush1.bf16.msra.mxu0 0
    %2416 = vmatprep.subr.bf16.mxu0 0
    %2417 = vmatpush1.bf16.msra.mxu0 0
    %2418 = vmatprep.subr.bf16.mxu0 0
    %2419 = vmatpush1.bf16.msra.mxu0 0
    %2420 = vmatprep.subr.bf16.mxu0 0
    %2421 = vmatpush1.bf16.msra.mxu0 0
    %2422 = vmatprep.subr.bf16.mxu0 0
    %2423 = vmatpush1.bf16.msra.mxu0 0
    %2424 = vmatprep.mubr.bf16.mxu0 0
    %2425 = vmatmul.mubr.bf16.gmra.mrb[0].mxu0 %v1266
    %v2426 = vpop.f32.mrb[0].mxu0
    %v2427 = vadd.f32 0.0, %v2426
    %v2428 = vpop.f32.mrb[0].mxu0
    %v2429 = vpop.f32.mrb[0].mxu0
    %v2430 = vpop.f32.mrb[0].mxu0
    %2431 = vdwg.mxu0
    %s2432 = scalar_lea.vmem [#allocation25], 60
    %2433 = vst.msk [vmem:[%s2432] sm:$0xf] %vm1014, %v2427
    %v2434 = vld [vmem:[#allocation25] sm:$0xf]
    %v2435 = vld [vmem:[#allocation25 + $0x4] sm:$0xf]
    %v2436 = vld [vmem:[#allocation25 + $0x8] sm:$0xf]
    %v2437 = vld [vmem:[#allocation25 + $0xc] sm:$0xf]
    %v2438 = vld [vmem:[#allocation25 + $0x10] sm:$0xf]
    %v2439 = vld [vmem:[#allocation25 + $0x14] sm:$0xf]
    %v2440 = vld [vmem:[#allocation25 + $0x18] sm:$0xf]
    %v2441 = vld [vmem:[#allocation25 + $0x1c] sm:$0xf]
    %v2442 = vld [vmem:[#allocation25 + $0x20] sm:$0xf]
    %v2443 = vld [vmem:[#allocation25 + $0x24] sm:$0xf]
    %v2444 = vld [vmem:[#allocation25 + $0x28] sm:$0xf]
    %v2445 = vld [vmem:[#allocation25 + $0x2c] sm:$0xf]
    %v2446 = vld [vmem:[#allocation25 + $0x30] sm:$0xf]
    %v2447 = vld [vmem:[#allocation25 + $0x34] sm:$0xf]
    %v2448 = vld [vmem:[#allocation25 + $0x38] sm:$0xf]
    %v2449 = vld [vmem:[#allocation25 + $0x3c] sm:$0xf]
    %v2450 = vsel %vm1014, %v2434, 0.0
    %v2451 = vrot.slane %v2450, 4
    %v2452 = vadd.f32 %v2450, %v2451
    %v2453 = vrot.slane %v2452, 2
    %v2454 = vadd.f32 %v2452, %v2453
    %v2455 = vrot.slane %v2454, 1
    %v2456 = vadd.f32 %v2454, %v2455
    %v2457 = vsel %vm1014, %v2435, 0.0
    %v2458 = vrot.slane %v2457, 4
    %v2459 = vadd.f32 %v2457, %v2458
    %v2460 = vrot.slane %v2459, 2
    %v2461 = vadd.f32 %v2459, %v2460
    %v2462 = vrot.slane %v2461, 1
    %v2463 = vadd.f32 %v2461, %v2462
    %v2464 = vsel %vm1014, %v2436, 0.0
    %v2465 = vrot.slane %v2464, 4
    %v2466 = vadd.f32 %v2464, %v2465
    %v2467 = vrot.slane %v2466, 2
    %v2468 = vadd.f32 %v2466, %v2467
    %v2469 = vrot.slane %v2468, 1
    %v2470 = vadd.f32 %v2468, %v2469
    %v2471 = vsel %vm1014, %v2437, 0.0
    %v2472 = vrot.slane %v2471, 4
    %v2473 = vadd.f32 %v2471, %v2472
    %v2474 = vrot.slane %v2473, 2
    %v2475 = vadd.f32 %v2473, %v2474
    %v2476 = vrot.slane %v2475, 1
    %v2477 = vadd.f32 %v2475, %v2476
    %v2478 = vsel %vm1014, %v2438, 0.0
    %v2479 = vrot.slane %v2478, 4
    %v2480 = vadd.f32 %v2478, %v2479
    %v2481 = vrot.slane %v2480, 2
    %v2482 = vadd.f32 %v2480, %v2481
    %v2483 = vrot.slane %v2482, 1
    %v2484 = vadd.f32 %v2482, %v2483
    %v2485 = vsel %vm1014, %v2439, 0.0
    %v2486 = vrot.slane %v2485, 4
    %v2487 = vadd.f32 %v2485, %v2486
    %v2488 = vrot.slane %v2487, 2
    %v2489 = vadd.f32 %v2487, %v2488
    %v2490 = vrot.slane %v2489, 1
    %v2491 = vadd.f32 %v2489, %v2490
    %v2492 = vsel %vm1014, %v2440, 0.0
    %v2493 = vrot.slane %v2492, 4
    %v2494 = vadd.f32 %v2492, %v2493
    %v2495 = vrot.slane %v2494, 2
    %v2496 = vadd.f32 %v2494, %v2495
    %v2497 = vrot.slane %v2496, 1
    %v2498 = vadd.f32 %v2496, %v2497
    %v2499 = vsel %vm1014, %v2441, 0.0
    %v2500 = vrot.slane %v2499, 4
    %v2501 = vadd.f32 %v2499, %v2500
    %v2502 = vrot.slane %v2501, 2
    %v2503 = vadd.f32 %v2501, %v2502
    %v2504 = vrot.slane %v2503, 1
    %v2505 = vadd.f32 %v2503, %v2504
    %v2506 = vsel %vm1014, %v2442, 0.0
    %v2507 = vrot.slane %v2506, 4
    %v2508 = vadd.f32 %v2506, %v2507
    %v2509 = vrot.slane %v2508, 2
    %v2510 = vadd.f32 %v2508, %v2509
    %v2511 = vrot.slane %v2510, 1
    %v2512 = vadd.f32 %v2510, %v2511
    %v2513 = vsel %vm1014, %v2443, 0.0
    %v2514 = vrot.slane %v2513, 4
    %v2515 = vadd.f32 %v2513, %v2514
    %v2516 = vrot.slane %v2515, 2
    %v2517 = vadd.f32 %v2515, %v2516
    %v2518 = vrot.slane %v2517, 1
    %v2519 = vadd.f32 %v2517, %v2518
    %v2520 = vsel %vm1014, %v2444, 0.0
    %v2521 = vrot.slane %v2520, 4
    %v2522 = vadd.f32 %v2520, %v2521
    %v2523 = vrot.slane %v2522, 2
    %v2524 = vadd.f32 %v2522, %v2523
    %v2525 = vrot.slane %v2524, 1
    %v2526 = vadd.f32 %v2524, %v2525
    %v2527 = vsel %vm1014, %v2445, 0.0
    %v2528 = vrot.slane %v2527, 4
    %v2529 = vadd.f32 %v2527, %v2528
    %v2530 = vrot.slane %v2529, 2
    %v2531 = vadd.f32 %v2529, %v2530
    %v2532 = vrot.slane %v2531, 1
    %v2533 = vadd.f32 %v2531, %v2532
    %v2534 = vsel %vm1014, %v2446, 0.0
    %v2535 = vrot.slane %v2534, 4
    %v2536 = vadd.f32 %v2534, %v2535
    %v2537 = vrot.slane %v2536, 2
    %v2538 = vadd.f32 %v2536, %v2537
    %v2539 = vrot.slane %v2538, 1
    %v2540 = vadd.f32 %v2538, %v2539
    %v2541 = vsel %vm1014, %v2447, 0.0
    %v2542 = vrot.slane %v2541, 4
    %v2543 = vadd.f32 %v2541, %v2542
    %v2544 = vrot.slane %v2543, 2
    %v2545 = vadd.f32 %v2543, %v2544
    %v2546 = vrot.slane %v2545, 1
    %v2547 = vadd.f32 %v2545, %v2546
    %v2548 = vsel %vm1014, %v2448, 0.0
    %v2549 = vrot.slane %v2548, 4
    %v2550 = vadd.f32 %v2548, %v2549
    %v2551 = vrot.slane %v2550, 2
    %v2552 = vadd.f32 %v2550, %v2551
    %v2553 = vrot.slane %v2552, 1
    %v2554 = vadd.f32 %v2552, %v2553
    %v2555 = vsel %vm1014, %v2449, 0.0
    %v2556 = vrot.slane %v2555, 4
    %v2557 = vadd.f32 %v2555, %v2556
    %v2558 = vrot.slane %v2557, 2
    %v2559 = vadd.f32 %v2557, %v2558
    %v2560 = vrot.slane %v2559, 1
    %v2561 = vadd.f32 %v2559, %v2560
    %v2562 = vmul.f32 %v2456, %v923
    %v2563 = vmul.f32 %v2463, %v923
    %v2564 = vmul.f32 %v2470, %v923
    %v2565 = vmul.f32 %v2477, %v923
    %v2566 = vmul.f32 %v2484, %v923
    %v2567 = vmul.f32 %v2491, %v923
    %v2568 = vmul.f32 %v2498, %v923
    %v2569 = vmul.f32 %v2505, %v923
    %v2570 = vmul.f32 %v2512, %v923
    %v2571 = vmul.f32 %v2519, %v923
    %v2572 = vmul.f32 %v2526, %v923
    %v2573 = vmul.f32 %v2533, %v923
    %v2574 = vmul.f32 %v2540, %v923
    %v2575 = vmul.f32 %v2547, %v923
    %v2576 = vmul.f32 %v2554, %v923
    %v2577 = vmul.f32 %v2561, %v923
    %v2578 = vsel %vm1090, %v2562, 0.0
    %v2579 = vsel %vm1090, %v2563, 0.0
    %v2580 = vadd.f32 %v2578, %v2579
    %v2581 = vsel %vm1090, %v2564, 0.0
    %v2582 = vadd.f32 %v2580, %v2581
    %v2583 = vsel %vm1090, %v2565, 0.0
    %v2584 = vadd.f32 %v2582, %v2583
    %v2585 = vsel %vm1090, %v2566, 0.0
    %v2586 = vadd.f32 %v2584, %v2585
    %v2587 = vsel %vm1090, %v2567, 0.0
    %v2588 = vadd.f32 %v2586, %v2587
    %v2589 = vsel %vm1090, %v2568, 0.0
    %v2590 = vadd.f32 %v2588, %v2589
    %v2591 = vsel %vm1090, %v2569, 0.0
    %v2592 = vadd.f32 %v2590, %v2591
    %v2593 = vsel %vm1090, %v2570, 0.0
    %v2594 = vadd.f32 %v2592, %v2593
    %v2595 = vsel %vm1090, %v2571, 0.0
    %v2596 = vadd.f32 %v2594, %v2595
    %v2597 = vsel %vm1090, %v2572, 0.0
    %v2598 = vadd.f32 %v2596, %v2597
    %v2599 = vsel %vm1090, %v2573, 0.0
    %v2600 = vadd.f32 %v2598, %v2599
    %v2601 = vsel %vm1090, %v2574, 0.0
    %v2602 = vadd.f32 %v2600, %v2601
    %v2603 = vsel %vm1090, %v2575, 0.0
    %v2604 = vadd.f32 %v2602, %v2603
    %v2605 = vsel %vm1090, %v2576, 0.0
    %v2606 = vadd.f32 %v2604, %v2605
    %v2607 = vsel %vm1090, %v2577, 0.0
    %v2608 = vadd.f32 %v2606, %v2607
    %v2609 = vrcp.pop 16.0
    %v2610 = vmul.f32 %v2608, %v2609
    %v2611 = vmul.f32 %v2434, %v2434
    %v2612 = vmul.f32 %v2435, %v2435
    %v2613 = vmul.f32 %v2436, %v2436
    %v2614 = vmul.f32 %v2437, %v2437
    %v2615 = vmul.f32 %v2438, %v2438
    %v2616 = vmul.f32 %v2439, %v2439
    %v2617 = vmul.f32 %v2440, %v2440
    %v2618 = vmul.f32 %v2441, %v2441
    %v2619 = vmul.f32 %v2442, %v2442
    %v2620 = vmul.f32 %v2443, %v2443
    %v2621 = vmul.f32 %v2444, %v2444
    %v2622 = vmul.f32 %v2445, %v2445
    %v2623 = vmul.f32 %v2446, %v2446
    %v2624 = vmul.f32 %v2447, %v2447
    %v2625 = vmul.f32 %v2448, %v2448
    %v2626 = vmul.f32 %v2449, %v2449
    %v2627 = vsel %vm1014, %v2611, 0.0
    %v2628 = vrot.slane %v2627, 4
    %v2629 = vadd.f32 %v2627, %v2628
    %v2630 = vrot.slane %v2629, 2
    %v2631 = vadd.f32 %v2629, %v2630
    %v2632 = vrot.slane %v2631, 1
    %v2633 = vadd.f32 %v2631, %v2632
    %v2634 = vsel %vm1014, %v2612, 0.0
    %v2635 = vrot.slane %v2634, 4
    %v2636 = vadd.f32 %v2634, %v2635
    %v2637 = vrot.slane %v2636, 2
    %v2638 = vadd.f32 %v2636, %v2637
    %v2639 = vrot.slane %v2638, 1
    %v2640 = vadd.f32 %v2638, %v2639
    %v2641 = vsel %vm1014, %v2613, 0.0
    %v2642 = vrot.slane %v2641, 4
    %v2643 = vadd.f32 %v2641, %v2642
    %v2644 = vrot.slane %v2643, 2
    %v2645 = vadd.f32 %v2643, %v2644
    %v2646 = vrot.slane %v2645, 1
    %v2647 = vadd.f32 %v2645, %v2646
    %v2648 = vsel %vm1014, %v2614, 0.0
    %v2649 = vrot.slane %v2648, 4
    %v2650 = vadd.f32 %v2648, %v2649
    %v2651 = vrot.slane %v2650, 2
    %v2652 = vadd.f32 %v2650, %v2651
    %v2653 = vrot.slane %v2652, 1
    %v2654 = vadd.f32 %v2652, %v2653
    %v2655 = vsel %vm1014, %v2615, 0.0
    %v2656 = vrot.slane %v2655, 4
    %v2657 = vadd.f32 %v2655, %v2656
    %v2658 = vrot.slane %v2657, 2
    %v2659 = vadd.f32 %v2657, %v2658
    %v2660 = vrot.slane %v2659, 1
    %v2661 = vadd.f32 %v2659, %v2660
    %v2662 = vsel %vm1014, %v2616, 0.0
    %v2663 = vrot.slane %v2662, 4
    %v2664 = vadd.f32 %v2662, %v2663
    %v2665 = vrot.slane %v2664, 2
    %v2666 = vadd.f32 %v2664, %v2665
    %v2667 = vrot.slane %v2666, 1
    %v2668 = vadd.f32 %v2666, %v2667
    %v2669 = vsel %vm1014, %v2617, 0.0
    %v2670 = vrot.slane %v2669, 4
    %v2671 = vadd.f32 %v2669, %v2670
    %v2672 = vrot.slane %v2671, 2
    %v2673 = vadd.f32 %v2671, %v2672
    %v2674 = vrot.slane %v2673, 1
    %v2675 = vadd.f32 %v2673, %v2674
    %v2676 = vsel %vm1014, %v2618, 0.0
    %v2677 = vrot.slane %v2676, 4
    %v2678 = vadd.f32 %v2676, %v2677
    %v2679 = vrot.slane %v2678, 2
    %v2680 = vadd.f32 %v2678, %v2679
    %v2681 = vrot.slane %v2680, 1
    %v2682 = vadd.f32 %v2680, %v2681
    %v2683 = vsel %vm1014, %v2619, 0.0
    %v2684 = vrot.slane %v2683, 4
    %v2685 = vadd.f32 %v2683, %v2684
    %v2686 = vrot.slane %v2685, 2
    %v2687 = vadd.f32 %v2685, %v2686
    %v2688 = vrot.slane %v2687, 1
    %v2689 = vadd.f32 %v2687, %v2688
    %v2690 = vsel %vm1014, %v2620, 0.0
    %v2691 = vrot.slane %v2690, 4
    %v2692 = vadd.f32 %v2690, %v2691
    %v2693 = vrot.slane %v2692, 2
    %v2694 = vadd.f32 %v2692, %v2693
    %v2695 = vrot.slane %v2694, 1
    %v2696 = vadd.f32 %v2694, %v2695
    %v2697 = vsel %vm1014, %v2621, 0.0
    %v2698 = vrot.slane %v2697, 4
    %v2699 = vadd.f32 %v2697, %v2698
    %v2700 = vrot.slane %v2699, 2
    %v2701 = vadd.f32 %v2699, %v2700
    %v2702 = vrot.slane %v2701, 1
    %v2703 = vadd.f32 %v2701, %v2702
    %v2704 = vsel %vm1014, %v2622, 0.0
    %v2705 = vrot.slane %v2704, 4
    %v2706 = vadd.f32 %v2704, %v2705
    %v2707 = vrot.slane %v2706, 2
    %v2708 = vadd.f32 %v2706, %v2707
    %v2709 = vrot.slane %v2708, 1
    %v2710 = vadd.f32 %v2708, %v2709
    %v2711 = vsel %vm1014, %v2623, 0.0
    %v2712 = vrot.slane %v2711, 4
    %v2713 = vadd.f32 %v2711, %v2712
    %v2714 = vrot.slane %v2713, 2
    %v2715 = vadd.f32 %v2713, %v2714
    %v2716 = vrot.slane %v2715, 1
    %v2717 = vadd.f32 %v2715, %v2716
    %v2718 = vsel %vm1014, %v2624, 0.0
    %v2719 = vrot.slane %v2718, 4
    %v2720 = vadd.f32 %v2718, %v2719
    %v2721 = vrot.slane %v2720, 2
    %v2722 = vadd.f32 %v2720, %v2721
    %v2723 = vrot.slane %v2722, 1
    %v2724 = vadd.f32 %v2722, %v2723
    %v2725 = vsel %vm1014, %v2625, 0.0
    %v2726 = vrot.slane %v2725, 4
    %v2727 = vadd.f32 %v2725, %v2726
    %v2728 = vrot.slane %v2727, 2
    %v2729 = vadd.f32 %v2727, %v2728
    %v2730 = vrot.slane %v2729, 1
    %v2731 = vadd.f32 %v2729, %v2730
    %v2732 = vsel %vm1014, %v2626, 0.0
    %v2733 = vrot.slane %v2732, 4
    %v2734 = vadd.f32 %v2732, %v2733
    %v2735 = vrot.slane %v2734, 2
    %v2736 = vadd.f32 %v2734, %v2735
    %v2737 = vrot.slane %v2736, 1
    %v2738 = vadd.f32 %v2736, %v2737
    %v2739 = vmul.f32 %v2633, %v923
    %v2740 = vmul.f32 %v2640, %v923
    %v2741 = vmul.f32 %v2647, %v923
    %v2742 = vmul.f32 %v2654, %v923
    %v2743 = vmul.f32 %v2661, %v923
    %v2744 = vmul.f32 %v2668, %v923
    %v2745 = vmul.f32 %v2675, %v923
    %v2746 = vmul.f32 %v2682, %v923
    %v2747 = vmul.f32 %v2689, %v923
    %v2748 = vmul.f32 %v2696, %v923
    %v2749 = vmul.f32 %v2703, %v923
    %v2750 = vmul.f32 %v2710, %v923
    %v2751 = vmul.f32 %v2717, %v923
    %v2752 = vmul.f32 %v2724, %v923
    %v2753 = vmul.f32 %v2731, %v923
    %v2754 = vmul.f32 %v2738, %v923
    %v2755 = vsel %vm1090, %v2739, 0.0
    %v2756 = vsel %vm1090, %v2740, 0.0
    %v2757 = vadd.f32 %v2755, %v2756
    %v2758 = vsel %vm1090, %v2741, 0.0
    %v2759 = vadd.f32 %v2757, %v2758
    %v2760 = vsel %vm1090, %v2742, 0.0
    %v2761 = vadd.f32 %v2759, %v2760
    %v2762 = vsel %vm1090, %v2743, 0.0
    %v2763 = vadd.f32 %v2761, %v2762
    %v2764 = vsel %vm1090, %v2744, 0.0
    %v2765 = vadd.f32 %v2763, %v2764
    %v2766 = vsel %vm1090, %v2745, 0.0
    %v2767 = vadd.f32 %v2765, %v2766
    %v2768 = vsel %vm1090, %v2746, 0.0
    %v2769 = vadd.f32 %v2767, %v2768
    %v2770 = vsel %vm1090, %v2747, 0.0
    %v2771 = vadd.f32 %v2769, %v2770
    %v2772 = vsel %vm1090, %v2748, 0.0
    %v2773 = vadd.f32 %v2771, %v2772
    %v2774 = vsel %vm1090, %v2749, 0.0
    %v2775 = vadd.f32 %v2773, %v2774
    %v2776 = vsel %vm1090, %v2750, 0.0
    %v2777 = vadd.f32 %v2775, %v2776
    %v2778 = vsel %vm1090, %v2751, 0.0
    %v2779 = vadd.f32 %v2777, %v2778
    %v2780 = vsel %vm1090, %v2752, 0.0
    %v2781 = vadd.f32 %v2779, %v2780
    %v2782 = vsel %vm1090, %v2753, 0.0
    %v2783 = vadd.f32 %v2781, %v2782
    %v2784 = vsel %vm1090, %v2754, 0.0
    %v2785 = vadd.f32 %v2783, %v2784
    %v2786 = vmul.f32 %v2785, %v2609
    %v2787 = vmul.f32 %v2610, %v2610
    %v2788 = vsub.f32 %v2786, %v2787
    %v2789 = vmax.f32 %v2788, 0.0
    %v2790 = vadd.f32 %v2789, 1e-05
    %v2791 = vrsqrt.pop %v2790
    %v2792 = vld [vmem:[#allocation20] sm:$0x1]
    %v2793 = vmul.f32 %v2434, %v2791
    %v2794 = vmul.f32 %v2435, %v2791
    %v2795 = vmul.f32 %v2436, %v2791
    %v2796 = vmul.f32 %v2437, %v2791
    %v2797 = vmul.f32 %v2438, %v2791
    %v2798 = vmul.f32 %v2439, %v2791
    %v2799 = vmul.f32 %v2440, %v2791
    %v2800 = vmul.f32 %v2441, %v2791
    %v2801 = vmul.f32 %v2442, %v2791
    %v2802 = vmul.f32 %v2443, %v2791
    %v2803 = vmul.f32 %v2444, %v2791
    %v2804 = vmul.f32 %v2445, %v2791
    %v2805 = vmul.f32 %v2446, %v2791
    %v2806 = vmul.f32 %v2447, %v2791
    %v2807 = vmul.f32 %v2448, %v2791
    %v2808 = vmul.f32 %v2449, %v2791
    %v2809 = vmul.f32 %v2610, %v2791
    %v2810 = vsub.f32 %v2792, %v2809
    %v2812 = vlaneseq
    %v2813 = vshrl.u32 %v2812, 7
    %v2814 = vsub.s32 0, %v2813
    %v2815 = vrot.slane %v2810, %v2814
    %v2817 = vadd.f32 %v2793, %v2815
    %v2818 = vadd.f32 %v2794, %v2815
    %v2819 = vadd.f32 %v2795, %v2815
    %v2820 = vadd.f32 %v2796, %v2815
    %v2821 = vadd.f32 %v2797, %v2815
    %v2822 = vadd.f32 %v2798, %v2815
    %v2823 = vadd.f32 %v2799, %v2815
    %v2824 = vadd.f32 %v2800, %v2815
    %v2825 = vadd.f32 %v2801, %v2815
    %v2826 = vadd.f32 %v2802, %v2815
    %v2827 = vadd.f32 %v2803, %v2815
    %v2828 = vadd.f32 %v2804, %v2815
    %v2829 = vadd.f32 %v2805, %v2815
    %v2830 = vadd.f32 %v2806, %v2815
    %v2831 = vadd.f32 %v2807, %v2815
    %v2832 = vadd.f32 %v2808, %v2815
    %vm2833 = vcmp.ge.f32.partialorder %v2817, 0.0
    %vm2834 = vcmp.ge.f32.partialorder %v2818, 0.0
    %vm2835 = vcmp.ge.f32.partialorder %v2819, 0.0
    %vm2836 = vcmp.ge.f32.partialorder %v2820, 0.0
    %vm2837 = vcmp.ge.f32.partialorder %v2821, 0.0
    %vm2838 = vcmp.ge.f32.partialorder %v2822, 0.0
    %vm2839 = vcmp.ge.f32.partialorder %v2823, 0.0
    %vm2840 = vcmp.ge.f32.partialorder %v2824, 0.0
    %vm2841 = vcmp.ge.f32.partialorder %v2825, 0.0
    %vm2842 = vcmp.ge.f32.partialorder %v2826, 0.0
    %vm2843 = vcmp.ge.f32.partialorder %v2827, 0.0
    %vm2844 = vcmp.ge.f32.partialorder %v2828, 0.0
    %vm2845 = vcmp.ge.f32.partialorder %v2829, 0.0
    %vm2846 = vcmp.ge.f32.partialorder %v2830, 0.0
    %vm2847 = vcmp.ge.f32.partialorder %v2831, 0.0
    %vm2848 = vcmp.ge.f32.partialorder %v2832, 0.0
    %v2849 = vmul.f32 %v2817, 0.01
    %v2850 = vmul.f32 %v2818, 0.01
    %v2851 = vmul.f32 %v2819, 0.01
    %v2852 = vmul.f32 %v2820, 0.01
    %v2853 = vmul.f32 %v2821, 0.01
    %v2854 = vmul.f32 %v2822, 0.01
    %v2855 = vmul.f32 %v2823, 0.01
    %v2856 = vmul.f32 %v2824, 0.01
    %v2857 = vmul.f32 %v2825, 0.01
    %v2858 = vmul.f32 %v2826, 0.01
    %v2859 = vmul.f32 %v2827, 0.01
    %v2860 = vmul.f32 %v2828, 0.01
    %v2861 = vmul.f32 %v2829, 0.01
    %v2862 = vmul.f32 %v2830, 0.01
    %v2863 = vmul.f32 %v2831, 0.01
    %v2864 = vmul.f32 %v2832, 0.01
    %v2865 = vsel %vm2833, %v2817, %v2849
    %v2866 = vsel %vm2834, %v2818, %v2850
    %v2867 = vsel %vm2835, %v2819, %v2851
    %v2868 = vsel %vm2836, %v2820, %v2852
    %v2869 = vsel %vm2837, %v2821, %v2853
    %v2870 = vsel %vm2838, %v2822, %v2854
    %v2871 = vsel %vm2839, %v2823, %v2855
    %v2872 = vsel %vm2840, %v2824, %v2856
    %v2873 = vsel %vm2841, %v2825, %v2857
    %v2874 = vsel %vm2842, %v2826, %v2858
    %v2875 = vsel %vm2843, %v2827, %v2859
    %v2876 = vsel %vm2844, %v2828, %v2860
    %v2877 = vsel %vm2845, %v2829, %v2861
    %v2878 = vsel %vm2846, %v2830, %v2862
    %v2879 = vsel %vm2847, %v2831, %v2863
    %v2880 = vsel %vm2848, %v2832, %v2864
    %2881 = vst.msk [vmem:[#allocation25] sm:$0xf] %vm1014, %v2865
    %2882 = vst.msk [vmem:[#allocation25 + $0x4] sm:$0xf] %vm1014, %v2866
    %2883 = vst.msk [vmem:[#allocation25 + $0x8] sm:$0xf] %vm1014, %v2867
    %2884 = vst.msk [vmem:[#allocation25 + $0xc] sm:$0xf] %vm1014, %v2868
    %2885 = vst.msk [vmem:[#allocation25 + $0x10] sm:$0xf] %vm1014, %v2869
    %2886 = vst.msk [vmem:[#allocation25 + $0x14] sm:$0xf] %vm1014, %v2870
    %2887 = vst.msk [vmem:[#allocation25 + $0x18] sm:$0xf] %vm1014, %v2871
    %2888 = vst.msk [vmem:[#allocation25 + $0x1c] sm:$0xf] %vm1014, %v2872
    %2889 = vst.msk [vmem:[#allocation25 + $0x20] sm:$0xf] %vm1014, %v2873
    %2890 = vst.msk [vmem:[#allocation25 + $0x24] sm:$0xf] %vm1014, %v2874
    %2891 = vst.msk [vmem:[#allocation25 + $0x28] sm:$0xf] %vm1014, %v2875
    %2892 = vst.msk [vmem:[#allocation25 + $0x2c] sm:$0xf] %vm1014, %v2876
    %2893 = vst.msk [vmem:[#allocation25 + $0x30] sm:$0xf] %vm1014, %v2877
    %2894 = vst.msk [vmem:[#allocation25 + $0x34] sm:$0xf] %vm1014, %v2878
    %2895 = vst.msk [vmem:[#allocation25 + $0x38] sm:$0xf] %vm1014, %v2879
    %2896 = vst.msk [vmem:[#allocation25 + $0x3c] sm:$0xf] %vm1014, %v2880
    // Predicated region
    $region98: #{covae_forward.8} parent=1 // pred_check
      _
    $region99: #{covae_forward.8} parent=1 // pred_check_branch
      %2898 = sbr.rel (0) target = $region101
    $region100: #{covae_forward.8} parent=1 // pred_region
      %s2900 = ssub.s32 64, 64
      %2901 = vsyncadd [#allocation4], %s2900
      %s2903 = sshll.u32 [#allocation22], 4
      %s2904 = int_to_ptr.vmem [resolvable:$true] %s2903
      %2906 = dma.vmem_to_hbm [thread:$0]  %s2904, 64, %s12, [#allocation4]
    $region101: #{covae_forward.8} parent=1 // pred_fallthru
      _
    // Predicated region
    $region102: #{covae_forward.8} parent=1 // pred_check
      _
    $region103: #{covae_forward.8} parent=1 // pred_check_branch
      %2908 = sbr.rel (0) target = $region105
    $region104: #{covae_forward.8} parent=1 // pred_region
      %s2910 = ssub.s32 64, 64
      %2911 = vsyncadd [#allocation24], %s2910
      %s2913 = sshll.u32 [#allocation23], 4
      %s2914 = int_to_ptr.vmem [resolvable:$true] %s2913
      %2916 = dma.vmem_to_hbm [thread:$0]  %s2914, 64, %s13, [#allocation24]
    $region105: #{covae_forward.8} parent=1 // pred_fallthru
      _
    // Predicated region
    $region106: #{covae_forward.8} parent=1 // pred_check
      _
    $region107: #{covae_forward.8} parent=1 // pred_check_branch
      %2918 = sbr.rel (0) target = $region109
    $region108: #{covae_forward.8} parent=1 // pred_region
      %s2920 = ssub.s32 1024, 1024
      %2921 = vsyncadd [#allocation24], %s2920
      %s2922 = sshll.u32 [#allocation25], 4
      %s2923 = int_to_ptr.vmem [resolvable:$true] %s2922
      %2928 = dma.vmem_to_hbm [thread:$0]  %s2923, 1024, %s14, [#allocation24], 64, 64, 4
    $region109: #{covae_forward.8} parent=1 // pred_fallthru
      _
    // Predicated region
    $region110: #{covae_forward.8} parent=1 // pred_check
      _
    $region111: #{covae_forward.8} parent=1 // pred_check_branch
      %2930 = sbr.rel (0) target = $region113
    $region112: #{covae_forward.8} parent=1 // pred_region
      %2931 = dma.done [#allocation4], 64
    $region113: #{covae_forward.8} parent=1 // pred_fallthru
      _
    // Predicated region
    $region114: #{covae_forward.8} parent=1 // pred_check
      _
    $region115: #{covae_forward.8} parent=1 // pred_check_branch
      %2933 = sbr.rel (0) target = $region117
    $region116: #{covae_forward.8} parent=1 // pred_region
      %2934 = dma.done [#allocation24], 64
    $region117: #{covae_forward.8} parent=1 // pred_fallthru
      _
    // Predicated region
    $region118: #{covae_forward.8} parent=1 // pred_check
      _
    $region119: #{covae_forward.8} parent=1 // pred_check_branch
      %2936 = sbr.rel (0) target = $region121
    $region120: #{covae_forward.8} parent=1 // pred_region
      %2937 = dma.done [#allocation24], 1024
    $region121: #{covae_forward.8} parent=1 // pred_fallthru
      _
    %2938 = vsyncpa [#allocation3], 1
    %2939 = vsyncpa [#allocation6], 1
    %2940 = vsyncpa [#allocation9], 1
    %2941 = vsyncpa [#allocation12], 1
    %2942 = vsyncpa [#allocation15], 1
    %2943 = vsyncpa [#allocation18], 1
    %2944 = vsyncpa [#allocation21], 1
    %2945 = vsyncpa [#allocation4], 1
    %2946 = vsyncpa [#allocation24], 1

// kernel: covae_forward.9
$region0: #{covae_forward.9}
  #allocation0 [shape = 'u32[]', space=smem, size = 0x4, offset = 0x4, fixed_abs, tag = 'smem constant byte address 0x4 - core index']
  #allocation1 [shape = 'u32[144,128]{1,0:T(1,128)}', space=vmem, size = 0x12000, scoped, tag = 'internal scratch']
  #allocation9 [shape = 's32[]', space=sflag, size = 0x4, offset = 0, fixed_abs, tag = 'sflag constant byte address 0x0 - dummy sync flag']
  #allocation11 [shape = 's32[]', space=sflag, size = 0x4, offset = 0, fixed_abs, tag = 'sflag constant byte address 0x0 - dummy sync flag']
  %s0 = inlined_call_operand.hbm [shape: bf16[4,32,256], index: 0, kind: input, shape index: {}]
  %s1 = inlined_call_operand.hbm [shape: bf16[4,256,64], index: 1, kind: input, shape index: {}]
  %s2 = inlined_call_operand.hbm [shape: f32[32,1], index: 2, kind: input, shape index: {}]
  %s3 = inlined_call_operand.hbm [shape: f32[4,32,64], index: 3, kind: output, shape index: {}]
  %s4 = sld [smem:[#allocation0]]
  $region57: #{covae_forward.9} parent=0
    _
  %s6 = ssub.s32 1, %s4
  %s7 = scalar_select 0, %s6, %s4
  $region1: #{covae_forward.9} parent=0
    #allocation2 [shape = 'u8[65536]{0}', space=vmem, size = 0x10000, scoped, tag = 'input window, operand 0']
    #allocation3 [shape = 's32[2]{0}', space=sflag, size = 0x8, scoped, tag = 'scoped memory for covae_forward.9']
    #allocation4 [shape = 's32[2]{0}', space=sflag, size = 0x8, scoped, tag = 'scoped memory for covae_forward.9']
    #allocation5 [shape = 'u8[262144]{0}', space=vmem, size = 0x40000, scoped, tag = 'input window, operand 1, single buffered']
    #allocation6 [shape = 's32[1]{0}', space=sflag, size = 0x4, scoped, tag = 'scoped memory for covae_forward.9']
    #allocation7 [shape = 'u8[16384]{0}', space=vmem, size = 0x4000, scoped, tag = 'input window, operand 2']
    #allocation8 [shape = 'u8[65536]{0}', space=vmem, size = 0x10000, scoped, tag = 'output window, operand 0']
    %8 = vsyncpa [#allocation3], 0
    %s9 = scalar_lea.sflag [#allocation3], 1
    %10 = vsyncpa %s9, 0
    %11 = vsyncpa [#allocation6], 0
    %12 = vsyncpa [#allocation4], 0
    %s13 = scalar_lea.sflag [#allocation4], 1
    %14 = vsyncpa %s13, 0
    loop: start=0, step=1, limit=4
    $region2: #{covae_forward.9} parent=1 // loop_pre_header
      _
    $region3: #{covae_forward.9} parent=1 // loop_header
      %s16 = sphi 0, %s20
      %p17 = scmp.ge.s32.totalorder %s16, 4
      %s26 = sphi 0, %s28
      %s29 = sphi 0, %s26
      %s30 = sphi 0, %s29
      %s46 = sphi 0, %s30
      %s50 = sphi 0, %s50
      %s52 = sphi 0, %s50
      %s53 = sphi 0, %s52
      %s67 = sphi 0, %s53
      %s73 = sphi 0, %s75
      %s76 = sphi 0, %s73
      %s77 = sphi 0, %s76
      %s93 = sphi 0, %s77
      %s99 = sphi 0, %s101
      %s102 = sphi 0, %s99
      %s103 = sphi 0, %s102
      %s119 = sphi 0, %s103
    $region4: #{covae_forward.9} parent=1 // loop_header_branch
      %19 = sbr.rel (%p17) target = $region8
    $region5: #{covae_forward.9} parent=1 // loop_body
      %s21 = ssub.s32 %s16, 1
      %s22 = ssub.s32 %s16, 2
      %s23 = sadd.s32 %s16, 1
      %s24 = ssub.s32 %s16, %s23
      %p25 = scmp.eq.s32.totalorder %s24, 0
      %s27 = sadd.s32 %s26, 1
      %s28 = scalar_select %p25, %s26, %s27
      %p31 = pneg %p25
      %p32 = scmp.eq.s32.totalorder %s16, 1
      %p33 = por %p31, %p32
      %p34 = scmp.ne.s32.totalorder %s26, %s29
      %p35 = scmp.eq.s32.totalorder %s16, 0
      %p36 = por %p34, %p35
      %p37 = scmp.ne.s32.totalorder %s26, %s29
      %p38 = scmp.eq.s32.totalorder %s21, 1
      %p39 = por %p37, %p38
      %p40 = scmp.ne.s32.totalorder %s29, %s30
      %p41 = scmp.eq.s32.totalorder %s21, 0
      %p42 = por %p40, %p41
      %p43 = scmp.ne.s32.totalorder %s29, %s30
      %p44 = scmp.eq.s32.totalorder %s22, 1
      %p45 = por %p43, %p44
      %p47 = scmp.ne.s32.totalorder %s30, %s46
      %p48 = scmp.eq.s32.totalorder %s22, 0
      %p49 = por %p47, %p48
      %s51 = sadd.s32 %s50, 1
      %p54 = scmp.eq.s32.totalorder %s16, 1
      %p55 = scmp.ne.s32.totalorder %s50, %s52
      %p56 = scmp.eq.s32.totalorder %s16, 0
      %p57 = por %p55, %p56
      %p58 = scmp.ne.s32.totalorder %s50, %s52
      %p59 = scmp.eq.s32.totalorder %s21, 1
      %p60 = por %p58, %p59
      %p61 = scmp.ne.s32.totalorder %s52, %s53
      %p62 = scmp.eq.s32.totalorder %s21, 0
      %p63 = por %p61, %p62
      %p64 = scmp.ne.s32.totalorder %s52, %s53
      %p65 = scmp.eq.s32.totalorder %s22, 1
      %p66 = por %p64, %p65
      %p68 = scmp.ne.s32.totalorder %s53, %s67
      %p69 = scmp.eq.s32.totalorder %s22, 0
      %p70 = por %p68, %p69
      %s71 = ssub.s32 %s16, %s23
      %p72 = scmp.eq.s32.totalorder %s71, 0
      %s74 = sadd.s32 %s73, 1
      %s75 = scalar_select %p72, %s73, %s74
      %p78 = pneg %p72
      %p79 = scmp.eq.s32.totalorder %s16, 1
      %p80 = por %p78, %p79
      %p81 = scmp.ne.s32.totalorder %s73, %s76
      %p82 = scmp.eq.s32.totalorder %s16, 0
      %p83 = por %p81, %p82
      %p84 = scmp.ne.s32.totalorder %s73, %s76
      %p85 = scmp.eq.s32.totalorder %s21, 1
      %p86 = por %p84, %p85
      %p87 = scmp.ne.s32.totalorder %s76, %s77
      %p88 = scmp.eq.s32.totalorder %s21, 0
      %p89 = por %p87, %p88
      %p90 = scmp.ne.s32.totalorder %s76, %s77
      %p91 = scmp.eq.s32.totalorder %s22, 1
      %p92 = por %p90, %p91
      %p94 = scmp.ne.s32.totalorder %s77, %s93
      %p95 = scmp.eq.s32.totalorder %s22, 0
      %p96 = por %p94, %p95
      %s97 = ssub.s32 %s16, %s23
      %p98 = scmp.eq.s32.totalorder %s97, 0
      %s100 = sadd.s32 %s99, 1
      %s101 = scalar_select %p98, %s99, %s100
      %p104 = pneg %p98
      %p105 = scmp.eq.s32.totalorder %s16, 1
      %p106 = por %p104, %p105
      %p107 = scmp.ne.s32.totalorder %s99, %s102
      %p108 = scmp.eq.s32.totalorder %s16, 0
      %p109 = por %p107, %p108
      %p110 = scmp.ne.s32.totalorder %s99, %s102
      %p111 = scmp.eq.s32.totalorder %s21, 1
      %p112 = por %p110, %p111
      %p113 = scmp.ne.s32.totalorder %s102, %s103
      %p114 = scmp.eq.s32.totalorder %s21, 0
      %p115 = por %p113, %p114
      %p116 = scmp.ne.s32.totalorder %s102, %s103
      %p117 = scmp.eq.s32.totalorder %s22, 1
      %p118 = por %p116, %p117
      %p120 = scmp.ne.s32.totalorder %s103, %s119
      %p121 = scmp.eq.s32.totalorder %s22, 0
      %p122 = por %p120, %p121
      %p123 = scmp.le.s32.totalorder 1, %s16
      %p124 = scmp.lt.s32.totalorder %s16, 3
      %p125 = pnand %p123, %p124
      %p126 = pneg %p125
      // Predicated region
      $region9: #{covae_forward.9} parent=5 // pred_check
        _
      $region10: #{covae_forward.9} parent=5 // pred_check_branch
        %128 = sbr.rel (%p125) target = $region12
      $region11: #{covae_forward.9} parent=5 // pred_region
        %s129 = ssub.s32 %s16, 1
        // Predicated region
        $region13: #{covae_forward.9} parent=11 // pred_check
          %p130 = pneg %p63
        $region14: #{covae_forward.9} parent=11 // pred_check_branch
          %132 = sbr.rel (%p130) target = $region16
        $region15: #{covae_forward.9} parent=11 // pred_region
          %s134 = ssub.s32 8192, 8192
          %135 = vsyncadd [#allocation6], %s134
          %s136 = sshll.u32 [#allocation5], 4
          %s137 = int_to_ptr.vmem [resolvable:$true] %s136
          %142 = dma.hbm_to_vmem [thread:$0]  %s1, 8192, %s137, [#allocation6], 64, 64, 4
        $region16: #{covae_forward.9} parent=11 // pred_fallthru
          _
      $region12: #{covae_forward.9} parent=5 // pred_fallthru
        _
      %p143 = scmp.lt.s32.totalorder %s16, 2
      // Predicated region
      $region17: #{covae_forward.9} parent=5 // pred_check
        %p144 = pneg %p143
      $region18: #{covae_forward.9} parent=5 // pred_check_branch
        %146 = sbr.rel (%p144) target = $region20
      $region19: #{covae_forward.9} parent=5 // pred_region
        // Predicated region
        $region21: #{covae_forward.9} parent=19 // pred_check
          %p147 = pneg %p36
        $region22: #{covae_forward.9} parent=19 // pred_check_branch
          %149 = sbr.rel (%p147) target = $region24
        $region23: #{covae_forward.9} parent=19 // pred_region
          #allocation10 [shape = 'u32[6]{0}', space=smem, size = 0x18, scoped, tag = 'DMA stride descriptor']
          %s150 = sand.u32 %s16, 1
          %s151 = scalar_lea.sflag [#allocation3], %s150
          %s152 = sand.u32 %s26, 1
          %s153 = smul.addr %s152, 64
          %s154 = scalar_lea.vmem [#allocation2], %s153
          %s155 = smul.u32 2, %s16
          %s157 = ssub.s32 1024, 1024
          %158 = vsyncadd %s151, %s157
          %s159 = smul.addr %s155, 2
          %s160 = smul.addr %s159, 64
          %s161 = scalar_lea.hbm %s0, %s160
          %s163 = sshll.u32 1, 14
          %s164 = sxor.u32 4294967295, %s163
          %s166 = sld [smem:[#allocation0]]
          %s167 = sadd.s32 2, %s166
          %s169 = sshll.u32 7, 26
          %s170 = sxor.u32 4294967295, %s169
          %s171 = sand.u32 0, %s170
          %s172 = sshll.u32 %s167, 26
          %s173 = sor.u32 %s171, %s172
          %s174 = sshll.u32 %s154, 4
          %s175 = int_to_ptr.vmem [resolvable:$true] %s174
          %181 = sst [smem:[#allocation10]] 512
          %s182 = scalar_lea.smem [#allocation10], 1
          %183 = sst [smem:[%s182]] 256
          %s184 = scalar_lea.smem [#allocation10], 2
          %185 = sst [smem:[%s184]] 2
          %s186 = scalar_lea.smem [#allocation10], 3
          %187 = sst [smem:[%s186]] 128
          %s188 = scalar_lea.smem [#allocation10], 4
          %189 = sst [smem:[%s188]] 128
          %s190 = scalar_lea.smem [#allocation10], 5
          %191 = sst [smem:[%s190]] 8
          %193 = dma.general %s161, 1024, %s175, %s151, [#allocation9], [#allocation10], %s173, 0
        $region24: #{covae_forward.9} parent=19 // pred_fallthru
          _
        // Predicated region
        $region25: #{covae_forward.9} parent=19 // pred_check
          %p194 = pneg %p83
        $region26: #{covae_forward.9} parent=19 // pred_check_branch
          %196 = sbr.rel (%p194) target = $region28
        $region27: #{covae_forward.9} parent=19 // pred_region
          %s197 = sand.u32 %s16, 1
          %s198 = scalar_lea.sflag [#allocation3], %s197
          %s199 = sand.u32 %s73, 1
          %s200 = smul.addr %s199, 16
          %s201 = scalar_lea.vmem [#allocation7], %s200
          %s202 = smul.u32 2, %s16
          %s204 = ssub.s32 256, 256
          %205 = vsyncadd %s198, %s204
          %s206 = smul.addr %s202, 128
          %s207 = scalar_lea.hbm %s2, %s206
          %s208 = sshll.u32 %s201, 4
          %s209 = int_to_ptr.vmem [resolvable:$true] %s208
          %214 = dma.hbm_to_vmem [thread:$0]  %s207, 256, %s209, %s198, 128, 128, 8
        $region28: #{covae_forward.9} parent=19 // pred_fallthru
          _
      $region20: #{covae_forward.9} parent=5 // pred_fallthru
        _
      %p215 = scmp.le.s32.totalorder 1, %s16
      %p216 = scmp.lt.s32.totalorder %s16, 3
      %p217 = pnand %p215, %p216
      %p218 = pneg %p217
      // Predicated region
      $region29: #{covae_forward.9} parent=5 // pred_check
        _
      $region30: #{covae_forward.9} parent=5 // pred_check_branch
        %220 = sbr.rel (%p217) target = $region32
      $region31: #{covae_forward.9} parent=5 // pred_region
        %s221 = ssub.s32 %s16, 1
        %s222 = sand.u32 %s21, 1
        %s223 = scalar_lea.sflag [#allocation3], %s222
        %s224 = sand.u32 %s29, 1
        %s225 = smul.addr %s224, 64
        %s226 = scalar_lea.vmem [#allocation2], %s225
        // Predicated region
        $region33: #{covae_forward.9} parent=31 // pred_check
          %p227 = pneg %p42
        $region34: #{covae_forward.9} parent=31 // pred_check_branch
          %229 = sbr.rel (%p227) target = $region36
        $region35: #{covae_forward.9} parent=31 // pred_region
          %230 = dma.done %s223, 1024
        $region36: #{covae_forward.9} parent=31 // pred_fallthru
          _
        // Predicated region
        $region37: #{covae_forward.9} parent=31 // pred_check
          %p231 = pneg %p63
        $region38: #{covae_forward.9} parent=31 // pred_check_branch
          %233 = sbr.rel (%p231) target = $region40
        $region39: #{covae_forward.9} parent=31 // pred_region
          %234 = dma.done [#allocation6], 8192
        $region40: #{covae_forward.9} parent=31 // pred_fallthru
          _
        %s235 = sand.u32 %s21, 1
        %s236 = scalar_lea.sflag [#allocation3], %s235
        %s237 = sand.u32 %s76, 1
        %s238 = smul.addr %s237, 16
        %s239 = scalar_lea.vmem [#allocation7], %s238
        // Predicated region
        $region41: #{covae_forward.9} parent=31 // pred_check
          %p240 = pneg %p89
        $region42: #{covae_forward.9} parent=31 // pred_check_branch
          %242 = sbr.rel (%p240) target = $region44
        $region43: #{covae_forward.9} parent=31 // pred_region
          %243 = dma.done %s236, 256
        $region44: #{covae_forward.9} parent=31 // pred_fallthru
          _
        %s244 = sand.u32 %s21, 1
        %s245 = scalar_lea.sflag [#allocation3], %s244
        %s246 = sand.u32 %s29, 1
        %s247 = smul.addr %s246, 64
        %s248 = scalar_lea.vmem [#allocation2], %s247
        %p249 = pneg %p42
        %p250 = pneg %p39
        %p251 = pneg %p63
        %p252 = pneg %p60
        %s253 = sand.u32 %s21, 1
        %s254 = scalar_lea.sflag [#allocation3], %s253
        %s255 = sand.u32 %s76, 1
        %s256 = smul.addr %s255, 16
        %s257 = scalar_lea.vmem [#allocation7], %s256
        %p258 = pneg %p89
        %p259 = pneg %p86
        %p260 = pneg %p115
        %p261 = pneg %p112
        %s262 = sand.u32 %s102, 1
        %s263 = scalar_lea.sflag [#allocation4], %s262
        %s264 = sand.u32 %s102, 1
        %s265 = smul.addr %s264, 64
        %s266 = scalar_lea.vmem [#allocation8], %s265
        %s267 = smul.u32 2, %s21
        %s268 = smul.u32 2, %s21
        %s269 = smul.u32 2, %s21
        %v271 = vld [vmem:[%s226] sm:$0xff]
        %v272 = vld [vmem:[%s226 + $0x8] sm:$0xff]
        %v273 = vld [vmem:[#allocation5] sm:$0xf]
        %v274 = vld [vmem:[#allocation5 + $0x4] sm:$0xf]
        %v275 = vld [vmem:[#allocation5 + $0x8] sm:$0xf]
        %v276 = vld [vmem:[#allocation5 + $0xc] sm:$0xf]
        %v277 = vld [vmem:[#allocation5 + $0x10] sm:$0xf]
        %v278 = vld [vmem:[#allocation5 + $0x14] sm:$0xf]
        %v279 = vld [vmem:[#allocation5 + $0x18] sm:$0xf]
        %v280 = vld [vmem:[#allocation5 + $0x1c] sm:$0xf]
        %v281 = vld [vmem:[#allocation5 + $0x20] sm:$0xf]
        %v282 = vld [vmem:[#allocation5 + $0x24] sm:$0xf]
        %v283 = vld [vmem:[#allocation5 + $0x28] sm:$0xf]
        %v284 = vld [vmem:[#allocation5 + $0x2c] sm:$0xf]
        %v285 = vld [vmem:[#allocation5 + $0x30] sm:$0xf]
        %v286 = vld [vmem:[#allocation5 + $0x34] sm:$0xf]
        %v287 = vld [vmem:[#allocation5 + $0x38] sm:$0xf]
        %v288 = vld [vmem:[#allocation5 + $0x3c] sm:$0xf]
        %v289 = vld [vmem:[#allocation5 + $0x40] sm:$0xf]
        %v290 = vld [vmem:[#allocation5 + $0x44] sm:$0xf]
        %v291 = vld [vmem:[#allocation5 + $0x48] sm:$0xf]
        %v292 = vld [vmem:[#allocation5 + $0x4c] sm:$0xf]
        %v293 = vld [vmem:[#allocation5 + $0x50] sm:$0xf]
        %v294 = vld [vmem:[#allocation5 + $0x54] sm:$0xf]
        %v295 = vld [vmem:[#allocation5 + $0x58] sm:$0xf]
        %v296 = vld [vmem:[#allocation5 + $0x5c] sm:$0xf]
        %v297 = vld [vmem:[#allocation5 + $0x60] sm:$0xf]
        %v298 = vld [vmem:[#allocation5 + $0x64] sm:$0xf]
        %v299 = vld [vmem:[#allocation5 + $0x68] sm:$0xf]
        %v300 = vld [vmem:[#allocation5 + $0x6c] sm:$0xf]
        %v301 = vld [vmem:[#allocation5 + $0x70] sm:$0xf]
        %v302 = vld [vmem:[#allocation5 + $0x74] sm:$0xf]
        %v303 = vld [vmem:[#allocation5 + $0x78] sm:$0xf]
        %v304 = vld [vmem:[#allocation5 + $0x7c] sm:$0xf]
        %v307 = vunpack.c.l.b16 %v271
        %v308 = vunpack.c.h.b16 %v271
        %v309 = vunpack.c.l.b16 %v272
        %v310 = vunpack.c.h.b16 %v272
        %v311 = vpack.c.b16 %v309, %v307
        %v312 = vpack.c.b16 %v310, %v308
        %v347 = vunpack.c.l.b16 %v273
        %v348 = vunpack.c.l.b16 %v274
        %v349 = vunpack.c.l.b16 %v275
        %v350 = vunpack.c.l.b16 %v276
        %v351 = vunpack.c.l.b16 %v277
        %v352 = vunpack.c.l.b16 %v278
        %v353 = vunpack.c.l.b16 %v279
        %v354 = vunpack.c.l.b16 %v280
        %v355 = vunpack.c.l.b16 %v281
        %v356 = vunpack.c.l.b16 %v282
        %v357 = vunpack.c.l.b16 %v283
        %v358 = vunpack.c.l.b16 %v284
        %v359 = vunpack.c.l.b16 %v285
        %v360 = vunpack.c.l.b16 %v286
        %v361 = vunpack.c.l.b16 %v287
        %v362 = vunpack.c.l.b16 %v288
        %v363 = vunpack.c.l.b16 %v289
        %v364 = vunpack.c.l.b16 %v290
        %v365 = vunpack.c.l.b16 %v291
        %v366 = vunpack.c.l.b16 %v292
        %v367 = vunpack.c.l.b16 %v293
        %v368 = vunpack.c.l.b16 %v294
        %v369 = vunpack.c.l.b16 %v295
        %v370 = vunpack.c.l.b16 %v296
        %v371 = vunpack.c.l.b16 %v297
        %v372 = vunpack.c.l.b16 %v298
        %v373 = vunpack.c.l.b16 %v299
        %v374 = vunpack.c.l.b16 %v300
        %v375 = vunpack.c.l.b16 %v301
        %v376 = vunpack.c.l.b16 %v302
        %v377 = vunpack.c.l.b16 %v303
        %v378 = vunpack.c.l.b16 %v304
        %v379 = vpack.c.b16 %v348, %v347
        %v380 = vpack.c.b16 %v350, %v349
        %v381 = vpack.c.b16 %v352, %v351
        %v382 = vpack.c.b16 %v354, %v353
        %v383 = vpack.c.b16 %v356, %v355
        %v384 = vpack.c.b16 %v358, %v357
        %v385 = vpack.c.b16 %v360, %v359
        %v386 = vpack.c.b16 %v362, %v361
        %v387 = vpack.c.b16 %v364, %v363
        %v388 = vpack.c.b16 %v366, %v365
        %v389 = vpack.c.b16 %v368, %v367
        %v390 = vpack.c.b16 %v370, %v369
        %v391 = vpack.c.b16 %v372, %v371
        %v392 = vpack.c.b16 %v374, %v373
        %v393 = vpack.c.b16 %v376, %v375
        %v394 = vpack.c.b16 %v378, %v377
        %411 = vmatprep.subr.bf16.mxu0 0
        %412 = vmatpush1.bf16.msra.mxu0 %v379
        %413 = vmatprep.subr.bf16.mxu0 0
        %414 = vmatpush1.bf16.msra.mxu0 %v380
        %415 = vmatprep.subr.bf16.mxu0 0
        %416 = vmatpush1.bf16.msra.mxu0 %v381
        %417 = vmatprep.subr.bf16.mxu0 0
        %418 = vmatpush1.bf16.msra.mxu0 %v382
        %419 = vmatprep.subr.bf16.mxu0 0
        %420 = vmatpush1.bf16.msra.mxu0 %v383
        %421 = vmatprep.subr.bf16.mxu0 0
        %422 = vmatpush1.bf16.msra.mxu0 %v384
        %423 = vmatprep.subr.bf16.mxu0 0
        %424 = vmatpush1.bf16.msra.mxu0 %v385
        %425 = vmatprep.subr.bf16.mxu0 0
        %426 = vmatpush1.bf16.msra.mxu0 %v386
        %427 = vmatprep.subr.bf16.mxu0 0
        %428 = vmatpush1.bf16.msra.mxu0 %v387
        %429 = vmatprep.subr.bf16.mxu0 0
        %430 = vmatpush1.bf16.msra.mxu0 %v388
        %431 = vmatprep.subr.bf16.mxu0 0
        %432 = vmatpush1.bf16.msra.mxu0 %v389
        %433 = vmatprep.subr.bf16.mxu0 0
        %434 = vmatpush1.bf16.msra.mxu0 %v390
        %435 = vmatprep.subr.bf16.mxu0 0
        %436 = vmatpush1.bf16.msra.mxu0 %v391
        %437 = vmatprep.subr.bf16.mxu0 0
        %438 = vmatpush1.bf16.msra.mxu0 %v392
        %439 = vmatprep.subr.bf16.mxu0 0
        %440 = vmatpush1.bf16.msra.mxu0 %v393
        %441 = vmatprep.subr.bf16.mxu0 0
        %442 = vmatpush1.bf16.msra.mxu0 %v394
        %443 = vmatprep.mubr.bf16.mxu0 %v312
        %444 = vmatmul.mubr.bf16.gmra.mrb[0].mxu0 %v311
        %v445 = vpop.f32.mrb[0].mxu0
        %v446 = vadd.f32 0.0, %v445
        %v447 = vpop.f32.mrb[0].mxu0
        %v448 = vpop.f32.mrb[0].mxu0
        %v449 = vadd.f32 0.0, %v448
        %v450 = vpop.f32.mrb[0].mxu0
        %451 = vdwg.mxu0
        %vm452 = vcmask 523264
        %453 = vst.msk [vmem:[%s266] sm:$0xff] %vm452, %v446
        %454 = vst.msk [vmem:[%s266 + $0x8] sm:$0xff] %vm452, %v449
        %s455 = scalar_lea.vmem %s226, 16 [#allocation2]
        %v456 = vld [vmem:[%s455] sm:$0xff]
        %v457 = vld [vmem:[%s455 + $0x8] sm:$0xff]
        %s458 = scalar_lea.vmem [#allocation5], 128
        %v459 = vld [vmem:[%s458] sm:$0xf]
        %v460 = vld [vmem:[%s458 + $0x4] sm:$0xf]
        %v461 = vld [vmem:[%s458 + $0x8] sm:$0xf]
        %v462 = vld [vmem:[%s458 + $0xc] sm:$0xf]
        %v463 = vld [vmem:[%s458 + $0x10] sm:$0xf]
        %v464 = vld [vmem:[%s458 + $0x14] sm:$0xf]
        %v465 = vld [vmem:[%s458 + $0x18] sm:$0xf]
        %v466 = vld [vmem:[%s458 + $0x1c] sm:$0xf]
        %v467 = vld [vmem:[%s458 + $0x20] sm:$0xf]
        %v468 = vld [vmem:[%s458 + $0x24] sm:$0xf]
        %v469 = vld [vmem:[%s458 + $0x28] sm:$0xf]
        %v470 = vld [vmem:[%s458 + $0x2c] sm:$0xf]
        %v471 = vld [vmem:[%s458 + $0x30] sm:$0xf]
        %v472 = vld [vmem:[%s458 + $0x34] sm:$0xf]
        %v473 = vld [vmem:[%s458 + $0x38] sm:$0xf]
        %v474 = vld [vmem:[%s458 + $0x3c] sm:$0xf]
        %v475 = vld [vmem:[%s458 + $0x40] sm:$0xf]
        %v476 = vld [vmem:[%s458 + $0x44] sm:$0xf]
        %v477 = vld [vmem:[%s458 + $0x48] sm:$0xf]
        %v478 = vld [vmem:[%s458 + $0x4c] sm:$0xf]
        %v479 = vld [vmem:[%s458 + $0x50] sm:$0xf]
        %v480 = vld [vmem:[%s458 + $0x54] sm:$0xf]
        %v481 = vld [vmem:[%s458 + $0x58] sm:$0xf]
        %v482 = vld [vmem:[%s458 + $0x5c] sm:$0xf]
        %v483 = vld [vmem:[%s458 + $0x60] sm:$0xf]
        %v484 = vld [vmem:[%s458 + $0x64] sm:$0xf]
        %v485 = vld [vmem:[%s458 + $0x68] sm:$0xf]
        %v486 = vld [vmem:[%s458 + $0x6c] sm:$0xf]
        %v487 = vld [vmem:[%s458 + $0x70] sm:$0xf]
        %v488 = vld [vmem:[%s458 + $0x74] sm:$0xf]
        %v489 = vld [vmem:[%s458 + $0x78] sm:$0xf]
        %v490 = vld [vmem:[%s458 + $0x7c] sm:$0xf]
        %v493 = vunpack.c.l.b16 %v456
        %v494 = vunpack.c.h.b16 %v456
        %v495 = vunpack.c.l.b16 %v457
        %v496 = vunpack.c.h.b16 %v457
        %v497 = vpack.c.b16 %v495, %v493
        %v498 = vpack.c.b16 %v496, %v494
        %v533 = vunpack.c.l.b16 %v459
        %v534 = vunpack.c.l.b16 %v460
        %v535 = vunpack.c.l.b16 %v461
        %v536 = vunpack.c.l.b16 %v462
        %v537 = vunpack.c.l.b16 %v463
        %v538 = vunpack.c.l.b16 %v464
        %v539 = vunpack.c.l.b16 %v465
        %v540 = vunpack.c.l.b16 %v466
        %v541 = vunpack.c.l.b16 %v467
        %v542 = vunpack.c.l.b16 %v468
        %v543 = vunpack.c.l.b16 %v469
        %v544 = vunpack.c.l.b16 %v470
        %v545 = vunpack.c.l.b16 %v471
        %v546 = vunpack.c.l.b16 %v472
        %v547 = vunpack.c.l.b16 %v473
        %v548 = vunpack.c.l.b16 %v474
        %v549 = vunpack.c.l.b16 %v475
        %v550 = vunpack.c.l.b16 %v476
        %v551 = vunpack.c.l.b16 %v477
        %v552 = vunpack.c.l.b16 %v478
        %v553 = vunpack.c.l.b16 %v479
        %v554 = vunpack.c.l.b16 %v480
        %v555 = vunpack.c.l.b16 %v481
        %v556 = vunpack.c.l.b16 %v482
        %v557 = vunpack.c.l.b16 %v483
        %v558 = vunpack.c.l.b16 %v484
        %v559 = vunpack.c.l.b16 %v485
        %v560 = vunpack.c.l.b16 %v486
        %v561 = vunpack.c.l.b16 %v487
        %v562 = vunpack.c.l.b16 %v488
        %v563 = vunpack.c.l.b16 %v489
        %v564 = vunpack.c.l.b16 %v490
        %v565 = vpack.c.b16 %v534, %v533
        %v566 = vpack.c.b16 %v536, %v535
        %v567 = vpack.c.b16 %v538, %v537
        %v568 = vpack.c.b16 %v540, %v539
        %v569 = vpack.c.b16 %v542, %v541
        %v570 = vpack.c.b16 %v544, %v543
        %v571 = vpack.c.b16 %v546, %v545
        %v572 = vpack.c.b16 %v548, %v547
        %v573 = vpack.c.b16 %v550, %v549
        %v574 = vpack.c.b16 %v552, %v551
        %v575 = vpack.c.b16 %v554, %v553
        %v576 = vpack.c.b16 %v556, %v555
        %v577 = vpack.c.b16 %v558, %v557
        %v578 = vpack.c.b16 %v560, %v559
        %v579 = vpack.c.b16 %v562, %v561
        %v580 = vpack.c.b16 %v564, %v563
        %597 = vmatprep.subr.bf16.mxu0 0
        %598 = vmatpush1.bf16.msra.mxu0 %v565
        %599 = vmatprep.subr.bf16.mxu0 0
        %600 = vmatpush1.bf16.msra.mxu0 %v566
        %601 = vmatprep.subr.bf16.mxu0 0
        %602 = vmatpush1.bf16.msra.mxu0 %v567
        %603 = vmatprep.subr.bf16.mxu0 0
        %604 = vmatpush1.bf16.msra.mxu0 %v568
        %605 = vmatprep.subr.bf16.mxu0 0
        %606 = vmatpush1.bf16.msra.mxu0 %v569
        %607 = vmatprep.subr.bf16.mxu0 0
        %608 = vmatpush1.bf16.msra.mxu0 %v570
        %609 = vmatprep.subr.bf16.mxu0 0
        %610 = vmatpush1.bf16.msra.mxu0 %v571
        %611 = vmatprep.subr.bf16.mxu0 0
        %612 = vmatpush1.bf16.msra.mxu0 %v572
        %613 = vmatprep.subr.bf16.mxu0 0
        %614 = vmatpush1.bf16.msra.mxu0 %v573
        %615 = vmatprep.subr.bf16.mxu0 0
        %616 = vmatpush1.bf16.msra.mxu0 %v574
        %617 = vmatprep.subr.bf16.mxu0 0
        %618 = vmatpush1.bf16.msra.mxu0 %v575
        %619 = vmatprep.subr.bf16.mxu0 0
        %620 = vmatpush1.bf16.msra.mxu0 %v576
        %621 = vmatprep.subr.bf16.mxu0 0
        %622 = vmatpush1.bf16.msra.mxu0 %v577
        %623 = vmatprep.subr.bf16.mxu0 0
        %624 = vmatpush1.bf16.msra.mxu0 %v578
        %625 = vmatprep.subr.bf16.mxu0 0
        %626 = vmatpush1.bf16.msra.mxu0 %v579
        %627 = vmatprep.subr.bf16.mxu0 0
        %628 = vmatpush1.bf16.msra.mxu0 %v580
        %629 = vmatprep.mubr.bf16.mxu0 %v498
        %630 = vmatmul.mubr.bf16.gmra.mrb[0].mxu0 %v497
        %v631 = vpop.f32.mrb[0].mxu0
        %v632 = vadd.f32 0.0, %v631
        %v633 = vpop.f32.mrb[0].mxu0
        %v634 = vpop.f32.mrb[0].mxu0
        %v635 = vadd.f32 0.0, %v634
        %v636 = vpop.f32.mrb[0].mxu0
        %637 = vdwg.mxu0
        %s638 = scalar_lea.vmem %s266, 16 [#allocation8]
        %639 = vst.msk [vmem:[%s638] sm:$0xff] %vm452, %v632
        %640 = vst.msk [vmem:[%s638 + $0x8] sm:$0xff] %vm452, %v635
        %s641 = scalar_lea.vmem %s226, 32 [#allocation2]
        %v642 = vld [vmem:[%s641] sm:$0xff]
        %v643 = vld [vmem:[%s641 + $0x8] sm:$0xff]
        %s644 = scalar_lea.vmem [#allocation5], 256
        %v645 = vld [vmem:[%s644] sm:$0xf]
        %v646 = vld [vmem:[%s644 + $0x4] sm:$0xf]
        %v647 = vld [vmem:[%s644 + $0x8] sm:$0xf]
        %v648 = vld [vmem:[%s644 + $0xc] sm:$0xf]
        %v649 = vld [vmem:[%s644 + $0x10] sm:$0xf]
        %v650 = vld [vmem:[%s644 + $0x14] sm:$0xf]
        %v651 = vld [vmem:[%s644 + $0x18] sm:$0xf]
        %v652 = vld [vmem:[%s644 + $0x1c] sm:$0xf]
        %v653 = vld [vmem:[%s644 + $0x20] sm:$0xf]
        %v654 = vld [vmem:[%s644 + $0x24] sm:$0xf]
        %v655 = vld [vmem:[%s644 + $0x28] sm:$0xf]
        %v656 = vld [vmem:[%s644 + $0x2c] sm:$0xf]
        %v657 = vld [vmem:[%s644 + $0x30] sm:$0xf]
        %v658 = vld [vmem:[%s644 + $0x34] sm:$0xf]
        %v659 = vld [vmem:[%s644 + $0x38] sm:$0xf]
        %v660 = vld [vmem:[%s644 + $0x3c] sm:$0xf]
        %v661 = vld [vmem:[%s644 + $0x40] sm:$0xf]
        %v662 = vld [vmem:[%s644 + $0x44] sm:$0xf]
        %v663 = vld [vmem:[%s644 + $0x48] sm:$0xf]
        %v664 = vld [vmem:[%s644 + $0x4c] sm:$0xf]
        %v665 = vld [vmem:[%s644 + $0x50] sm:$0xf]
        %v666 = vld [vmem:[%s644 + $0x54] sm:$0xf]
        %v667 = vld [vmem:[%s644 + $0x58] sm:$0xf]
        %v668 = vld [vmem:[%s644 + $0x5c] sm:$0xf]
        %v669 = vld [vmem:[%s644 + $0x60] sm:$0xf]
        %v670 = vld [vmem:[%s644 + $0x64] sm:$0xf]
        %v671 = vld [vmem:[%s644 + $0x68] sm:$0xf]
        %v672 = vld [vmem:[%s644 + $0x6c] sm:$0xf]
        %v673 = vld [vmem:[%s644 + $0x70] sm:$0xf]
        %v674 = vld [vmem:[%s644 + $0x74] sm:$0xf]
        %v675 = vld [vmem:[%s644 + $0x78] sm:$0xf]
        %v676 = vld [vmem:[%s644 + $0x7c] sm:$0xf]
        %v679 = vunpack.c.l.b16 %v642
        %v680 = vunpack.c.h.b16 %v642
        %v681 = vunpack.c.l.b16 %v643
        %v682 = vunpack.c.h.b16 %v643
        %v683 = vpack.c.b16 %v681, %v679
        %v684 = vpack.c.b16 %v682, %v680
        %v719 = vunpack.c.l.b16 %v645
        %v720 = vunpack.c.l.b16 %v646
        %v721 = vunpack.c.l.b16 %v647
        %v722 = vunpack.c.l.b16 %v648
        %v723 = vunpack.c.l.b16 %v649
        %v724 = vunpack.c.l.b16 %v650
        %v725 = vunpack.c.l.b16 %v651
        %v726 = vunpack.c.l.b16 %v652
        %v727 = vunpack.c.l.b16 %v653
        %v728 = vunpack.c.l.b16 %v654
        %v729 = vunpack.c.l.b16 %v655
        %v730 = vunpack.c.l.b16 %v656
        %v731 = vunpack.c.l.b16 %v657
        %v732 = vunpack.c.l.b16 %v658
        %v733 = vunpack.c.l.b16 %v659
        %v734 = vunpack.c.l.b16 %v660
        %v735 = vunpack.c.l.b16 %v661
        %v736 = vunpack.c.l.b16 %v662
        %v737 = vunpack.c.l.b16 %v663
        %v738 = vunpack.c.l.b16 %v664
        %v739 = vunpack.c.l.b16 %v665
        %v740 = vunpack.c.l.b16 %v666
        %v741 = vunpack.c.l.b16 %v667
        %v742 = vunpack.c.l.b16 %v668
        %v743 = vunpack.c.l.b16 %v669
        %v744 = vunpack.c.l.b16 %v670
        %v745 = vunpack.c.l.b16 %v671
        %v746 = vunpack.c.l.b16 %v672
        %v747 = vunpack.c.l.b16 %v673
        %v748 = vunpack.c.l.b16 %v674
        %v749 = vunpack.c.l.b16 %v675
        %v750 = vunpack.c.l.b16 %v676
        %v751 = vpack.c.b16 %v720, %v719
        %v752 = vpack.c.b16 %v722, %v721
        %v753 = vpack.c.b16 %v724, %v723
        %v754 = vpack.c.b16 %v726, %v725
        %v755 = vpack.c.b16 %v728, %v727
        %v756 = vpack.c.b16 %v730, %v729
        %v757 = vpack.c.b16 %v732, %v731
        %v758 = vpack.c.b16 %v734, %v733
        %v759 = vpack.c.b16 %v736, %v735
        %v760 = vpack.c.b16 %v738, %v737
        %v761 = vpack.c.b16 %v740, %v739
        %v762 = vpack.c.b16 %v742, %v741
        %v763 = vpack.c.b16 %v744, %v743
        %v764 = vpack.c.b16 %v746, %v745
        %v765 = vpack.c.b16 %v748, %v747
        %v766 = vpack.c.b16 %v750, %v749
        %783 = vmatprep.subr.bf16.mxu0 0
        %784 = vmatpush1.bf16.msra.mxu0 %v751
        %785 = vmatprep.subr.bf16.mxu0 0
        %786 = vmatpush1.bf16.msra.mxu0 %v752
        %787 = vmatprep.subr.bf16.mxu0 0
        %788 = vmatpush1.bf16.msra.mxu0 %v753
        %789 = vmatprep.subr.bf16.mxu0 0
        %790 = vmatpush1.bf16.msra.mxu0 %v754
        %791 = vmatprep.subr.bf16.mxu0 0
        %792 = vmatpush1.bf16.msra.mxu0 %v755
        %793 = vmatprep.subr.bf16.mxu0 0
        %794 = vmatpush1.bf16.msra.mxu0 %v756
        %795 = vmatprep.subr.bf16.mxu0 0
        %796 = vmatpush1.bf16.msra.mxu0 %v757
        %797 = vmatprep.subr.bf16.mxu0 0
        %798 = vmatpush1.bf16.msra.mxu0 %v758
        %799 = vmatprep.subr.bf16.mxu0 0
        %800 = vmatpush1.bf16.msra.mxu0 %v759
        %801 = vmatprep.subr.bf16.mxu0 0
        %802 = vmatpush1.bf16.msra.mxu0 %v760
        %803 = vmatprep.subr.bf16.mxu0 0
        %804 = vmatpush1.bf16.msra.mxu0 %v761
        %805 = vmatprep.subr.bf16.mxu0 0
        %806 = vmatpush1.bf16.msra.mxu0 %v762
        %807 = vmatprep.subr.bf16.mxu0 0
        %808 = vmatpush1.bf16.msra.mxu0 %v763
        %809 = vmatprep.subr.bf16.mxu0 0
        %810 = vmatpush1.bf16.msra.mxu0 %v764
        %811 = vmatprep.subr.bf16.mxu0 0
        %812 = vmatpush1.bf16.msra.mxu0 %v765
        %813 = vmatprep.subr.bf16.mxu0 0
        %814 = vmatpush1.bf16.msra.mxu0 %v766
        %815 = vmatprep.mubr.bf16.mxu0 %v684
        %816 = vmatmul.mubr.bf16.gmra.mrb[0].mxu0 %v683
        %v817 = vpop.f32.mrb[0].mxu0
        %v818 = vadd.f32 0.0, %v817
        %v819 = vpop.f32.mrb[0].mxu0
        %v820 = vpop.f32.mrb[0].mxu0
        %v821 = vadd.f32 0.0, %v820
        %v822 = vpop.f32.mrb[0].mxu0
        %823 = vdwg.mxu0
        %s824 = scalar_lea.vmem %s266, 32 [#allocation8]
        %825 = vst.msk [vmem:[%s824] sm:$0xff] %vm452, %v818
        %826 = vst.msk [vmem:[%s824 + $0x8] sm:$0xff] %vm452, %v821
        %s827 = scalar_lea.vmem %s226, 48 [#allocation2]
        %v828 = vld [vmem:[%s827] sm:$0xff]
        %v829 = vld [vmem:[%s827 + $0x8] sm:$0xff]
        %s830 = scalar_lea.vmem [#allocation5], 384
        %v831 = vld [vmem:[%s830] sm:$0xf]
        %v832 = vld [vmem:[%s830 + $0x4] sm:$0xf]
        %v833 = vld [vmem:[%s830 + $0x8] sm:$0xf]
        %v834 = vld [vmem:[%s830 + $0xc] sm:$0xf]
        %v835 = vld [vmem:[%s830 + $0x10] sm:$0xf]
        %v836 = vld [vmem:[%s830 + $0x14] sm:$0xf]
        %v837 = vld [vmem:[%s830 + $0x18] sm:$0xf]
        %v838 = vld [vmem:[%s830 + $0x1c] sm:$0xf]
        %v839 = vld [vmem:[%s830 + $0x20] sm:$0xf]
        %v840 = vld [vmem:[%s830 + $0x24] sm:$0xf]
        %v841 = vld [vmem:[%s830 + $0x28] sm:$0xf]
        %v842 = vld [vmem:[%s830 + $0x2c] sm:$0xf]
        %v843 = vld [vmem:[%s830 + $0x30] sm:$0xf]
        %v844 = vld [vmem:[%s830 + $0x34] sm:$0xf]
        %v845 = vld [vmem:[%s830 + $0x38] sm:$0xf]
        %v846 = vld [vmem:[%s830 + $0x3c] sm:$0xf]
        %v847 = vld [vmem:[%s830 + $0x40] sm:$0xf]
        %v848 = vld [vmem:[%s830 + $0x44] sm:$0xf]
        %v849 = vld [vmem:[%s830 + $0x48] sm:$0xf]
        %v850 = vld [vmem:[%s830 + $0x4c] sm:$0xf]
        %v851 = vld [vmem:[%s830 + $0x50] sm:$0xf]
        %v852 = vld [vmem:[%s830 + $0x54] sm:$0xf]
        %v853 = vld [vmem:[%s830 + $0x58] sm:$0xf]
        %v854 = vld [vmem:[%s830 + $0x5c] sm:$0xf]
        %v855 = vld [vmem:[%s830 + $0x60] sm:$0xf]
        %v856 = vld [vmem:[%s830 + $0x64] sm:$0xf]
        %v857 = vld [vmem:[%s830 + $0x68] sm:$0xf]
        %v858 = vld [vmem:[%s830 + $0x6c] sm:$0xf]
        %v859 = vld [vmem:[%s830 + $0x70] sm:$0xf]
        %v860 = vld [vmem:[%s830 + $0x74] sm:$0xf]
        %v861 = vld [vmem:[%s830 + $0x78] sm:$0xf]
        %v862 = vld [vmem:[%s830 + $0x7c] sm:$0xf]
        %v865 = vunpack.c.l.b16 %v828
        %v866 = vunpack.c.h.b16 %v828
        %v867 = vunpack.c.l.b16 %v829
        %v868 = vunpack.c.h.b16 %v829
        %v869 = vpack.c.b16 %v867, %v865
        %v870 = vpack.c.b16 %v868, %v866
        %v905 = vunpack.c.l.b16 %v831
        %v906 = vunpack.c.l.b16 %v832
        %v907 = vunpack.c.l.b16 %v833
        %v908 = vunpack.c.l.b16 %v834
        %v909 = vunpack.c.l.b16 %v835
        %v910 = vunpack.c.l.b16 %v836
        %v911 = vunpack.c.l.b16 %v837
        %v912 = vunpack.c.l.b16 %v838
        %v913 = vunpack.c.l.b16 %v839
        %v914 = vunpack.c.l.b16 %v840
        %v915 = vunpack.c.l.b16 %v841
        %v916 = vunpack.c.l.b16 %v842
        %v917 = vunpack.c.l.b16 %v843
        %v918 = vunpack.c.l.b16 %v844
        %v919 = vunpack.c.l.b16 %v845
        %v920 = vunpack.c.l.b16 %v846
        %v921 = vunpack.c.l.b16 %v847
        %v922 = vunpack.c.l.b16 %v848
        %v923 = vunpack.c.l.b16 %v849
        %v924 = vunpack.c.l.b16 %v850
        %v925 = vunpack.c.l.b16 %v851
        %v926 = vunpack.c.l.b16 %v852
        %v927 = vunpack.c.l.b16 %v853
        %v928 = vunpack.c.l.b16 %v854
        %v929 = vunpack.c.l.b16 %v855
        %v930 = vunpack.c.l.b16 %v856
        %v931 = vunpack.c.l.b16 %v857
        %v932 = vunpack.c.l.b16 %v858
        %v933 = vunpack.c.l.b16 %v859
        %v934 = vunpack.c.l.b16 %v860
        %v935 = vunpack.c.l.b16 %v861
        %v936 = vunpack.c.l.b16 %v862
        %v937 = vpack.c.b16 %v906, %v905
        %v938 = vpack.c.b16 %v908, %v907
        %v939 = vpack.c.b16 %v910, %v909
        %v940 = vpack.c.b16 %v912, %v911
        %v941 = vpack.c.b16 %v914, %v913
        %v942 = vpack.c.b16 %v916, %v915
        %v943 = vpack.c.b16 %v918, %v917
        %v944 = vpack.c.b16 %v920, %v919
        %v945 = vpack.c.b16 %v922, %v921
        %v946 = vpack.c.b16 %v924, %v923
        %v947 = vpack.c.b16 %v926, %v925
        %v948 = vpack.c.b16 %v928, %v927
        %v949 = vpack.c.b16 %v930, %v929
        %v950 = vpack.c.b16 %v932, %v931
        %v951 = vpack.c.b16 %v934, %v933
        %v952 = vpack.c.b16 %v936, %v935
        %969 = vmatprep.subr.bf16.mxu0 0
        %970 = vmatpush1.bf16.msra.mxu0 %v937
        %971 = vmatprep.subr.bf16.mxu0 0
        %972 = vmatpush1.bf16.msra.mxu0 %v938
        %973 = vmatprep.subr.bf16.mxu0 0
        %974 = vmatpush1.bf16.msra.mxu0 %v939
        %975 = vmatprep.subr.bf16.mxu0 0
        %976 = vmatpush1.bf16.msra.mxu0 %v940
        %977 = vmatprep.subr.bf16.mxu0 0
        %978 = vmatpush1.bf16.msra.mxu0 %v941
        %979 = vmatprep.subr.bf16.mxu0 0
        %980 = vmatpush1.bf16.msra.mxu0 %v942
        %981 = vmatprep.subr.bf16.mxu0 0
        %982 = vmatpush1.bf16.msra.mxu0 %v943
        %983 = vmatprep.subr.bf16.mxu0 0
        %984 = vmatpush1.bf16.msra.mxu0 %v944
        %985 = vmatprep.subr.bf16.mxu0 0
        %986 = vmatpush1.bf16.msra.mxu0 %v945
        %987 = vmatprep.subr.bf16.mxu0 0
        %988 = vmatpush1.bf16.msra.mxu0 %v946
        %989 = vmatprep.subr.bf16.mxu0 0
        %990 = vmatpush1.bf16.msra.mxu0 %v947
        %991 = vmatprep.subr.bf16.mxu0 0
        %992 = vmatpush1.bf16.msra.mxu0 %v948
        %993 = vmatprep.subr.bf16.mxu0 0
        %994 = vmatpush1.bf16.msra.mxu0 %v949
        %995 = vmatprep.subr.bf16.mxu0 0
        %996 = vmatpush1.bf16.msra.mxu0 %v950
        %997 = vmatprep.subr.bf16.mxu0 0
        %998 = vmatpush1.bf16.msra.mxu0 %v951
        %999 = vmatprep.subr.bf16.mxu0 0
        %1000 = vmatpush1.bf16.msra.mxu0 %v952
        %1001 = vmatprep.mubr.bf16.mxu0 %v870
        %1002 = vmatmul.mubr.bf16.gmra.mrb[0].mxu0 %v869
        %v1003 = vpop.f32.mrb[0].mxu0
        %v1004 = vadd.f32 0.0, %v1003
        %v1005 = vpop.f32.mrb[0].mxu0
        %v1006 = vpop.f32.mrb[0].mxu0
        %v1007 = vadd.f32 0.0, %v1006
        %v1008 = vpop.f32.mrb[0].mxu0
        %1009 = vdwg.mxu0
        %s1010 = scalar_lea.vmem %s266, 48 [#allocation8]
        %1011 = vst.msk [vmem:[%s1010] sm:$0xff] %vm452, %v1004
        %1012 = vst.msk [vmem:[%s1010 + $0x8] sm:$0xff] %vm452, %v1007
        %v1013 = vld [vmem:[%s266] sm:$0xff]
        %v1014 = vld [vmem:[%s266 + $0x8] sm:$0xff]
        %v1015 = vld [vmem:[%s266 + $0x10] sm:$0xff]
        %v1016 = vld [vmem:[%s266 + $0x18] sm:$0xff]
        %v1017 = vld [vmem:[%s266 + $0x20] sm:$0xff]
        %v1018 = vld [vmem:[%s266 + $0x28] sm:$0xff]
        %v1019 = vld [vmem:[%s266 + $0x30] sm:$0xff]
        %v1020 = vld [vmem:[%s266 + $0x38] sm:$0xff]
        %v1021 = vsel %vm452, %v1013, 0.0
        %1022 = vadd.xlane.f32.xlu0 %v1021
        %v1023 = vpop.xlane.xlu0 %1022
        %v1024 = vsel %vm452, %v1014, 0.0
        %1025 = vadd.xlane.f32.xlu0 %v1024
        %v1026 = vpop.xlane.xlu0 %1025
        %v1027 = vsel %vm452, %v1015, 0.0
        %1028 = vadd.xlane.f32.xlu0 %v1027
        %v1029 = vpop.xlane.xlu0 %1028
        %v1030 = vsel %vm452, %v1016, 0.0
        %1031 = vadd.xlane.f32.xlu0 %v1030
        %v1032 = vpop.xlane.xlu0 %1031
        %v1033 = vsel %vm452, %v1017, 0.0
        %1034 = vadd.xlane.f32.xlu0 %v1033
        %v1035 = vpop.xlane.xlu0 %1034
        %v1036 = vsel %vm452, %v1018, 0.0
        %1037 = vadd.xlane.f32.xlu0 %v1036
        %v1038 = vpop.xlane.xlu0 %1037
        %v1039 = vsel %vm452, %v1019, 0.0
        %1040 = vadd.xlane.f32.xlu0 %v1039
        %v1041 = vpop.xlane.xlu0 %1040
        %v1042 = vsel %vm452, %v1020, 0.0
        %1043 = vadd.xlane.f32.xlu0 %v1042
        %v1044 = vpop.xlane.xlu0 %1043
        %v1045 = vrcp.pop 64.0
        %v1046 = vmul.f32 %v1023, %v1045
        %v1047 = vmul.f32 %v1026, %v1045
        %v1048 = vmul.f32 %v1029, %v1045
        %v1049 = vmul.f32 %v1032, %v1045
        %v1050 = vmul.f32 %v1035, %v1045
        %v1051 = vmul.f32 %v1038, %v1045
        %v1052 = vmul.f32 %v1041, %v1045
        %v1053 = vmul.f32 %v1044, %v1045
        %v1054 = vadd.f32 %v1046, %v1048
        %v1055 = vadd.f32 %v1054, %v1050
        %v1056 = vadd.f32 %v1055, %v1052
        %v1057 = vadd.f32 %v1047, %v1049
        %v1058 = vadd.f32 %v1057, %v1051
        %v1059 = vadd.f32 %v1058, %v1053
        %v1060 = vrcp.pop 4.0
        %v1061 = vmul.f32 %v1056, %v1060
        %v1062 = vmul.f32 %v1059, %v1060
        %v1063 = vmul.f32 %v1013, %v1013
        %v1064 = vmul.f32 %v1014, %v1014
        %v1065 = vmul.f32 %v1015, %v1015
        %v1066 = vmul.f32 %v1016, %v1016
        %v1067 = vmul.f32 %v1017, %v1017
        %v1068 = vmul.f32 %v1018, %v1018
        %v1069 = vmul.f32 %v1019, %v1019
        %v1070 = vmul.f32 %v1020, %v1020
        %v1071 = vsel %vm452, %v1063, 0.0
        %1072 = vadd.xlane.f32.xlu0 %v1071
        %v1073 = vpop.xlane.xlu0 %1072
        %v1074 = vsel %vm452, %v1064, 0.0
        %1075 = vadd.xlane.f32.xlu0 %v1074
        %v1076 = vpop.xlane.xlu0 %1075
        %v1077 = vsel %vm452, %v1065, 0.0
        %1078 = vadd.xlane.f32.xlu0 %v1077
        %v1079 = vpop.xlane.xlu0 %1078
        %v1080 = vsel %vm452, %v1066, 0.0
        %1081 = vadd.xlane.f32.xlu0 %v1080
        %v1082 = vpop.xlane.xlu0 %1081
        %v1083 = vsel %vm452, %v1067, 0.0
        %1084 = vadd.xlane.f32.xlu0 %v1083
        %v1085 = vpop.xlane.xlu0 %1084
        %v1086 = vsel %vm452, %v1068, 0.0
        %1087 = vadd.xlane.f32.xlu0 %v1086
        %v1088 = vpop.xlane.xlu0 %1087
        %v1089 = vsel %vm452, %v1069, 0.0
        %1090 = vadd.xlane.f32.xlu0 %v1089
        %v1091 = vpop.xlane.xlu0 %1090
        %v1092 = vsel %vm452, %v1070, 0.0
        %1093 = vadd.xlane.f32.xlu0 %v1092
        %v1094 = vpop.xlane.xlu0 %1093
        %v1095 = vmul.f32 %v1073, %v1045
        %v1096 = vmul.f32 %v1076, %v1045
        %v1097 = vmul.f32 %v1079, %v1045
        %v1098 = vmul.f32 %v1082, %v1045
        %v1099 = vmul.f32 %v1085, %v1045
        %v1100 = vmul.f32 %v1088, %v1045
        %v1101 = vmul.f32 %v1091, %v1045
        %v1102 = vmul.f32 %v1094, %v1045
        %v1103 = vadd.f32 %v1095, %v1097
        %v1104 = vadd.f32 %v1103, %v1099
        %v1105 = vadd.f32 %v1104, %v1101
        %v1106 = vadd.f32 %v1096, %v1098
        %v1107 = vadd.f32 %v1106, %v1100
        %v1108 = vadd.f32 %v1107, %v1102
        %v1109 = vmul.f32 %v1105, %v1060
        %v1110 = vmul.f32 %v1108, %v1060
        %v1111 = vmul.f32 %v1061, %v1061
        %v1112 = vmul.f32 %v1062, %v1062
        %v1113 = vsub.f32 %v1109, %v1111
        %v1114 = vsub.f32 %v1110, %v1112
        %v1115 = vmax.f32 %v1113, 0.0
        %v1116 = vmax.f32 %v1114, 0.0
        %v1117 = vadd.f32 %v1115, 1e-05
        %v1118 = vadd.f32 %v1116, 1e-05
        %v1119 = vrsqrt.pop %v1117
        %v1120 = vrsqrt.pop %v1118
        %v1121 = vld [vmem:[%s239] sm:$0xff]
        %v1122 = vld [vmem:[%s239 + $0x8] sm:$0xff]
        %v1123 = vmul.f32 %v1013, %v1119
        %v1124 = vmul.f32 %v1014, %v1120
        %v1125 = vmul.f32 %v1015, %v1119
        %v1126 = vmul.f32 %v1016, %v1120
        %v1127 = vmul.f32 %v1017, %v1119
        %v1128 = vmul.f32 %v1018, %v1120
        %v1129 = vmul.f32 %v1019, %v1119
        %v1130 = vmul.f32 %v1020, %v1120
        %v1131 = vmul.f32 %v1061, %v1119
        %v1132 = vmul.f32 %v1062, %v1120
        %v1133 = vsub.f32 %v1121, %v1131
        %v1134 = vsub.f32 %v1122, %v1132
        %1136 = vset.pattern.permute.xlu0 0
        %1137 = vperm.xlu0 %1136, %v1133
        %v1138 = vpop.permute.xlu0 %1137
        %1141 = vset.pattern.permute.xlu0 0
        %1142 = vperm.xlu0 %1141, %v1134
        %v1143 = vpop.permute.xlu0 %1142
        %v1145 = vadd.f32 %v1123, %v1138
        %v1146 = vadd.f32 %v1124, %v1143
        %v1147 = vadd.f32 %v1125, %v1138
        %v1148 = vadd.f32 %v1126, %v1143
        %v1149 = vadd.f32 %v1127, %v1138
        %v1150 = vadd.f32 %v1128, %v1143
        %v1151 = vadd.f32 %v1129, %v1138
        %v1152 = vadd.f32 %v1130, %v1143
        %vm1153 = vcmp.ge.f32.partialorder %v1145, 0.0
        %vm1154 = vcmp.ge.f32.partialorder %v1146, 0.0
        %vm1155 = vcmp.ge.f32.partialorder %v1147, 0.0
        %vm1156 = vcmp.ge.f32.partialorder %v1148, 0.0
        %vm1157 = vcmp.ge.f32.partialorder %v1149, 0.0
        %vm1158 = vcmp.ge.f32.partialorder %v1150, 0.0
        %vm1159 = vcmp.ge.f32.partialorder %v1151, 0.0
        %vm1160 = vcmp.ge.f32.partialorder %v1152, 0.0
        %v1161 = vmul.f32 %v1145, 0.01
        %v1162 = vmul.f32 %v1146, 0.01
        %v1163 = vmul.f32 %v1147, 0.01
        %v1164 = vmul.f32 %v1148, 0.01
        %v1165 = vmul.f32 %v1149, 0.01
        %v1166 = vmul.f32 %v1150, 0.01
        %v1167 = vmul.f32 %v1151, 0.01
        %v1168 = vmul.f32 %v1152, 0.01
        %v1169 = vsel %vm1153, %v1145, %v1161
        %v1170 = vsel %vm1154, %v1146, %v1162
        %v1171 = vsel %vm1155, %v1147, %v1163
        %v1172 = vsel %vm1156, %v1148, %v1164
        %v1173 = vsel %vm1157, %v1149, %v1165
        %v1174 = vsel %vm1158, %v1150, %v1166
        %v1175 = vsel %vm1159, %v1151, %v1167
        %v1176 = vsel %vm1160, %v1152, %v1168
        %1177 = vst.msk [vmem:[%s266] sm:$0xff] %vm452, %v1169
        %1178 = vst.msk [vmem:[%s266 + $0x8] sm:$0xff] %vm452, %v1170
        %1179 = vst.msk [vmem:[%s266 + $0x10] sm:$0xff] %vm452, %v1171
        %1180 = vst.msk [vmem:[%s266 + $0x18] sm:$0xff] %vm452, %v1172
        %1181 = vst.msk [vmem:[%s266 + $0x20] sm:$0xff] %vm452, %v1173
        %1182 = vst.msk [vmem:[%s266 + $0x28] sm:$0xff] %vm452, %v1174
        %1183 = vst.msk [vmem:[%s266 + $0x30] sm:$0xff] %vm452, %v1175
        %1184 = vst.msk [vmem:[%s266 + $0x38] sm:$0xff] %vm452, %v1176
        %s1185 = sand.u32 %s102, 1
        %s1186 = scalar_lea.sflag [#allocation4], %s1185
        %s1187 = sand.u32 %s102, 1
        %s1188 = smul.addr %s1187, 64
        %s1189 = scalar_lea.vmem [#allocation8], %s1188
        // Predicated region
        $region45: #{covae_forward.9} parent=31 // pred_check
          %p1190 = pneg %p112
        $region46: #{covae_forward.9} parent=31 // pred_check_branch
          %1192 = sbr.rel (%p1190) target = $region48
        $region47: #{covae_forward.9} parent=31 // pred_region
          #allocation12 [shape = 'u32[6]{0}', space=smem, size = 0x18, scoped, tag = 'DMA stride descriptor']
          %s1193 = smul.u32 2, %s21
          %s1195 = ssub.s32 1024, 1024
          %1196 = vsyncadd %s1186, %s1195
          %s1197 = smul.addr %s1193, 128
          %s1198 = scalar_lea.hbm %s3, %s1197
          %s1200 = sshll.u32 1, 14
          %s1201 = sxor.u32 4294967295, %s1200
          %s1204 = sshll.u32 7, 18
          %s1205 = sxor.u32 4294967295, %s1204
          %s1206 = sand.u32 0, %s1205
          %s1208 = sor.u32 %s1206, 0
          %s1210 = sshll.u32 3, 24
          %s1211 = sxor.u32 4294967295, %s1210
          %s1212 = sand.u32 %s1208, %s1211
          %s1214 = sor.u32 %s1212, 0
          %s1215 = sshll.u32 %s1189, 4
          %s1216 = int_to_ptr.vmem [resolvable:$true] %s1215
          %1222 = sst [smem:[#allocation12]] 256
          %s1223 = scalar_lea.smem [#allocation12], 1
          %1224 = sst [smem:[%s1223]] 512
          %s1225 = scalar_lea.smem [#allocation12], 2
          %1226 = sst [smem:[%s1225]] 2
          %s1227 = scalar_lea.smem [#allocation12], 3
          %1228 = sst [smem:[%s1227]] 128
          %s1229 = scalar_lea.smem [#allocation12], 4
          %1230 = sst [smem:[%s1229]] 128
          %s1231 = scalar_lea.smem [#allocation12], 5
          %1232 = sst [smem:[%s1231]] 8
          %1234 = dma.general %s1216, 1024, %s1198, %s1186, [#allocation11], [#allocation12], %s1214, 0
        $region48: #{covae_forward.9} parent=31 // pred_fallthru
          _
      $region32: #{covae_forward.9} parent=5 // pred_fallthru
        _
      %p1235 = scmp.le.s32.totalorder 2, %s16
      // Predicated region
      $region49: #{covae_forward.9} parent=5 // pred_check
        %p1236 = pneg %p1235
      $region50: #{covae_forward.9} parent=5 // pred_check_branch
        %1238 = sbr.rel (%p1236) target = $region52
      $region51: #{covae_forward.9} parent=5 // pred_region
        %s1239 = ssub.s32 %s16, 2
        // Predicated region
        $region53: #{covae_forward.9} parent=51 // pred_check
          %p1240 = pneg %p118
        $region54: #{covae_forward.9} parent=51 // pred_check_branch
          %1242 = sbr.rel (%p1240) target = $region56
        $region55: #{covae_forward.9} parent=51 // pred_region
          %s1243 = sand.u32 %s103, 1
          %s1244 = scalar_lea.sflag [#allocation4], %s1243
          %s1245 = sand.u32 %s103, 1
          %s1246 = smul.addr %s1245, 64
          %s1247 = scalar_lea.vmem [#allocation8], %s1246
          %1248 = dma.done %s1244, 1024
        $region56: #{covae_forward.9} parent=51 // pred_fallthru
          _
      $region52: #{covae_forward.9} parent=5 // pred_fallthru
        _
    $region6: #{covae_forward.9} parent=1 // loop_footer
      %s20 = sadd.s32 1, %s16
    $region7: #{covae_forward.9} parent=1 // loop_footer_branch
      %15 = sbr.rel target = $region3
    $region8: #{covae_forward.9} parent=1 // loop_exit
      _
    %1249 = vsyncpa [#allocation3], 1
    %s1250 = scalar_lea.sflag [#allocation3], 1
    %1251 = vsyncpa %s1250, 1
    %1252 = vsyncpa [#allocation6], 1
    %1253 = vsyncpa [#allocation4], 1
    %s1254 = scalar_lea.sflag [#allocation4], 1
    %1255 = vsyncpa %s1254, 1

// kernel: covae_forward.10
$region0: #{covae_forward.10}
  #allocation0 [shape = 'u32[]', space=smem, size = 0x4, offset = 0x4, fixed_abs, tag = 'smem constant byte address 0x4 - core index']
  #allocation1 [shape = 'u32[144,128]{1,0:T(1,128)}', space=vmem, size = 0x12000, scoped, tag = 'internal scratch']
  %s0 = inlined_call_operand.hbm [shape: bf16[4,16,128], index: 0, kind: input, shape index: {}]
  %s1 = inlined_call_operand.hbm [shape: bf16[4,128,256], index: 1, kind: input, shape index: {}]
  %s2 = inlined_call_operand.hbm [shape: f32[16,1], index: 2, kind: input, shape index: {}]
  %s3 = inlined_call_operand.hbm [shape: f32[4,16,256], index: 3, kind: output, shape index: {}]
  %s4 = sld [smem:[#allocation0]]
  $region57: #{covae_forward.10} parent=0
    _
  %s6 = ssub.s32 1, %s4
  %s7 = scalar_select 0, %s6, %s4
  $region1: #{covae_forward.10} parent=0
    #allocation2 [shape = 'u8[16384]{0}', space=vmem, size = 0x4000, scoped, tag = 'input window, operand 0']
    #allocation3 [shape = 's32[2]{0}', space=sflag, size = 0x8, scoped, tag = 'scoped memory for covae_forward.10']
    #allocation4 [shape = 's32[2]{0}', space=sflag, size = 0x8, scoped, tag = 'scoped memory for covae_forward.10']
    #allocation5 [shape = 'u8[262144]{0}', space=vmem, size = 0x40000, scoped, tag = 'input window, operand 1, single buffered']
    #allocation6 [shape = 's32[1]{0}', space=sflag, size = 0x4, scoped, tag = 'scoped memory for covae_forward.10']
    #allocation7 [shape = 'u8[8192]{0}', space=vmem, size = 0x2000, scoped, tag = 'input window, operand 2']
    #allocation8 [shape = 'u8[65536]{0}', space=vmem, size = 0x10000, scoped, tag = 'output window, operand 0']
    %8 = vsyncpa [#allocation3], 0
    %s9 = scalar_lea.sflag [#allocation3], 1
    %10 = vsyncpa %s9, 0
    %11 = vsyncpa [#allocation6], 0
    %12 = vsyncpa [#allocation4], 0
    %s13 = scalar_lea.sflag [#allocation4], 1
    %14 = vsyncpa %s13, 0
    loop: start=0, step=1, limit=4
    $region2: #{covae_forward.10} parent=1 // loop_pre_header
      _
    $region3: #{covae_forward.10} parent=1 // loop_header
      %s16 = sphi 0, %s20
      %p17 = scmp.ge.s32.totalorder %s16, 4
      %s26 = sphi 0, %s28
      %s29 = sphi 0, %s26
      %s30 = sphi 0, %s29
      %s46 = sphi 0, %s30
      %s50 = sphi 0, %s50
      %s52 = sphi 0, %s50
      %s53 = sphi 0, %s52
      %s67 = sphi 0, %s53
      %s73 = sphi 0, %s75
      %s76 = sphi 0, %s73
      %s77 = sphi 0, %s76
      %s93 = sphi 0, %s77
      %s99 = sphi 0, %s101
      %s102 = sphi 0, %s99
      %s103 = sphi 0, %s102
      %s119 = sphi 0, %s103
    $region4: #{covae_forward.10} parent=1 // loop_header_branch
      %19 = sbr.rel (%p17) target = $region8
    $region5: #{covae_forward.10} parent=1 // loop_body
      %s21 = ssub.s32 %s16, 1
      %s22 = ssub.s32 %s16, 2
      %s23 = sadd.s32 %s16, 1
      %s24 = ssub.s32 %s16, %s23
      %p25 = scmp.eq.s32.totalorder %s24, 0
      %s27 = sadd.s32 %s26, 1
      %s28 = scalar_select %p25, %s26, %s27
      %p31 = pneg %p25
      %p32 = scmp.eq.s32.totalorder %s16, 1
      %p33 = por %p31, %p32
      %p34 = scmp.ne.s32.totalorder %s26, %s29
      %p35 = scmp.eq.s32.totalorder %s16, 0
      %p36 = por %p34, %p35
      %p37 = scmp.ne.s32.totalorder %s26, %s29
      %p38 = scmp.eq.s32.totalorder %s21, 1
      %p39 = por %p37, %p38
      %p40 = scmp.ne.s32.totalorder %s29, %s30
      %p41 = scmp.eq.s32.totalorder %s21, 0
      %p42 = por %p40, %p41
      %p43 = scmp.ne.s32.totalorder %s29, %s30
      %p44 = scmp.eq.s32.totalorder %s22, 1
      %p45 = por %p43, %p44
      %p47 = scmp.ne.s32.totalorder %s30, %s46
      %p48 = scmp.eq.s32.totalorder %s22, 0
      %p49 = por %p47, %p48
      %s51 = sadd.s32 %s50, 1
      %p54 = scmp.eq.s32.totalorder %s16, 1
      %p55 = scmp.ne.s32.totalorder %s50, %s52
      %p56 = scmp.eq.s32.totalorder %s16, 0
      %p57 = por %p55, %p56
      %p58 = scmp.ne.s32.totalorder %s50, %s52
      %p59 = scmp.eq.s32.totalorder %s21, 1
      %p60 = por %p58, %p59
      %p61 = scmp.ne.s32.totalorder %s52, %s53
      %p62 = scmp.eq.s32.totalorder %s21, 0
      %p63 = por %p61, %p62
      %p64 = scmp.ne.s32.totalorder %s52, %s53
      %p65 = scmp.eq.s32.totalorder %s22, 1
      %p66 = por %p64, %p65
      %p68 = scmp.ne.s32.totalorder %s53, %s67
      %p69 = scmp.eq.s32.totalorder %s22, 0
      %p70 = por %p68, %p69
      %s71 = ssub.s32 %s16, %s23
      %p72 = scmp.eq.s32.totalorder %s71, 0
      %s74 = sadd.s32 %s73, 1
      %s75 = scalar_select %p72, %s73, %s74
      %p78 = pneg %p72
      %p79 = scmp.eq.s32.totalorder %s16, 1
      %p80 = por %p78, %p79
      %p81 = scmp.ne.s32.totalorder %s73, %s76
      %p82 = scmp.eq.s32.totalorder %s16, 0
      %p83 = por %p81, %p82
      %p84 = scmp.ne.s32.totalorder %s73, %s76
      %p85 = scmp.eq.s32.totalorder %s21, 1
      %p86 = por %p84, %p85
      %p87 = scmp.ne.s32.totalorder %s76, %s77
      %p88 = scmp.eq.s32.totalorder %s21, 0
      %p89 = por %p87, %p88
      %p90 = scmp.ne.s32.totalorder %s76, %s77
      %p91 = scmp.eq.s32.totalorder %s22, 1
      %p92 = por %p90, %p91
      %p94 = scmp.ne.s32.totalorder %s77, %s93
      %p95 = scmp.eq.s32.totalorder %s22, 0
      %p96 = por %p94, %p95
      %s97 = ssub.s32 %s16, %s23
      %p98 = scmp.eq.s32.totalorder %s97, 0
      %s100 = sadd.s32 %s99, 1
      %s101 = scalar_select %p98, %s99, %s100
      %p104 = pneg %p98
      %p105 = scmp.eq.s32.totalorder %s16, 1
      %p106 = por %p104, %p105
      %p107 = scmp.ne.s32.totalorder %s99, %s102
      %p108 = scmp.eq.s32.totalorder %s16, 0
      %p109 = por %p107, %p108
      %p110 = scmp.ne.s32.totalorder %s99, %s102
      %p111 = scmp.eq.s32.totalorder %s21, 1
      %p112 = por %p110, %p111
      %p113 = scmp.ne.s32.totalorder %s102, %s103
      %p114 = scmp.eq.s32.totalorder %s21, 0
      %p115 = por %p113, %p114
      %p116 = scmp.ne.s32.totalorder %s102, %s103
      %p117 = scmp.eq.s32.totalorder %s22, 1
      %p118 = por %p116, %p117
      %p120 = scmp.ne.s32.totalorder %s103, %s119
      %p121 = scmp.eq.s32.totalorder %s22, 0
      %p122 = por %p120, %p121
      %p123 = scmp.le.s32.totalorder 1, %s16
      %p124 = scmp.lt.s32.totalorder %s16, 3
      %p125 = pnand %p123, %p124
      %p126 = pneg %p125
      // Predicated region
      $region9: #{covae_forward.10} parent=5 // pred_check
        _
      $region10: #{covae_forward.10} parent=5 // pred_check_branch
        %128 = sbr.rel (%p125) target = $region12
      $region11: #{covae_forward.10} parent=5 // pred_region
        %s129 = ssub.s32 %s16, 1
        // Predicated region
        $region13: #{covae_forward.10} parent=11 // pred_check
          %p130 = pneg %p63
        $region14: #{covae_forward.10} parent=11 // pred_check_branch
          %132 = sbr.rel (%p130) target = $region16
        $region15: #{covae_forward.10} parent=11 // pred_region
          %s134 = ssub.s32 8192, 8192
          %135 = vsyncadd [#allocation6], %s134
          %s136 = sshll.u32 [#allocation5], 4
          %s137 = int_to_ptr.vmem [resolvable:$true] %s136
          %142 = dma.hbm_to_vmem [thread:$0]  %s1, 8192, %s137, [#allocation6], 128, 128, 8
        $region16: #{covae_forward.10} parent=11 // pred_fallthru
          _
      $region12: #{covae_forward.10} parent=5 // pred_fallthru
        _
      %p143 = scmp.lt.s32.totalorder %s16, 2
      // Predicated region
      $region17: #{covae_forward.10} parent=5 // pred_check
        %p144 = pneg %p143
      $region18: #{covae_forward.10} parent=5 // pred_check_branch
        %146 = sbr.rel (%p144) target = $region20
      $region19: #{covae_forward.10} parent=5 // pred_region
        // Predicated region
        $region21: #{covae_forward.10} parent=19 // pred_check
          %p147 = pneg %p36
        $region22: #{covae_forward.10} parent=19 // pred_check_branch
          %149 = sbr.rel (%p147) target = $region24
        $region23: #{covae_forward.10} parent=19 // pred_region
          %s150 = sand.u32 %s16, 1
          %s151 = scalar_lea.sflag [#allocation3], %s150
          %s152 = sand.u32 %s26, 1
          %s153 = smul.addr %s152, 16
          %s154 = scalar_lea.vmem [#allocation2], %s153
          %s156 = ssub.s32 256, 256
          %157 = vsyncadd %s151, %s156
          %s158 = smul.addr %s16, 64
          %s159 = scalar_lea.hbm %s0, %s158
          %s160 = sshll.u32 %s154, 4
          %s161 = int_to_ptr.vmem [resolvable:$true] %s160
          %166 = dma.hbm_to_vmem [thread:$0]  %s159, 256, %s161, %s151, 128, 64, 4
        $region24: #{covae_forward.10} parent=19 // pred_fallthru
          _
        // Predicated region
        $region25: #{covae_forward.10} parent=19 // pred_check
          %p167 = pneg %p83
        $region26: #{covae_forward.10} parent=19 // pred_check_branch
          %169 = sbr.rel (%p167) target = $region28
        $region27: #{covae_forward.10} parent=19 // pred_region
          %s170 = sand.u32 %s16, 1
          %s171 = scalar_lea.sflag [#allocation3], %s170
          %s172 = sand.u32 %s73, 1
          %s173 = smul.addr %s172, 8
          %s174 = scalar_lea.vmem [#allocation7], %s173
          %s176 = ssub.s32 128, 128
          %177 = vsyncadd %s171, %s176
          %s178 = smul.addr %s16, 128
          %s179 = scalar_lea.hbm %s2, %s178
          %s181 = sshll.u32 %s174, 4
          %s182 = int_to_ptr.vmem [resolvable:$true] %s181
          %184 = dma.hbm_to_vmem [thread:$0]  %s179, 128, %s182, %s171
        $region28: #{covae_forward.10} parent=19 // pred_fallthru
          _
      $region20: #{covae_forward.10} parent=5 // pred_fallthru
        _
      %p185 = scmp.le.s32.totalorder 1, %s16
      %p186 = scmp.lt.s32.totalorder %s16, 3
      %p187 = pnand %p185, %p186
      %p188 = pneg %p187
      // Predicated region
      $region29: #{covae_forward.10} parent=5 // pred_check
        _
      $region30: #{covae_forward.10} parent=5 // pred_check_branch
        %190 = sbr.rel (%p187) target = $region32
      $region31: #{covae_forward.10} parent=5 // pred_region
        %s191 = ssub.s32 %s16, 1
        %s192 = sand.u32 %s21, 1
        %s193 = scalar_lea.sflag [#allocation3], %s192
        %s194 = sand.u32 %s29, 1
        %s195 = smul.addr %s194, 16
        %s196 = scalar_lea.vmem [#allocation2], %s195
        // Predicated region
        $region33: #{covae_forward.10} parent=31 // pred_check
          %p197 = pneg %p42
        $region34: #{covae_forward.10} parent=31 // pred_check_branch
          %199 = sbr.rel (%p197) target = $region36
        $region35: #{covae_forward.10} parent=31 // pred_region
          %200 = dma.done %s193, 256
        $region36: #{covae_forward.10} parent=31 // pred_fallthru
          _
        // Predicated region
        $region37: #{covae_forward.10} parent=31 // pred_check
          %p201 = pneg %p63
        $region38: #{covae_forward.10} parent=31 // pred_check_branch
          %203 = sbr.rel (%p201) target = $region40
        $region39: #{covae_forward.10} parent=31 // pred_region
          %204 = dma.done [#allocation6], 8192
        $region40: #{covae_forward.10} parent=31 // pred_fallthru
          _
        %s205 = sand.u32 %s21, 1
        %s206 = scalar_lea.sflag [#allocation3], %s205
        %s207 = sand.u32 %s76, 1
        %s208 = smul.addr %s207, 8
        %s209 = scalar_lea.vmem [#allocation7], %s208
        // Predicated region
        $region41: #{covae_forward.10} parent=31 // pred_check
          %p210 = pneg %p89
        $region42: #{covae_forward.10} parent=31 // pred_check_branch
          %212 = sbr.rel (%p210) target = $region44
        $region43: #{covae_forward.10} parent=31 // pred_region
          %213 = dma.done %s206, 128
        $region44: #{covae_forward.10} parent=31 // pred_fallthru
          _
        %s214 = sand.u32 %s21, 1
        %s215 = scalar_lea.sflag [#allocation3], %s214
        %s216 = sand.u32 %s29, 1
        %s217 = smul.addr %s216, 16
        %s218 = scalar_lea.vmem [#allocation2], %s217
        %p219 = pneg %p42
        %p220 = pneg %p39
        %p221 = pneg %p63
        %p222 = pneg %p60
        %s223 = sand.u32 %s21, 1
        %s224 = scalar_lea.sflag [#allocation3], %s223
        %s225 = sand.u32 %s76, 1
        %s226 = smul.addr %s225, 8
        %s227 = scalar_lea.vmem [#allocation7], %s226
        %p228 = pneg %p89
        %p229 = pneg %p86
        %p230 = pneg %p115
        %p231 = pneg %p112
        %s232 = sand.u32 %s102, 1
        %s233 = scalar_lea.sflag [#allocation4], %s232
        %s234 = sand.u32 %s102, 1
        %s235 = smul.addr %s234, 64
        %s236 = scalar_lea.vmem [#allocation8], %s235
        %v238 = vld [vmem:[%s196] sm:$0xf]
        %v239 = vld [vmem:[#allocation5] sm:$0xff]
        %v240 = vld [vmem:[#allocation5 + $0x8] sm:$0xff]
        %v241 = vld [vmem:[#allocation5 + $0x10] sm:$0xff]
        %v242 = vld [vmem:[#allocation5 + $0x18] sm:$0xff]
        %v243 = vld [vmem:[#allocation5 + $0x20] sm:$0xff]
        %v244 = vld [vmem:[#allocation5 + $0x28] sm:$0xff]
        %v245 = vld [vmem:[#allocation5 + $0x30] sm:$0xff]
        %v246 = vld [vmem:[#allocation5 + $0x38] sm:$0xff]
        %v247 = vld [vmem:[#allocation5 + $0x40] sm:$0xff]
        %v248 = vld [vmem:[#allocation5 + $0x48] sm:$0xff]
        %v249 = vld [vmem:[#allocation5 + $0x50] sm:$0xff]
        %v250 = vld [vmem:[#allocation5 + $0x58] sm:$0xff]
        %v251 = vld [vmem:[#allocation5 + $0x60] sm:$0xff]
        %v252 = vld [vmem:[#allocation5 + $0x68] sm:$0xff]
        %v253 = vld [vmem:[#allocation5 + $0x70] sm:$0xff]
        %v254 = vld [vmem:[#allocation5 + $0x78] sm:$0xff]
        %v271 = vunpack.c.l.b16 %v239
        %v272 = vunpack.c.h.b16 %v239
        %v273 = vunpack.c.l.b16 %v240
        %v274 = vunpack.c.h.b16 %v240
        %v275 = vunpack.c.l.b16 %v241
        %v276 = vunpack.c.h.b16 %v241
        %v277 = vunpack.c.l.b16 %v242
        %v278 = vunpack.c.h.b16 %v242
        %v279 = vunpack.c.l.b16 %v243
        %v280 = vunpack.c.h.b16 %v243
        %v281 = vunpack.c.l.b16 %v244
        %v282 = vunpack.c.h.b16 %v244
        %v283 = vunpack.c.l.b16 %v245
        %v284 = vunpack.c.h.b16 %v245
        %v285 = vunpack.c.l.b16 %v246
        %v286 = vunpack.c.h.b16 %v246
        %v287 = vunpack.c.l.b16 %v247
        %v288 = vunpack.c.h.b16 %v247
        %v289 = vunpack.c.l.b16 %v248
        %v290 = vunpack.c.h.b16 %v248
        %v291 = vunpack.c.l.b16 %v249
        %v292 = vunpack.c.h.b16 %v249
        %v293 = vunpack.c.l.b16 %v250
        %v294 = vunpack.c.h.b16 %v250
        %v295 = vunpack.c.l.b16 %v251
        %v296 = vunpack.c.h.b16 %v251
        %v297 = vunpack.c.l.b16 %v252
        %v298 = vunpack.c.h.b16 %v252
        %v299 = vunpack.c.l.b16 %v253
        %v300 = vunpack.c.h.b16 %v253
        %v301 = vunpack.c.l.b16 %v254
        %v302 = vunpack.c.h.b16 %v254
        %v303 = vpack.c.b16 %v273, %v271
        %v304 = vpack.c.b16 %v274, %v272
        %v305 = vpack.c.b16 %v277, %v275
        %v306 = vpack.c.b16 %v278, %v276
        %v307 = vpack.c.b16 %v281, %v279
        %v308 = vpack.c.b16 %v282, %v280
        %v309 = vpack.c.b16 %v285, %v283
        %v310 = vpack.c.b16 %v286, %v284
        %v311 = vpack.c.b16 %v289, %v287
        %v312 = vpack.c.b16 %v290, %v288
        %v313 = vpack.c.b16 %v293, %v291
        %v314 = vpack.c.b16 %v294, %v292
        %v315 = vpack.c.b16 %v297, %v295
        %v316 = vpack.c.b16 %v298, %v296
        %v317 = vpack.c.b16 %v301, %v299
        %v318 = vpack.c.b16 %v302, %v300
        %335 = vmatprep.subr.bf16.mxu0 %v304
        %336 = vmatpush1.bf16.msra.mxu0 %v303
        %337 = vmatprep.subr.bf16.mxu0 %v306
        %338 = vmatpush1.bf16.msra.mxu0 %v305
        %339 = vmatprep.subr.bf16.mxu0 %v308
        %340 = vmatpush1.bf16.msra.mxu0 %v307
        %341 = vmatprep.subr.bf16.mxu0 %v310
        %342 = vmatpush1.bf16.msra.mxu0 %v309
        %343 = vmatprep.subr.bf16.mxu0 %v312
        %344 = vmatpush1.bf16.msra.mxu0 %v311
        %345 = vmatprep.subr.bf16.mxu0 %v314
        %346 = vmatpush1.bf16.msra.mxu0 %v313
        %347 = vmatprep.subr.bf16.mxu0 %v316
        %348 = vmatpush1.bf16.msra.mxu0 %v315
        %349 = vmatprep.subr.bf16.mxu0 %v318
        %350 = vmatpush1.bf16.msra.mxu0 %v317
        %351 = vmatprep.subr.bf16.mxu0 0
        %352 = vmatpush1.bf16.msra.mxu0 0
        %353 = vmatprep.subr.bf16.mxu0 0
        %354 = vmatpush1.bf16.msra.mxu0 0
        %355 = vmatprep.subr.bf16.mxu0 0
        %356 = vmatpush1.bf16.msra.mxu0 0
        %357 = vmatprep.subr.bf16.mxu0 0
        %358 = vmatpush1.bf16.msra.mxu0 0
        %359 = vmatprep.subr.bf16.mxu0 0
        %360 = vmatpush1.bf16.msra.mxu0 0
        %361 = vmatprep.subr.bf16.mxu0 0
        %362 = vmatpush1.bf16.msra.mxu0 0
        %363 = vmatprep.subr.bf16.mxu0 0
        %364 = vmatpush1.bf16.msra.mxu0 0
        %365 = vmatprep.subr.bf16.mxu0 0
        %366 = vmatpush1.bf16.msra.mxu0 0
        %367 = vmatprep.mubr.bf16.mxu0 0
        %368 = vmatmul.mubr.bf16.gmra.mrb[0].mxu0 %v238
        %v369 = vpop.f32.mrb[0].mxu0
        %v370 = vadd.f32 0.0, %v369
        %v371 = vpop.f32.mrb[0].mxu0
        %v372 = vadd.f32 0.0, %v371
        %v373 = vpop.f32.mrb[0].mxu0
        %v374 = vpop.f32.mrb[0].mxu0
        %375 = vdwg.mxu0
        %376 = vst [vmem:[%s236] sm:$0xff] %v370
        %377 = vst [vmem:[%s236 + $0x8] sm:$0xff] %v372
        %s378 = scalar_lea.vmem %s196, 4 [#allocation2]
        %v379 = vld [vmem:[%s378] sm:$0xf]
        %s380 = scalar_lea.vmem [#allocation5], 128
        %v381 = vld [vmem:[%s380] sm:$0xff]
        %v382 = vld [vmem:[%s380 + $0x8] sm:$0xff]
        %v383 = vld [vmem:[%s380 + $0x10] sm:$0xff]
        %v384 = vld [vmem:[%s380 + $0x18] sm:$0xff]
        %v385 = vld [vmem:[%s380 + $0x20] sm:$0xff]
        %v386 = vld [vmem:[%s380 + $0x28] sm:$0xff]
        %v387 = vld [vmem:[%s380 + $0x30] sm:$0xff]
        %v388 = vld [vmem:[%s380 + $0x38] sm:$0xff]
        %v389 = vld [vmem:[%s380 + $0x40] sm:$0xff]
        %v390 = vld [vmem:[%s380 + $0x48] sm:$0xff]
        %v391 = vld [vmem:[%s380 + $0x50] sm:$0xff]
        %v392 = vld [vmem:[%s380 + $0x58] sm:$0xff]
        %v393 = vld [vmem:[%s380 + $0x60] sm:$0xff]
        %v394 = vld [vmem:[%s380 + $0x68] sm:$0xff]
        %v395 = vld [vmem:[%s380 + $0x70] sm:$0xff]
        %v396 = vld [vmem:[%s380 + $0x78] sm:$0xff]
        %v413 = vunpack.c.l.b16 %v381
        %v414 = vunpack.c.h.b16 %v381
        %v415 = vunpack.c.l.b16 %v382
        %v416 = vunpack.c.h.b16 %v382
        %v417 = vunpack.c.l.b16 %v383
        %v418 = vunpack.c.h.b16 %v383
        %v419 = vunpack.c.l.b16 %v384
        %v420 = vunpack.c.h.b16 %v384
        %v421 = vunpack.c.l.b16 %v385
        %v422 = vunpack.c.h.b16 %v385
        %v423 = vunpack.c.l.b16 %v386
        %v424 = vunpack.c.h.b16 %v386
        %v425 = vunpack.c.l.b16 %v387
        %v426 = vunpack.c.h.b16 %v387
        %v427 = vunpack.c.l.b16 %v388
        %v428 = vunpack.c.h.b16 %v388
        %v429 = vunpack.c.l.b16 %v389
        %v430 = vunpack.c.h.b16 %v389
        %v431 = vunpack.c.l.b16 %v390
        %v432 = vunpack.c.h.b16 %v390
        %v433 = vunpack.c.l.b16 %v391
        %v434 = vunpack.c.h.b16 %v391
        %v435 = vunpack.c.l.b16 %v392
        %v436 = vunpack.c.h.b16 %v392
        %v437 = vunpack.c.l.b16 %v393
        %v438 = vunpack.c.h.b16 %v393
        %v439 = vunpack.c.l.b16 %v394
        %v440 = vunpack.c.h.b16 %v394
        %v441 = vunpack.c.l.b16 %v395
        %v442 = vunpack.c.h.b16 %v395
        %v443 = vunpack.c.l.b16 %v396
        %v444 = vunpack.c.h.b16 %v396
        %v445 = vpack.c.b16 %v415, %v413
        %v446 = vpack.c.b16 %v416, %v414
        %v447 = vpack.c.b16 %v419, %v417
        %v448 = vpack.c.b16 %v420, %v418
        %v449 = vpack.c.b16 %v423, %v421
        %v450 = vpack.c.b16 %v424, %v422
        %v451 = vpack.c.b16 %v427, %v425
        %v452 = vpack.c.b16 %v428, %v426
        %v453 = vpack.c.b16 %v431, %v429
        %v454 = vpack.c.b16 %v432, %v430
        %v455 = vpack.c.b16 %v435, %v433
        %v456 = vpack.c.b16 %v436, %v434
        %v457 = vpack.c.b16 %v439, %v437
        %v458 = vpack.c.b16 %v440, %v438
        %v459 = vpack.c.b16 %v443, %v441
        %v460 = vpack.c.b16 %v444, %v442
        %477 = vmatprep.subr.bf16.mxu0 %v446
        %478 = vmatpush1.bf16.msra.mxu0 %v445
        %479 = vmatprep.subr.bf16.mxu0 %v448
        %480 = vmatpush1.bf16.msra.mxu0 %v447
        %481 = vmatprep.subr.bf16.mxu0 %v450
        %482 = vmatpush1.bf16.msra.mxu0 %v449
        %483 = vmatprep.subr.bf16.mxu0 %v452
        %484 = vmatpush1.bf16.msra.mxu0 %v451
        %485 = vmatprep.subr.bf16.mxu0 %v454
        %486 = vmatpush1.bf16.msra.mxu0 %v453
        %487 = vmatprep.subr.bf16.mxu0 %v456
        %488 = vmatpush1.bf16.msra.mxu0 %v455
        %489 = vmatprep.subr.bf16.mxu0 %v458
        %490 = vmatpush1.bf16.msra.mxu0 %v457
        %491 = vmatprep.subr.bf16.mxu0 %v460
        %492 = vmatpush1.bf16.msra.mxu0 %v459
        %493 = vmatprep.subr.bf16.mxu0 0
        %494 = vmatpush1.bf16.msra.mxu0 0
        %495 = vmatprep.subr.bf16.mxu0 0
        %496 = vmatpush1.bf16.msra.mxu0 0
        %497 = vmatprep.subr.bf16.mxu0 0
        %498 = vmatpush1.bf16.msra.mxu0 0
        %499 = vmatprep.subr.bf16.mxu0 0
        %500 = vmatpush1.bf16.msra.mxu0 0
        %501 = vmatprep.subr.bf16.mxu0 0
        %502 = vmatpush1.bf16.msra.mxu0 0
        %503 = vmatprep.subr.bf16.mxu0 0
        %504 = vmatpush1.bf16.msra.mxu0 0
        %505 = vmatprep.subr.bf16.mxu0 0
        %506 = vmatpush1.bf16.msra.mxu0 0
        %507 = vmatprep.subr.bf16.mxu0 0
        %508 = vmatpush1.bf16.msra.mxu0 0
        %509 = vmatprep.mubr.bf16.mxu0 0
        %510 = vmatmul.mubr.bf16.gmra.mrb[0].mxu0 %v379
        %v511 = vpop.f32.mrb[0].mxu0
        %v512 = vadd.f32 0.0, %v511
        %v513 = vpop.f32.mrb[0].mxu0
        %v514 = vadd.f32 0.0, %v513
        %v515 = vpop.f32.mrb[0].mxu0
        %v516 = vpop.f32.mrb[0].mxu0
        %517 = vdwg.mxu0
        %s518 = scalar_lea.vmem %s236, 16 [#allocation8]
        %519 = vst [vmem:[%s518] sm:$0xff] %v512
        %520 = vst [vmem:[%s518 + $0x8] sm:$0xff] %v514
        %s521 = scalar_lea.vmem %s196, 8 [#allocation2]
        %v522 = vld [vmem:[%s521] sm:$0xf]
        %s523 = scalar_lea.vmem [#allocation5], 256
        %v524 = vld [vmem:[%s523] sm:$0xff]
        %v525 = vld [vmem:[%s523 + $0x8] sm:$0xff]
        %v526 = vld [vmem:[%s523 + $0x10] sm:$0xff]
        %v527 = vld [vmem:[%s523 + $0x18] sm:$0xff]
        %v528 = vld [vmem:[%s523 + $0x20] sm:$0xff]
        %v529 = vld [vmem:[%s523 + $0x28] sm:$0xff]
        %v530 = vld [vmem:[%s523 + $0x30] sm:$0xff]
        %v531 = vld [vmem:[%s523 + $0x38] sm:$0xff]
        %v532 = vld [vmem:[%s523 + $0x40] sm:$0xff]
        %v533 = vld [vmem:[%s523 + $0x48] sm:$0xff]
        %v534 = vld [vmem:[%s523 + $0x50] sm:$0xff]
        %v535 = vld [vmem:[%s523 + $0x58] sm:$0xff]
        %v536 = vld [vmem:[%s523 + $0x60] sm:$0xff]
        %v537 = vld [vmem:[%s523 + $0x68] sm:$0xff]
        %v538 = vld [vmem:[%s523 + $0x70] sm:$0xff]
        %v539 = vld [vmem:[%s523 + $0x78] sm:$0xff]
        %v556 = vunpack.c.l.b16 %v524
        %v557 = vunpack.c.h.b16 %v524
        %v558 = vunpack.c.l.b16 %v525
        %v559 = vunpack.c.h.b16 %v525
        %v560 = vunpack.c.l.b16 %v526
        %v561 = vunpack.c.h.b16 %v526
        %v562 = vunpack.c.l.b16 %v527
        %v563 = vunpack.c.h.b16 %v527
        %v564 = vunpack.c.l.b16 %v528
        %v565 = vunpack.c.h.b16 %v528
        %v566 = vunpack.c.l.b16 %v529
        %v567 = vunpack.c.h.b16 %v529
        %v568 = vunpack.c.l.b16 %v530
        %v569 = vunpack.c.h.b16 %v530
        %v570 = vunpack.c.l.b16 %v531
        %v571 = vunpack.c.h.b16 %v531
        %v572 = vunpack.c.l.b16 %v532
        %v573 = vunpack.c.h.b16 %v532
        %v574 = vunpack.c.l.b16 %v533
        %v575 = vunpack.c.h.b16 %v533
        %v576 = vunpack.c.l.b16 %v534
        %v577 = vunpack.c.h.b16 %v534
        %v578 = vunpack.c.l.b16 %v535
        %v579 = vunpack.c.h.b16 %v535
        %v580 = vunpack.c.l.b16 %v536
        %v581 = vunpack.c.h.b16 %v536
        %v582 = vunpack.c.l.b16 %v537
        %v583 = vunpack.c.h.b16 %v537
        %v584 = vunpack.c.l.b16 %v538
        %v585 = vunpack.c.h.b16 %v538
        %v586 = vunpack.c.l.b16 %v539
        %v587 = vunpack.c.h.b16 %v539
        %v588 = vpack.c.b16 %v558, %v556
        %v589 = vpack.c.b16 %v559, %v557
        %v590 = vpack.c.b16 %v562, %v560
        %v591 = vpack.c.b16 %v563, %v561
        %v592 = vpack.c.b16 %v566, %v564
        %v593 = vpack.c.b16 %v567, %v565
        %v594 = vpack.c.b16 %v570, %v568
        %v595 = vpack.c.b16 %v571, %v569
        %v596 = vpack.c.b16 %v574, %v572
        %v597 = vpack.c.b16 %v575, %v573
        %v598 = vpack.c.b16 %v578, %v576
        %v599 = vpack.c.b16 %v579, %v577
        %v600 = vpack.c.b16 %v582, %v580
        %v601 = vpack.c.b16 %v583, %v581
        %v602 = vpack.c.b16 %v586, %v584
        %v603 = vpack.c.b16 %v587, %v585
        %620 = vmatprep.subr.bf16.mxu0 %v589
        %621 = vmatpush1.bf16.msra.mxu0 %v588
        %622 = vmatprep.subr.bf16.mxu0 %v591
        %623 = vmatpush1.bf16.msra.mxu0 %v590
        %624 = vmatprep.subr.bf16.mxu0 %v593
        %625 = vmatpush1.bf16.msra.mxu0 %v592
        %626 = vmatprep.subr.bf16.mxu0 %v595
        %627 = vmatpush1.bf16.msra.mxu0 %v594
        %628 = vmatprep.subr.bf16.mxu0 %v597
        %629 = vmatpush1.bf16.msra.mxu0 %v596
        %630 = vmatprep.subr.bf16.mxu0 %v599
        %631 = vmatpush1.bf16.msra.mxu0 %v598
        %632 = vmatprep.subr.bf16.mxu0 %v601
        %633 = vmatpush1.bf16.msra.mxu0 %v600
        %634 = vmatprep.subr.bf16.mxu0 %v603
        %635 = vmatpush1.bf16.msra.mxu0 %v602
        %636 = vmatprep.subr.bf16.mxu0 0
        %637 = vmatpush1.bf16.msra.mxu0 0
        %638 = vmatprep.subr.bf16.mxu0 0
        %639 = vmatpush1.bf16.msra.mxu0 0
        %640 = vmatprep.subr.bf16.mxu0 0
        %641 = vmatpush1.bf16.msra.mxu0 0
        %642 = vmatprep.subr.bf16.mxu0 0
        %643 = vmatpush1.bf16.msra.mxu0 0
        %644 = vmatprep.subr.bf16.mxu0 0
        %645 = vmatpush1.bf16.msra.mxu0 0
        %646 = vmatprep.subr.bf16.mxu0 0
        %647 = vmatpush1.bf16.msra.mxu0 0
        %648 = vmatprep.subr.bf16.mxu0 0
        %649 = vmatpush1.bf16.msra.mxu0 0
        %650 = vmatprep.subr.bf16.mxu0 0
        %651 = vmatpush1.bf16.msra.mxu0 0
        %652 = vmatprep.mubr.bf16.mxu0 0
        %653 = vmatmul.mubr.bf16.gmra.mrb[0].mxu0 %v522
        %v654 = vpop.f32.mrb[0].mxu0
        %v655 = vadd.f32 0.0, %v654
        %v656 = vpop.f32.mrb[0].mxu0
        %v657 = vadd.f32 0.0, %v656
        %v658 = vpop.f32.mrb[0].mxu0
        %v659 = vpop.f32.mrb[0].mxu0
        %660 = vdwg.mxu0
        %s661 = scalar_lea.vmem %s236, 32 [#allocation8]
        %662 = vst [vmem:[%s661] sm:$0xff] %v655
        %663 = vst [vmem:[%s661 + $0x8] sm:$0xff] %v657
        %s664 = scalar_lea.vmem %s196, 12 [#allocation2]
        %v665 = vld [vmem:[%s664] sm:$0xf]
        %s666 = scalar_lea.vmem [#allocation5], 384
        %v667 = vld [vmem:[%s666] sm:$0xff]
        %v668 = vld [vmem:[%s666 + $0x8] sm:$0xff]
        %v669 = vld [vmem:[%s666 + $0x10] sm:$0xff]
        %v670 = vld [vmem:[%s666 + $0x18] sm:$0xff]
        %v671 = vld [vmem:[%s666 + $0x20] sm:$0xff]
        %v672 = vld [vmem:[%s666 + $0x28] sm:$0xff]
        %v673 = vld [vmem:[%s666 + $0x30] sm:$0xff]
        %v674 = vld [vmem:[%s666 + $0x38] sm:$0xff]
        %v675 = vld [vmem:[%s666 + $0x40] sm:$0xff]
        %v676 = vld [vmem:[%s666 + $0x48] sm:$0xff]
        %v677 = vld [vmem:[%s666 + $0x50] sm:$0xff]
        %v678 = vld [vmem:[%s666 + $0x58] sm:$0xff]
        %v679 = vld [vmem:[%s666 + $0x60] sm:$0xff]
        %v680 = vld [vmem:[%s666 + $0x68] sm:$0xff]
        %v681 = vld [vmem:[%s666 + $0x70] sm:$0xff]
        %v682 = vld [vmem:[%s666 + $0x78] sm:$0xff]
        %v699 = vunpack.c.l.b16 %v667
        %v700 = vunpack.c.h.b16 %v667
        %v701 = vunpack.c.l.b16 %v668
        %v702 = vunpack.c.h.b16 %v668
        %v703 = vunpack.c.l.b16 %v669
        %v704 = vunpack.c.h.b16 %v669
        %v705 = vunpack.c.l.b16 %v670
        %v706 = vunpack.c.h.b16 %v670
        %v707 = vunpack.c.l.b16 %v671
        %v708 = vunpack.c.h.b16 %v671
        %v709 = vunpack.c.l.b16 %v672
        %v710 = vunpack.c.h.b16 %v672
        %v711 = vunpack.c.l.b16 %v673
        %v712 = vunpack.c.h.b16 %v673
        %v713 = vunpack.c.l.b16 %v674
        %v714 = vunpack.c.h.b16 %v674
        %v715 = vunpack.c.l.b16 %v675
        %v716 = vunpack.c.h.b16 %v675
        %v717 = vunpack.c.l.b16 %v676
        %v718 = vunpack.c.h.b16 %v676
        %v719 = vunpack.c.l.b16 %v677
        %v720 = vunpack.c.h.b16 %v677
        %v721 = vunpack.c.l.b16 %v678
        %v722 = vunpack.c.h.b16 %v678
        %v723 = vunpack.c.l.b16 %v679
        %v724 = vunpack.c.h.b16 %v679
        %v725 = vunpack.c.l.b16 %v680
        %v726 = vunpack.c.h.b16 %v680
        %v727 = vunpack.c.l.b16 %v681
        %v728 = vunpack.c.h.b16 %v681
        %v729 = vunpack.c.l.b16 %v682
        %v730 = vunpack.c.h.b16 %v682
        %v731 = vpack.c.b16 %v701, %v699
        %v732 = vpack.c.b16 %v702, %v700
        %v733 = vpack.c.b16 %v705, %v703
        %v734 = vpack.c.b16 %v706, %v704
        %v735 = vpack.c.b16 %v709, %v707
        %v736 = vpack.c.b16 %v710, %v708
        %v737 = vpack.c.b16 %v713, %v711
        %v738 = vpack.c.b16 %v714, %v712
        %v739 = vpack.c.b16 %v717, %v715
        %v740 = vpack.c.b16 %v718, %v716
        %v741 = vpack.c.b16 %v721, %v719
        %v742 = vpack.c.b16 %v722, %v720
        %v743 = vpack.c.b16 %v725, %v723
        %v744 = vpack.c.b16 %v726, %v724
        %v745 = vpack.c.b16 %v729, %v727
        %v746 = vpack.c.b16 %v730, %v728
        %763 = vmatprep.subr.bf16.mxu0 %v732
        %764 = vmatpush1.bf16.msra.mxu0 %v731
        %765 = vmatprep.subr.bf16.mxu0 %v734
        %766 = vmatpush1.bf16.msra.mxu0 %v733
        %767 = vmatprep.subr.bf16.mxu0 %v736
        %768 = vmatpush1.bf16.msra.mxu0 %v735
        %769 = vmatprep.subr.bf16.mxu0 %v738
        %770 = vmatpush1.bf16.msra.mxu0 %v737
        %771 = vmatprep.subr.bf16.mxu0 %v740
        %772 = vmatpush1.bf16.msra.mxu0 %v739
        %773 = vmatprep.subr.bf16.mxu0 %v742
        %774 = vmatpush1.bf16.msra.mxu0 %v741
        %775 = vmatprep.subr.bf16.mxu0 %v744
        %776 = vmatpush1.bf16.msra.mxu0 %v743
        %777 = vmatprep.subr.bf16.mxu0 %v746
        %778 = vmatpush1.bf16.msra.mxu0 %v745
        %779 = vmatprep.subr.bf16.mxu0 0
        %780 = vmatpush1.bf16.msra.mxu0 0
        %781 = vmatprep.subr.bf16.mxu0 0
        %782 = vmatpush1.bf16.msra.mxu0 0
        %783 = vmatprep.subr.bf16.mxu0 0
        %784 = vmatpush1.bf16.msra.mxu0 0
        %785 = vmatprep.subr.bf16.mxu0 0
        %786 = vmatpush1.bf16.msra.mxu0 0
        %787 = vmatprep.subr.bf16.mxu0 0
        %788 = vmatpush1.bf16.msra.mxu0 0
        %789 = vmatprep.subr.bf16.mxu0 0
        %790 = vmatpush1.bf16.msra.mxu0 0
        %791 = vmatprep.subr.bf16.mxu0 0
        %792 = vmatpush1.bf16.msra.mxu0 0
        %793 = vmatprep.subr.bf16.mxu0 0
        %794 = vmatpush1.bf16.msra.mxu0 0
        %795 = vmatprep.mubr.bf16.mxu0 0
        %796 = vmatmul.mubr.bf16.gmra.mrb[0].mxu0 %v665
        %v797 = vpop.f32.mrb[0].mxu0
        %v798 = vadd.f32 0.0, %v797
        %v799 = vpop.f32.mrb[0].mxu0
        %v800 = vadd.f32 0.0, %v799
        %v801 = vpop.f32.mrb[0].mxu0
        %v802 = vpop.f32.mrb[0].mxu0
        %803 = vdwg.mxu0
        %s804 = scalar_lea.vmem %s236, 48 [#allocation8]
        %805 = vst [vmem:[%s804] sm:$0xff] %v798
        %806 = vst [vmem:[%s804 + $0x8] sm:$0xff] %v800
        %v807 = vld [vmem:[%s236] sm:$0xff]
        %v808 = vld [vmem:[%s236 + $0x8] sm:$0xff]
        %v809 = vld [vmem:[%s236 + $0x10] sm:$0xff]
        %v810 = vld [vmem:[%s236 + $0x18] sm:$0xff]
        %v811 = vld [vmem:[%s236 + $0x20] sm:$0xff]
        %v812 = vld [vmem:[%s236 + $0x28] sm:$0xff]
        %v813 = vld [vmem:[%s236 + $0x30] sm:$0xff]
        %v814 = vld [vmem:[%s236 + $0x38] sm:$0xff]
        %v815 = vadd.f32 %v807, %v808
        %816 = vadd.xlane.f32.xlu0 %v815
        %v817 = vpop.xlane.xlu0 %816
        %v818 = vadd.f32 %v809, %v810
        %819 = vadd.xlane.f32.xlu0 %v818
        %v820 = vpop.xlane.xlu0 %819
        %v821 = vadd.f32 %v811, %v812
        %822 = vadd.xlane.f32.xlu0 %v821
        %v823 = vpop.xlane.xlu0 %822
        %v824 = vadd.f32 %v813, %v814
        %825 = vadd.xlane.f32.xlu0 %v824
        %v826 = vpop.xlane.xlu0 %825
        %v827 = vrcp.pop 256.0
        %v828 = vmul.f32 %v817, %v827
        %v829 = vmul.f32 %v820, %v827
        %v830 = vmul.f32 %v823, %v827
        %v831 = vmul.f32 %v826, %v827
        %v832 = vadd.f32 %v828, %v829
        %v833 = vadd.f32 %v832, %v830
        %v834 = vadd.f32 %v833, %v831
        %v835 = vrcp.pop 4.0
        %v836 = vmul.f32 %v834, %v835
        %v837 = vmul.f32 %v807, %v807
        %v838 = vmul.f32 %v808, %v808
        %v839 = vmul.f32 %v809, %v809
        %v840 = vmul.f32 %v810, %v810
        %v841 = vmul.f32 %v811, %v811
        %v842 = vmul.f32 %v812, %v812
        %v843 = vmul.f32 %v813, %v813
        %v844 = vmul.f32 %v814, %v814
        %v845 = vadd.f32 %v837, %v838
        %846 = vadd.xlane.f32.xlu0 %v845
        %v847 = vpop.xlane.xlu0 %846
        %v848 = vadd.f32 %v839, %v840
        %849 = vadd.xlane.f32.xlu0 %v848
        %v850 = vpop.xlane.xlu0 %849
        %v851 = vadd.f32 %v841, %v842
        %852 = vadd.xlane.f32.xlu0 %v851
        %v853 = vpop.xlane.xlu0 %852
        %v854 = vadd.f32 %v843, %v844
        %855 = vadd.xlane.f32.xlu0 %v854
        %v856 = vpop.xlane.xlu0 %855
        %v857 = vmul.f32 %v847, %v827
        %v858 = vmul.f32 %v850, %v827
        %v859 = vmul.f32 %v853, %v827
        %v860 = vmul.f32 %v856, %v827
        %v861 = vadd.f32 %v857, %v858
        %v862 = vadd.f32 %v861, %v859
        %v863 = vadd.f32 %v862, %v860
        %v864 = vmul.f32 %v863, %v835
        %v865 = vmul.f32 %v836, %v836
        %v866 = vsub.f32 %v864, %v865
        %v867 = vmax.f32 %v866, 0.0
        %v868 = vadd.f32 %v867, 1e-05
        %v869 = vrsqrt.pop %v868
        %v870 = vld [vmem:[%s209] sm:$0xff]
        %v871 = vmul.f32 %v807, %v869
        %v872 = vmul.f32 %v808, %v869
        %v873 = vmul.f32 %v809, %v869
        %v874 = vmul.f32 %v810, %v869
        %v875 = vmul.f32 %v811, %v869
        %v876 = vmul.f32 %v812, %v869
        %v877 = vmul.f32 %v813, %v869
        %v878 = vmul.f32 %v814, %v869
        %v879 = vmul.f32 %v836, %v869
        %v880 = vsub.f32 %v870, %v879
        %882 = vset.pattern.permute.xlu0 0
        %883 = vperm.xlu0 %882, %v880
        %v884 = vpop.permute.xlu0 %883
        %v886 = vadd.f32 %v871, %v884
        %v887 = vadd.f32 %v872, %v884
        %v888 = vadd.f32 %v873, %v884
        %v889 = vadd.f32 %v874, %v884
        %v890 = vadd.f32 %v875, %v884
        %v891 = vadd.f32 %v876, %v884
        %v892 = vadd.f32 %v877, %v884
        %v893 = vadd.f32 %v878, %v884
        %vm894 = vcmp.ge.f32.partialorder %v886, 0.0
        %vm895 = vcmp.ge.f32.partialorder %v887, 0.0
        %vm896 = vcmp.ge.f32.partialorder %v888, 0.0
        %vm897 = vcmp.ge.f32.partialorder %v889, 0.0
        %vm898 = vcmp.ge.f32.partialorder %v890, 0.0
        %vm899 = vcmp.ge.f32.partialorder %v891, 0.0
        %vm900 = vcmp.ge.f32.partialorder %v892, 0.0
        %vm901 = vcmp.ge.f32.partialorder %v893, 0.0
        %v902 = vmul.f32 %v886, 0.01
        %v903 = vmul.f32 %v887, 0.01
        %v904 = vmul.f32 %v888, 0.01
        %v905 = vmul.f32 %v889, 0.01
        %v906 = vmul.f32 %v890, 0.01
        %v907 = vmul.f32 %v891, 0.01
        %v908 = vmul.f32 %v892, 0.01
        %v909 = vmul.f32 %v893, 0.01
        %v910 = vsel %vm894, %v886, %v902
        %v911 = vsel %vm895, %v887, %v903
        %v912 = vsel %vm896, %v888, %v904
        %v913 = vsel %vm897, %v889, %v905
        %v914 = vsel %vm898, %v890, %v906
        %v915 = vsel %vm899, %v891, %v907
        %v916 = vsel %vm900, %v892, %v908
        %v917 = vsel %vm901, %v893, %v909
        %918 = vst [vmem:[%s236] sm:$0xff] %v910
        %919 = vst [vmem:[%s236 + $0x8] sm:$0xff] %v911
        %920 = vst [vmem:[%s236 + $0x10] sm:$0xff] %v912
        %921 = vst [vmem:[%s236 + $0x18] sm:$0xff] %v913
        %922 = vst [vmem:[%s236 + $0x20] sm:$0xff] %v914
        %923 = vst [vmem:[%s236 + $0x28] sm:$0xff] %v915
        %924 = vst [vmem:[%s236 + $0x30] sm:$0xff] %v916
        %925 = vst [vmem:[%s236 + $0x38] sm:$0xff] %v917
        %s926 = sand.u32 %s102, 1
        %s927 = scalar_lea.sflag [#allocation4], %s926
        %s928 = sand.u32 %s102, 1
        %s929 = smul.addr %s928, 64
        %s930 = scalar_lea.vmem [#allocation8], %s929
        // Predicated region
        $region45: #{covae_forward.10} parent=31 // pred_check
          %p931 = pneg %p112
        $region46: #{covae_forward.10} parent=31 // pred_check_branch
          %933 = sbr.rel (%p931) target = $region48
        $region47: #{covae_forward.10} parent=31 // pred_region
          %s935 = ssub.s32 1024, 1024
          %936 = vsyncadd %s927, %s935
          %s937 = smul.addr %s21, 2
          %s938 = smul.addr %s937, 128
          %s939 = scalar_lea.hbm %s3, %s938
          %s940 = sshll.u32 %s930, 4
          %s941 = int_to_ptr.vmem [resolvable:$true] %s940
          %946 = dma.vmem_to_hbm [thread:$0]  %s941, 1024, %s939, %s927, 256, 512, 16
        $region48: #{covae_forward.10} parent=31 // pred_fallthru
          _
      $region32: #{covae_forward.10} parent=5 // pred_fallthru
        _
      %p947 = scmp.le.s32.totalorder 2, %s16
      // Predicated region
      $region49: #{covae_forward.10} parent=5 // pred_check
        %p948 = pneg %p947
      $region50: #{covae_forward.10} parent=5 // pred_check_branch
        %950 = sbr.rel (%p948) target = $region52
      $region51: #{covae_forward.10} parent=5 // pred_region
        %s951 = ssub.s32 %s16, 2
        // Predicated region
        $region53: #{covae_forward.10} parent=51 // pred_check
          %p952 = pneg %p118
        $region54: #{covae_forward.10} parent=51 // pred_check_branch
          %954 = sbr.rel (%p952) target = $region56
        $region55: #{covae_forward.10} parent=51 // pred_region
          %s955 = sand.u32 %s103, 1
          %s956 = scalar_lea.sflag [#allocation4], %s955
          %s957 = sand.u32 %s103, 1
          %s958 = smul.addr %s957, 64
          %s959 = scalar_lea.vmem [#allocation8], %s958
          %960 = dma.done %s956, 1024
        $region56: #{covae_forward.10} parent=51 // pred_fallthru
          _
      $region52: #{covae_forward.10} parent=5 // pred_fallthru
        _
    $region6: #{covae_forward.10} parent=1 // loop_footer
      %s20 = sadd.s32 1, %s16
    $region7: #{covae_forward.10} parent=1 // loop_footer_branch
      %15 = sbr.rel target = $region3
    $region8: #{covae_forward.10} parent=1 // loop_exit
      _
    %961 = vsyncpa [#allocation3], 1
    %s962 = scalar_lea.sflag [#allocation3], 1
    %963 = vsyncpa %s962, 1
    %964 = vsyncpa [#allocation6], 1
    %965 = vsyncpa [#allocation4], 1
    %s966 = scalar_lea.sflag [#allocation4], 1
    %967 = vsyncpa %s966, 1

// kernel: covae_forward.11
$region0: #{covae_forward.11}
  #allocation0 [shape = 'u32[]', space=smem, size = 0x4, offset = 0x4, fixed_abs, tag = 'smem constant byte address 0x4 - core index']
  #allocation1 [shape = 'u32[144,128]{1,0:T(1,128)}', space=vmem, size = 0x12000, scoped, tag = 'internal scratch']
  #allocation2 [shape = 'f32[4,16,1024]{2,1,0:T(8,128)}', space=vmem, size = 0x40000, scoped, tag = 'scratch operand']
  %s0 = inlined_call_operand.hbm [shape: bf16[4,16,64], index: 0, kind: input, shape index: {}]
  %s1 = inlined_call_operand.hbm [shape: bf16[4,64,1024], index: 1, kind: input, shape index: {}]
  %s2 = inlined_call_operand.hbm [shape: f32[16,1], index: 2, kind: input, shape index: {}]
  %s3 = inlined_call_operand.hbm [shape: bf16[4,16], index: 3, kind: input, shape index: {}]
  %s4 = inlined_call_operand.hbm [shape: f32[4,1], index: 4, kind: input, shape index: {}]
  %s5 = inlined_call_operand.hbm [shape: f32[4,4,1024], index: 5, kind: output, shape index: {}]
  %s6 = sld [smem:[#allocation0]]
  $region50: #{covae_forward.11} parent=0
    _
  %s8 = ssub.s32 1, %s6
  %s9 = scalar_select 0, %s8, %s6
  $region1: #{covae_forward.11} parent=0
    #allocation3 [shape = 'u8[16384]{0}', space=vmem, size = 0x4000, scoped, tag = 'input window, operand 0, single buffered']
    #allocation4 [shape = 's32[1]{0}', space=sflag, size = 0x4, scoped, tag = 'scoped memory for covae_forward.11']
    #allocation5 [shape = 's32[1]{0}', space=sflag, size = 0x4, scoped, tag = 'scoped memory for covae_forward.11']
    #allocation6 [shape = 'u8[524288]{0}', space=vmem, size = 0x80000, scoped, tag = 'input window, operand 1, single buffered']
    #allocation7 [shape = 's32[1]{0}', space=sflag, size = 0x4, scoped, tag = 'scoped memory for covae_forward.11']
    #allocation8 [shape = 'u8[8192]{0}', space=vmem, size = 0x2000, scoped, tag = 'input window, operand 2, single buffered']
    #allocation9 [shape = 'u8[1024]{0}', space=vmem, size = 0x400, scoped, tag = 'input window, operand 3, single buffered']
    #allocation10 [shape = 's32[1]{0}', space=sflag, size = 0x4, scoped, tag = 'scoped memory for covae_forward.11']
    #allocation11 [shape = 'u8[2048]{0}', space=vmem, size = 0x800, scoped, tag = 'input window, operand 4, single buffered']
    #allocation12 [shape = 'u8[65536]{0}', space=vmem, size = 0x10000, scoped, tag = 'output window, operand 0, single buffered']
    %10 = vsyncpa [#allocation4], 0
    %11 = vsyncpa [#allocation7], 0
    %12 = vsyncpa [#allocation10], 0
    %13 = vsyncpa [#allocation5], 0
    // Predicated region
    $region2: #{covae_forward.11} parent=1 // pred_check
      _
    $region3: #{covae_forward.11} parent=1 // pred_check_branch
      %15 = sbr.rel (0) target = $region5
    $region4: #{covae_forward.11} parent=1 // pred_region
      %s17 = ssub.s32 512, 512
      %18 = vsyncadd [#allocation4], %s17
      %s19 = sshll.u32 [#allocation3], 4
      %s20 = int_to_ptr.vmem [resolvable:$true] %s19
      %25 = dma.hbm_to_vmem [thread:$0]  %s0, 512, %s20, [#allocation4], 64, 64, 4
    $region5: #{covae_forward.11} parent=1 // pred_fallthru
      _
    // Predicated region
    $region6: #{covae_forward.11} parent=1 // pred_check
      _
    $region7: #{covae_forward.11} parent=1 // pred_check_branch
      %27 = sbr.rel (0) target = $region9
    $region8: #{covae_forward.11} parent=1 // pred_region
      %s29 = ssub.s32 16384, 16384
      %30 = vsyncadd [#allocation7], %s29
      %s31 = sshll.u32 [#allocation6], 4
      %s32 = int_to_ptr.vmem [resolvable:$true] %s31
      %37 = dma.hbm_to_vmem [thread:$0]  %s1, 16384, %s32, [#allocation7], 512, 512, 32
    $region9: #{covae_forward.11} parent=1 // pred_fallthru
      _
    // Predicated region
    $region10: #{covae_forward.11} parent=1 // pred_check
      _
    $region11: #{covae_forward.11} parent=1 // pred_check_branch
      %39 = sbr.rel (0) target = $region13
    $region12: #{covae_forward.11} parent=1 // pred_region
      %s41 = ssub.s32 256, 256
      %42 = vsyncadd [#allocation7], %s41
      %s43 = sshll.u32 [#allocation8], 4
      %s44 = int_to_ptr.vmem [resolvable:$true] %s43
      %49 = dma.hbm_to_vmem [thread:$0]  %s2, 256, %s44, [#allocation7], 128, 128, 8
    $region13: #{covae_forward.11} parent=1 // pred_fallthru
      _
    // Predicated region
    $region14: #{covae_forward.11} parent=1 // pred_check
      _
    $region15: #{covae_forward.11} parent=1 // pred_check_branch
      %51 = sbr.rel (0) target = $region17
    $region16: #{covae_forward.11} parent=1 // pred_region
      %s53 = ssub.s32 32, 32
      %54 = vsyncadd [#allocation10], %s53
      %s56 = sshll.u32 [#allocation9], 4
      %s57 = int_to_ptr.vmem [resolvable:$true] %s56
      %59 = dma.hbm_to_vmem [thread:$0]  %s3, 32, %s57, [#allocation10]
    $region17: #{covae_forward.11} parent=1 // pred_fallthru
      _
    // Predicated region
    $region18: #{covae_forward.11} parent=1 // pred_check
      _
    $region19: #{covae_forward.11} parent=1 // pred_check_branch
      %61 = sbr.rel (0) target = $region21
    $region20: #{covae_forward.11} parent=1 // pred_region
      %s63 = ssub.s32 64, 64
      %64 = vsyncadd [#allocation10], %s63
      %s66 = sshll.u32 [#allocation11], 4
      %s67 = int_to_ptr.vmem [resolvable:$true] %s66
      %69 = dma.hbm_to_vmem [thread:$0]  %s4, 64, %s67, [#allocation10]
    $region21: #{covae_forward.11} parent=1 // pred_fallthru
      _
    // Predicated region
    $region22: #{covae_forward.11} parent=1 // pred_check
      _
    $region23: #{covae_forward.11} parent=1 // pred_check_branch
      %71 = sbr.rel (0) target = $region25
    $region24: #{covae_forward.11} parent=1 // pred_region
      %72 = dma.done [#allocation4], 512
    $region25: #{covae_forward.11} parent=1 // pred_fallthru
      _
    // Predicated region
    $region26: #{covae_forward.11} parent=1 // pred_check
      _
    $region27: #{covae_forward.11} parent=1 // pred_check_branch
      %74 = sbr.rel (0) target = $region29
    $region28: #{covae_forward.11} parent=1 // pred_region
      %75 = dma.done [#allocation7], 16384
    $region29: #{covae_forward.11} parent=1 // pred_fallthru
      _
    // Predicated region
    $region30: #{covae_forward.11} parent=1 // pred_check
      _
    $region31: #{covae_forward.11} parent=1 // pred_check_branch
      %77 = sbr.rel (0) target = $region33
    $region32: #{covae_forward.11} parent=1 // pred_region
      %78 = dma.done [#allocation7], 256
    $region33: #{covae_forward.11} parent=1 // pred_fallthru
      _
    // Predicated region
    $region34: #{covae_forward.11} parent=1 // pred_check
      _
    $region35: #{covae_forward.11} parent=1 // pred_check_branch
      %80 = sbr.rel (0) target = $region37
    $region36: #{covae_forward.11} parent=1 // pred_region
      %81 = dma.done [#allocation10], 32
    $region37: #{covae_forward.11} parent=1 // pred_fallthru
      _
    // Predicated region
    $region38: #{covae_forward.11} parent=1 // pred_check
      _
    $region39: #{covae_forward.11} parent=1 // pred_check_branch
      %83 = sbr.rel (0) target = $region41
    $region40: #{covae_forward.11} parent=1 // pred_region
      %84 = dma.done [#allocation10], 64
    $region41: #{covae_forward.11} parent=1 // pred_fallthru
      _
    %v86 = vld [vmem:[#allocation3] sm:$0xf]
    %v87 = vld [vmem:[#allocation3 + $0x4] sm:$0xf]
    %v88 = vld [vmem:[#allocation6] sm:$0xff]
    %v89 = vld [vmem:[#allocation6 + $0x8] sm:$0xff]
    %v90 = vld [vmem:[#allocation6 + $0x10] sm:$0xff]
    %v91 = vld [vmem:[#allocation6 + $0x18] sm:$0xff]
    %v92 = vld [vmem:[#allocation6 + $0x20] sm:$0xff]
    %v93 = vld [vmem:[#allocation6 + $0x28] sm:$0xff]
    %v94 = vld [vmem:[#allocation6 + $0x30] sm:$0xff]
    %v95 = vld [vmem:[#allocation6 + $0x38] sm:$0xff]
    %v96 = vld [vmem:[#allocation6 + $0x40] sm:$0xff]
    %v97 = vld [vmem:[#allocation6 + $0x48] sm:$0xff]
    %v98 = vld [vmem:[#allocation6 + $0x50] sm:$0xff]
    %v99 = vld [vmem:[#allocation6 + $0x58] sm:$0xff]
    %v100 = vld [vmem:[#allocation6 + $0x60] sm:$0xff]
    %v101 = vld [vmem:[#allocation6 + $0x68] sm:$0xff]
    %v102 = vld [vmem:[#allocation6 + $0x70] sm:$0xff]
    %v103 = vld [vmem:[#allocation6 + $0x78] sm:$0xff]
    %v104 = vld [vmem:[#allocation6 + $0x80] sm:$0xff]
    %v105 = vld [vmem:[#allocation6 + $0x88] sm:$0xff]
    %v106 = vld [vmem:[#allocation6 + $0x90] sm:$0xff]
    %v107 = vld [vmem:[#allocation6 + $0x98] sm:$0xff]
    %v108 = vld [vmem:[#allocation6 + $0xa0] sm:$0xff]
    %v109 = vld [vmem:[#allocation6 + $0xa8] sm:$0xff]
    %v110 = vld [vmem:[#allocation6 + $0xb0] sm:$0xff]
    %v111 = vld [vmem:[#allocation6 + $0xb8] sm:$0xff]
    %v112 = vld [vmem:[#allocation6 + $0xc0] sm:$0xff]
    %v113 = vld [vmem:[#allocation6 + $0xc8] sm:$0xff]
    %v114 = vld [vmem:[#allocation6 + $0xd0] sm:$0xff]
    %v115 = vld [vmem:[#allocation6 + $0xd8] sm:$0xff]
    %v116 = vld [vmem:[#allocation6 + $0xe0] sm:$0xff]
    %v117 = vld [vmem:[#allocation6 + $0xe8] sm:$0xff]
    %v118 = vld [vmem:[#allocation6 + $0xf0] sm:$0xff]
    %v119 = vld [vmem:[#allocation6 + $0xf8] sm:$0xff]
    %v122 = vunpack.c.l.b16 %v86
    %v123 = vunpack.c.l.b16 %v87
    %v124 = vpack.c.b16 %v123, %v122
    %v157 = vunpack.c.l.b16 %v88
    %v158 = vunpack.c.h.b16 %v88
    %v159 = vunpack.c.l.b16 %v89
    %v160 = vunpack.c.h.b16 %v89
    %v161 = vunpack.c.l.b16 %v90
    %v162 = vunpack.c.h.b16 %v90
    %v163 = vunpack.c.l.b16 %v91
    %v164 = vunpack.c.h.b16 %v91
    %v165 = vunpack.c.l.b16 %v92
    %v166 = vunpack.c.h.b16 %v92
    %v167 = vunpack.c.l.b16 %v93
    %v168 = vunpack.c.h.b16 %v93
    %v169 = vunpack.c.l.b16 %v94
    %v170 = vunpack.c.h.b16 %v94
    %v171 = vunpack.c.l.b16 %v95
    %v172 = vunpack.c.h.b16 %v95
    %v173 = vunpack.c.l.b16 %v96
    %v174 = vunpack.c.h.b16 %v96
    %v175 = vunpack.c.l.b16 %v97
    %v176 = vunpack.c.h.b16 %v97
    %v177 = vunpack.c.l.b16 %v98
    %v178 = vunpack.c.h.b16 %v98
    %v179 = vunpack.c.l.b16 %v99
    %v180 = vunpack.c.h.b16 %v99
    %v181 = vunpack.c.l.b16 %v100
    %v182 = vunpack.c.h.b16 %v100
    %v183 = vunpack.c.l.b16 %v101
    %v184 = vunpack.c.h.b16 %v101
    %v185 = vunpack.c.l.b16 %v102
    %v186 = vunpack.c.h.b16 %v102
    %v187 = vunpack.c.l.b16 %v103
    %v188 = vunpack.c.h.b16 %v103
    %v189 = vunpack.c.l.b16 %v104
    %v190 = vunpack.c.h.b16 %v104
    %v191 = vunpack.c.l.b16 %v105
    %v192 = vunpack.c.h.b16 %v105
    %v193 = vunpack.c.l.b16 %v106
    %v194 = vunpack.c.h.b16 %v106
    %v195 = vunpack.c.l.b16 %v107
    %v196 = vunpack.c.h.b16 %v107
    %v197 = vunpack.c.l.b16 %v108
    %v198 = vunpack.c.h.b16 %v108
    %v199 = vunpack.c.l.b16 %v109
    %v200 = vunpack.c.h.b16 %v109
    %v201 = vunpack.c.l.b16 %v110
    %v202 = vunpack.c.h.b16 %v110
    %v203 = vunpack.c.l.b16 %v111
    %v204 = vunpack.c.h.b16 %v111
    %v205 = vunpack.c.l.b16 %v112
    %v206 = vunpack.c.h.b16 %v112
    %v207 = vunpack.c.l.b16 %v113
    %v208 = vunpack.c.h.b16 %v113
    %v209 = vunpack.c.l.b16 %v114
    %v210 = vunpack.c.h.b16 %v114
    %v211 = vunpack.c.l.b16 %v115
    %v212 = vunpack.c.h.b16 %v115
    %v213 = vunpack.c.l.b16 %v116
    %v214 = vunpack.c.h.b16 %v116
    %v215 = vunpack.c.l.b16 %v117
    %v216 = vunpack.c.h.b16 %v117
    %v217 = vunpack.c.l.b16 %v118
    %v218 = vunpack.c.h.b16 %v118
    %v219 = vunpack.c.l.b16 %v119
    %v220 = vunpack.c.h.b16 %v119
    %v221 = vpack.c.b16 %v165, %v157
    %v222 = vpack.c.b16 %v166, %v158
    %v223 = vpack.c.b16 %v167, %v159
    %v224 = vpack.c.b16 %v168, %v160
    %v225 = vpack.c.b16 %v169, %v161
    %v226 = vpack.c.b16 %v170, %v162
    %v227 = vpack.c.b16 %v171, %v163
    %v228 = vpack.c.b16 %v172, %v164
    %v229 = vpack.c.b16 %v181, %v173
    %v230 = vpack.c.b16 %v182, %v174
    %v231 = vpack.c.b16 %v183, %v175
    %v232 = vpack.c.b16 %v184, %v176
    %v233 = vpack.c.b16 %v185, %v177
    %v234 = vpack.c.b16 %v186, %v178
    %v235 = vpack.c.b16 %v187, %v179
    %v236 = vpack.c.b16 %v188, %v180
    %v237 = vpack.c.b16 %v197, %v189
    %v238 = vpack.c.b16 %v198, %v190
    %v239 = vpack.c.b16 %v199, %v191
    %v240 = vpack.c.b16 %v200, %v192
    %v241 = vpack.c.b16 %v201, %v193
    %v242 = vpack.c.b16 %v202, %v194
    %v243 = vpack.c.b16 %v203, %v195
    %v244 = vpack.c.b16 %v204, %v196
    %v245 = vpack.c.b16 %v213, %v205
    %v246 = vpack.c.b16 %v214, %v206
    %v247 = vpack.c.b16 %v215, %v207
    %v248 = vpack.c.b16 %v216, %v208
    %v249 = vpack.c.b16 %v217, %v209
    %v250 = vpack.c.b16 %v218, %v210
    %v251 = vpack.c.b16 %v219, %v211
    %v252 = vpack.c.b16 %v220, %v212
    %vm285 = vcmask 523264
    %v287 = vsel %vm285, %v124, 0
    %289 = vmatprep.subr.bf16.mxu0 %v222
    %290 = vmatpush1.bf16.msra.mxu0 %v221
    %291 = vmatprep.subr.bf16.mxu0 %v230
    %292 = vmatpush1.bf16.msra.mxu0 %v229
    %293 = vmatprep.subr.bf16.mxu0 %v238
    %294 = vmatpush1.bf16.msra.mxu0 %v237
    %295 = vmatprep.subr.bf16.mxu0 %v246
    %296 = vmatpush1.bf16.msra.mxu0 %v245
    %297 = vmatprep.subr.bf16.mxu0 0
    %298 = vmatpush1.bf16.msra.mxu0 0
    %299 = vmatprep.subr.bf16.mxu0 0
    %300 = vmatpush1.bf16.msra.mxu0 0
    %301 = vmatprep.subr.bf16.mxu0 0
    %302 = vmatpush1.bf16.msra.mxu0 0
    %303 = vmatprep.subr.bf16.mxu0 0
    %304 = vmatpush1.bf16.msra.mxu0 0
    %305 = vmatprep.subr.bf16.mxu0 0
    %306 = vmatpush1.bf16.msra.mxu0 0
    %307 = vmatprep.subr.bf16.mxu0 0
    %308 = vmatpush1.bf16.msra.mxu0 0
    %309 = vmatprep.subr.bf16.mxu0 0
    %310 = vmatpush1.bf16.msra.mxu0 0
    %311 = vmatprep.subr.bf16.mxu0 0
    %312 = vmatpush1.bf16.msra.mxu0 0
    %313 = vmatprep.subr.bf16.mxu0 0
    %314 = vmatpush1.bf16.msra.mxu0 0
    %315 = vmatprep.subr.bf16.mxu0 0
    %316 = vmatpush1.bf16.msra.mxu0 0
    %317 = vmatprep.subr.bf16.mxu0 0
    %318 = vmatpush1.bf16.msra.mxu0 0
    %319 = vmatprep.subr.bf16.mxu0 0
    %320 = vmatpush1.bf16.msra.mxu0 0
    %321 = vmatprep.mubr.bf16.mxu0 0
    %322 = vmatmul.mubr.bf16.gmra.mrb[0].mxu0 %v287
    %v323 = vpop.f32.mrb[0].mxu0
    %v324 = vadd.f32 0.0, %v323
    %v325 = vpop.f32.mrb[0].mxu0
    %v326 = vadd.f32 0.0, %v325
    %v327 = vpop.f32.mrb[0].mxu0
    %v328 = vadd.f32 0.0, %v327
    %v329 = vpop.f32.mrb[0].mxu0
    %v330 = vadd.f32 0.0, %v329
    %331 = vdwg.mxu0
    %332 = vmatprep.subr.bf16.mxu0 %v224
    %333 = vmatpush1.bf16.msra.mxu0 %v223
    %334 = vmatprep.subr.bf16.mxu0 %v232
    %335 = vmatpush1.bf16.msra.mxu0 %v231
    %336 = vmatprep.subr.bf16.mxu0 %v240
    %337 = vmatpush1.bf16.msra.mxu0 %v239
    %338 = vmatprep.subr.bf16.mxu0 %v248
    %339 = vmatpush1.bf16.msra.mxu0 %v247
    %340 = vmatprep.subr.bf16.mxu0 0
    %341 = vmatpush1.bf16.msra.mxu0 0
    %342 = vmatprep.subr.bf16.mxu0 0
    %343 = vmatpush1.bf16.msra.mxu0 0
    %344 = vmatprep.subr.bf16.mxu0 0
    %345 = vmatpush1.bf16.msra.mxu0 0
    %346 = vmatprep.subr.bf16.mxu0 0
    %347 = vmatpush1.bf16.msra.mxu0 0
    %348 = vmatprep.subr.bf16.mxu0 0
    %349 = vmatpush1.bf16.msra.mxu0 0
    %350 = vmatprep.subr.bf16.mxu0 0
    %351 = vmatpush1.bf16.msra.mxu0 0
    %352 = vmatprep.subr.bf16.mxu0 0
    %353 = vmatpush1.bf16.msra.mxu0 0
    %354 = vmatprep.subr.bf16.mxu0 0
    %355 = vmatpush1.bf16.msra.mxu0 0
    %356 = vmatprep.subr.bf16.mxu0 0
    %357 = vmatpush1.bf16.msra.mxu0 0
    %358 = vmatprep.subr.bf16.mxu0 0
    %359 = vmatpush1.bf16.msra.mxu0 0
    %360 = vmatprep.subr.bf16.mxu0 0
    %361 = vmatpush1.bf16.msra.mxu0 0
    %362 = vmatprep.subr.bf16.mxu0 0
    %363 = vmatpush1.bf16.msra.mxu0 0
    %364 = vmatprep.mubr.bf16.mxu0 0
    %365 = vmatmul.mubr.bf16.gmra.mrb[0].mxu0 %v287
    %v366 = vpop.f32.mrb[0].mxu0
    %v367 = vadd.f32 0.0, %v366
    %v368 = vpop.f32.mrb[0].mxu0
    %v369 = vadd.f32 0.0, %v368
    %v370 = vpop.f32.mrb[0].mxu0
    %v371 = vadd.f32 0.0, %v370
    %v372 = vpop.f32.mrb[0].mxu0
    %v373 = vadd.f32 0.0, %v372
    %374 = vdwg.mxu0
    %375 = vmatprep.subr.bf16.mxu0 %v226
    %376 = vmatpush1.bf16.msra.mxu0 %v225
    %377 = vmatprep.subr.bf16.mxu0 %v234
    %378 = vmatpush1.bf16.msra.mxu0 %v233
    %379 = vmatprep.subr.bf16.mxu0 %v242
    %380 = vmatpush1.bf16.msra.mxu0 %v241
    %381 = vmatprep.subr.bf16.mxu0 %v250
    %382 = vmatpush1.bf16.msra.mxu0 %v249
    %383 = vmatprep.subr.bf16.mxu0 0
    %384 = vmatpush1.bf16.msra.mxu0 0
    %385 = vmatprep.subr.bf16.mxu0 0
    %386 = vmatpush1.bf16.msra.mxu0 0
    %387 = vmatprep.subr.bf16.mxu0 0
    %388 = vmatpush1.bf16.msra.mxu0 0
    %389 = vmatprep.subr.bf16.mxu0 0
    %390 = vmatpush1.bf16.msra.mxu0 0
    %391 = vmatprep.subr.bf16.mxu0 0
    %392 = vmatpush1.bf16.msra.mxu0 0
    %393 = vmatprep.subr.bf16.mxu0 0
    %394 = vmatpush1.bf16.msra.mxu0 0
    %395 = vmatprep.subr.bf16.mxu0 0
    %396 = vmatpush1.bf16.msra.mxu0 0
    %397 = vmatprep.subr.bf16.mxu0 0
    %398 = vmatpush1.bf16.msra.mxu0 0
    %399 = vmatprep.subr.bf16.mxu0 0
    %400 = vmatpush1.bf16.msra.mxu0 0
    %401 = vmatprep.subr.bf16.mxu0 0
    %402 = vmatpush1.bf16.msra.mxu0 0
    %403 = vmatprep.subr.bf16.mxu0 0
    %404 = vmatpush1.bf16.msra.mxu0 0
    %405 = vmatprep.subr.bf16.mxu0 0
    %406 = vmatpush1.bf16.msra.mxu0 0
    %407 = vmatprep.mubr.bf16.mxu0 0
    %408 = vmatmul.mubr.bf16.gmra.mrb[0].mxu0 %v287
    %v409 = vpop.f32.mrb[0].mxu0
    %v410 = vadd.f32 0.0, %v409
    %v411 = vpop.f32.mrb[0].mxu0
    %v412 = vadd.f32 0.0, %v411
    %v413 = vpop.f32.mrb[0].mxu0
    %v414 = vadd.f32 0.0, %v413
    %v415 = vpop.f32.mrb[0].mxu0
    %v416 = vadd.f32 0.0, %v415
    %417 = vdwg.mxu0
    %418 = vmatprep.subr.bf16.mxu0 %v228
    %419 = vmatpush1.bf16.msra.mxu0 %v227
    %420 = vmatprep.subr.bf16.mxu0 %v236
    %421 = vmatpush1.bf16.msra.mxu0 %v235
    %422 = vmatprep.subr.bf16.mxu0 %v244
    %423 = vmatpush1.bf16.msra.mxu0 %v243
    %424 = vmatprep.subr.bf16.mxu0 %v252
    %425 = vmatpush1.bf16.msra.mxu0 %v251
    %426 = vmatprep.subr.bf16.mxu0 0
    %427 = vmatpush1.bf16.msra.mxu0 0
    %428 = vmatprep.subr.bf16.mxu0 0
    %429 = vmatpush1.bf16.msra.mxu0 0
    %430 = vmatprep.subr.bf16.mxu0 0
    %431 = vmatpush1.bf16.msra.mxu0 0
    %432 = vmatprep.subr.bf16.mxu0 0
    %433 = vmatpush1.bf16.msra.mxu0 0
    %434 = vmatprep.subr.bf16.mxu0 0
    %435 = vmatpush1.bf16.msra.mxu0 0
    %436 = vmatprep.subr.bf16.mxu0 0
    %437 = vmatpush1.bf16.msra.mxu0 0
    %438 = vmatprep.subr.bf16.mxu0 0
    %439 = vmatpush1.bf16.msra.mxu0 0
    %440 = vmatprep.subr.bf16.mxu0 0
    %441 = vmatpush1.bf16.msra.mxu0 0
    %442 = vmatprep.subr.bf16.mxu0 0
    %443 = vmatpush1.bf16.msra.mxu0 0
    %444 = vmatprep.subr.bf16.mxu0 0
    %445 = vmatpush1.bf16.msra.mxu0 0
    %446 = vmatprep.subr.bf16.mxu0 0
    %447 = vmatpush1.bf16.msra.mxu0 0
    %448 = vmatprep.subr.bf16.mxu0 0
    %449 = vmatpush1.bf16.msra.mxu0 0
    %450 = vmatprep.mubr.bf16.mxu0 0
    %451 = vmatmul.mubr.bf16.gmra.mrb[0].mxu0 %v287
    %v452 = vpop.f32.mrb[0].mxu0
    %v453 = vadd.f32 0.0, %v452
    %v454 = vpop.f32.mrb[0].mxu0
    %v455 = vadd.f32 0.0, %v454
    %v456 = vpop.f32.mrb[0].mxu0
    %v457 = vadd.f32 0.0, %v456
    %v458 = vpop.f32.mrb[0].mxu0
    %v459 = vadd.f32 0.0, %v458
    %460 = vdwg.mxu0
    %461 = vst [vmem:[#allocation2] sm:$0xff] %v324
    %462 = vst [vmem:[#allocation2 + $0x8] sm:$0xff] %v326
    %463 = vst [vmem:[#allocation2 + $0x10] sm:$0xff] %v367
    %464 = vst [vmem:[#allocation2 + $0x18] sm:$0xff] %v369
    %465 = vst [vmem:[#allocation2 + $0x20] sm:$0xff] %v410
    %466 = vst [vmem:[#allocation2 + $0x28] sm:$0xff] %v412
    %467 = vst [vmem:[#allocation2 + $0x30] sm:$0xff] %v453
    %468 = vst [vmem:[#allocation2 + $0x38] sm:$0xff] %v455
    %469 = vst [vmem:[#allocation2 + $0x40] sm:$0xff] %v328
    %470 = vst [vmem:[#allocation2 + $0x48] sm:$0xff] %v330
    %471 = vst [vmem:[#allocation2 + $0x50] sm:$0xff] %v371
    %472 = vst [vmem:[#allocation2 + $0x58] sm:$0xff] %v373
    %473 = vst [vmem:[#allocation2 + $0x60] sm:$0xff] %v414
    %474 = vst [vmem:[#allocation2 + $0x68] sm:$0xff] %v416
    %475 = vst [vmem:[#allocation2 + $0x70] sm:$0xff] %v457
    %476 = vst [vmem:[#allocation2 + $0x78] sm:$0xff] %v459
    %s477 = scalar_lea.vmem [#allocation3], 8
    %v478 = vld [vmem:[%s477] sm:$0xf]
    %v479 = vld [vmem:[%s477 + $0x4] sm:$0xf]
    %s480 = scalar_lea.vmem [#allocation6], 256
    %v481 = vld [vmem:[%s480] sm:$0xff]
    %v482 = vld [vmem:[%s480 + $0x8] sm:$0xff]
    %v483 = vld [vmem:[%s480 + $0x10] sm:$0xff]
    %v484 = vld [vmem:[%s480 + $0x18] sm:$0xff]
    %v485 = vld [vmem:[%s480 + $0x20] sm:$0xff]
    %v486 = vld [vmem:[%s480 + $0x28] sm:$0xff]
    %v487 = vld [vmem:[%s480 + $0x30] sm:$0xff]
    %v488 = vld [vmem:[%s480 + $0x38] sm:$0xff]
    %v489 = vld [vmem:[%s480 + $0x40] sm:$0xff]
    %v490 = vld [vmem:[%s480 + $0x48] sm:$0xff]
    %v491 = vld [vmem:[%s480 + $0x50] sm:$0xff]
    %v492 = vld [vmem:[%s480 + $0x58] sm:$0xff]
    %v493 = vld [vmem:[%s480 + $0x60] sm:$0xff]
    %v494 = vld [vmem:[%s480 + $0x68] sm:$0xff]
    %v495 = vld [vmem:[%s480 + $0x70] sm:$0xff]
    %v496 = vld [vmem:[%s480 + $0x78] sm:$0xff]
    %v497 = vld [vmem:[%s480 + $0x80] sm:$0xff]
    %v498 = vld [vmem:[%s480 + $0x88] sm:$0xff]
    %v499 = vld [vmem:[%s480 + $0x90] sm:$0xff]
    %v500 = vld [vmem:[%s480 + $0x98] sm:$0xff]
    %v501 = vld [vmem:[%s480 + $0xa0] sm:$0xff]
    %v502 = vld [vmem:[%s480 + $0xa8] sm:$0xff]
    %v503 = vld [vmem:[%s480 + $0xb0] sm:$0xff]
    %v504 = vld [vmem:[%s480 + $0xb8] sm:$0xff]
    %v505 = vld [vmem:[%s480 + $0xc0] sm:$0xff]
    %v506 = vld [vmem:[%s480 + $0xc8] sm:$0xff]
    %v507 = vld [vmem:[%s480 + $0xd0] sm:$0xff]
    %v508 = vld [vmem:[%s480 + $0xd8] sm:$0xff]
    %v509 = vld [vmem:[%s480 + $0xe0] sm:$0xff]
    %v510 = vld [vmem:[%s480 + $0xe8] sm:$0xff]
    %v511 = vld [vmem:[%s480 + $0xf0] sm:$0xff]
    %v512 = vld [vmem:[%s480 + $0xf8] sm:$0xff]
    %v515 = vunpack.c.l.b16 %v478
    %v516 = vunpack.c.l.b16 %v479
    %v517 = vpack.c.b16 %v516, %v515
    %v550 = vunpack.c.l.b16 %v481
    %v551 = vunpack.c.h.b16 %v481
    %v552 = vunpack.c.l.b16 %v482
    %v553 = vunpack.c.h.b16 %v482
    %v554 = vunpack.c.l.b16 %v483
    %v555 = vunpack.c.h.b16 %v483
    %v556 = vunpack.c.l.b16 %v484
    %v557 = vunpack.c.h.b16 %v484
    %v558 = vunpack.c.l.b16 %v485
    %v559 = vunpack.c.h.b16 %v485
    %v560 = vunpack.c.l.b16 %v486
    %v561 = vunpack.c.h.b16 %v486
    %v562 = vunpack.c.l.b16 %v487
    %v563 = vunpack.c.h.b16 %v487
    %v564 = vunpack.c.l.b16 %v488
    %v565 = vunpack.c.h.b16 %v488
    %v566 = vunpack.c.l.b16 %v489
    %v567 = vunpack.c.h.b16 %v489
    %v568 = vunpack.c.l.b16 %v490
    %v569 = vunpack.c.h.b16 %v490
    %v570 = vunpack.c.l.b16 %v491
    %v571 = vunpack.c.h.b16 %v491
    %v572 = vunpack.c.l.b16 %v492
    %v573 = vunpack.c.h.b16 %v492
    %v574 = vunpack.c.l.b16 %v493
    %v575 = vunpack.c.h.b16 %v493
    %v576 = vunpack.c.l.b16 %v494
    %v577 = vunpack.c.h.b16 %v494
    %v578 = vunpack.c.l.b16 %v495
    %v579 = vunpack.c.h.b16 %v495
    %v580 = vunpack.c.l.b16 %v496
    %v581 = vunpack.c.h.b16 %v496
    %v582 = vunpack.c.l.b16 %v497
    %v583 = vunpack.c.h.b16 %v497
    %v584 = vunpack.c.l.b16 %v498
    %v585 = vunpack.c.h.b16 %v498
    %v586 = vunpack.c.l.b16 %v499
    %v587 = vunpack.c.h.b16 %v499
    %v588 = vunpack.c.l.b16 %v500
    %v589 = vunpack.c.h.b16 %v500
    %v590 = vunpack.c.l.b16 %v501
    %v591 = vunpack.c.h.b16 %v501
    %v592 = vunpack.c.l.b16 %v502
    %v593 = vunpack.c.h.b16 %v502
    %v594 = vunpack.c.l.b16 %v503
    %v595 = vunpack.c.h.b16 %v503
    %v596 = vunpack.c.l.b16 %v504
    %v597 = vunpack.c.h.b16 %v504
    %v598 = vunpack.c.l.b16 %v505
    %v599 = vunpack.c.h.b16 %v505
    %v600 = vunpack.c.l.b16 %v506
    %v601 = vunpack.c.h.b16 %v506
    %v602 = vunpack.c.l.b16 %v507
    %v603 = vunpack.c.h.b16 %v507
    %v604 = vunpack.c.l.b16 %v508
    %v605 = vunpack.c.h.b16 %v508
    %v606 = vunpack.c.l.b16 %v509
    %v607 = vunpack.c.h.b16 %v509
    %v608 = vunpack.c.l.b16 %v510
    %v609 = vunpack.c.h.b16 %v510
    %v610 = vunpack.c.l.b16 %v511
    %v611 = vunpack.c.h.b16 %v511
    %v612 = vunpack.c.l.b16 %v512
    %v613 = vunpack.c.h.b16 %v512
    %v614 = vpack.c.b16 %v558, %v550
    %v615 = vpack.c.b16 %v559, %v551
    %v616 = vpack.c.b16 %v560, %v552
    %v617 = vpack.c.b16 %v561, %v553
    %v618 = vpack.c.b16 %v562, %v554
    %v619 = vpack.c.b16 %v563, %v555
    %v620 = vpack.c.b16 %v564, %v556
    %v621 = vpack.c.b16 %v565, %v557
    %v622 = vpack.c.b16 %v574, %v566
    %v623 = vpack.c.b16 %v575, %v567
    %v624 = vpack.c.b16 %v576, %v568
    %v625 = vpack.c.b16 %v577, %v569
    %v626 = vpack.c.b16 %v578, %v570
    %v627 = vpack.c.b16 %v579, %v571
    %v628 = vpack.c.b16 %v580, %v572
    %v629 = vpack.c.b16 %v581, %v573
    %v630 = vpack.c.b16 %v590, %v582
    %v631 = vpack.c.b16 %v591, %v583
    %v632 = vpack.c.b16 %v592, %v584
    %v633 = vpack.c.b16 %v593, %v585
    %v634 = vpack.c.b16 %v594, %v586
    %v635 = vpack.c.b16 %v595, %v587
    %v636 = vpack.c.b16 %v596, %v588
    %v637 = vpack.c.b16 %v597, %v589
    %v638 = vpack.c.b16 %v606, %v598
    %v639 = vpack.c.b16 %v607, %v599
    %v640 = vpack.c.b16 %v608, %v600
    %v641 = vpack.c.b16 %v609, %v601
    %v642 = vpack.c.b16 %v610, %v602
    %v643 = vpack.c.b16 %v611, %v603
    %v644 = vpack.c.b16 %v612, %v604
    %v645 = vpack.c.b16 %v613, %v605
    %v679 = vsel %vm285, %v517, 0
    %681 = vmatprep.subr.bf16.mxu0 %v615
    %682 = vmatpush1.bf16.msra.mxu0 %v614
    %683 = vmatprep.subr.bf16.mxu0 %v623
    %684 = vmatpush1.bf16.msra.mxu0 %v622
    %685 = vmatprep.subr.bf16.mxu0 %v631
    %686 = vmatpush1.bf16.msra.mxu0 %v630
    %687 = vmatprep.subr.bf16.mxu0 %v639
    %688 = vmatpush1.bf16.msra.mxu0 %v638
    %689 = vmatprep.subr.bf16.mxu0 0
    %690 = vmatpush1.bf16.msra.mxu0 0
    %691 = vmatprep.subr.bf16.mxu0 0
    %692 = vmatpush1.bf16.msra.mxu0 0
    %693 = vmatprep.subr.bf16.mxu0 0
    %694 = vmatpush1.bf16.msra.mxu0 0
    %695 = vmatprep.subr.bf16.mxu0 0
    %696 = vmatpush1.bf16.msra.mxu0 0
    %697 = vmatprep.subr.bf16.mxu0 0
    %698 = vmatpush1.bf16.msra.mxu0 0
    %699 = vmatprep.subr.bf16.mxu0 0
    %700 = vmatpush1.bf16.msra.mxu0 0
    %701 = vmatprep.subr.bf16.mxu0 0
    %702 = vmatpush1.bf16.msra.mxu0 0
    %703 = vmatprep.subr.bf16.mxu0 0
    %704 = vmatpush1.bf16.msra.mxu0 0
    %705 = vmatprep.subr.bf16.mxu0 0
    %706 = vmatpush1.bf16.msra.mxu0 0
    %707 = vmatprep.subr.bf16.mxu0 0
    %708 = vmatpush1.bf16.msra.mxu0 0
    %709 = vmatprep.subr.bf16.mxu0 0
    %710 = vmatpush1.bf16.msra.mxu0 0
    %711 = vmatprep.subr.bf16.mxu0 0
    %712 = vmatpush1.bf16.msra.mxu0 0
    %713 = vmatprep.mubr.bf16.mxu0 0
    %714 = vmatmul.mubr.bf16.gmra.mrb[0].mxu0 %v679
    %v715 = vpop.f32.mrb[0].mxu0
    %v716 = vadd.f32 0.0, %v715
    %v717 = vpop.f32.mrb[0].mxu0
    %v718 = vadd.f32 0.0, %v717
    %v719 = vpop.f32.mrb[0].mxu0
    %v720 = vadd.f32 0.0, %v719
    %v721 = vpop.f32.mrb[0].mxu0
    %v722 = vadd.f32 0.0, %v721
    %723 = vdwg.mxu0
    %724 = vmatprep.subr.bf16.mxu0 %v617
    %725 = vmatpush1.bf16.msra.mxu0 %v616
    %726 = vmatprep.subr.bf16.mxu0 %v625
    %727 = vmatpush1.bf16.msra.mxu0 %v624
    %728 = vmatprep.subr.bf16.mxu0 %v633
    %729 = vmatpush1.bf16.msra.mxu0 %v632
    %730 = vmatprep.subr.bf16.mxu0 %v641
    %731 = vmatpush1.bf16.msra.mxu0 %v640
    %732 = vmatprep.subr.bf16.mxu0 0
    %733 = vmatpush1.bf16.msra.mxu0 0
    %734 = vmatprep.subr.bf16.mxu0 0
    %735 = vmatpush1.bf16.msra.mxu0 0
    %736 = vmatprep.subr.bf16.mxu0 0
    %737 = vmatpush1.bf16.msra.mxu0 0
    %738 = vmatprep.subr.bf16.mxu0 0
    %739 = vmatpush1.bf16.msra.mxu0 0
    %740 = vmatprep.subr.bf16.mxu0 0
    %741 = vmatpush1.bf16.msra.mxu0 0
    %742 = vmatprep.subr.bf16.mxu0 0
    %743 = vmatpush1.bf16.msra.mxu0 0
    %744 = vmatprep.subr.bf16.mxu0 0
    %745 = vmatpush1.bf16.msra.mxu0 0
    %746 = vmatprep.subr.bf16.mxu0 0
    %747 = vmatpush1.bf16.msra.mxu0 0
    %748 = vmatprep.subr.bf16.mxu0 0
    %749 = vmatpush1.bf16.msra.mxu0 0
    %750 = vmatprep.subr.bf16.mxu0 0
    %751 = vmatpush1.bf16.msra.mxu0 0
    %752 = vmatprep.subr.bf16.mxu0 0
    %753 = vmatpush1.bf16.msra.mxu0 0
    %754 = vmatprep.subr.bf16.mxu0 0
    %755 = vmatpush1.bf16.msra.mxu0 0
    %756 = vmatprep.mubr.bf16.mxu0 0
    %757 = vmatmul.mubr.bf16.gmra.mrb[0].mxu0 %v679
    %v758 = vpop.f32.mrb[0].mxu0
    %v759 = vadd.f32 0.0, %v758
    %v760 = vpop.f32.mrb[0].mxu0
    %v761 = vadd.f32 0.0, %v760
    %v762 = vpop.f32.mrb[0].mxu0
    %v763 = vadd.f32 0.0, %v762
    %v764 = vpop.f32.mrb[0].mxu0
    %v765 = vadd.f32 0.0, %v764
    %766 = vdwg.mxu0
    %767 = vmatprep.subr.bf16.mxu0 %v619
    %768 = vmatpush1.bf16.msra.mxu0 %v618
    %769 = vmatprep.subr.bf16.mxu0 %v627
    %770 = vmatpush1.bf16.msra.mxu0 %v626
    %771 = vmatprep.subr.bf16.mxu0 %v635
    %772 = vmatpush1.bf16.msra.mxu0 %v634
    %773 = vmatprep.subr.bf16.mxu0 %v643
    %774 = vmatpush1.bf16.msra.mxu0 %v642
    %775 = vmatprep.subr.bf16.mxu0 0
    %776 = vmatpush1.bf16.msra.mxu0 0
    %777 = vmatprep.subr.bf16.mxu0 0
    %778 = vmatpush1.bf16.msra.mxu0 0
    %779 = vmatprep.subr.bf16.mxu0 0
    %780 = vmatpush1.bf16.msra.mxu0 0
    %781 = vmatprep.subr.bf16.mxu0 0
    %782 = vmatpush1.bf16.msra.mxu0 0
    %783 = vmatprep.subr.bf16.mxu0 0
    %784 = vmatpush1.bf16.msra.mxu0 0
    %785 = vmatprep.subr.bf16.mxu0 0
    %786 = vmatpush1.bf16.msra.mxu0 0
    %787 = vmatprep.subr.bf16.mxu0 0
    %788 = vmatpush1.bf16.msra.mxu0 0
    %789 = vmatprep.subr.bf16.mxu0 0
    %790 = vmatpush1.bf16.msra.mxu0 0
    %791 = vmatprep.subr.bf16.mxu0 0
    %792 = vmatpush1.bf16.msra.mxu0 0
    %793 = vmatprep.subr.bf16.mxu0 0
    %794 = vmatpush1.bf16.msra.mxu0 0
    %795 = vmatprep.subr.bf16.mxu0 0
    %796 = vmatpush1.bf16.msra.mxu0 0
    %797 = vmatprep.subr.bf16.mxu0 0
    %798 = vmatpush1.bf16.msra.mxu0 0
    %799 = vmatprep.mubr.bf16.mxu0 0
    %800 = vmatmul.mubr.bf16.gmra.mrb[0].mxu0 %v679
    %v801 = vpop.f32.mrb[0].mxu0
    %v802 = vadd.f32 0.0, %v801
    %v803 = vpop.f32.mrb[0].mxu0
    %v804 = vadd.f32 0.0, %v803
    %v805 = vpop.f32.mrb[0].mxu0
    %v806 = vadd.f32 0.0, %v805
    %v807 = vpop.f32.mrb[0].mxu0
    %v808 = vadd.f32 0.0, %v807
    %809 = vdwg.mxu0
    %810 = vmatprep.subr.bf16.mxu0 %v621
    %811 = vmatpush1.bf16.msra.mxu0 %v620
    %812 = vmatprep.subr.bf16.mxu0 %v629
    %813 = vmatpush1.bf16.msra.mxu0 %v628
    %814 = vmatprep.subr.bf16.mxu0 %v637
    %815 = vmatpush1.bf16.msra.mxu0 %v636
    %816 = vmatprep.subr.bf16.mxu0 %v645
    %817 = vmatpush1.bf16.msra.mxu0 %v644
    %818 = vmatprep.subr.bf16.mxu0 0
    %819 = vmatpush1.bf16.msra.mxu0 0
    %820 = vmatprep.subr.bf16.mxu0 0
    %821 = vmatpush1.bf16.msra.mxu0 0
    %822 = vmatprep.subr.bf16.mxu0 0
    %823 = vmatpush1.bf16.msra.mxu0 0
    %824 = vmatprep.subr.bf16.mxu0 0
    %825 = vmatpush1.bf16.msra.mxu0 0
    %826 = vmatprep.subr.bf16.mxu0 0
    %827 = vmatpush1.bf16.msra.mxu0 0
    %828 = vmatprep.subr.bf16.mxu0 0
    %829 = vmatpush1.bf16.msra.mxu0 0
    %830 = vmatprep.subr.bf16.mxu0 0
    %831 = vmatpush1.bf16.msra.mxu0 0
    %832 = vmatprep.subr.bf16.mxu0 0
    %833 = vmatpush1.bf16.msra.mxu0 0
    %834 = vmatprep.subr.bf16.mxu0 0
    %835 = vmatpush1.bf16.msra.mxu0 0
    %836 = vmatprep.subr.bf16.mxu0 0
    %837 = vmatpush1.bf16.msra.mxu0 0
    %838 = vmatprep.subr.bf16.mxu0 0
    %839 = vmatpush1.bf16.msra.mxu0 0
    %840 = vmatprep.subr.bf16.mxu0 0
    %841 = vmatpush1.bf16.msra.mxu0 0
    %842 = vmatprep.mubr.bf16.mxu0 0
    %843 = vmatmul.mubr.bf16.gmra.mrb[0].mxu0 %v679
    %v844 = vpop.f32.mrb[0].mxu0
    %v845 = vadd.f32 0.0, %v844
    %v846 = vpop.f32.mrb[0].mxu0
    %v847 = vadd.f32 0.0, %v846
    %v848 = vpop.f32.mrb[0].mxu0
    %v849 = vadd.f32 0.0, %v848
    %v850 = vpop.f32.mrb[0].mxu0
    %v851 = vadd.f32 0.0, %v850
    %852 = vdwg.mxu0
    %s853 = scalar_lea.vmem [#allocation2], 128
    %854 = vst [vmem:[%s853] sm:$0xff] %v716
    %855 = vst [vmem:[%s853 + $0x8] sm:$0xff] %v718
    %856 = vst [vmem:[%s853 + $0x10] sm:$0xff] %v759
    %857 = vst [vmem:[%s853 + $0x18] sm:$0xff] %v761
    %858 = vst [vmem:[%s853 + $0x20] sm:$0xff] %v802
    %859 = vst [vmem:[%s853 + $0x28] sm:$0xff] %v804
    %860 = vst [vmem:[%s853 + $0x30] sm:$0xff] %v845
    %861 = vst [vmem:[%s853 + $0x38] sm:$0xff] %v847
    %862 = vst [vmem:[%s853 + $0x40] sm:$0xff] %v720
    %863 = vst [vmem:[%s853 + $0x48] sm:$0xff] %v722
    %864 = vst [vmem:[%s853 + $0x50] sm:$0xff] %v763
    %865 = vst [vmem:[%s853 + $0x58] sm:$0xff] %v765
    %866 = vst [vmem:[%s853 + $0x60] sm:$0xff] %v806
    %867 = vst [vmem:[%s853 + $0x68] sm:$0xff] %v808
    %868 = vst [vmem:[%s853 + $0x70] sm:$0xff] %v849
    %869 = vst [vmem:[%s853 + $0x78] sm:$0xff] %v851
    %s870 = scalar_lea.vmem [#allocation3], 16
    %v871 = vld [vmem:[%s870] sm:$0xf]
    %v872 = vld [vmem:[%s870 + $0x4] sm:$0xf]
    %s873 = scalar_lea.vmem [#allocation6], 512
    %v874 = vld [vmem:[%s873] sm:$0xff]
    %v875 = vld [vmem:[%s873 + $0x8] sm:$0xff]
    %v876 = vld [vmem:[%s873 + $0x10] sm:$0xff]
    %v877 = vld [vmem:[%s873 + $0x18] sm:$0xff]
    %v878 = vld [vmem:[%s873 + $0x20] sm:$0xff]
    %v879 = vld [vmem:[%s873 + $0x28] sm:$0xff]
    %v880 = vld [vmem:[%s873 + $0x30] sm:$0xff]
    %v881 = vld [vmem:[%s873 + $0x38] sm:$0xff]
    %v882 = vld [vmem:[%s873 + $0x40] sm:$0xff]
    %v883 = vld [vmem:[%s873 + $0x48] sm:$0xff]
    %v884 = vld [vmem:[%s873 + $0x50] sm:$0xff]
    %v885 = vld [vmem:[%s873 + $0x58] sm:$0xff]
    %v886 = vld [vmem:[%s873 + $0x60] sm:$0xff]
    %v887 = vld [vmem:[%s873 + $0x68] sm:$0xff]
    %v888 = vld [vmem:[%s873 + $0x70] sm:$0xff]
    %v889 = vld [vmem:[%s873 + $0x78] sm:$0xff]
    %v890 = vld [vmem:[%s873 + $0x80] sm:$0xff]
    %v891 = vld [vmem:[%s873 + $0x88] sm:$0xff]
    %v892 = vld [vmem:[%s873 + $0x90] sm:$0xff]
    %v893 = vld [vmem:[%s873 + $0x98] sm:$0xff]
    %v894 = vld [vmem:[%s873 + $0xa0] sm:$0xff]
    %v895 = vld [vmem:[%s873 + $0xa8] sm:$0xff]
    %v896 = vld [vmem:[%s873 + $0xb0] sm:$0xff]
    %v897 = vld [vmem:[%s873 + $0xb8] sm:$0xff]
    %v898 = vld [vmem:[%s873 + $0xc0] sm:$0xff]
    %v899 = vld [vmem:[%s873 + $0xc8] sm:$0xff]
    %v900 = vld [vmem:[%s873 + $0xd0] sm:$0xff]
    %v901 = vld [vmem:[%s873 + $0xd8] sm:$0xff]
    %v902 = vld [vmem:[%s873 + $0xe0] sm:$0xff]
    %v903 = vld [vmem:[%s873 + $0xe8] sm:$0xff]
    %v904 = vld [vmem:[%s873 + $0xf0] sm:$0xff]
    %v905 = vld [vmem:[%s873 + $0xf8] sm:$0xff]
    %v908 = vunpack.c.l.b16 %v871
    %v909 = vunpack.c.l.b16 %v872
    %v910 = vpack.c.b16 %v909, %v908
    %v943 = vunpack.c.l.b16 %v874
    %v944 = vunpack.c.h.b16 %v874
    %v945 = vunpack.c.l.b16 %v875
    %v946 = vunpack.c.h.b16 %v875
    %v947 = vunpack.c.l.b16 %v876
    %v948 = vunpack.c.h.b16 %v876
    %v949 = vunpack.c.l.b16 %v877
    %v950 = vunpack.c.h.b16 %v877
    %v951 = vunpack.c.l.b16 %v878
    %v952 = vunpack.c.h.b16 %v878
    %v953 = vunpack.c.l.b16 %v879
    %v954 = vunpack.c.h.b16 %v879
    %v955 = vunpack.c.l.b16 %v880
    %v956 = vunpack.c.h.b16 %v880
    %v957 = vunpack.c.l.b16 %v881
    %v958 = vunpack.c.h.b16 %v881
    %v959 = vunpack.c.l.b16 %v882
    %v960 = vunpack.c.h.b16 %v882
    %v961 = vunpack.c.l.b16 %v883
    %v962 = vunpack.c.h.b16 %v883
    %v963 = vunpack.c.l.b16 %v884
    %v964 = vunpack.c.h.b16 %v884
    %v965 = vunpack.c.l.b16 %v885
    %v966 = vunpack.c.h.b16 %v885
    %v967 = vunpack.c.l.b16 %v886
    %v968 = vunpack.c.h.b16 %v886
    %v969 = vunpack.c.l.b16 %v887
    %v970 = vunpack.c.h.b16 %v887
    %v971 = vunpack.c.l.b16 %v888
    %v972 = vunpack.c.h.b16 %v888
    %v973 = vunpack.c.l.b16 %v889
    %v974 = vunpack.c.h.b16 %v889
    %v975 = vunpack.c.l.b16 %v890
    %v976 = vunpack.c.h.b16 %v890
    %v977 = vunpack.c.l.b16 %v891
    %v978 = vunpack.c.h.b16 %v891
    %v979 = vunpack.c.l.b16 %v892
    %v980 = vunpack.c.h.b16 %v892
    %v981 = vunpack.c.l.b16 %v893
    %v982 = vunpack.c.h.b16 %v893
    %v983 = vunpack.c.l.b16 %v894
    %v984 = vunpack.c.h.b16 %v894
    %v985 = vunpack.c.l.b16 %v895
    %v986 = vunpack.c.h.b16 %v895
    %v987 = vunpack.c.l.b16 %v896
    %v988 = vunpack.c.h.b16 %v896
    %v989 = vunpack.c.l.b16 %v897
    %v990 = vunpack.c.h.b16 %v897
    %v991 = vunpack.c.l.b16 %v898
    %v992 = vunpack.c.h.b16 %v898
    %v993 = vunpack.c.l.b16 %v899
    %v994 = vunpack.c.h.b16 %v899
    %v995 = vunpack.c.l.b16 %v900
    %v996 = vunpack.c.h.b16 %v900
    %v997 = vunpack.c.l.b16 %v901
    %v998 = vunpack.c.h.b16 %v901
    %v999 = vunpack.c.l.b16 %v902
    %v1000 = vunpack.c.h.b16 %v902
    %v1001 = vunpack.c.l.b16 %v903
    %v1002 = vunpack.c.h.b16 %v903
    %v1003 = vunpack.c.l.b16 %v904
    %v1004 = vunpack.c.h.b16 %v904
    %v1005 = vunpack.c.l.b16 %v905
    %v1006 = vunpack.c.h.b16 %v905
    %v1007 = vpack.c.b16 %v951, %v943
    %v1008 = vpack.c.b16 %v952, %v944
    %v1009 = vpack.c.b16 %v953, %v945
    %v1010 = vpack.c.b16 %v954, %v946
    %v1011 = vpack.c.b16 %v955, %v947
    %v1012 = vpack.c.b16 %v956, %v948
    %v1013 = vpack.c.b16 %v957, %v949
    %v1014 = vpack.c.b16 %v958, %v950
    %v1015 = vpack.c.b16 %v967, %v959
    %v1016 = vpack.c.b16 %v968, %v960
    %v1017 = vpack.c.b16 %v969, %v961
    %v1018 = vpack.c.b16 %v970, %v962
    %v1019 = vpack.c.b16 %v971, %v963
    %v1020 = vpack.c.b16 %v972, %v964
    %v1021 = vpack.c.b16 %v973, %v965
    %v1022 = vpack.c.b16 %v974, %v966
    %v1023 = vpack.c.b16 %v983, %v975
    %v1024 = vpack.c.b16 %v984, %v976
    %v1025 = vpack.c.b16 %v985, %v977
    %v1026 = vpack.c.b16 %v986, %v978
    %v1027 = vpack.c.b16 %v987, %v979
    %v1028 = vpack.c.b16 %v988, %v980
    %v1029 = vpack.c.b16 %v989, %v981
    %v1030 = vpack.c.b16 %v990, %v982
    %v1031 = vpack.c.b16 %v999, %v991
    %v1032 = vpack.c.b16 %v1000, %v992
    %v1033 = vpack.c.b16 %v1001, %v993
    %v1034 = vpack.c.b16 %v1002, %v994
    %v1035 = vpack.c.b16 %v1003, %v995
    %v1036 = vpack.c.b16 %v1004, %v996
    %v1037 = vpack.c.b16 %v1005, %v997
    %v1038 = vpack.c.b16 %v1006, %v998
    %v1072 = vsel %vm285, %v910, 0
    %1074 = vmatprep.subr.bf16.mxu0 %v1008
    %1075 = vmatpush1.bf16.msra.mxu0 %v1007
    %1076 = vmatprep.subr.bf16.mxu0 %v1016
    %1077 = vmatpush1.bf16.msra.mxu0 %v1015
    %1078 = vmatprep.subr.bf16.mxu0 %v1024
    %1079 = vmatpush1.bf16.msra.mxu0 %v1023
    %1080 = vmatprep.subr.bf16.mxu0 %v1032
    %1081 = vmatpush1.bf16.msra.mxu0 %v1031
    %1082 = vmatprep.subr.bf16.mxu0 0
    %1083 = vmatpush1.bf16.msra.mxu0 0
    %1084 = vmatprep.subr.bf16.mxu0 0
    %1085 = vmatpush1.bf16.msra.mxu0 0
    %1086 = vmatprep.subr.bf16.mxu0 0
    %1087 = vmatpush1.bf16.msra.mxu0 0
    %1088 = vmatprep.subr.bf16.mxu0 0
    %1089 = vmatpush1.bf16.msra.mxu0 0
    %1090 = vmatprep.subr.bf16.mxu0 0
    %1091 = vmatpush1.bf16.msra.mxu0 0
    %1092 = vmatprep.subr.bf16.mxu0 0
    %1093 = vmatpush1.bf16.msra.mxu0 0
    %1094 = vmatprep.subr.bf16.mxu0 0
    %1095 = vmatpush1.bf16.msra.mxu0 0
    %1096 = vmatprep.subr.bf16.mxu0 0
    %1097 = vmatpush1.bf16.msra.mxu0 0
    %1098 = vmatprep.subr.bf16.mxu0 0
    %1099 = vmatpush1.bf16.msra.mxu0 0
    %1100 = vmatprep.subr.bf16.mxu0 0
    %1101 = vmatpush1.bf16.msra.mxu0 0
    %1102 = vmatprep.subr.bf16.mxu0 0
    %1103 = vmatpush1.bf16.msra.mxu0 0
    %1104 = vmatprep.subr.bf16.mxu0 0
    %1105 = vmatpush1.bf16.msra.mxu0 0
    %1106 = vmatprep.mubr.bf16.mxu0 0
    %1107 = vmatmul.mubr.bf16.gmra.mrb[0].mxu0 %v1072
    %v1108 = vpop.f32.mrb[0].mxu0
    %v1109 = vadd.f32 0.0, %v1108
    %v1110 = vpop.f32.mrb[0].mxu0
    %v1111 = vadd.f32 0.0, %v1110
    %v1112 = vpop.f32.mrb[0].mxu0
    %v1113 = vadd.f32 0.0, %v1112
    %v1114 = vpop.f32.mrb[0].mxu0
    %v1115 = vadd.f32 0.0, %v1114
    %1116 = vdwg.mxu0
    %1117 = vmatprep.subr.bf16.mxu0 %v1010
    %1118 = vmatpush1.bf16.msra.mxu0 %v1009
    %1119 = vmatprep.subr.bf16.mxu0 %v1018
    %1120 = vmatpush1.bf16.msra.mxu0 %v1017
    %1121 = vmatprep.subr.bf16.mxu0 %v1026
    %1122 = vmatpush1.bf16.msra.mxu0 %v1025
    %1123 = vmatprep.subr.bf16.mxu0 %v1034
    %1124 = vmatpush1.bf16.msra.mxu0 %v1033
    %1125 = vmatprep.subr.bf16.mxu0 0
    %1126 = vmatpush1.bf16.msra.mxu0 0
    %1127 = vmatprep.subr.bf16.mxu0 0
    %1128 = vmatpush1.bf16.msra.mxu0 0
    %1129 = vmatprep.subr.bf16.mxu0 0
    %1130 = vmatpush1.bf16.msra.mxu0 0
    %1131 = vmatprep.subr.bf16.mxu0 0
    %1132 = vmatpush1.bf16.msra.mxu0 0
    %1133 = vmatprep.subr.bf16.mxu0 0
    %1134 = vmatpush1.bf16.msra.mxu0 0
    %1135 = vmatprep.subr.bf16.mxu0 0
    %1136 = vmatpush1.bf16.msra.mxu0 0
    %1137 = vmatprep.subr.bf16.mxu0 0
    %1138 = vmatpush1.bf16.msra.mxu0 0
    %1139 = vmatprep.subr.bf16.mxu0 0
    %1140 = vmatpush1.bf16.msra.mxu0 0
    %1141 = vmatprep.subr.bf16.mxu0 0
    %1142 = vmatpush1.bf16.msra.mxu0 0
    %1143 = vmatprep.subr.bf16.mxu0 0
    %1144 = vmatpush1.bf16.msra.mxu0 0
    %1145 = vmatprep.subr.bf16.mxu0 0
    %1146 = vmatpush1.bf16.msra.mxu0 0
    %1147 = vmatprep.subr.bf16.mxu0 0
    %1148 = vmatpush1.bf16.msra.mxu0 0
    %1149 = vmatprep.mubr.bf16.mxu0 0
    %1150 = vmatmul.mubr.bf16.gmra.mrb[0].mxu0 %v1072
    %v1151 = vpop.f32.mrb[0].mxu0
    %v1152 = vadd.f32 0.0, %v1151
    %v1153 = vpop.f32.mrb[0].mxu0
    %v1154 = vadd.f32 0.0, %v1153
    %v1155 = vpop.f32.mrb[0].mxu0
    %v1156 = vadd.f32 0.0, %v1155
    %v1157 = vpop.f32.mrb[0].mxu0
    %v1158 = vadd.f32 0.0, %v1157
    %1159 = vdwg.mxu0
    %1160 = vmatprep.subr.bf16.mxu0 %v1012
    %1161 = vmatpush1.bf16.msra.mxu0 %v1011
    %1162 = vmatprep.subr.bf16.mxu0 %v1020
    %1163 = vmatpush1.bf16.msra.mxu0 %v1019
    %1164 = vmatprep.subr.bf16.mxu0 %v1028
    %1165 = vmatpush1.bf16.msra.mxu0 %v1027
    %1166 = vmatprep.subr.bf16.mxu0 %v1036
    %1167 = vmatpush1.bf16.msra.mxu0 %v1035
    %1168 = vmatprep.subr.bf16.mxu0 0
    %1169 = vmatpush1.bf16.msra.mxu0 0
    %1170 = vmatprep.subr.bf16.mxu0 0
    %1171 = vmatpush1.bf16.msra.mxu0 0
    %1172 = vmatprep.subr.bf16.mxu0 0
    %1173 = vmatpush1.bf16.msra.mxu0 0
    %1174 = vmatprep.subr.bf16.mxu0 0
    %1175 = vmatpush1.bf16.msra.mxu0 0
    %1176 = vmatprep.subr.bf16.mxu0 0
    %1177 = vmatpush1.bf16.msra.mxu0 0
    %1178 = vmatprep.subr.bf16.mxu0 0
    %1179 = vmatpush1.bf16.msra.mxu0 0
    %1180 = vmatprep.subr.bf16.mxu0 0
    %1181 = vmatpush1.bf16.msra.mxu0 0
    %1182 = vmatprep.subr.bf16.mxu0 0
    %1183 = vmatpush1.bf16.msra.mxu0 0
    %1184 = vmatprep.subr.bf16.mxu0 0
    %1185 = vmatpush1.bf16.msra.mxu0 0
    %1186 = vmatprep.subr.bf16.mxu0 0
    %1187 = vmatpush1.bf16.msra.mxu0 0
    %1188 = vmatprep.subr.bf16.mxu0 0
    %1189 = vmatpush1.bf16.msra.mxu0 0
    %1190 = vmatprep.subr.bf16.mxu0 0
    %1191 = vmatpush1.bf16.msra.mxu0 0
    %1192 = vmatprep.mubr.bf16.mxu0 0
    %1193 = vmatmul.mubr.bf16.gmra.mrb[0].mxu0 %v1072
    %v1194 = vpop.f32.mrb[0].mxu0
    %v1195 = vadd.f32 0.0, %v1194
    %v1196 = vpop.f32.mrb[0].mxu0
    %v1197 = vadd.f32 0.0, %v1196
    %v1198 = vpop.f32.mrb[0].mxu0
    %v1199 = vadd.f32 0.0, %v1198
    %v1200 = vpop.f32.mrb[0].mxu0
    %v1201 = vadd.f32 0.0, %v1200
    %1202 = vdwg.mxu0
    %1203 = vmatprep.subr.bf16.mxu0 %v1014
    %1204 = vmatpush1.bf16.msra.mxu0 %v1013
    %1205 = vmatprep.subr.bf16.mxu0 %v1022
    %1206 = vmatpush1.bf16.msra.mxu0 %v1021
    %1207 = vmatprep.subr.bf16.mxu0 %v1030
    %1208 = vmatpush1.bf16.msra.mxu0 %v1029
    %1209 = vmatprep.subr.bf16.mxu0 %v1038
    %1210 = vmatpush1.bf16.msra.mxu0 %v1037
    %1211 = vmatprep.subr.bf16.mxu0 0
    %1212 = vmatpush1.bf16.msra.mxu0 0
    %1213 = vmatprep.subr.bf16.mxu0 0
    %1214 = vmatpush1.bf16.msra.mxu0 0
    %1215 = vmatprep.subr.bf16.mxu0 0
    %1216 = vmatpush1.bf16.msra.mxu0 0
    %1217 = vmatprep.subr.bf16.mxu0 0
    %1218 = vmatpush1.bf16.msra.mxu0 0
    %1219 = vmatprep.subr.bf16.mxu0 0
    %1220 = vmatpush1.bf16.msra.mxu0 0
    %1221 = vmatprep.subr.bf16.mxu0 0
    %1222 = vmatpush1.bf16.msra.mxu0 0
    %1223 = vmatprep.subr.bf16.mxu0 0
    %1224 = vmatpush1.bf16.msra.mxu0 0
    %1225 = vmatprep.subr.bf16.mxu0 0
    %1226 = vmatpush1.bf16.msra.mxu0 0
    %1227 = vmatprep.subr.bf16.mxu0 0
    %1228 = vmatpush1.bf16.msra.mxu0 0
    %1229 = vmatprep.subr.bf16.mxu0 0
    %1230 = vmatpush1.bf16.msra.mxu0 0
    %1231 = vmatprep.subr.bf16.mxu0 0
    %1232 = vmatpush1.bf16.msra.mxu0 0
    %1233 = vmatprep.subr.bf16.mxu0 0
    %1234 = vmatpush1.bf16.msra.mxu0 0
    %1235 = vmatprep.mubr.bf16.mxu0 0
    %1236 = vmatmul.mubr.bf16.gmra.mrb[0].mxu0 %v1072
    %v1237 = vpop.f32.mrb[0].mxu0
    %v1238 = vadd.f32 0.0, %v1237
    %v1239 = vpop.f32.mrb[0].mxu0
    %v1240 = vadd.f32 0.0, %v1239
    %v1241 = vpop.f32.mrb[0].mxu0
    %v1242 = vadd.f32 0.0, %v1241
    %v1243 = vpop.f32.mrb[0].mxu0
    %v1244 = vadd.f32 0.0, %v1243
    %1245 = vdwg.mxu0
    %s1246 = scalar_lea.vmem [#allocation2], 256
    %1247 = vst [vmem:[%s1246] sm:$0xff] %v1109
    %1248 = vst [vmem:[%s1246 + $0x8] sm:$0xff] %v1111
    %1249 = vst [vmem:[%s1246 + $0x10] sm:$0xff] %v1152
    %1250 = vst [vmem:[%s1246 + $0x18] sm:$0xff] %v1154
    %1251 = vst [vmem:[%s1246 + $0x20] sm:$0xff] %v1195
    %1252 = vst [vmem:[%s1246 + $0x28] sm:$0xff] %v1197
    %1253 = vst [vmem:[%s1246 + $0x30] sm:$0xff] %v1238
    %1254 = vst [vmem:[%s1246 + $0x38] sm:$0xff] %v1240
    %1255 = vst [vmem:[%s1246 + $0x40] sm:$0xff] %v1113
    %1256 = vst [vmem:[%s1246 + $0x48] sm:$0xff] %v1115
    %1257 = vst [vmem:[%s1246 + $0x50] sm:$0xff] %v1156
    %1258 = vst [vmem:[%s1246 + $0x58] sm:$0xff] %v1158
    %1259 = vst [vmem:[%s1246 + $0x60] sm:$0xff] %v1199
    %1260 = vst [vmem:[%s1246 + $0x68] sm:$0xff] %v1201
    %1261 = vst [vmem:[%s1246 + $0x70] sm:$0xff] %v1242
    %1262 = vst [vmem:[%s1246 + $0x78] sm:$0xff] %v1244
    %s1263 = scalar_lea.vmem [#allocation3], 24
    %v1264 = vld [vmem:[%s1263] sm:$0xf]
    %v1265 = vld [vmem:[%s1263 + $0x4] sm:$0xf]
    %s1266 = scalar_lea.vmem [#allocation6], 768
    %v1267 = vld [vmem:[%s1266] sm:$0xff]
    %v1268 = vld [vmem:[%s1266 + $0x8] sm:$0xff]
    %v1269 = vld [vmem:[%s1266 + $0x10] sm:$0xff]
    %v1270 = vld [vmem:[%s1266 + $0x18] sm:$0xff]
    %v1271 = vld [vmem:[%s1266 + $0x20] sm:$0xff]
    %v1272 = vld [vmem:[%s1266 + $0x28] sm:$0xff]
    %v1273 = vld [vmem:[%s1266 + $0x30] sm:$0xff]
    %v1274 = vld [vmem:[%s1266 + $0x38] sm:$0xff]
    %v1275 = vld [vmem:[%s1266 + $0x40] sm:$0xff]
    %v1276 = vld [vmem:[%s1266 + $0x48] sm:$0xff]
    %v1277 = vld [vmem:[%s1266 + $0x50] sm:$0xff]
    %v1278 = vld [vmem:[%s1266 + $0x58] sm:$0xff]
    %v1279 = vld [vmem:[%s1266 + $0x60] sm:$0xff]
    %v1280 = vld [vmem:[%s1266 + $0x68] sm:$0xff]
    %v1281 = vld [vmem:[%s1266 + $0x70] sm:$0xff]
    %v1282 = vld [vmem:[%s1266 + $0x78] sm:$0xff]
    %v1283 = vld [vmem:[%s1266 + $0x80] sm:$0xff]
    %v1284 = vld [vmem:[%s1266 + $0x88] sm:$0xff]
    %v1285 = vld [vmem:[%s1266 + $0x90] sm:$0xff]
    %v1286 = vld [vmem:[%s1266 + $0x98] sm:$0xff]
    %v1287 = vld [vmem:[%s1266 + $0xa0] sm:$0xff]
    %v1288 = vld [vmem:[%s1266 + $0xa8] sm:$0xff]
    %v1289 = vld [vmem:[%s1266 + $0xb0] sm:$0xff]
    %v1290 = vld [vmem:[%s1266 + $0xb8] sm:$0xff]
    %v1291 = vld [vmem:[%s1266 + $0xc0] sm:$0xff]
    %v1292 = vld [vmem:[%s1266 + $0xc8] sm:$0xff]
    %v1293 = vld [vmem:[%s1266 + $0xd0] sm:$0xff]
    %v1294 = vld [vmem:[%s1266 + $0xd8] sm:$0xff]
    %v1295 = vld [vmem:[%s1266 + $0xe0] sm:$0xff]
    %v1296 = vld [vmem:[%s1266 + $0xe8] sm:$0xff]
    %v1297 = vld [vmem:[%s1266 + $0xf0] sm:$0xff]
    %v1298 = vld [vmem:[%s1266 + $0xf8] sm:$0xff]
    %v1301 = vunpack.c.l.b16 %v1264
    %v1302 = vunpack.c.l.b16 %v1265
    %v1303 = vpack.c.b16 %v1302, %v1301
    %v1336 = vunpack.c.l.b16 %v1267
    %v1337 = vunpack.c.h.b16 %v1267
    %v1338 = vunpack.c.l.b16 %v1268
    %v1339 = vunpack.c.h.b16 %v1268
    %v1340 = vunpack.c.l.b16 %v1269
    %v1341 = vunpack.c.h.b16 %v1269
    %v1342 = vunpack.c.l.b16 %v1270
    %v1343 = vunpack.c.h.b16 %v1270
    %v1344 = vunpack.c.l.b16 %v1271
    %v1345 = vunpack.c.h.b16 %v1271
    %v1346 = vunpack.c.l.b16 %v1272
    %v1347 = vunpack.c.h.b16 %v1272
    %v1348 = vunpack.c.l.b16 %v1273
    %v1349 = vunpack.c.h.b16 %v1273
    %v1350 = vunpack.c.l.b16 %v1274
    %v1351 = vunpack.c.h.b16 %v1274
    %v1352 = vunpack.c.l.b16 %v1275
    %v1353 = vunpack.c.h.b16 %v1275
    %v1354 = vunpack.c.l.b16 %v1276
    %v1355 = vunpack.c.h.b16 %v1276
    %v1356 = vunpack.c.l.b16 %v1277
    %v1357 = vunpack.c.h.b16 %v1277
    %v1358 = vunpack.c.l.b16 %v1278
    %v1359 = vunpack.c.h.b16 %v1278
    %v1360 = vunpack.c.l.b16 %v1279
    %v1361 = vunpack.c.h.b16 %v1279
    %v1362 = vunpack.c.l.b16 %v1280
    %v1363 = vunpack.c.h.b16 %v1280
    %v1364 = vunpack.c.l.b16 %v1281
    %v1365 = vunpack.c.h.b16 %v1281
    %v1366 = vunpack.c.l.b16 %v1282
    %v1367 = vunpack.c.h.b16 %v1282
    %v1368 = vunpack.c.l.b16 %v1283
    %v1369 = vunpack.c.h.b16 %v1283
    %v1370 = vunpack.c.l.b16 %v1284
    %v1371 = vunpack.c.h.b16 %v1284
    %v1372 = vunpack.c.l.b16 %v1285
    %v1373 = vunpack.c.h.b16 %v1285
    %v1374 = vunpack.c.l.b16 %v1286
    %v1375 = vunpack.c.h.b16 %v1286
    %v1376 = vunpack.c.l.b16 %v1287
    %v1377 = vunpack.c.h.b16 %v1287
    %v1378 = vunpack.c.l.b16 %v1288
    %v1379 = vunpack.c.h.b16 %v1288
    %v1380 = vunpack.c.l.b16 %v1289
    %v1381 = vunpack.c.h.b16 %v1289
    %v1382 = vunpack.c.l.b16 %v1290
    %v1383 = vunpack.c.h.b16 %v1290
    %v1384 = vunpack.c.l.b16 %v1291
    %v1385 = vunpack.c.h.b16 %v1291
    %v1386 = vunpack.c.l.b16 %v1292
    %v1387 = vunpack.c.h.b16 %v1292
    %v1388 = vunpack.c.l.b16 %v1293
    %v1389 = vunpack.c.h.b16 %v1293
    %v1390 = vunpack.c.l.b16 %v1294
    %v1391 = vunpack.c.h.b16 %v1294
    %v1392 = vunpack.c.l.b16 %v1295
    %v1393 = vunpack.c.h.b16 %v1295
    %v1394 = vunpack.c.l.b16 %v1296
    %v1395 = vunpack.c.h.b16 %v1296
    %v1396 = vunpack.c.l.b16 %v1297
    %v1397 = vunpack.c.h.b16 %v1297
    %v1398 = vunpack.c.l.b16 %v1298
    %v1399 = vunpack.c.h.b16 %v1298
    %v1400 = vpack.c.b16 %v1344, %v1336
    %v1401 = vpack.c.b16 %v1345, %v1337
    %v1402 = vpack.c.b16 %v1346, %v1338
    %v1403 = vpack.c.b16 %v1347, %v1339
    %v1404 = vpack.c.b16 %v1348, %v1340
    %v1405 = vpack.c.b16 %v1349, %v1341
    %v1406 = vpack.c.b16 %v1350, %v1342
    %v1407 = vpack.c.b16 %v1351, %v1343
    %v1408 = vpack.c.b16 %v1360, %v1352
    %v1409 = vpack.c.b16 %v1361, %v1353
    %v1410 = vpack.c.b16 %v1362, %v1354
    %v1411 = vpack.c.b16 %v1363, %v1355
    %v1412 = vpack.c.b16 %v1364, %v1356
    %v1413 = vpack.c.b16 %v1365, %v1357
    %v1414 = vpack.c.b16 %v1366, %v1358
    %v1415 = vpack.c.b16 %v1367, %v1359
    %v1416 = vpack.c.b16 %v1376, %v1368
    %v1417 = vpack.c.b16 %v1377, %v1369
    %v1418 = vpack.c.b16 %v1378, %v1370
    %v1419 = vpack.c.b16 %v1379, %v1371
    %v1420 = vpack.c.b16 %v1380, %v1372
    %v1421 = vpack.c.b16 %v1381, %v1373
    %v1422 = vpack.c.b16 %v1382, %v1374
    %v1423 = vpack.c.b16 %v1383, %v1375
    %v1424 = vpack.c.b16 %v1392, %v1384
    %v1425 = vpack.c.b16 %v1393, %v1385
    %v1426 = vpack.c.b16 %v1394, %v1386
    %v1427 = vpack.c.b16 %v1395, %v1387
    %v1428 = vpack.c.b16 %v1396, %v1388
    %v1429 = vpack.c.b16 %v1397, %v1389
    %v1430 = vpack.c.b16 %v1398, %v1390
    %v1431 = vpack.c.b16 %v1399, %v1391
    %v1465 = vsel %vm285, %v1303, 0
    %1467 = vmatprep.subr.bf16.mxu0 %v1401
    %1468 = vmatpush1.bf16.msra.mxu0 %v1400
    %1469 = vmatprep.subr.bf16.mxu0 %v1409
    %1470 = vmatpush1.bf16.msra.mxu0 %v1408
    %1471 = vmatprep.subr.bf16.mxu0 %v1417
    %1472 = vmatpush1.bf16.msra.mxu0 %v1416
    %1473 = vmatprep.subr.bf16.mxu0 %v1425
    %1474 = vmatpush1.bf16.msra.mxu0 %v1424
    %1475 = vmatprep.subr.bf16.mxu0 0
    %1476 = vmatpush1.bf16.msra.mxu0 0
    %1477 = vmatprep.subr.bf16.mxu0 0
    %1478 = vmatpush1.bf16.msra.mxu0 0
    %1479 = vmatprep.subr.bf16.mxu0 0
    %1480 = vmatpush1.bf16.msra.mxu0 0
    %1481 = vmatprep.subr.bf16.mxu0 0
    %1482 = vmatpush1.bf16.msra.mxu0 0
    %1483 = vmatprep.subr.bf16.mxu0 0
    %1484 = vmatpush1.bf16.msra.mxu0 0
    %1485 = vmatprep.subr.bf16.mxu0 0
    %1486 = vmatpush1.bf16.msra.mxu0 0
    %1487 = vmatprep.subr.bf16.mxu0 0
    %1488 = vmatpush1.bf16.msra.mxu0 0
    %1489 = vmatprep.subr.bf16.mxu0 0
    %1490 = vmatpush1.bf16.msra.mxu0 0
    %1491 = vmatprep.subr.bf16.mxu0 0
    %1492 = vmatpush1.bf16.msra.mxu0 0
    %1493 = vmatprep.subr.bf16.mxu0 0
    %1494 = vmatpush1.bf16.msra.mxu0 0
    %1495 = vmatprep.subr.bf16.mxu0 0
    %1496 = vmatpush1.bf16.msra.mxu0 0
    %1497 = vmatprep.subr.bf16.mxu0 0
    %1498 = vmatpush1.bf16.msra.mxu0 0
    %1499 = vmatprep.mubr.bf16.mxu0 0
    %1500 = vmatmul.mubr.bf16.gmra.mrb[0].mxu0 %v1465
    %v1501 = vpop.f32.mrb[0].mxu0
    %v1502 = vadd.f32 0.0, %v1501
    %v1503 = vpop.f32.mrb[0].mxu0
    %v1504 = vadd.f32 0.0, %v1503
    %v1505 = vpop.f32.mrb[0].mxu0
    %v1506 = vadd.f32 0.0, %v1505
    %v1507 = vpop.f32.mrb[0].mxu0
    %v1508 = vadd.f32 0.0, %v1507
    %1509 = vdwg.mxu0
    %1510 = vmatprep.subr.bf16.mxu0 %v1403
    %1511 = vmatpush1.bf16.msra.mxu0 %v1402
    %1512 = vmatprep.subr.bf16.mxu0 %v1411
    %1513 = vmatpush1.bf16.msra.mxu0 %v1410
    %1514 = vmatprep.subr.bf16.mxu0 %v1419
    %1515 = vmatpush1.bf16.msra.mxu0 %v1418
    %1516 = vmatprep.subr.bf16.mxu0 %v1427
    %1517 = vmatpush1.bf16.msra.mxu0 %v1426
    %1518 = vmatprep.subr.bf16.mxu0 0
    %1519 = vmatpush1.bf16.msra.mxu0 0
    %1520 = vmatprep.subr.bf16.mxu0 0
    %1521 = vmatpush1.bf16.msra.mxu0 0
    %1522 = vmatprep.subr.bf16.mxu0 0
    %1523 = vmatpush1.bf16.msra.mxu0 0
    %1524 = vmatprep.subr.bf16.mxu0 0
    %1525 = vmatpush1.bf16.msra.mxu0 0
    %1526 = vmatprep.subr.bf16.mxu0 0
    %1527 = vmatpush1.bf16.msra.mxu0 0
    %1528 = vmatprep.subr.bf16.mxu0 0
    %1529 = vmatpush1.bf16.msra.mxu0 0
    %1530 = vmatprep.subr.bf16.mxu0 0
    %1531 = vmatpush1.bf16.msra.mxu0 0
    %1532 = vmatprep.subr.bf16.mxu0 0
    %1533 = vmatpush1.bf16.msra.mxu0 0
    %1534 = vmatprep.subr.bf16.mxu0 0
    %1535 = vmatpush1.bf16.msra.mxu0 0
    %1536 = vmatprep.subr.bf16.mxu0 0
    %1537 = vmatpush1.bf16.msra.mxu0 0
    %1538 = vmatprep.subr.bf16.mxu0 0
    %1539 = vmatpush1.bf16.msra.mxu0 0
    %1540 = vmatprep.subr.bf16.mxu0 0
    %1541 = vmatpush1.bf16.msra.mxu0 0
    %1542 = vmatprep.mubr.bf16.mxu0 0
    %1543 = vmatmul.mubr.bf16.gmra.mrb[0].mxu0 %v1465
    %v1544 = vpop.f32.mrb[0].mxu0
    %v1545 = vadd.f32 0.0, %v1544
    %v1546 = vpop.f32.mrb[0].mxu0
    %v1547 = vadd.f32 0.0, %v1546
    %v1548 = vpop.f32.mrb[0].mxu0
    %v1549 = vadd.f32 0.0, %v1548
    %v1550 = vpop.f32.mrb[0].mxu0
    %v1551 = vadd.f32 0.0, %v1550
    %1552 = vdwg.mxu0
    %1553 = vmatprep.subr.bf16.mxu0 %v1405
    %1554 = vmatpush1.bf16.msra.mxu0 %v1404
    %1555 = vmatprep.subr.bf16.mxu0 %v1413
    %1556 = vmatpush1.bf16.msra.mxu0 %v1412
    %1557 = vmatprep.subr.bf16.mxu0 %v1421
    %1558 = vmatpush1.bf16.msra.mxu0 %v1420
    %1559 = vmatprep.subr.bf16.mxu0 %v1429
    %1560 = vmatpush1.bf16.msra.mxu0 %v1428
    %1561 = vmatprep.subr.bf16.mxu0 0
    %1562 = vmatpush1.bf16.msra.mxu0 0
    %1563 = vmatprep.subr.bf16.mxu0 0
    %1564 = vmatpush1.bf16.msra.mxu0 0
    %1565 = vmatprep.subr.bf16.mxu0 0
    %1566 = vmatpush1.bf16.msra.mxu0 0
    %1567 = vmatprep.subr.bf16.mxu0 0
    %1568 = vmatpush1.bf16.msra.mxu0 0
    %1569 = vmatprep.subr.bf16.mxu0 0
    %1570 = vmatpush1.bf16.msra.mxu0 0
    %1571 = vmatprep.subr.bf16.mxu0 0
    %1572 = vmatpush1.bf16.msra.mxu0 0
    %1573 = vmatprep.subr.bf16.mxu0 0
    %1574 = vmatpush1.bf16.msra.mxu0 0
    %1575 = vmatprep.subr.bf16.mxu0 0
    %1576 = vmatpush1.bf16.msra.mxu0 0
    %1577 = vmatprep.subr.bf16.mxu0 0
    %1578 = vmatpush1.bf16.msra.mxu0 0
    %1579 = vmatprep.subr.bf16.mxu0 0
    %1580 = vmatpush1.bf16.msra.mxu0 0
    %1581 = vmatprep.subr.bf16.mxu0 0
    %1582 = vmatpush1.bf16.msra.mxu0 0
    %1583 = vmatprep.subr.bf16.mxu0 0
    %1584 = vmatpush1.bf16.msra.mxu0 0
    %1585 = vmatprep.mubr.bf16.mxu0 0
    %1586 = vmatmul.mubr.bf16.gmra.mrb[0].mxu0 %v1465
    %v1587 = vpop.f32.mrb[0].mxu0
    %v1588 = vadd.f32 0.0, %v1587
    %v1589 = vpop.f32.mrb[0].mxu0
    %v1590 = vadd.f32 0.0, %v1589
    %v1591 = vpop.f32.mrb[0].mxu0
    %v1592 = vadd.f32 0.0, %v1591
    %v1593 = vpop.f32.mrb[0].mxu0
    %v1594 = vadd.f32 0.0, %v1593
    %1595 = vdwg.mxu0
    %1596 = vmatprep.subr.bf16.mxu0 %v1407
    %1597 = vmatpush1.bf16.msra.mxu0 %v1406
    %1598 = vmatprep.subr.bf16.mxu0 %v1415
    %1599 = vmatpush1.bf16.msra.mxu0 %v1414
    %1600 = vmatprep.subr.bf16.mxu0 %v1423
    %1601 = vmatpush1.bf16.msra.mxu0 %v1422
    %1602 = vmatprep.subr.bf16.mxu0 %v1431
    %1603 = vmatpush1.bf16.msra.mxu0 %v1430
    %1604 = vmatprep.subr.bf16.mxu0 0
    %1605 = vmatpush1.bf16.msra.mxu0 0
    %1606 = vmatprep.subr.bf16.mxu0 0
    %1607 = vmatpush1.bf16.msra.mxu0 0
    %1608 = vmatprep.subr.bf16.mxu0 0
    %1609 = vmatpush1.bf16.msra.mxu0 0
    %1610 = vmatprep.subr.bf16.mxu0 0
    %1611 = vmatpush1.bf16.msra.mxu0 0
    %1612 = vmatprep.subr.bf16.mxu0 0
    %1613 = vmatpush1.bf16.msra.mxu0 0
    %1614 = vmatprep.subr.bf16.mxu0 0
    %1615 = vmatpush1.bf16.msra.mxu0 0
    %1616 = vmatprep.subr.bf16.mxu0 0
    %1617 = vmatpush1.bf16.msra.mxu0 0
    %1618 = vmatprep.subr.bf16.mxu0 0
    %1619 = vmatpush1.bf16.msra.mxu0 0
    %1620 = vmatprep.subr.bf16.mxu0 0
    %1621 = vmatpush1.bf16.msra.mxu0 0
    %1622 = vmatprep.subr.bf16.mxu0 0
    %1623 = vmatpush1.bf16.msra.mxu0 0
    %1624 = vmatprep.subr.bf16.mxu0 0
    %1625 = vmatpush1.bf16.msra.mxu0 0
    %1626 = vmatprep.subr.bf16.mxu0 0
    %1627 = vmatpush1.bf16.msra.mxu0 0
    %1628 = vmatprep.mubr.bf16.mxu0 0
    %1629 = vmatmul.mubr.bf16.gmra.mrb[0].mxu0 %v1465
    %v1630 = vpop.f32.mrb[0].mxu0
    %v1631 = vadd.f32 0.0, %v1630
    %v1632 = vpop.f32.mrb[0].mxu0
    %v1633 = vadd.f32 0.0, %v1632
    %v1634 = vpop.f32.mrb[0].mxu0
    %v1635 = vadd.f32 0.0, %v1634
    %v1636 = vpop.f32.mrb[0].mxu0
    %v1637 = vadd.f32 0.0, %v1636
    %1638 = vdwg.mxu0
    %s1639 = scalar_lea.vmem [#allocation2], 384
    %1640 = vst [vmem:[%s1639] sm:$0xff] %v1502
    %1641 = vst [vmem:[%s1639 + $0x8] sm:$0xff] %v1504
    %1642 = vst [vmem:[%s1639 + $0x10] sm:$0xff] %v1545
    %1643 = vst [vmem:[%s1639 + $0x18] sm:$0xff] %v1547
    %1644 = vst [vmem:[%s1639 + $0x20] sm:$0xff] %v1588
    %1645 = vst [vmem:[%s1639 + $0x28] sm:$0xff] %v1590
    %1646 = vst [vmem:[%s1639 + $0x30] sm:$0xff] %v1631
    %1647 = vst [vmem:[%s1639 + $0x38] sm:$0xff] %v1633
    %1648 = vst [vmem:[%s1639 + $0x40] sm:$0xff] %v1506
    %1649 = vst [vmem:[%s1639 + $0x48] sm:$0xff] %v1508
    %1650 = vst [vmem:[%s1639 + $0x50] sm:$0xff] %v1549
    %1651 = vst [vmem:[%s1639 + $0x58] sm:$0xff] %v1551
    %1652 = vst [vmem:[%s1639 + $0x60] sm:$0xff] %v1592
    %1653 = vst [vmem:[%s1639 + $0x68] sm:$0xff] %v1594
    %1654 = vst [vmem:[%s1639 + $0x70] sm:$0xff] %v1635
    %1655 = vst [vmem:[%s1639 + $0x78] sm:$0xff] %v1637
    %v1656 = vld [vmem:[#allocation2] sm:$0xff]
    %v1657 = vld [vmem:[#allocation2 + $0x8] sm:$0xff]
    %v1658 = vld [vmem:[#allocation2 + $0x10] sm:$0xff]
    %v1659 = vld [vmem:[#allocation2 + $0x18] sm:$0xff]
    %v1660 = vld [vmem:[#allocation2 + $0x20] sm:$0xff]
    %v1661 = vld [vmem:[#allocation2 + $0x28] sm:$0xff]
    %v1662 = vld [vmem:[#allocation2 + $0x30] sm:$0xff]
    %v1663 = vld [vmem:[#allocation2 + $0x38] sm:$0xff]
    %v1664 = vld [vmem:[#allocation2 + $0x40] sm:$0xff]
    %v1665 = vld [vmem:[#allocation2 + $0x48] sm:$0xff]
    %v1666 = vld [vmem:[#allocation2 + $0x50] sm:$0xff]
    %v1667 = vld [vmem:[#allocation2 + $0x58] sm:$0xff]
    %v1668 = vld [vmem:[#allocation2 + $0x60] sm:$0xff]
    %v1669 = vld [vmem:[#allocation2 + $0x68] sm:$0xff]
    %v1670 = vld [vmem:[#allocation2 + $0x70] sm:$0xff]
    %v1671 = vld [vmem:[#allocation2 + $0x78] sm:$0xff]
    %v1672 = vld [vmem:[#allocation2 + $0x80] sm:$0xff]
    %v1673 = vld [vmem:[#allocation2 + $0x88] sm:$0xff]
    %v1674 = vld [vmem:[#allocation2 + $0x90] sm:$0xff]
    %v1675 = vld [vmem:[#allocation2 + $0x98] sm:$0xff]
    %v1676 = vld [vmem:[#allocation2 + $0xa0] sm:$0xff]
    %v1677 = vld [vmem:[#allocation2 + $0xa8] sm:$0xff]
    %v1678 = vld [vmem:[#allocation2 + $0xb0] sm:$0xff]
    %v1679 = vld [vmem:[#allocation2 + $0xb8] sm:$0xff]
    %v1680 = vld [vmem:[#allocation2 + $0xc0] sm:$0xff]
    %v1681 = vld [vmem:[#allocation2 + $0xc8] sm:$0xff]
    %v1682 = vld [vmem:[#allocation2 + $0xd0] sm:$0xff]
    %v1683 = vld [vmem:[#allocation2 + $0xd8] sm:$0xff]
    %v1684 = vld [vmem:[#allocation2 + $0xe0] sm:$0xff]
    %v1685 = vld [vmem:[#allocation2 + $0xe8] sm:$0xff]
    %v1686 = vld [vmem:[#allocation2 + $0xf0] sm:$0xff]
    %v1687 = vld [vmem:[#allocation2 + $0xf8] sm:$0xff]
    %v1688 = vld [vmem:[#allocation2 + $0x100] sm:$0xff]
    %v1689 = vld [vmem:[#allocation2 + $0x108] sm:$0xff]
    %v1690 = vld [vmem:[#allocation2 + $0x110] sm:$0xff]
    %v1691 = vld [vmem:[#allocation2 + $0x118] sm:$0xff]
    %v1692 = vld [vmem:[#allocation2 + $0x120] sm:$0xff]
    %v1693 = vld [vmem:[#allocation2 + $0x128] sm:$0xff]
    %v1694 = vld [vmem:[#allocation2 + $0x130] sm:$0xff]
    %v1695 = vld [vmem:[#allocation2 + $0x138] sm:$0xff]
    %v1696 = vld [vmem:[#allocation2 + $0x140] sm:$0xff]
    %v1697 = vld [vmem:[#allocation2 + $0x148] sm:$0xff]
    %v1698 = vld [vmem:[#allocation2 + $0x150] sm:$0xff]
    %v1699 = vld [vmem:[#allocation2 + $0x158] sm:$0xff]
    %v1700 = vld [vmem:[#allocation2 + $0x160] sm:$0xff]
    %v1701 = vld [vmem:[#allocation2 + $0x168] sm:$0xff]
    %v1702 = vld [vmem:[#allocation2 + $0x170] sm:$0xff]
    %v1703 = vld [vmem:[#allocation2 + $0x178] sm:$0xff]
    %v1704 = vld [vmem:[#allocation2 + $0x180] sm:$0xff]
    %v1705 = vld [vmem:[#allocation2 + $0x188] sm:$0xff]
    %v1706 = vld [vmem:[#allocation2 + $0x190] sm:$0xff]
    %v1707 = vld [vmem:[#allocation2 + $0x198] sm:$0xff]
    %v1708 = vld [vmem:[#allocation2 + $0x1a0] sm:$0xff]
    %v1709 = vld [vmem:[#allocation2 + $0x1a8] sm:$0xff]
    %v1710 = vld [vmem:[#allocation2 + $0x1b0] sm:$0xff]
    %v1711 = vld [vmem:[#allocation2 + $0x1b8] sm:$0xff]
    %v1712 = vld [vmem:[#allocation2 + $0x1c0] sm:$0xff]
    %v1713 = vld [vmem:[#allocation2 + $0x1c8] sm:$0xff]
    %v1714 = vld [vmem:[#allocation2 + $0x1d0] sm:$0xff]
    %v1715 = vld [vmem:[#allocation2 + $0x1d8] sm:$0xff]
    %v1716 = vld [vmem:[#allocation2 + $0x1e0] sm:$0xff]
    %v1717 = vld [vmem:[#allocation2 + $0x1e8] sm:$0xff]
    %v1718 = vld [vmem:[#allocation2 + $0x1f0] sm:$0xff]
    %v1719 = vld [vmem:[#allocation2 + $0x1f8] sm:$0xff]
    %v1720 = vadd.f32 %v1656, %v1657
    %v1721 = vadd.f32 %v1720, %v1658
    %v1722 = vadd.f32 %v1721, %v1659
    %v1723 = vadd.f32 %v1722, %v1660
    %v1724 = vadd.f32 %v1723, %v1661
    %v1725 = vadd.f32 %v1724, %v1662
    %v1726 = vadd.f32 %v1725, %v1663
    %1727 = vadd.xlane.f32.xlu0 %v1726
    %v1728 = vpop.xlane.xlu0 %1727
    %v1729 = vadd.f32 %v1664, %v1665
    %v1730 = vadd.f32 %v1729, %v1666
    %v1731 = vadd.f32 %v1730, %v1667
    %v1732 = vadd.f32 %v1731, %v1668
    %v1733 = vadd.f32 %v1732, %v1669
    %v1734 = vadd.f32 %v1733, %v1670
    %v1735 = vadd.f32 %v1734, %v1671
    %1736 = vadd.xlane.f32.xlu0 %v1735
    %v1737 = vpop.xlane.xlu0 %1736
    %v1738 = vadd.f32 %v1672, %v1673
    %v1739 = vadd.f32 %v1738, %v1674
    %v1740 = vadd.f32 %v1739, %v1675
    %v1741 = vadd.f32 %v1740, %v1676
    %v1742 = vadd.f32 %v1741, %v1677
    %v1743 = vadd.f32 %v1742, %v1678
    %v1744 = vadd.f32 %v1743, %v1679
    %1745 = vadd.xlane.f32.xlu0 %v1744
    %v1746 = vpop.xlane.xlu0 %1745
    %v1747 = vadd.f32 %v1680, %v1681
    %v1748 = vadd.f32 %v1747, %v1682
    %v1749 = vadd.f32 %v1748, %v1683
    %v1750 = vadd.f32 %v1749, %v1684
    %v1751 = vadd.f32 %v1750, %v1685
    %v1752 = vadd.f32 %v1751, %v1686
    %v1753 = vadd.f32 %v1752, %v1687
    %1754 = vadd.xlane.f32.xlu0 %v1753
    %v1755 = vpop.xlane.xlu0 %1754
    %v1756 = vadd.f32 %v1688, %v1689
    %v1757 = vadd.f32 %v1756, %v1690
    %v1758 = vadd.f32 %v1757, %v1691
    %v1759 = vadd.f32 %v1758, %v1692
    %v1760 = vadd.f32 %v1759, %v1693
    %v1761 = vadd.f32 %v1760, %v1694
    %v1762 = vadd.f32 %v1761, %v1695
    %1763 = vadd.xlane.f32.xlu0 %v1762
    %v1764 = vpop.xlane.xlu0 %1763
    %v1765 = vadd.f32 %v1696, %v1697
    %v1766 = vadd.f32 %v1765, %v1698
    %v1767 = vadd.f32 %v1766, %v1699
    %v1768 = vadd.f32 %v1767, %v1700
    %v1769 = vadd.f32 %v1768, %v1701
    %v1770 = vadd.f32 %v1769, %v1702
    %v1771 = vadd.f32 %v1770, %v1703
    %1772 = vadd.xlane.f32.xlu0 %v1771
    %v1773 = vpop.xlane.xlu0 %1772
    %v1774 = vadd.f32 %v1704, %v1705
    %v1775 = vadd.f32 %v1774, %v1706
    %v1776 = vadd.f32 %v1775, %v1707
    %v1777 = vadd.f32 %v1776, %v1708
    %v1778 = vadd.f32 %v1777, %v1709
    %v1779 = vadd.f32 %v1778, %v1710
    %v1780 = vadd.f32 %v1779, %v1711
    %1781 = vadd.xlane.f32.xlu0 %v1780
    %v1782 = vpop.xlane.xlu0 %1781
    %v1783 = vadd.f32 %v1712, %v1713
    %v1784 = vadd.f32 %v1783, %v1714
    %v1785 = vadd.f32 %v1784, %v1715
    %v1786 = vadd.f32 %v1785, %v1716
    %v1787 = vadd.f32 %v1786, %v1717
    %v1788 = vadd.f32 %v1787, %v1718
    %v1789 = vadd.f32 %v1788, %v1719
    %1790 = vadd.xlane.f32.xlu0 %v1789
    %v1791 = vpop.xlane.xlu0 %1790
    %v1792 = vrcp.pop 1024.0
    %v1793 = vmul.f32 %v1728, %v1792
    %v1794 = vmul.f32 %v1737, %v1792
    %v1795 = vmul.f32 %v1746, %v1792
    %v1796 = vmul.f32 %v1755, %v1792
    %v1797 = vmul.f32 %v1764, %v1792
    %v1798 = vmul.f32 %v1773, %v1792
    %v1799 = vmul.f32 %v1782, %v1792
    %v1800 = vmul.f32 %v1791, %v1792
    %v1801 = vadd.f32 %v1793, %v1795
    %v1802 = vadd.f32 %v1801, %v1797
    %v1803 = vadd.f32 %v1802, %v1799
    %v1804 = vadd.f32 %v1794, %v1796
    %v1805 = vadd.f32 %v1804, %v1798
    %v1806 = vadd.f32 %v1805, %v1800
    %v1807 = vrcp.pop 4.0
    %v1808 = vmul.f32 %v1803, %v1807
    %v1809 = vmul.f32 %v1806, %v1807
    %v1810 = vmul.f32 %v1656, %v1656
    %v1811 = vmul.f32 %v1657, %v1657
    %v1812 = vmul.f32 %v1658, %v1658
    %v1813 = vmul.f32 %v1659, %v1659
    %v1814 = vmul.f32 %v1660, %v1660
    %v1815 = vmul.f32 %v1661, %v1661
    %v1816 = vmul.f32 %v1662, %v1662
    %v1817 = vmul.f32 %v1663, %v1663
    %v1818 = vmul.f32 %v1664, %v1664
    %v1819 = vmul.f32 %v1665, %v1665
    %v1820 = vmul.f32 %v1666, %v1666
    %v1821 = vmul.f32 %v1667, %v1667
    %v1822 = vmul.f32 %v1668, %v1668
    %v1823 = vmul.f32 %v1669, %v1669
    %v1824 = vmul.f32 %v1670, %v1670
    %v1825 = vmul.f32 %v1671, %v1671
    %v1826 = vmul.f32 %v1672, %v1672
    %v1827 = vmul.f32 %v1673, %v1673
    %v1828 = vmul.f32 %v1674, %v1674
    %v1829 = vmul.f32 %v1675, %v1675
    %v1830 = vmul.f32 %v1676, %v1676
    %v1831 = vmul.f32 %v1677, %v1677
    %v1832 = vmul.f32 %v1678, %v1678
    %v1833 = vmul.f32 %v1679, %v1679
    %v1834 = vmul.f32 %v1680, %v1680
    %v1835 = vmul.f32 %v1681, %v1681
    %v1836 = vmul.f32 %v1682, %v1682
    %v1837 = vmul.f32 %v1683, %v1683
    %v1838 = vmul.f32 %v1684, %v1684
    %v1839 = vmul.f32 %v1685, %v1685
    %v1840 = vmul.f32 %v1686, %v1686
    %v1841 = vmul.f32 %v1687, %v1687
    %v1842 = vmul.f32 %v1688, %v1688
    %v1843 = vmul.f32 %v1689, %v1689
    %v1844 = vmul.f32 %v1690, %v1690
    %v1845 = vmul.f32 %v1691, %v1691
    %v1846 = vmul.f32 %v1692, %v1692
    %v1847 = vmul.f32 %v1693, %v1693
    %v1848 = vmul.f32 %v1694, %v1694
    %v1849 = vmul.f32 %v1695, %v1695
    %v1850 = vmul.f32 %v1696, %v1696
    %v1851 = vmul.f32 %v1697, %v1697
    %v1852 = vmul.f32 %v1698, %v1698
    %v1853 = vmul.f32 %v1699, %v1699
    %v1854 = vmul.f32 %v1700, %v1700
    %v1855 = vmul.f32 %v1701, %v1701
    %v1856 = vmul.f32 %v1702, %v1702
    %v1857 = vmul.f32 %v1703, %v1703
    %v1858 = vmul.f32 %v1704, %v1704
    %v1859 = vmul.f32 %v1705, %v1705
    %v1860 = vmul.f32 %v1706, %v1706
    %v1861 = vmul.f32 %v1707, %v1707
    %v1862 = vmul.f32 %v1708, %v1708
    %v1863 = vmul.f32 %v1709, %v1709
    %v1864 = vmul.f32 %v1710, %v1710
    %v1865 = vmul.f32 %v1711, %v1711
    %v1866 = vmul.f32 %v1712, %v1712
    %v1867 = vmul.f32 %v1713, %v1713
    %v1868 = vmul.f32 %v1714, %v1714
    %v1869 = vmul.f32 %v1715, %v1715
    %v1870 = vmul.f32 %v1716, %v1716
    %v1871 = vmul.f32 %v1717, %v1717
    %v1872 = vmul.f32 %v1718, %v1718
    %v1873 = vmul.f32 %v1719, %v1719
    %v1874 = vadd.f32 %v1810, %v1811
    %v1875 = vadd.f32 %v1874, %v1812
    %v1876 = vadd.f32 %v1875, %v1813
    %v1877 = vadd.f32 %v1876, %v1814
    %v1878 = vadd.f32 %v1877, %v1815
    %v1879 = vadd.f32 %v1878, %v1816
    %v1880 = vadd.f32 %v1879, %v1817
    %1881 = vadd.xlane.f32.xlu0 %v1880
    %v1882 = vpop.xlane.xlu0 %1881
    %v1883 = vadd.f32 %v1818, %v1819
    %v1884 = vadd.f32 %v1883, %v1820
    %v1885 = vadd.f32 %v1884, %v1821
    %v1886 = vadd.f32 %v1885, %v1822
    %v1887 = vadd.f32 %v1886, %v1823
    %v1888 = vadd.f32 %v1887, %v1824
    %v1889 = vadd.f32 %v1888, %v1825
    %1890 = vadd.xlane.f32.xlu0 %v1889
    %v1891 = vpop.xlane.xlu0 %1890
    %v1892 = vadd.f32 %v1826, %v1827
    %v1893 = vadd.f32 %v1892, %v1828
    %v1894 = vadd.f32 %v1893, %v1829
    %v1895 = vadd.f32 %v1894, %v1830
    %v1896 = vadd.f32 %v1895, %v1831
    %v1897 = vadd.f32 %v1896, %v1832
    %v1898 = vadd.f32 %v1897, %v1833
    %1899 = vadd.xlane.f32.xlu0 %v1898
    %v1900 = vpop.xlane.xlu0 %1899
    %v1901 = vadd.f32 %v1834, %v1835
    %v1902 = vadd.f32 %v1901, %v1836
    %v1903 = vadd.f32 %v1902, %v1837
    %v1904 = vadd.f32 %v1903, %v1838
    %v1905 = vadd.f32 %v1904, %v1839
    %v1906 = vadd.f32 %v1905, %v1840
    %v1907 = vadd.f32 %v1906, %v1841
    %1908 = vadd.xlane.f32.xlu0 %v1907
    %v1909 = vpop.xlane.xlu0 %1908
    %v1910 = vadd.f32 %v1842, %v1843
    %v1911 = vadd.f32 %v1910, %v1844
    %v1912 = vadd.f32 %v1911, %v1845
    %v1913 = vadd.f32 %v1912, %v1846
    %v1914 = vadd.f32 %v1913, %v1847
    %v1915 = vadd.f32 %v1914, %v1848
    %v1916 = vadd.f32 %v1915, %v1849
    %1917 = vadd.xlane.f32.xlu0 %v1916
    %v1918 = vpop.xlane.xlu0 %1917
    %v1919 = vadd.f32 %v1850, %v1851
    %v1920 = vadd.f32 %v1919, %v1852
    %v1921 = vadd.f32 %v1920, %v1853
    %v1922 = vadd.f32 %v1921, %v1854
    %v1923 = vadd.f32 %v1922, %v1855
    %v1924 = vadd.f32 %v1923, %v1856
    %v1925 = vadd.f32 %v1924, %v1857
    %1926 = vadd.xlane.f32.xlu0 %v1925
    %v1927 = vpop.xlane.xlu0 %1926
    %v1928 = vadd.f32 %v1858, %v1859
    %v1929 = vadd.f32 %v1928, %v1860
    %v1930 = vadd.f32 %v1929, %v1861
    %v1931 = vadd.f32 %v1930, %v1862
    %v1932 = vadd.f32 %v1931, %v1863
    %v1933 = vadd.f32 %v1932, %v1864
    %v1934 = vadd.f32 %v1933, %v1865
    %1935 = vadd.xlane.f32.xlu0 %v1934
    %v1936 = vpop.xlane.xlu0 %1935
    %v1937 = vadd.f32 %v1866, %v1867
    %v1938 = vadd.f32 %v1937, %v1868
    %v1939 = vadd.f32 %v1938, %v1869
    %v1940 = vadd.f32 %v1939, %v1870
    %v1941 = vadd.f32 %v1940, %v1871
    %v1942 = vadd.f32 %v1941, %v1872
    %v1943 = vadd.f32 %v1942, %v1873
    %1944 = vadd.xlane.f32.xlu0 %v1943
    %v1945 = vpop.xlane.xlu0 %1944
    %v1946 = vmul.f32 %v1882, %v1792
    %v1947 = vmul.f32 %v1891, %v1792
    %v1948 = vmul.f32 %v1900, %v1792
    %v1949 = vmul.f32 %v1909, %v1792
    %v1950 = vmul.f32 %v1918, %v1792
    %v1951 = vmul.f32 %v1927, %v1792
    %v1952 = vmul.f32 %v1936, %v1792
    %v1953 = vmul.f32 %v1945, %v1792
    %v1954 = vadd.f32 %v1946, %v1948
    %v1955 = vadd.f32 %v1954, %v1950
    %v1956 = vadd.f32 %v1955, %v1952
    %v1957 = vadd.f32 %v1947, %v1949
    %v1958 = vadd.f32 %v1957, %v1951
    %v1959 = vadd.f32 %v1958, %v1953
    %v1960 = vmul.f32 %v1956, %v1807
    %v1961 = vmul.f32 %v1959, %v1807
    %v1962 = vmul.f32 %v1808, %v1808
    %v1963 = vmul.f32 %v1809, %v1809
    %v1964 = vsub.f32 %v1960, %v1962
    %v1965 = vsub.f32 %v1961, %v1963
    %v1966 = vmax.f32 %v1964, 0.0
    %v1967 = vmax.f32 %v1965, 0.0
    %v1968 = vadd.f32 %v1966, 1e-05
    %v1969 = vadd.f32 %v1967, 1e-05
    %v1970 = vrsqrt.pop %v1968
    %v1971 = vrsqrt.pop %v1969
    %v1972 = vld [vmem:[#allocation8] sm:$0xff]
    %v1973 = vld [vmem:[#allocation8 + $0x8] sm:$0xff]
    %v1974 = vmul.f32 %v1656, %v1970
    %v1975 = vmul.f32 %v1657, %v1970
    %v1976 = vmul.f32 %v1658, %v1970
    %v1977 = vmul.f32 %v1659, %v1970
    %v1978 = vmul.f32 %v1660, %v1970
    %v1979 = vmul.f32 %v1661, %v1970
    %v1980 = vmul.f32 %v1662, %v1970
    %v1981 = vmul.f32 %v1663, %v1970
    %v1982 = vmul.f32 %v1664, %v1971
    %v1983 = vmul.f32 %v1665, %v1971
    %v1984 = vmul.f32 %v1666, %v1971
    %v1985 = vmul.f32 %v1667, %v1971
    %v1986 = vmul.f32 %v1668, %v1971
    %v1987 = vmul.f32 %v1669, %v1971
    %v1988 = vmul.f32 %v1670, %v1971
    %v1989 = vmul.f32 %v1671, %v1971
    %v1990 = vmul.f32 %v1672, %v1970
    %v1991 = vmul.f32 %v1673, %v1970
    %v1992 = vmul.f32 %v1674, %v1970
    %v1993 = vmul.f32 %v1675, %v1970
    %v1994 = vmul.f32 %v1676, %v1970
    %v1995 = vmul.f32 %v1677, %v1970
    %v1996 = vmul.f32 %v1678, %v1970
    %v1997 = vmul.f32 %v1679, %v1970
    %v1998 = vmul.f32 %v1680, %v1971
    %v1999 = vmul.f32 %v1681, %v1971
    %v2000 = vmul.f32 %v1682, %v1971
    %v2001 = vmul.f32 %v1683, %v1971
    %v2002 = vmul.f32 %v1684, %v1971
    %v2003 = vmul.f32 %v1685, %v1971
    %v2004 = vmul.f32 %v1686, %v1971
    %v2005 = vmul.f32 %v1687, %v1971
    %v2006 = vmul.f32 %v1688, %v1970
    %v2007 = vmul.f32 %v1689, %v1970
    %v2008 = vmul.f32 %v1690, %v1970
    %v2009 = vmul.f32 %v1691, %v1970
    %v2010 = vmul.f32 %v1692, %v1970
    %v2011 = vmul.f32 %v1693, %v1970
    %v2012 = vmul.f32 %v1694, %v1970
    %v2013 = vmul.f32 %v1695, %v1970
    %v2014 = vmul.f32 %v1696, %v1971
    %v2015 = vmul.f32 %v1697, %v1971
    %v2016 = vmul.f32 %v1698, %v1971
    %v2017 = vmul.f32 %v1699, %v1971
    %v2018 = vmul.f32 %v1700, %v1971
    %v2019 = vmul.f32 %v1701, %v1971
    %v2020 = vmul.f32 %v1702, %v1971
    %v2021 = vmul.f32 %v1703, %v1971
    %v2022 = vmul.f32 %v1704, %v1970
    %v2023 = vmul.f32 %v1705, %v1970
    %v2024 = vmul.f32 %v1706, %v1970
    %v2025 = vmul.f32 %v1707, %v1970
    %v2026 = vmul.f32 %v1708, %v1970
    %v2027 = vmul.f32 %v1709, %v1970
    %v2028 = vmul.f32 %v1710, %v1970
    %v2029 = vmul.f32 %v1711, %v1970
    %v2030 = vmul.f32 %v1712, %v1971
    %v2031 = vmul.f32 %v1713, %v1971
    %v2032 = vmul.f32 %v1714, %v1971
    %v2033 = vmul.f32 %v1715, %v1971
    %v2034 = vmul.f32 %v1716, %v1971
    %v2035 = vmul.f32 %v1717, %v1971
    %v2036 = vmul.f32 %v1718, %v1971
    %v2037 = vmul.f32 %v1719, %v1971
    %v2038 = vmul.f32 %v1808, %v1970
    %v2039 = vmul.f32 %v1809, %v1971
    %v2040 = vsub.f32 %v1972, %v2038
    %v2041 = vsub.f32 %v1973, %v2039
    %2043 = vset.pattern.permute.xlu0 0
    %2044 = vperm.xlu0 %2043, %v2040
    %v2045 = vpop.permute.xlu0 %2044
    %2048 = vset.pattern.permute.xlu0 0
    %2049 = vperm.xlu0 %2048, %v2041
    %v2050 = vpop.permute.xlu0 %2049
    %v2052 = vadd.f32 %v1974, %v2045
    %v2053 = vadd.f32 %v1975, %v2045
    %v2054 = vadd.f32 %v1976, %v2045
    %v2055 = vadd.f32 %v1977, %v2045
    %v2056 = vadd.f32 %v1978, %v2045
    %v2057 = vadd.f32 %v1979, %v2045
    %v2058 = vadd.f32 %v1980, %v2045
    %v2059 = vadd.f32 %v1981, %v2045
    %v2060 = vadd.f32 %v1982, %v2050
    %v2061 = vadd.f32 %v1983, %v2050
    %v2062 = vadd.f32 %v1984, %v2050
    %v2063 = vadd.f32 %v1985, %v2050
    %v2064 = vadd.f32 %v1986, %v2050
    %v2065 = vadd.f32 %v1987, %v2050
    %v2066 = vadd.f32 %v1988, %v2050
    %v2067 = vadd.f32 %v1989, %v2050
    %v2068 = vadd.f32 %v1990, %v2045
    %v2069 = vadd.f32 %v1991, %v2045
    %v2070 = vadd.f32 %v1992, %v2045
    %v2071 = vadd.f32 %v1993, %v2045
    %v2072 = vadd.f32 %v1994, %v2045
    %v2073 = vadd.f32 %v1995, %v2045
    %v2074 = vadd.f32 %v1996, %v2045
    %v2075 = vadd.f32 %v1997, %v2045
    %v2076 = vadd.f32 %v1998, %v2050
    %v2077 = vadd.f32 %v1999, %v2050
    %v2078 = vadd.f32 %v2000, %v2050
    %v2079 = vadd.f32 %v2001, %v2050
    %v2080 = vadd.f32 %v2002, %v2050
    %v2081 = vadd.f32 %v2003, %v2050
    %v2082 = vadd.f32 %v2004, %v2050
    %v2083 = vadd.f32 %v2005, %v2050
    %v2084 = vadd.f32 %v2006, %v2045
    %v2085 = vadd.f32 %v2007, %v2045
    %v2086 = vadd.f32 %v2008, %v2045
    %v2087 = vadd.f32 %v2009, %v2045
    %v2088 = vadd.f32 %v2010, %v2045
    %v2089 = vadd.f32 %v2011, %v2045
    %v2090 = vadd.f32 %v2012, %v2045
    %v2091 = vadd.f32 %v2013, %v2045
    %v2092 = vadd.f32 %v2014, %v2050
    %v2093 = vadd.f32 %v2015, %v2050
    %v2094 = vadd.f32 %v2016, %v2050
    %v2095 = vadd.f32 %v2017, %v2050
    %v2096 = vadd.f32 %v2018, %v2050
    %v2097 = vadd.f32 %v2019, %v2050
    %v2098 = vadd.f32 %v2020, %v2050
    %v2099 = vadd.f32 %v2021, %v2050
    %v2100 = vadd.f32 %v2022, %v2045
    %v2101 = vadd.f32 %v2023, %v2045
    %v2102 = vadd.f32 %v2024, %v2045
    %v2103 = vadd.f32 %v2025, %v2045
    %v2104 = vadd.f32 %v2026, %v2045
    %v2105 = vadd.f32 %v2027, %v2045
    %v2106 = vadd.f32 %v2028, %v2045
    %v2107 = vadd.f32 %v2029, %v2045
    %v2108 = vadd.f32 %v2030, %v2050
    %v2109 = vadd.f32 %v2031, %v2050
    %v2110 = vadd.f32 %v2032, %v2050
    %v2111 = vadd.f32 %v2033, %v2050
    %v2112 = vadd.f32 %v2034, %v2050
    %v2113 = vadd.f32 %v2035, %v2050
    %v2114 = vadd.f32 %v2036, %v2050
    %v2115 = vadd.f32 %v2037, %v2050
    %vm2116 = vcmp.ge.f32.partialorder %v2052, 0.0
    %vm2117 = vcmp.ge.f32.partialorder %v2053, 0.0
    %vm2118 = vcmp.ge.f32.partialorder %v2054, 0.0
    %vm2119 = vcmp.ge.f32.partialorder %v2055, 0.0
    %vm2120 = vcmp.ge.f32.partialorder %v2056, 0.0
    %vm2121 = vcmp.ge.f32.partialorder %v2057, 0.0
    %vm2122 = vcmp.ge.f32.partialorder %v2058, 0.0
    %vm2123 = vcmp.ge.f32.partialorder %v2059, 0.0
    %vm2124 = vcmp.ge.f32.partialorder %v2060, 0.0
    %vm2125 = vcmp.ge.f32.partialorder %v2061, 0.0
    %vm2126 = vcmp.ge.f32.partialorder %v2062, 0.0
    %vm2127 = vcmp.ge.f32.partialorder %v2063, 0.0
    %vm2128 = vcmp.ge.f32.partialorder %v2064, 0.0
    %vm2129 = vcmp.ge.f32.partialorder %v2065, 0.0
    %vm2130 = vcmp.ge.f32.partialorder %v2066, 0.0
    %vm2131 = vcmp.ge.f32.partialorder %v2067, 0.0
    %vm2132 = vcmp.ge.f32.partialorder %v2068, 0.0
    %vm2133 = vcmp.ge.f32.partialorder %v2069, 0.0
    %vm2134 = vcmp.ge.f32.partialorder %v2070, 0.0
    %vm2135 = vcmp.ge.f32.partialorder %v2071, 0.0
    %vm2136 = vcmp.ge.f32.partialorder %v2072, 0.0
    %vm2137 = vcmp.ge.f32.partialorder %v2073, 0.0
    %vm2138 = vcmp.ge.f32.partialorder %v2074, 0.0
    %vm2139 = vcmp.ge.f32.partialorder %v2075, 0.0
    %vm2140 = vcmp.ge.f32.partialorder %v2076, 0.0
    %vm2141 = vcmp.ge.f32.partialorder %v2077, 0.0
    %vm2142 = vcmp.ge.f32.partialorder %v2078, 0.0
    %vm2143 = vcmp.ge.f32.partialorder %v2079, 0.0
    %vm2144 = vcmp.ge.f32.partialorder %v2080, 0.0
    %vm2145 = vcmp.ge.f32.partialorder %v2081, 0.0
    %vm2146 = vcmp.ge.f32.partialorder %v2082, 0.0
    %vm2147 = vcmp.ge.f32.partialorder %v2083, 0.0
    %vm2148 = vcmp.ge.f32.partialorder %v2084, 0.0
    %vm2149 = vcmp.ge.f32.partialorder %v2085, 0.0
    %vm2150 = vcmp.ge.f32.partialorder %v2086, 0.0
    %vm2151 = vcmp.ge.f32.partialorder %v2087, 0.0
    %vm2152 = vcmp.ge.f32.partialorder %v2088, 0.0
    %vm2153 = vcmp.ge.f32.partialorder %v2089, 0.0
    %vm2154 = vcmp.ge.f32.partialorder %v2090, 0.0
    %vm2155 = vcmp.ge.f32.partialorder %v2091, 0.0
    %vm2156 = vcmp.ge.f32.partialorder %v2092, 0.0
    %vm2157 = vcmp.ge.f32.partialorder %v2093, 0.0
    %vm2158 = vcmp.ge.f32.partialorder %v2094, 0.0
    %vm2159 = vcmp.ge.f32.partialorder %v2095, 0.0
    %vm2160 = vcmp.ge.f32.partialorder %v2096, 0.0
    %vm2161 = vcmp.ge.f32.partialorder %v2097, 0.0
    %vm2162 = vcmp.ge.f32.partialorder %v2098, 0.0
    %vm2163 = vcmp.ge.f32.partialorder %v2099, 0.0
    %vm2164 = vcmp.ge.f32.partialorder %v2100, 0.0
    %vm2165 = vcmp.ge.f32.partialorder %v2101, 0.0
    %vm2166 = vcmp.ge.f32.partialorder %v2102, 0.0
    %vm2167 = vcmp.ge.f32.partialorder %v2103, 0.0
    %vm2168 = vcmp.ge.f32.partialorder %v2104, 0.0
    %vm2169 = vcmp.ge.f32.partialorder %v2105, 0.0
    %vm2170 = vcmp.ge.f32.partialorder %v2106, 0.0
    %vm2171 = vcmp.ge.f32.partialorder %v2107, 0.0
    %vm2172 = vcmp.ge.f32.partialorder %v2108, 0.0
    %vm2173 = vcmp.ge.f32.partialorder %v2109, 0.0
    %vm2174 = vcmp.ge.f32.partialorder %v2110, 0.0
    %vm2175 = vcmp.ge.f32.partialorder %v2111, 0.0
    %vm2176 = vcmp.ge.f32.partialorder %v2112, 0.0
    %vm2177 = vcmp.ge.f32.partialorder %v2113, 0.0
    %vm2178 = vcmp.ge.f32.partialorder %v2114, 0.0
    %vm2179 = vcmp.ge.f32.partialorder %v2115, 0.0
    %v2180 = vmul.f32 %v2052, 0.01
    %v2181 = vmul.f32 %v2053, 0.01
    %v2182 = vmul.f32 %v2054, 0.01
    %v2183 = vmul.f32 %v2055, 0.01
    %v2184 = vmul.f32 %v2056, 0.01
    %v2185 = vmul.f32 %v2057, 0.01
    %v2186 = vmul.f32 %v2058, 0.01
    %v2187 = vmul.f32 %v2059, 0.01
    %v2188 = vmul.f32 %v2060, 0.01
    %v2189 = vmul.f32 %v2061, 0.01
    %v2190 = vmul.f32 %v2062, 0.01
    %v2191 = vmul.f32 %v2063, 0.01
    %v2192 = vmul.f32 %v2064, 0.01
    %v2193 = vmul.f32 %v2065, 0.01
    %v2194 = vmul.f32 %v2066, 0.01
    %v2195 = vmul.f32 %v2067, 0.01
    %v2196 = vmul.f32 %v2068, 0.01
    %v2197 = vmul.f32 %v2069, 0.01
    %v2198 = vmul.f32 %v2070, 0.01
    %v2199 = vmul.f32 %v2071, 0.01
    %v2200 = vmul.f32 %v2072, 0.01
    %v2201 = vmul.f32 %v2073, 0.01
    %v2202 = vmul.f32 %v2074, 0.01
    %v2203 = vmul.f32 %v2075, 0.01
    %v2204 = vmul.f32 %v2076, 0.01
    %v2205 = vmul.f32 %v2077, 0.01
    %v2206 = vmul.f32 %v2078, 0.01
    %v2207 = vmul.f32 %v2079, 0.01
    %v2208 = vmul.f32 %v2080, 0.01
    %v2209 = vmul.f32 %v2081, 0.01
    %v2210 = vmul.f32 %v2082, 0.01
    %v2211 = vmul.f32 %v2083, 0.01
    %v2212 = vmul.f32 %v2084, 0.01
    %v2213 = vmul.f32 %v2085, 0.01
    %v2214 = vmul.f32 %v2086, 0.01
    %v2215 = vmul.f32 %v2087, 0.01
    %v2216 = vmul.f32 %v2088, 0.01
    %v2217 = vmul.f32 %v2089, 0.01
    %v2218 = vmul.f32 %v2090, 0.01
    %v2219 = vmul.f32 %v2091, 0.01
    %v2220 = vmul.f32 %v2092, 0.01
    %v2221 = vmul.f32 %v2093, 0.01
    %v2222 = vmul.f32 %v2094, 0.01
    %v2223 = vmul.f32 %v2095, 0.01
    %v2224 = vmul.f32 %v2096, 0.01
    %v2225 = vmul.f32 %v2097, 0.01
    %v2226 = vmul.f32 %v2098, 0.01
    %v2227 = vmul.f32 %v2099, 0.01
    %v2228 = vmul.f32 %v2100, 0.01
    %v2229 = vmul.f32 %v2101, 0.01
    %v2230 = vmul.f32 %v2102, 0.01
    %v2231 = vmul.f32 %v2103, 0.01
    %v2232 = vmul.f32 %v2104, 0.01
    %v2233 = vmul.f32 %v2105, 0.01
    %v2234 = vmul.f32 %v2106, 0.01
    %v2235 = vmul.f32 %v2107, 0.01
    %v2236 = vmul.f32 %v2108, 0.01
    %v2237 = vmul.f32 %v2109, 0.01
    %v2238 = vmul.f32 %v2110, 0.01
    %v2239 = vmul.f32 %v2111, 0.01
    %v2240 = vmul.f32 %v2112, 0.01
    %v2241 = vmul.f32 %v2113, 0.01
    %v2242 = vmul.f32 %v2114, 0.01
    %v2243 = vmul.f32 %v2115, 0.01
    %v2244 = vsel %vm2116, %v2052, %v2180
    %v2245 = vsel %vm2117, %v2053, %v2181
    %v2246 = vsel %vm2118, %v2054, %v2182
    %v2247 = vsel %vm2119, %v2055, %v2183
    %v2248 = vsel %vm2120, %v2056, %v2184
    %v2249 = vsel %vm2121, %v2057, %v2185
    %v2250 = vsel %vm2122, %v2058, %v2186
    %v2251 = vsel %vm2123, %v2059, %v2187
    %v2252 = vsel %vm2124, %v2060, %v2188
    %v2253 = vsel %vm2125, %v2061, %v2189
    %v2254 = vsel %vm2126, %v2062, %v2190
    %v2255 = vsel %vm2127, %v2063, %v2191
    %v2256 = vsel %vm2128, %v2064, %v2192
    %v2257 = vsel %vm2129, %v2065, %v2193
    %v2258 = vsel %vm2130, %v2066, %v2194
    %v2259 = vsel %vm2131, %v2067, %v2195
    %v2260 = vsel %vm2132, %v2068, %v2196
    %v2261 = vsel %vm2133, %v2069, %v2197
    %v2262 = vsel %vm2134, %v2070, %v2198
    %v2263 = vsel %vm2135, %v2071, %v2199
    %v2264 = vsel %vm2136, %v2072, %v2200
    %v2265 = vsel %vm2137, %v2073, %v2201
    %v2266 = vsel %vm2138, %v2074, %v2202
    %v2267 = vsel %vm2139, %v2075, %v2203
    %v2268 = vsel %vm2140, %v2076, %v2204
    %v2269 = vsel %vm2141, %v2077, %v2205
    %v2270 = vsel %vm2142, %v2078, %v2206
    %v2271 = vsel %vm2143, %v2079, %v2207
    %v2272 = vsel %vm2144, %v2080, %v2208
    %v2273 = vsel %vm2145, %v2081, %v2209
    %v2274 = vsel %vm2146, %v2082, %v2210
    %v2275 = vsel %vm2147, %v2083, %v2211
    %v2276 = vsel %vm2148, %v2084, %v2212
    %v2277 = vsel %vm2149, %v2085, %v2213
    %v2278 = vsel %vm2150, %v2086, %v2214
    %v2279 = vsel %vm2151, %v2087, %v2215
    %v2280 = vsel %vm2152, %v2088, %v2216
    %v2281 = vsel %vm2153, %v2089, %v2217
    %v2282 = vsel %vm2154, %v2090, %v2218
    %v2283 = vsel %vm2155, %v2091, %v2219
    %v2284 = vsel %vm2156, %v2092, %v2220
    %v2285 = vsel %vm2157, %v2093, %v2221
    %v2286 = vsel %vm2158, %v2094, %v2222
    %v2287 = vsel %vm2159, %v2095, %v2223
    %v2288 = vsel %vm2160, %v2096, %v2224
    %v2289 = vsel %vm2161, %v2097, %v2225
    %v2290 = vsel %vm2162, %v2098, %v2226
    %v2291 = vsel %vm2163, %v2099, %v2227
    %v2292 = vsel %vm2164, %v2100, %v2228
    %v2293 = vsel %vm2165, %v2101, %v2229
    %v2294 = vsel %vm2166, %v2102, %v2230
    %v2295 = vsel %vm2167, %v2103, %v2231
    %v2296 = vsel %vm2168, %v2104, %v2232
    %v2297 = vsel %vm2169, %v2105, %v2233
    %v2298 = vsel %vm2170, %v2106, %v2234
    %v2299 = vsel %vm2171, %v2107, %v2235
    %v2300 = vsel %vm2172, %v2108, %v2236
    %v2301 = vsel %vm2173, %v2109, %v2237
    %v2302 = vsel %vm2174, %v2110, %v2238
    %v2303 = vsel %vm2175, %v2111, %v2239
    %v2304 = vsel %vm2176, %v2112, %v2240
    %v2305 = vsel %vm2177, %v2113, %v2241
    %v2306 = vsel %vm2178, %v2114, %v2242
    %v2307 = vsel %vm2179, %v2115, %v2243
    %v2308 = vld [vmem:[#allocation9] sm:$0x3]
    %v2309 = vpack.c.bf16 %v2252, %v2244
    %v2310 = vpack.c.bf16 %v2253, %v2245
    %v2311 = vpack.c.bf16 %v2254, %v2246
    %v2312 = vpack.c.bf16 %v2255, %v2247
    %v2313 = vpack.c.bf16 %v2256, %v2248
    %v2314 = vpack.c.bf16 %v2257, %v2249
    %v2315 = vpack.c.bf16 %v2258, %v2250
    %v2316 = vpack.c.bf16 %v2259, %v2251
    %v2317 = vld [vmem:[#allocation11] sm:$0xf]
    %2319 = vset.pattern.permute.xlu0 0
    %2320 = vperm.xlu0 %2319, %v2317
    %v2321 = vpop.permute.xlu0 %2320
    %vm2323 = vcmask 130048
    %v2325 = vsel %vm2323, %v2308, 0
    %2327 = vmatprep.subr.bf16.mxu0 %v2310
    %2328 = vmatpush1.bf16.msra.mxu0 %v2309
    %2329 = vmatprep.subr.bf16.mxu0 0
    %2330 = vmatpush1.bf16.msra.mxu0 0
    %2331 = vmatprep.subr.bf16.mxu0 0
    %2332 = vmatpush1.bf16.msra.mxu0 0
    %2333 = vmatprep.subr.bf16.mxu0 0
    %2334 = vmatpush1.bf16.msra.mxu0 0
    %2335 = vmatprep.subr.bf16.mxu0 0
    %2336 = vmatpush1.bf16.msra.mxu0 0
    %2337 = vmatprep.subr.bf16.mxu0 0
    %2338 = vmatpush1.bf16.msra.mxu0 0
    %2339 = vmatprep.subr.bf16.mxu0 0
    %2340 = vmatpush1.bf16.msra.mxu0 0
    %2341 = vmatprep.subr.bf16.mxu0 0
    %2342 = vmatpush1.bf16.msra.mxu0 0
    %2343 = vmatprep.subr.bf16.mxu0 0
    %2344 = vmatpush1.bf16.msra.mxu0 0
    %2345 = vmatprep.subr.bf16.mxu0 0
    %2346 = vmatpush1.bf16.msra.mxu0 0
    %2347 = vmatprep.subr.bf16.mxu0 0
    %2348 = vmatpush1.bf16.msra.mxu0 0
    %2349 = vmatprep.subr.bf16.mxu0 0
    %2350 = vmatpush1.bf16.msra.mxu0 0
    %2351 = vmatprep.subr.bf16.mxu0 0
    %2352 = vmatpush1.bf16.msra.mxu0 0
    %2353 = vmatprep.subr.bf16.mxu0 0
    %2354 = vmatpush1.bf16.msra.mxu0 0
    %2355 = vmatprep.subr.bf16.mxu0 0
    %2356 = vmatpush1.bf16.msra.mxu0 0
    %2357 = vmatprep.subr.bf16.mxu0 0
    %2358 = vmatpush1.bf16.msra.mxu0 0
    %2359 = vmatprep.mubr.bf16.mxu0 0
    %2360 = vmatmul.mubr.bf16.gmra.mrb[0].mxu0 %v2325
    %v2361 = vpop.f32.mrb[0].mxu0
    %v2362 = vadd.f32 %v2321, %v2361
    %v2363 = vpop.f32.mrb[0].mxu0
    %v2364 = vadd.f32 %v2321, %v2363
    %v2365 = vpop.f32.mrb[0].mxu0
    %v2366 = vpop.f32.mrb[0].mxu0
    %2367 = vdwg.mxu0
    %2368 = vmatprep.subr.bf16.mxu0 %v2312
    %2369 = vmatpush1.bf16.msra.mxu0 %v2311
    %2370 = vmatprep.subr.bf16.mxu0 0
    %2371 = vmatpush1.bf16.msra.mxu0 0
    %2372 = vmatprep.subr.bf16.mxu0 0
    %2373 = vmatpush1.bf16.msra.mxu0 0
    %2374 = vmatprep.subr.bf16.mxu0 0
    %2375 = vmatpush1.bf16.msra.mxu0 0
    %2376 = vmatprep.subr.bf16.mxu0 0
    %2377 = vmatpush1.bf16.msra.mxu0 0
    %2378 = vmatprep.subr.bf16.mxu0 0
    %2379 = vmatpush1.bf16.msra.mxu0 0
    %2380 = vmatprep.subr.bf16.mxu0 0
    %2381 = vmatpush1.bf16.msra.mxu0 0
    %2382 = vmatprep.subr.bf16.mxu0 0
    %2383 = vmatpush1.bf16.msra.mxu0 0
    %2384 = vmatprep.subr.bf16.mxu0 0
    %2385 = vmatpush1.bf16.msra.mxu0 0
    %2386 = vmatprep.subr.bf16.mxu0 0
    %2387 = vmatpush1.bf16.msra.mxu0 0
    %2388 = vmatprep.subr.bf16.mxu0 0
    %2389 = vmatpush1.bf16.msra.mxu0 0
    %2390 = vmatprep.subr.bf16.mxu0 0
    %2391 = vmatpush1.bf16.msra.mxu0 0
    %2392 = vmatprep.subr.bf16.mxu0 0
    %2393 = vmatpush1.bf16.msra.mxu0 0
    %2394 = vmatprep.subr.bf16.mxu0 0
    %2395 = vmatpush1.bf16.msra.mxu0 0
    %2396 = vmatprep.subr.bf16.mxu0 0
    %2397 = vmatpush1.bf16.msra.mxu0 0
    %2398 = vmatprep.subr.bf16.mxu0 0
    %2399 = vmatpush1.bf16.msra.mxu0 0
    %2400 = vmatprep.mubr.bf16.mxu0 0
    %2401 = vmatmul.mubr.bf16.gmra.mrb[0].mxu0 %v2325
    %v2402 = vpop.f32.mrb[0].mxu0
    %v2403 = vadd.f32 %v2321, %v2402
    %v2404 = vpop.f32.mrb[0].mxu0
    %v2405 = vadd.f32 %v2321, %v2404
    %v2406 = vpop.f32.mrb[0].mxu0
    %v2407 = vpop.f32.mrb[0].mxu0
    %2408 = vdwg.mxu0
    %2409 = vmatprep.subr.bf16.mxu0 %v2314
    %2410 = vmatpush1.bf16.msra.mxu0 %v2313
    %2411 = vmatprep.subr.bf16.mxu0 0
    %2412 = vmatpush1.bf16.msra.mxu0 0
    %2413 = vmatprep.subr.bf16.mxu0 0
    %2414 = vmatpush1.bf16.msra.mxu0 0
    %2415 = vmatprep.subr.bf16.mxu0 0
    %2416 = vmatpush1.bf16.msra.mxu0 0
    %2417 = vmatprep.subr.bf16.mxu0 0
    %2418 = vmatpush1.bf16.msra.mxu0 0
    %2419 = vmatprep.subr.bf16.mxu0 0
    %2420 = vmatpush1.bf16.msra.mxu0 0
    %2421 = vmatprep.subr.bf16.mxu0 0
    %2422 = vmatpush1.bf16.msra.mxu0 0
    %2423 = vmatprep.subr.bf16.mxu0 0
    %2424 = vmatpush1.bf16.msra.mxu0 0
    %2425 = vmatprep.subr.bf16.mxu0 0
    %2426 = vmatpush1.bf16.msra.mxu0 0
    %2427 = vmatprep.subr.bf16.mxu0 0
    %2428 = vmatpush1.bf16.msra.mxu0 0
    %2429 = vmatprep.subr.bf16.mxu0 0
    %2430 = vmatpush1.bf16.msra.mxu0 0
    %2431 = vmatprep.subr.bf16.mxu0 0
    %2432 = vmatpush1.bf16.msra.mxu0 0
    %2433 = vmatprep.subr.bf16.mxu0 0
    %2434 = vmatpush1.bf16.msra.mxu0 0
    %2435 = vmatprep.subr.bf16.mxu0 0
    %2436 = vmatpush1.bf16.msra.mxu0 0
    %2437 = vmatprep.subr.bf16.mxu0 0
    %2438 = vmatpush1.bf16.msra.mxu0 0
    %2439 = vmatprep.subr.bf16.mxu0 0
    %2440 = vmatpush1.bf16.msra.mxu0 0
    %2441 = vmatprep.mubr.bf16.mxu0 0
    %2442 = vmatmul.mubr.bf16.gmra.mrb[0].mxu0 %v2325
    %v2443 = vpop.f32.mrb[0].mxu0
    %v2444 = vadd.f32 %v2321, %v2443
    %v2445 = vpop.f32.mrb[0].mxu0
    %v2446 = vadd.f32 %v2321, %v2445
    %v2447 = vpop.f32.mrb[0].mxu0
    %v2448 = vpop.f32.mrb[0].mxu0
    %2449 = vdwg.mxu0
    %2450 = vmatprep.subr.bf16.mxu0 %v2316
    %2451 = vmatpush1.bf16.msra.mxu0 %v2315
    %2452 = vmatprep.subr.bf16.mxu0 0
    %2453 = vmatpush1.bf16.msra.mxu0 0
    %2454 = vmatprep.subr.bf16.mxu0 0
    %2455 = vmatpush1.bf16.msra.mxu0 0
    %2456 = vmatprep.subr.bf16.mxu0 0
    %2457 = vmatpush1.bf16.msra.mxu0 0
    %2458 = vmatprep.subr.bf16.mxu0 0
    %2459 = vmatpush1.bf16.msra.mxu0 0
    %2460 = vmatprep.subr.bf16.mxu0 0
    %2461 = vmatpush1.bf16.msra.mxu0 0
    %2462 = vmatprep.subr.bf16.mxu0 0
    %2463 = vmatpush1.bf16.msra.mxu0 0
    %2464 = vmatprep.subr.bf16.mxu0 0
    %2465 = vmatpush1.bf16.msra.mxu0 0
    %2466 = vmatprep.subr.bf16.mxu0 0
    %2467 = vmatpush1.bf16.msra.mxu0 0
    %2468 = vmatprep.subr.bf16.mxu0 0
    %2469 = vmatpush1.bf16.msra.mxu0 0
    %2470 = vmatprep.subr.bf16.mxu0 0
    %2471 = vmatpush1.bf16.msra.mxu0 0
    %2472 = vmatprep.subr.bf16.mxu0 0
    %2473 = vmatpush1.bf16.msra.mxu0 0
    %2474 = vmatprep.subr.bf16.mxu0 0
    %2475 = vmatpush1.bf16.msra.mxu0 0
    %2476 = vmatprep.subr.bf16.mxu0 0
    %2477 = vmatpush1.bf16.msra.mxu0 0
    %2478 = vmatprep.subr.bf16.mxu0 0
    %2479 = vmatpush1.bf16.msra.mxu0 0
    %2480 = vmatprep.subr.bf16.mxu0 0
    %2481 = vmatpush1.bf16.msra.mxu0 0
    %2482 = vmatprep.mubr.bf16.mxu0 0
    %2483 = vmatmul.mubr.bf16.gmra.mrb[0].mxu0 %v2325
    %v2484 = vpop.f32.mrb[0].mxu0
    %v2485 = vadd.f32 %v2321, %v2484
    %v2486 = vpop.f32.mrb[0].mxu0
    %v2487 = vadd.f32 %v2321, %v2486
    %v2488 = vpop.f32.mrb[0].mxu0
    %v2489 = vpop.f32.mrb[0].mxu0
    %2490 = vdwg.mxu0
    %v2491 = vtanh.pop %v2362
    %v2492 = vtanh.pop %v2364
    %v2493 = vtanh.pop %v2403
    %v2494 = vtanh.pop %v2405
    %v2495 = vtanh.pop %v2444
    %v2496 = vtanh.pop %v2446
    %v2497 = vtanh.pop %v2485
    %v2498 = vtanh.pop %v2487
    %v2507 = vcombine.low %v2491, %v2492
    %v2508 = vcombine.low %v2493, %v2494
    %v2509 = vcombine.low %v2495, %v2496
    %v2510 = vcombine.low %v2497, %v2498
    %2515 = vst [vmem:[#allocation12] sm:$0xff] %v2507
    %2516 = vst [vmem:[#allocation12 + $0x8] sm:$0xff] %v2508
    %2517 = vst [vmem:[#allocation12 + $0x10] sm:$0xff] %v2509
    %2518 = vst [vmem:[#allocation12 + $0x18] sm:$0xff] %v2510
    %v2519 = vld [vmem:[#allocation9] sm:$0x3]
    %v2520 = vpack.c.bf16 %v2268, %v2260
    %v2521 = vpack.c.bf16 %v2269, %v2261
    %v2522 = vpack.c.bf16 %v2270, %v2262
    %v2523 = vpack.c.bf16 %v2271, %v2263
    %v2524 = vpack.c.bf16 %v2272, %v2264
    %v2525 = vpack.c.bf16 %v2273, %v2265
    %v2526 = vpack.c.bf16 %v2274, %v2266
    %v2527 = vpack.c.bf16 %v2275, %v2267
    %v2528 = vld [vmem:[#allocation11] sm:$0xf]
    %2530 = vset.pattern.permute.xlu0 0
    %2531 = vperm.xlu0 %2530, %v2528
    %v2532 = vpop.permute.xlu0 %2531
    %v2535 = vsel %vm2323, %v2519, 0
    %2537 = vmatprep.subr.bf16.mxu0 %v2521
    %2538 = vmatpush1.bf16.msra.mxu0 %v2520
    %2539 = vmatprep.subr.bf16.mxu0 0
    %2540 = vmatpush1.bf16.msra.mxu0 0
    %2541 = vmatprep.subr.bf16.mxu0 0
    %2542 = vmatpush1.bf16.msra.mxu0 0
    %2543 = vmatprep.subr.bf16.mxu0 0
    %2544 = vmatpush1.bf16.msra.mxu0 0
    %2545 = vmatprep.subr.bf16.mxu0 0
    %2546 = vmatpush1.bf16.msra.mxu0 0
    %2547 = vmatprep.subr.bf16.mxu0 0
    %2548 = vmatpush1.bf16.msra.mxu0 0
    %2549 = vmatprep.subr.bf16.mxu0 0
    %2550 = vmatpush1.bf16.msra.mxu0 0
    %2551 = vmatprep.subr.bf16.mxu0 0
    %2552 = vmatpush1.bf16.msra.mxu0 0
    %2553 = vmatprep.subr.bf16.mxu0 0
    %2554 = vmatpush1.bf16.msra.mxu0 0
    %2555 = vmatprep.subr.bf16.mxu0 0
    %2556 = vmatpush1.bf16.msra.mxu0 0
    %2557 = vmatprep.subr.bf16.mxu0 0
    %2558 = vmatpush1.bf16.msra.mxu0 0
    %2559 = vmatprep.subr.bf16.mxu0 0
    %2560 = vmatpush1.bf16.msra.mxu0 0
    %2561 = vmatprep.subr.bf16.mxu0 0
    %2562 = vmatpush1.bf16.msra.mxu0 0
    %2563 = vmatprep.subr.bf16.mxu0 0
    %2564 = vmatpush1.bf16.msra.mxu0 0
    %2565 = vmatprep.subr.bf16.mxu0 0
    %2566 = vmatpush1.bf16.msra.mxu0 0
    %2567 = vmatprep.subr.bf16.mxu0 0
    %2568 = vmatpush1.bf16.msra.mxu0 0
    %2569 = vmatprep.mubr.bf16.mxu0 0
    %2570 = vmatmul.mubr.bf16.gmra.mrb[0].mxu0 %v2535
    %v2571 = vpop.f32.mrb[0].mxu0
    %v2572 = vadd.f32 %v2532, %v2571
    %v2573 = vpop.f32.mrb[0].mxu0
    %v2574 = vadd.f32 %v2532, %v2573
    %v2575 = vpop.f32.mrb[0].mxu0
    %v2576 = vpop.f32.mrb[0].mxu0
    %2577 = vdwg.mxu0
    %2578 = vmatprep.subr.bf16.mxu0 %v2523
    %2579 = vmatpush1.bf16.msra.mxu0 %v2522
    %2580 = vmatprep.subr.bf16.mxu0 0
    %2581 = vmatpush1.bf16.msra.mxu0 0
    %2582 = vmatprep.subr.bf16.mxu0 0
    %2583 = vmatpush1.bf16.msra.mxu0 0
    %2584 = vmatprep.subr.bf16.mxu0 0
    %2585 = vmatpush1.bf16.msra.mxu0 0
    %2586 = vmatprep.subr.bf16.mxu0 0
    %2587 = vmatpush1.bf16.msra.mxu0 0
    %2588 = vmatprep.subr.bf16.mxu0 0
    %2589 = vmatpush1.bf16.msra.mxu0 0
    %2590 = vmatprep.subr.bf16.mxu0 0
    %2591 = vmatpush1.bf16.msra.mxu0 0
    %2592 = vmatprep.subr.bf16.mxu0 0
    %2593 = vmatpush1.bf16.msra.mxu0 0
    %2594 = vmatprep.subr.bf16.mxu0 0
    %2595 = vmatpush1.bf16.msra.mxu0 0
    %2596 = vmatprep.subr.bf16.mxu0 0
    %2597 = vmatpush1.bf16.msra.mxu0 0
    %2598 = vmatprep.subr.bf16.mxu0 0
    %2599 = vmatpush1.bf16.msra.mxu0 0
    %2600 = vmatprep.subr.bf16.mxu0 0
    %2601 = vmatpush1.bf16.msra.mxu0 0
    %2602 = vmatprep.subr.bf16.mxu0 0
    %2603 = vmatpush1.bf16.msra.mxu0 0
    %2604 = vmatprep.subr.bf16.mxu0 0
    %2605 = vmatpush1.bf16.msra.mxu0 0
    %2606 = vmatprep.subr.bf16.mxu0 0
    %2607 = vmatpush1.bf16.msra.mxu0 0
    %2608 = vmatprep.subr.bf16.mxu0 0
    %2609 = vmatpush1.bf16.msra.mxu0 0
    %2610 = vmatprep.mubr.bf16.mxu0 0
    %2611 = vmatmul.mubr.bf16.gmra.mrb[0].mxu0 %v2535
    %v2612 = vpop.f32.mrb[0].mxu0
    %v2613 = vadd.f32 %v2532, %v2612
    %v2614 = vpop.f32.mrb[0].mxu0
    %v2615 = vadd.f32 %v2532, %v2614
    %v2616 = vpop.f32.mrb[0].mxu0
    %v2617 = vpop.f32.mrb[0].mxu0
    %2618 = vdwg.mxu0
    %2619 = vmatprep.subr.bf16.mxu0 %v2525
    %2620 = vmatpush1.bf16.msra.mxu0 %v2524
    %2621 = vmatprep.subr.bf16.mxu0 0
    %2622 = vmatpush1.bf16.msra.mxu0 0
    %2623 = vmatprep.subr.bf16.mxu0 0
    %2624 = vmatpush1.bf16.msra.mxu0 0
    %2625 = vmatprep.subr.bf16.mxu0 0
    %2626 = vmatpush1.bf16.msra.mxu0 0
    %2627 = vmatprep.subr.bf16.mxu0 0
    %2628 = vmatpush1.bf16.msra.mxu0 0
    %2629 = vmatprep.subr.bf16.mxu0 0
    %2630 = vmatpush1.bf16.msra.mxu0 0
    %2631 = vmatprep.subr.bf16.mxu0 0
    %2632 = vmatpush1.bf16.msra.mxu0 0
    %2633 = vmatprep.subr.bf16.mxu0 0
    %2634 = vmatpush1.bf16.msra.mxu0 0
    %2635 = vmatprep.subr.bf16.mxu0 0
    %2636 = vmatpush1.bf16.msra.mxu0 0
    %2637 = vmatprep.subr.bf16.mxu0 0
    %2638 = vmatpush1.bf16.msra.mxu0 0
    %2639 = vmatprep.subr.bf16.mxu0 0
    %2640 = vmatpush1.bf16.msra.mxu0 0
    %2641 = vmatprep.subr.bf16.mxu0 0
    %2642 = vmatpush1.bf16.msra.mxu0 0
    %2643 = vmatprep.subr.bf16.mxu0 0
    %2644 = vmatpush1.bf16.msra.mxu0 0
    %2645 = vmatprep.subr.bf16.mxu0 0
    %2646 = vmatpush1.bf16.msra.mxu0 0
    %2647 = vmatprep.subr.bf16.mxu0 0
    %2648 = vmatpush1.bf16.msra.mxu0 0
    %2649 = vmatprep.subr.bf16.mxu0 0
    %2650 = vmatpush1.bf16.msra.mxu0 0
    %2651 = vmatprep.mubr.bf16.mxu0 0
    %2652 = vmatmul.mubr.bf16.gmra.mrb[0].mxu0 %v2535
    %v2653 = vpop.f32.mrb[0].mxu0
    %v2654 = vadd.f32 %v2532, %v2653
    %v2655 = vpop.f32.mrb[0].mxu0
    %v2656 = vadd.f32 %v2532, %v2655
    %v2657 = vpop.f32.mrb[0].mxu0
    %v2658 = vpop.f32.mrb[0].mxu0
    %2659 = vdwg.mxu0
    %2660 = vmatprep.subr.bf16.mxu0 %v2527
    %2661 = vmatpush1.bf16.msra.mxu0 %v2526
    %2662 = vmatprep.subr.bf16.mxu0 0
    %2663 = vmatpush1.bf16.msra.mxu0 0
    %2664 = vmatprep.subr.bf16.mxu0 0
    %2665 = vmatpush1.bf16.msra.mxu0 0
    %2666 = vmatprep.subr.bf16.mxu0 0
    %2667 = vmatpush1.bf16.msra.mxu0 0
    %2668 = vmatprep.subr.bf16.mxu0 0
    %2669 = vmatpush1.bf16.msra.mxu0 0
    %2670 = vmatprep.subr.bf16.mxu0 0
    %2671 = vmatpush1.bf16.msra.mxu0 0
    %2672 = vmatprep.subr.bf16.mxu0 0
    %2673 = vmatpush1.bf16.msra.mxu0 0
    %2674 = vmatprep.subr.bf16.mxu0 0
    %2675 = vmatpush1.bf16.msra.mxu0 0
    %2676 = vmatprep.subr.bf16.mxu0 0
    %2677 = vmatpush1.bf16.msra.mxu0 0
    %2678 = vmatprep.subr.bf16.mxu0 0
    %2679 = vmatpush1.bf16.msra.mxu0 0
    %2680 = vmatprep.subr.bf16.mxu0 0
    %2681 = vmatpush1.bf16.msra.mxu0 0
    %2682 = vmatprep.subr.bf16.mxu0 0
    %2683 = vmatpush1.bf16.msra.mxu0 0
    %2684 = vmatprep.subr.bf16.mxu0 0
    %2685 = vmatpush1.bf16.msra.mxu0 0
    %2686 = vmatprep.subr.bf16.mxu0 0
    %2687 = vmatpush1.bf16.msra.mxu0 0
    %2688 = vmatprep.subr.bf16.mxu0 0
    %2689 = vmatpush1.bf16.msra.mxu0 0
    %2690 = vmatprep.subr.bf16.mxu0 0
    %2691 = vmatpush1.bf16.msra.mxu0 0
    %2692 = vmatprep.mubr.bf16.mxu0 0
    %2693 = vmatmul.mubr.bf16.gmra.mrb[0].mxu0 %v2535
    %v2694 = vpop.f32.mrb[0].mxu0
    %v2695 = vadd.f32 %v2532, %v2694
    %v2696 = vpop.f32.mrb[0].mxu0
    %v2697 = vadd.f32 %v2532, %v2696
    %v2698 = vpop.f32.mrb[0].mxu0
    %v2699 = vpop.f32.mrb[0].mxu0
    %2700 = vdwg.mxu0
    %v2701 = vtanh.pop %v2572
    %v2702 = vtanh.pop %v2574
    %v2703 = vtanh.pop %v2613
    %v2704 = vtanh.pop %v2615
    %v2705 = vtanh.pop %v2654
    %v2706 = vtanh.pop %v2656
    %v2707 = vtanh.pop %v2695
    %v2708 = vtanh.pop %v2697
    %v2717 = vcombine.low %v2701, %v2702
    %v2718 = vcombine.low %v2703, %v2704
    %v2719 = vcombine.low %v2705, %v2706
    %v2720 = vcombine.low %v2707, %v2708
    %s2725 = scalar_lea.vmem [#allocation12], 32
    %2726 = vst [vmem:[%s2725] sm:$0xff] %v2717
    %2727 = vst [vmem:[%s2725 + $0x8] sm:$0xff] %v2718
    %2728 = vst [vmem:[%s2725 + $0x10] sm:$0xff] %v2719
    %2729 = vst [vmem:[%s2725 + $0x18] sm:$0xff] %v2720
    %v2730 = vld [vmem:[#allocation9] sm:$0x3]
    %v2731 = vpack.c.bf16 %v2284, %v2276
    %v2732 = vpack.c.bf16 %v2285, %v2277
    %v2733 = vpack.c.bf16 %v2286, %v2278
    %v2734 = vpack.c.bf16 %v2287, %v2279
    %v2735 = vpack.c.bf16 %v2288, %v2280
    %v2736 = vpack.c.bf16 %v2289, %v2281
    %v2737 = vpack.c.bf16 %v2290, %v2282
    %v2738 = vpack.c.bf16 %v2291, %v2283
    %v2739 = vld [vmem:[#allocation11] sm:$0xf]
    %2741 = vset.pattern.permute.xlu0 0
    %2742 = vperm.xlu0 %2741, %v2739
    %v2743 = vpop.permute.xlu0 %2742
    %v2746 = vsel %vm2323, %v2730, 0
    %2748 = vmatprep.subr.bf16.mxu0 %v2732
    %2749 = vmatpush1.bf16.msra.mxu0 %v2731
    %2750 = vmatprep.subr.bf16.mxu0 0
    %2751 = vmatpush1.bf16.msra.mxu0 0
    %2752 = vmatprep.subr.bf16.mxu0 0
    %2753 = vmatpush1.bf16.msra.mxu0 0
    %2754 = vmatprep.subr.bf16.mxu0 0
    %2755 = vmatpush1.bf16.msra.mxu0 0
    %2756 = vmatprep.subr.bf16.mxu0 0
    %2757 = vmatpush1.bf16.msra.mxu0 0
    %2758 = vmatprep.subr.bf16.mxu0 0
    %2759 = vmatpush1.bf16.msra.mxu0 0
    %2760 = vmatprep.subr.bf16.mxu0 0
    %2761 = vmatpush1.bf16.msra.mxu0 0
    %2762 = vmatprep.subr.bf16.mxu0 0
    %2763 = vmatpush1.bf16.msra.mxu0 0
    %2764 = vmatprep.subr.bf16.mxu0 0
    %2765 = vmatpush1.bf16.msra.mxu0 0
    %2766 = vmatprep.subr.bf16.mxu0 0
    %2767 = vmatpush1.bf16.msra.mxu0 0
    %2768 = vmatprep.subr.bf16.mxu0 0
    %2769 = vmatpush1.bf16.msra.mxu0 0
    %2770 = vmatprep.subr.bf16.mxu0 0
    %2771 = vmatpush1.bf16.msra.mxu0 0
    %2772 = vmatprep.subr.bf16.mxu0 0
    %2773 = vmatpush1.bf16.msra.mxu0 0
    %2774 = vmatprep.subr.bf16.mxu0 0
    %2775 = vmatpush1.bf16.msra.mxu0 0
    %2776 = vmatprep.subr.bf16.mxu0 0
    %2777 = vmatpush1.bf16.msra.mxu0 0
    %2778 = vmatprep.subr.bf16.mxu0 0
    %2779 = vmatpush1.bf16.msra.mxu0 0
    %2780 = vmatprep.mubr.bf16.mxu0 0
    %2781 = vmatmul.mubr.bf16.gmra.mrb[0].mxu0 %v2746
    %v2782 = vpop.f32.mrb[0].mxu0
    %v2783 = vadd.f32 %v2743, %v2782
    %v2784 = vpop.f32.mrb[0].mxu0
    %v2785 = vadd.f32 %v2743, %v2784
    %v2786 = vpop.f32.mrb[0].mxu0
    %v2787 = vpop.f32.mrb[0].mxu0
    %2788 = vdwg.mxu0
    %2789 = vmatprep.subr.bf16.mxu0 %v2734
    %2790 = vmatpush1.bf16.msra.mxu0 %v2733
    %2791 = vmatprep.subr.bf16.mxu0 0
    %2792 = vmatpush1.bf16.msra.mxu0 0
    %2793 = vmatprep.subr.bf16.mxu0 0
    %2794 = vmatpush1.bf16.msra.mxu0 0
    %2795 = vmatprep.subr.bf16.mxu0 0
    %2796 = vmatpush1.bf16.msra.mxu0 0
    %2797 = vmatprep.subr.bf16.mxu0 0
    %2798 = vmatpush1.bf16.msra.mxu0 0
    %2799 = vmatprep.subr.bf16.mxu0 0
    %2800 = vmatpush1.bf16.msra.mxu0 0
    %2801 = vmatprep.subr.bf16.mxu0 0
    %2802 = vmatpush1.bf16.msra.mxu0 0
    %2803 = vmatprep.subr.bf16.mxu0 0
    %2804 = vmatpush1.bf16.msra.mxu0 0
    %2805 = vmatprep.subr.bf16.mxu0 0
    %2806 = vmatpush1.bf16.msra.mxu0 0
    %2807 = vmatprep.subr.bf16.mxu0 0
    %2808 = vmatpush1.bf16.msra.mxu0 0
    %2809 = vmatprep.subr.bf16.mxu0 0
    %2810 = vmatpush1.bf16.msra.mxu0 0
    %2811 = vmatprep.subr.bf16.mxu0 0
    %2812 = vmatpush1.bf16.msra.mxu0 0
    %2813 = vmatprep.subr.bf16.mxu0 0
    %2814 = vmatpush1.bf16.msra.mxu0 0
    %2815 = vmatprep.subr.bf16.mxu0 0
    %2816 = vmatpush1.bf16.msra.mxu0 0
    %2817 = vmatprep.subr.bf16.mxu0 0
    %2818 = vmatpush1.bf16.msra.mxu0 0
    %2819 = vmatprep.subr.bf16.mxu0 0
    %2820 = vmatpush1.bf16.msra.mxu0 0
    %2821 = vmatprep.mubr.bf16.mxu0 0
    %2822 = vmatmul.mubr.bf16.gmra.mrb[0].mxu0 %v2746
    %v2823 = vpop.f32.mrb[0].mxu0
    %v2824 = vadd.f32 %v2743, %v2823
    %v2825 = vpop.f32.mrb[0].mxu0
    %v2826 = vadd.f32 %v2743, %v2825
    %v2827 = vpop.f32.mrb[0].mxu0
    %v2828 = vpop.f32.mrb[0].mxu0
    %2829 = vdwg.mxu0
    %2830 = vmatprep.subr.bf16.mxu0 %v2736
    %2831 = vmatpush1.bf16.msra.mxu0 %v2735
    %2832 = vmatprep.subr.bf16.mxu0 0
    %2833 = vmatpush1.bf16.msra.mxu0 0
    %2834 = vmatprep.subr.bf16.mxu0 0
    %2835 = vmatpush1.bf16.msra.mxu0 0
    %2836 = vmatprep.subr.bf16.mxu0 0
    %2837 = vmatpush1.bf16.msra.mxu0 0
    %2838 = vmatprep.subr.bf16.mxu0 0
    %2839 = vmatpush1.bf16.msra.mxu0 0
    %2840 = vmatprep.subr.bf16.mxu0 0
    %2841 = vmatpush1.bf16.msra.mxu0 0
    %2842 = vmatprep.subr.bf16.mxu0 0
    %2843 = vmatpush1.bf16.msra.mxu0 0
    %2844 = vmatprep.subr.bf16.mxu0 0
    %2845 = vmatpush1.bf16.msra.mxu0 0
    %2846 = vmatprep.subr.bf16.mxu0 0
    %2847 = vmatpush1.bf16.msra.mxu0 0
    %2848 = vmatprep.subr.bf16.mxu0 0
    %2849 = vmatpush1.bf16.msra.mxu0 0
    %2850 = vmatprep.subr.bf16.mxu0 0
    %2851 = vmatpush1.bf16.msra.mxu0 0
    %2852 = vmatprep.subr.bf16.mxu0 0
    %2853 = vmatpush1.bf16.msra.mxu0 0
    %2854 = vmatprep.subr.bf16.mxu0 0
    %2855 = vmatpush1.bf16.msra.mxu0 0
    %2856 = vmatprep.subr.bf16.mxu0 0
    %2857 = vmatpush1.bf16.msra.mxu0 0
    %2858 = vmatprep.subr.bf16.mxu0 0
    %2859 = vmatpush1.bf16.msra.mxu0 0
    %2860 = vmatprep.subr.bf16.mxu0 0
    %2861 = vmatpush1.bf16.msra.mxu0 0
    %2862 = vmatprep.mubr.bf16.mxu0 0
    %2863 = vmatmul.mubr.bf16.gmra.mrb[0].mxu0 %v2746
    %v2864 = vpop.f32.mrb[0].mxu0
    %v2865 = vadd.f32 %v2743, %v2864
    %v2866 = vpop.f32.mrb[0].mxu0
    %v2867 = vadd.f32 %v2743, %v2866
    %v2868 = vpop.f32.mrb[0].mxu0
    %v2869 = vpop.f32.mrb[0].mxu0
    %2870 = vdwg.mxu0
    %2871 = vmatprep.subr.bf16.mxu0 %v2738
    %2872 = vmatpush1.bf16.msra.mxu0 %v2737
    %2873 = vmatprep.subr.bf16.mxu0 0
    %2874 = vmatpush1.bf16.msra.mxu0 0
    %2875 = vmatprep.subr.bf16.mxu0 0
    %2876 = vmatpush1.bf16.msra.mxu0 0
    %2877 = vmatprep.subr.bf16.mxu0 0
    %2878 = vmatpush1.bf16.msra.mxu0 0
    %2879 = vmatprep.subr.bf16.mxu0 0
    %2880 = vmatpush1.bf16.msra.mxu0 0
    %2881 = vmatprep.subr.bf16.mxu0 0
    %2882 = vmatpush1.bf16.msra.mxu0 0
    %2883 = vmatprep.subr.bf16.mxu0 0
    %2884 = vmatpush1.bf16.msra.mxu0 0
    %2885 = vmatprep.subr.bf16.mxu0 0
    %2886 = vmatpush1.bf16.msra.mxu0 0
    %2887 = vmatprep.subr.bf16.mxu0 0
    %2888 = vmatpush1.bf16.msra.mxu0 0
    %2889 = vmatprep.subr.bf16.mxu0 0
    %2890 = vmatpush1.bf16.msra.mxu0 0
    %2891 = vmatprep.subr.bf16.mxu0 0
    %2892 = vmatpush1.bf16.msra.mxu0 0
    %2893 = vmatprep.subr.bf16.mxu0 0
    %2894 = vmatpush1.bf16.msra.mxu0 0
    %2895 = vmatprep.subr.bf16.mxu0 0
    %2896 = vmatpush1.bf16.msra.mxu0 0
    %2897 = vmatprep.subr.bf16.mxu0 0
    %2898 = vmatpush1.bf16.msra.mxu0 0
    %2899 = vmatprep.subr.bf16.mxu0 0
    %2900 = vmatpush1.bf16.msra.mxu0 0
    %2901 = vmatprep.subr.bf16.mxu0 0
    %2902 = vmatpush1.bf16.msra.mxu0 0
    %2903 = vmatprep.mubr.bf16.mxu0 0
    %2904 = vmatmul.mubr.bf16.gmra.mrb[0].mxu0 %v2746
    %v2905 = vpop.f32.mrb[0].mxu0
    %v2906 = vadd.f32 %v2743, %v2905
    %v2907 = vpop.f32.mrb[0].mxu0
    %v2908 = vadd.f32 %v2743, %v2907
    %v2909 = vpop.f32.mrb[0].mxu0
    %v2910 = vpop.f32.mrb[0].mxu0
    %2911 = vdwg.mxu0
    %v2912 = vtanh.pop %v2783
    %v2913 = vtanh.pop %v2785
    %v2914 = vtanh.pop %v2824
    %v2915 = vtanh.pop %v2826
    %v2916 = vtanh.pop %v2865
    %v2917 = vtanh.pop %v2867
    %v2918 = vtanh.pop %v2906
    %v2919 = vtanh.pop %v2908
    %v2928 = vcombine.low %v2912, %v2913
    %v2929 = vcombine.low %v2914, %v2915
    %v2930 = vcombine.low %v2916, %v2917
    %v2931 = vcombine.low %v2918, %v2919
    %s2936 = scalar_lea.vmem [#allocation12], 64
    %2937 = vst [vmem:[%s2936] sm:$0xff] %v2928
    %2938 = vst [vmem:[%s2936 + $0x8] sm:$0xff] %v2929
    %2939 = vst [vmem:[%s2936 + $0x10] sm:$0xff] %v2930
    %2940 = vst [vmem:[%s2936 + $0x18] sm:$0xff] %v2931
    %v2941 = vld [vmem:[#allocation9] sm:$0x3]
    %v2942 = vpack.c.bf16 %v2300, %v2292
    %v2943 = vpack.c.bf16 %v2301, %v2293
    %v2944 = vpack.c.bf16 %v2302, %v2294
    %v2945 = vpack.c.bf16 %v2303, %v2295
    %v2946 = vpack.c.bf16 %v2304, %v2296
    %v2947 = vpack.c.bf16 %v2305, %v2297
    %v2948 = vpack.c.bf16 %v2306, %v2298
    %v2949 = vpack.c.bf16 %v2307, %v2299
    %v2950 = vld [vmem:[#allocation11] sm:$0xf]
    %2952 = vset.pattern.permute.xlu0 0
    %2953 = vperm.xlu0 %2952, %v2950
    %v2954 = vpop.permute.xlu0 %2953
    %v2957 = vsel %vm2323, %v2941, 0
    %2959 = vmatprep.subr.bf16.mxu0 %v2943
    %2960 = vmatpush1.bf16.msra.mxu0 %v2942
    %2961 = vmatprep.subr.bf16.mxu0 0
    %2962 = vmatpush1.bf16.msra.mxu0 0
    %2963 = vmatprep.subr.bf16.mxu0 0
    %2964 = vmatpush1.bf16.msra.mxu0 0
    %2965 = vmatprep.subr.bf16.mxu0 0
    %2966 = vmatpush1.bf16.msra.mxu0 0
    %2967 = vmatprep.subr.bf16.mxu0 0
    %2968 = vmatpush1.bf16.msra.mxu0 0
    %2969 = vmatprep.subr.bf16.mxu0 0
    %2970 = vmatpush1.bf16.msra.mxu0 0
    %2971 = vmatprep.subr.bf16.mxu0 0
    %2972 = vmatpush1.bf16.msra.mxu0 0
    %2973 = vmatprep.subr.bf16.mxu0 0
    %2974 = vmatpush1.bf16.msra.mxu0 0
    %2975 = vmatprep.subr.bf16.mxu0 0
    %2976 = vmatpush1.bf16.msra.mxu0 0
    %2977 = vmatprep.subr.bf16.mxu0 0
    %2978 = vmatpush1.bf16.msra.mxu0 0
    %2979 = vmatprep.subr.bf16.mxu0 0
    %2980 = vmatpush1.bf16.msra.mxu0 0
    %2981 = vmatprep.subr.bf16.mxu0 0
    %2982 = vmatpush1.bf16.msra.mxu0 0
    %2983 = vmatprep.subr.bf16.mxu0 0
    %2984 = vmatpush1.bf16.msra.mxu0 0
    %2985 = vmatprep.subr.bf16.mxu0 0
    %2986 = vmatpush1.bf16.msra.mxu0 0
    %2987 = vmatprep.subr.bf16.mxu0 0
    %2988 = vmatpush1.bf16.msra.mxu0 0
    %2989 = vmatprep.subr.bf16.mxu0 0
    %2990 = vmatpush1.bf16.msra.mxu0 0
    %2991 = vmatprep.mubr.bf16.mxu0 0
    %2992 = vmatmul.mubr.bf16.gmra.mrb[0].mxu0 %v2957
    %v2993 = vpop.f32.mrb[0].mxu0
    %v2994 = vadd.f32 %v2954, %v2993
    %v2995 = vpop.f32.mrb[0].mxu0
    %v2996 = vadd.f32 %v2954, %v2995
    %v2997 = vpop.f32.mrb[0].mxu0
    %v2998 = vpop.f32.mrb[0].mxu0
    %2999 = vdwg.mxu0
    %3000 = vmatprep.subr.bf16.mxu0 %v2945
    %3001 = vmatpush1.bf16.msra.mxu0 %v2944
    %3002 = vmatprep.subr.bf16.mxu0 0
    %3003 = vmatpush1.bf16.msra.mxu0 0
    %3004 = vmatprep.subr.bf16.mxu0 0
    %3005 = vmatpush1.bf16.msra.mxu0 0
    %3006 = vmatprep.subr.bf16.mxu0 0
    %3007 = vmatpush1.bf16.msra.mxu0 0
    %3008 = vmatprep.subr.bf16.mxu0 0
    %3009 = vmatpush1.bf16.msra.mxu0 0
    %3010 = vmatprep.subr.bf16.mxu0 0
    %3011 = vmatpush1.bf16.msra.mxu0 0
    %3012 = vmatprep.subr.bf16.mxu0 0
    %3013 = vmatpush1.bf16.msra.mxu0 0
    %3014 = vmatprep.subr.bf16.mxu0 0
    %3015 = vmatpush1.bf16.msra.mxu0 0
    %3016 = vmatprep.subr.bf16.mxu0 0
    %3017 = vmatpush1.bf16.msra.mxu0 0
    %3018 = vmatprep.subr.bf16.mxu0 0
    %3019 = vmatpush1.bf16.msra.mxu0 0
    %3020 = vmatprep.subr.bf16.mxu0 0
    %3021 = vmatpush1.bf16.msra.mxu0 0
    %3022 = vmatprep.subr.bf16.mxu0 0
    %3023 = vmatpush1.bf16.msra.mxu0 0
    %3024 = vmatprep.subr.bf16.mxu0 0
    %3025 = vmatpush1.bf16.msra.mxu0 0
    %3026 = vmatprep.subr.bf16.mxu0 0
    %3027 = vmatpush1.bf16.msra.mxu0 0
    %3028 = vmatprep.subr.bf16.mxu0 0
    %3029 = vmatpush1.bf16.msra.mxu0 0
    %3030 = vmatprep.subr.bf16.mxu0 0
    %3031 = vmatpush1.bf16.msra.mxu0 0
    %3032 = vmatprep.mubr.bf16.mxu0 0
    %3033 = vmatmul.mubr.bf16.gmra.mrb[0].mxu0 %v2957
    %v3034 = vpop.f32.mrb[0].mxu0
    %v3035 = vadd.f32 %v2954, %v3034
    %v3036 = vpop.f32.mrb[0].mxu0
    %v3037 = vadd.f32 %v2954, %v3036
    %v3038 = vpop.f32.mrb[0].mxu0
    %v3039 = vpop.f32.mrb[0].mxu0
    %3040 = vdwg.mxu0
    %3041 = vmatprep.subr.bf16.mxu0 %v2947
    %3042 = vmatpush1.bf16.msra.mxu0 %v2946
    %3043 = vmatprep.subr.bf16.mxu0 0
    %3044 = vmatpush1.bf16.msra.mxu0 0
    %3045 = vmatprep.subr.bf16.mxu0 0
    %3046 = vmatpush1.bf16.msra.mxu0 0
    %3047 = vmatprep.subr.bf16.mxu0 0
    %3048 = vmatpush1.bf16.msra.mxu0 0
    %3049 = vmatprep.subr.bf16.mxu0 0
    %3050 = vmatpush1.bf16.msra.mxu0 0
    %3051 = vmatprep.subr.bf16.mxu0 0
    %3052 = vmatpush1.bf16.msra.mxu0 0
    %3053 = vmatprep.subr.bf16.mxu0 0
    %3054 = vmatpush1.bf16.msra.mxu0 0
    %3055 = vmatprep.subr.bf16.mxu0 0
    %3056 = vmatpush1.bf16.msra.mxu0 0
    %3057 = vmatprep.subr.bf16.mxu0 0
    %3058 = vmatpush1.bf16.msra.mxu0 0
    %3059 = vmatprep.subr.bf16.mxu0 0
    %3060 = vmatpush1.bf16.msra.mxu0 0
    %3061 = vmatprep.subr.bf16.mxu0 0
    %3062 = vmatpush1.bf16.msra.mxu0 0
    %3063 = vmatprep.subr.bf16.mxu0 0
    %3064 = vmatpush1.bf16.msra.mxu0 0
    %3065 = vmatprep.subr.bf16.mxu0 0
    %3066 = vmatpush1.bf16.msra.mxu0 0
    %3067 = vmatprep.subr.bf16.mxu0 0
    %3068 = vmatpush1.bf16.msra.mxu0 0
    %3069 = vmatprep.subr.bf16.mxu0 0
    %3070 = vmatpush1.bf16.msra.mxu0 0
    %3071 = vmatprep.subr.bf16.mxu0 0
    %3072 = vmatpush1.bf16.msra.mxu0 0
    %3073 = vmatprep.mubr.bf16.mxu0 0
    %3074 = vmatmul.mubr.bf16.gmra.mrb[0].mxu0 %v2957
    %v3075 = vpop.f32.mrb[0].mxu0
    %v3076 = vadd.f32 %v2954, %v3075
    %v3077 = vpop.f32.mrb[0].mxu0
    %v3078 = vadd.f32 %v2954, %v3077
    %v3079 = vpop.f32.mrb[0].mxu0
    %v3080 = vpop.f32.mrb[0].mxu0
    %3081 = vdwg.mxu0
    %3082 = vmatprep.subr.bf16.mxu0 %v2949
    %3083 = vmatpush1.bf16.msra.mxu0 %v2948
    %3084 = vmatprep.subr.bf16.mxu0 0
    %3085 = vmatpush1.bf16.msra.mxu0 0
    %3086 = vmatprep.subr.bf16.mxu0 0
    %3087 = vmatpush1.bf16.msra.mxu0 0
    %3088 = vmatprep.subr.bf16.mxu0 0
    %3089 = vmatpush1.bf16.msra.mxu0 0
    %3090 = vmatprep.subr.bf16.mxu0 0
    %3091 = vmatpush1.bf16.msra.mxu0 0
    %3092 = vmatprep.subr.bf16.mxu0 0
    %3093 = vmatpush1.bf16.msra.mxu0 0
    %3094 = vmatprep.subr.bf16.mxu0 0
    %3095 = vmatpush1.bf16.msra.mxu0 0
    %3096 = vmatprep.subr.bf16.mxu0 0
    %3097 = vmatpush1.bf16.msra.mxu0 0
    %3098 = vmatprep.subr.bf16.mxu0 0
    %3099 = vmatpush1.bf16.msra.mxu0 0
    %3100 = vmatprep.subr.bf16.mxu0 0
    %3101 = vmatpush1.bf16.msra.mxu0 0
    %3102 = vmatprep.subr.bf16.mxu0 0
    %3103 = vmatpush1.bf16.msra.mxu0 0
    %3104 = vmatprep.subr.bf16.mxu0 0
    %3105 = vmatpush1.bf16.msra.mxu0 0
    %3106 = vmatprep.subr.bf16.mxu0 0
    %3107 = vmatpush1.bf16.msra.mxu0 0
    %3108 = vmatprep.subr.bf16.mxu0 0
    %3109 = vmatpush1.bf16.msra.mxu0 0
    %3110 = vmatprep.subr.bf16.mxu0 0
    %3111 = vmatpush1.bf16.msra.mxu0 0
    %3112 = vmatprep.subr.bf16.mxu0 0
    %3113 = vmatpush1.bf16.msra.mxu0 0
    %3114 = vmatprep.mubr.bf16.mxu0 0
    %3115 = vmatmul.mubr.bf16.gmra.mrb[0].mxu0 %v2957
    %v3116 = vpop.f32.mrb[0].mxu0
    %v3117 = vadd.f32 %v2954, %v3116
    %v3118 = vpop.f32.mrb[0].mxu0
    %v3119 = vadd.f32 %v2954, %v3118
    %v3120 = vpop.f32.mrb[0].mxu0
    %v3121 = vpop.f32.mrb[0].mxu0
    %3122 = vdwg.mxu0
    %v3123 = vtanh.pop %v2994
    %v3124 = vtanh.pop %v2996
    %v3125 = vtanh.pop %v3035
    %v3126 = vtanh.pop %v3037
    %v3127 = vtanh.pop %v3076
    %v3128 = vtanh.pop %v3078
    %v3129 = vtanh.pop %v3117
    %v3130 = vtanh.pop %v3119
    %v3139 = vcombine.low %v3123, %v3124
    %v3140 = vcombine.low %v3125, %v3126
    %v3141 = vcombine.low %v3127, %v3128
    %v3142 = vcombine.low %v3129, %v3130
    %s3147 = scalar_lea.vmem [#allocation12], 96
    %3148 = vst [vmem:[%s3147] sm:$0xff] %v3139
    %3149 = vst [vmem:[%s3147 + $0x8] sm:$0xff] %v3140
    %3150 = vst [vmem:[%s3147 + $0x10] sm:$0xff] %v3141
    %3151 = vst [vmem:[%s3147 + $0x18] sm:$0xff] %v3142
    // Predicated region
    $region42: #{covae_forward.11} parent=1 // pred_check
      _
    $region43: #{covae_forward.11} parent=1 // pred_check_branch
      %3153 = sbr.rel (0) target = $region45
    $region44: #{covae_forward.11} parent=1 // pred_region
      %s3155 = ssub.s32 2048, 2048
      %3156 = vsyncadd [#allocation5], %s3155
      %s3157 = sshll.u32 [#allocation12], 4
      %s3158 = int_to_ptr.vmem [resolvable:$true] %s3157
      %3163 = dma.vmem_to_hbm [thread:$0]  %s3158, 2048, %s5, [#allocation5], 512, 512, 32
    $region45: #{covae_forward.11} parent=1 // pred_fallthru
      _
    // Predicated region
    $region46: #{covae_forward.11} parent=1 // pred_check
      _
    $region47: #{covae_forward.11} parent=1 // pred_check_branch
      %3165 = sbr.rel (0) target = $region49
    $region48: #{covae_forward.11} parent=1 // pred_region
      %3166 = dma.done [#allocation5], 2048
    $region49: #{covae_forward.11} parent=1 // pred_fallthru
      _
    %3167 = vsyncpa [#allocation4], 1
    %3168 = vsyncpa [#allocation7], 1
    %3169 = vsyncpa [#allocation10], 1
    %3170 = vsyncpa [#allocation5], 1

</llo_original>
